<compile_context>
chip_gen: v6e
topology: v6e:2x2x1
jax: 0.10.0
libtpu: 0.0.40
codegen_flags: <defaults>
</compile_context>

<pallas_src>
import functools

import jax
import jax.numpy as jnp
from jax import lax
from jax.experimental import pallas as pl
from jax.experimental.pallas import tpu as pltpu

_LANES = 128
_TM_QUANTUM = 1024            # tm multiple of 1024 -> output block sublane dim is a multiple of 8
_SMALL_K = 16                 # at or below this, the per-class running-min (VPU) path wins
_VMEM_TILE_BUDGET = 20 << 20  # per-tile working-set budget (safe for v7x's 64 MiB VMEM)
_VMEM_LIMIT_BYTES = 48 << 20  # scoped VMEM limit: > 32 MiB default, < v7x physical 64 MiB


def _round_up(x, m):
    return (x + m - 1) // m * m


def _knn_matmul_kernel(x_ref, et_ref, e2_ref, out_ref, *, tm):
    """p == 2, larger K: ||x||^2 - 2 x.E + ||e||^2 on the MXU, argmin over classes."""
    x = x_ref[...]                                              # (tm, C) native dtype -> MXU
    xf = x.astype(jnp.float32)
    x2 = jnp.sum(xf * xf, axis=-1, keepdims=True)               # (tm, 1)  f32 (VPU)
    # Table is already transposed/padded in the wrapper: no per-step XLU transpose,
    # no per-step ||e||^2 reduce.
    cross = jnp.dot(x, et_ref[...], preferred_element_type=jnp.float32)   # (tm, K_pad)
    dist = x2 - 2.0 * cross + e2_ref[...]                       # (tm, K_pad); pad cols = +big
    # NOTE: expansion can suffer cancellation on near-ties; accumulation is f32.
    idx = jnp.argmin(dist, axis=-1).astype(jnp.int32)           # first-min tie-break (sklearn)
    out_ref[...] = idx.reshape(tm // _LANES, _LANES)            # lane-dense store


def _knn_loop_kernel(x_ref, emb_ref, out_ref, *, p, tm):
    """General Minkowski p, or small K: running (best_dist, best_idx) over classes (VPU)."""
    K = emb_ref.shape[0]
    x = x_ref[...].astype(jnp.float32)                          # (tm, C)
    big = jnp.float32(jnp.finfo(jnp.float32).max)
    p_is_int = float(p) == int(p)

    def class_dist(e_k):                                        # e_k: (1, C) f32
        diff = x - e_k
        if p_is_int:
            pi = int(p)
            base = diff if pi % 2 == 0 else jnp.abs(diff)       # drop abs for even p
            pw = base
            for _ in range(pi - 1):                             # explicit multiplies, no pow
                pw = pw * base
        else:
            pw = jnp.abs(diff) ** p                             # non-integer p -> EUP exp/log
        return jnp.sum(pw, axis=-1, keepdims=True)              # (tm, 1)

    def body(k, carry):
        best_d, best_i = carry
        e_k = emb_ref[pl.ds(k, 1), :].astype(jnp.float32)       # (1, C) dynamic row
        d = class_dist(e_k)
        better = d < best_d                                     # strict '<' == lowest-index ties
        return (jnp.where(better, d, best_d),
                jnp.where(better, k, best_i))

    init = (jnp.full((tm, 1), big, jnp.float32),
            jnp.zeros((tm, 1), jnp.int32))
    _, best_i = lax.fori_loop(0, K, body, init, unroll=K <= _SMALL_K)
    out_ref[...] = best_i.astype(jnp.int32).reshape(tm // _LANES, _LANES)   # lane-dense store


def _auto_tm(tm, M, C, kcols, in_itemsize):
    """Clamp tm to the (padded) problem size and to a per-tile VMEM budget (v7x-safe)."""
    tm = max(_TM_QUANTUM, (tm // _TM_QUANTUM) * _TM_QUANTUM)
    tm = min(tm, _round_up(M, _TM_QUANTUM))

    def working_set(t):
        return (2 * t * C * in_itemsize                         # double-buffered pixel tile
                + kcols * C * in_itemsize + kcols * 4           # resident table + norms
                + t * kcols * 4                                 # dist / select temporaries
                + 2 * (t // _LANES) * _LANES * 4)               # double-buffered int32 output

    while tm > _TM_QUANTUM and working_set(tm) > _VMEM_TILE_BUDGET:
        tm -= _TM_QUANTUM
    return tm


def knn_interpret(x_nchw, class_emb_vecs, *, p=2, tm=2048):
    """Nearest-class-embedding segmentation.

    x_nchw:         (N, C, H, W) float array (NCHW, like the PyTorch module).
    class_emb_vecs: (K, C) float array of class embeddings.
    Returns:        (N, H, W) int32 class indices.
    """
    N, C, H, W = x_nchw.shape
    K, Ce = class_emb_vecs.shape
    assert Ce == C, "embedding dim must match channel dim"

    # Plain-JAX glue: NCHW -> NHWC -> (M, C) pixel matrix, padded to a tile multiple.
    x_flat = jnp.transpose(x_nchw, (0, 2, 3, 1)).reshape(-1, C)
    M = x_flat.shape[0]
    in_itemsize = jnp.dtype(x_flat.dtype).itemsize

    use_matmul = (p == 2) and (K > _SMALL_K)
    K_pad = _round_up(K, _LANES) if use_matmul else K

    tm = _auto_tm(tm, M, C, K_pad if use_matmul else _LANES, in_itemsize)
    Mp = _round_up(M, tm)
    if Mp != M:
        x_flat = jnp.pad(x_flat, ((0, Mp - M), (0, 0)))         # padded rows sliced off below

    grid = (Mp // tm,)
    x_spec = pl.BlockSpec((tm, C), lambda i: (i, 0))
    out_spec = pl.BlockSpec((tm // _LANES, _LANES), lambda i: (i, 0))
    out_shape = jax.ShapeDtypeStruct((Mp // _LANES, _LANES), jnp.int32)

    if use_matmul:
        emb_f32 = class_emb_vecs.astype(jnp.float32)
        e2 = jnp.sum(emb_f32 * emb_f32, axis=-1)                # (K,)
        big = jnp.finfo(jnp.float32).max / 4.0
        e2_row = jnp.full((1, K_pad), big, jnp.float32).at[0, :K].set(e2)
        e_t = jnp.zeros((C, K_pad), x_flat.dtype).at[:, :K].set(
            class_emb_vecs.astype(x_flat.dtype).T)              # pre-transposed, zero-padded

        kernel = functools.partial(_knn_matmul_kernel, tm=tm)
        in_specs = [x_spec,
                    pl.BlockSpec((C, K_pad), lambda i: (0, 0)),
                    pl.BlockSpec((1, K_pad), lambda i: (0, 0))]
        inputs = (x_flat, e_t, e2_row)
        cost = pl.CostEstimate(
            flops=2 * Mp * C * K_pad + 4 * Mp * K_pad + 2 * Mp * C,
            transcendentals=0,
            bytes_accessed=Mp * C * in_itemsize + (C + 1) * K_pad * 4 + Mp * 4)
    else:
        kernel = functools.partial(_knn_loop_kernel, p=p, tm=tm)
        in_specs = [x_spec, pl.BlockSpec((K, C), lambda i: (0, 0))]
        inputs = (x_flat, class_emb_vecs)
        cost = pl.CostEstimate(
            flops=4 * Mp * K * C,
            transcendentals=0 if float(p) == int(p) else Mp * K * C,
            bytes_accessed=Mp * C * in_itemsize + K * C * 4 + Mp * 4)

    out = pl.pallas_call(
        kernel,
        out_shape=out_shape,
        grid_spec=pltpu.PrefetchScalarGridSpec(
            num_scalar_prefetch=0,
            grid=grid,
            in_specs=in_specs,
            out_specs=out_spec),
        compiler_params=pltpu.CompilerParams(
            dimension_semantics=("parallel",),           # shards across v7x's 2 TCs
            vmem_limit_bytes=_VMEM_LIMIT_BYTES),
        cost_estimate=cost,
    )(*inputs)

    # Lane-dense slab -> flat pixel order -> (N, H, W); drop the padded rows.
    return out.reshape(-1)[:M].reshape(N, H, W)


def _reference(x_nchw, class_emb_vecs, p=2):
    # Pure-JAX reference of the sklearn brute 1-NN forward pass.
    N, C, H, W = x_nchw.shape
    x = jnp.transpose(x_nchw, (0, 2, 3, 1)).reshape(-1, C)
    diff = jnp.abs(x[:, None, :] - class_emb_vecs[None, :, :])
    dist = jnp.sum(diff ** p, axis=-1)
    return jnp.argmin(dist, axis=-1).astype(jnp.int32).reshape(N, H, W)


if __name__ == "__main__":
    key = jax.random.PRNGKey(0)
    k1, k2, k3, k4 = jax.random.split(key, 4)

    # Case 1: module's small setup (N=2, C=4, 16x16, K=8, p=2) -> small-K VPU running-min path.
    x_small = jax.random.normal(k1, (2, 4, 16, 16), dtype=jnp.float32)
    emb_small = jax.random.normal(k2, (8, 4), dtype=jnp.float32)  # stand-in for np.load(idx_to_vec_path)
    out_small = jax.block_until_ready(knn_interpret(x_small, emb_small, p=2))
    assert out_small.shape == (2, 16, 16)
    assert bool(jnp.all(out_small == _reference(x_small, emb_small, p=2)))

    # Case 2: larger class table (K=160, C=8, p=2) -> MXU path (K padded to 256 lanes).
    x_big = jax.random.normal(k3, (1, 8, 16, 16), dtype=jnp.float32)
    emb_big = jax.random.normal(k4, (160, 8), dtype=jnp.float32)
    out_big = jax.block_until_ready(knn_interpret(x_big, emb_big, p=2))
    assert out_big.shape == (1, 16, 16)
    assert bool(jnp.all(out_big == _reference(x_big, emb_big, p=2)))

    # Case 3: Minkowski p=1 exercises the general-p running-min path.
    out_l1 = jax.block_until_ready(knn_interpret(x_small, emb_small, p=1))
    assert bool(jnp.all(out_l1 == _reference(x_small, emb_small, p=1)))

    print("KERNEL_OK")
</pallas_src>

<mosaic_0001>
module attributes {stable_mosaic.version = 11 : i64} {
  func.func @_knn_loop_kernel(%arg0: i32, %arg1: memref<1024x4xf32, #tpu.memory_space<vmem>>, %arg2: memref<8x4xf32, #tpu.memory_space<vmem>>, %arg3: memref<8x128xi32, #tpu.memory_space<vmem>>) attributes {dimension_semantics = [#tpu.dimension_semantics<parallel>], iteration_bounds = array<i64: 1>, scalar_prefetch = 0 : i64, scratch_operands = 0 : i64, tpu.core_type = #tpu.core_type<tc>, window_params = [{transform_indices = @transform_0, window_bounds = array<i64: 1024, 4>}, {pipeline_mode = #tpu.pipeline_mode<synchronous>, transform_indices = @transform_1, window_bounds = array<i64: 8, 4>}, {transform_indices = @transform_2, window_bounds = array<i64: 8, 128>}]} {
    %c0 = arith.constant 0 : index
    %c0_0 = arith.constant 0 : index
    %0 = vector.load %arg1[%c0, %c0_0] : memref<1024x4xf32, #tpu.memory_space<vmem>>, vector<1024x4xf32>
    %cst = arith.constant 3.40282347E+38 : f32
    %1 = vector.broadcast %cst : f32 to vector<1024x1xf32>
    %c0_i32 = arith.constant 0 : i32
    %2 = vector.broadcast %c0_i32 : i32 to vector<1024x1xi32>
    %c0_i32_1 = arith.constant 0 : i32
    %3 = arith.index_cast %c0_i32_1 : i32 to index
    %c0_2 = arith.constant 0 : index
    %4 = vector.load %arg2[%3, %c0_2] : memref<8x4xf32, #tpu.memory_space<vmem>>, vector<1x4xf32>
    %5 = vector.broadcast %4 : vector<1x4xf32> to vector<1024x4xf32>
    %6 = arith.subf %0, %5 : vector<1024x4xf32>
    %7 = arith.mulf %6, %6 : vector<1024x4xf32>
    %cst_3 = arith.constant dense<0.000000e+00> : vector<1024xf32>
    %8 = vector.multi_reduction <add>, %7, %cst_3 [1] : vector<1024x4xf32> to vector<1024xf32>
    %9 = vector.shape_cast %8 : vector<1024xf32> to vector<1024x1xf32>
    %10 = arith.cmpf olt, %9, %1 : vector<1024x1xf32>
    %11 = arith.select %10, %9, %1 : vector<1024x1xi1>, vector<1024x1xf32>
    %12 = vector.broadcast %c0_i32_1 : i32 to vector<1024x1xi32>
    %13 = arith.select %10, %12, %2 : vector<1024x1xi1>, vector<1024x1xi32>
    %c1_i32 = arith.constant 1 : i32
    %14 = arith.index_cast %c1_i32 : i32 to index
    %c0_4 = arith.constant 0 : index
    %15 = vector.load %arg2[%14, %c0_4] : memref<8x4xf32, #tpu.memory_space<vmem>>, vector<1x4xf32>
    %16 = vector.broadcast %15 : vector<1x4xf32> to vector<1024x4xf32>
    %17 = arith.subf %0, %16 : vector<1024x4xf32>
    %18 = arith.mulf %17, %17 : vector<1024x4xf32>
    %cst_5 = arith.constant dense<0.000000e+00> : vector<1024xf32>
    %19 = vector.multi_reduction <add>, %18, %cst_5 [1] : vector<1024x4xf32> to vector<1024xf32>
    %20 = vector.shape_cast %19 : vector<1024xf32> to vector<1024x1xf32>
    %21 = arith.cmpf olt, %20, %11 : vector<1024x1xf32>
    %22 = arith.select %21, %20, %11 : vector<1024x1xi1>, vector<1024x1xf32>
    %23 = vector.broadcast %c1_i32 : i32 to vector<1024x1xi32>
    %24 = arith.select %21, %23, %13 : vector<1024x1xi1>, vector<1024x1xi32>
    %c2_i32 = arith.constant 2 : i32
    %25 = arith.index_cast %c2_i32 : i32 to index
    %c0_6 = arith.constant 0 : index
    %26 = vector.load %arg2[%25, %c0_6] : memref<8x4xf32, #tpu.memory_space<vmem>>, vector<1x4xf32>
    %27 = vector.broadcast %26 : vector<1x4xf32> to vector<1024x4xf32>
    %28 = arith.subf %0, %27 : vector<1024x4xf32>
    %29 = arith.mulf %28, %28 : vector<1024x4xf32>
    %cst_7 = arith.constant dense<0.000000e+00> : vector<1024xf32>
    %30 = vector.multi_reduction <add>, %29, %cst_7 [1] : vector<1024x4xf32> to vector<1024xf32>
    %31 = vector.shape_cast %30 : vector<1024xf32> to vector<1024x1xf32>
    %32 = arith.cmpf olt, %31, %22 : vector<1024x1xf32>
    %33 = arith.select %32, %31, %22 : vector<1024x1xi1>, vector<1024x1xf32>
    %34 = vector.broadcast %c2_i32 : i32 to vector<1024x1xi32>
    %35 = arith.select %32, %34, %24 : vector<1024x1xi1>, vector<1024x1xi32>
    %c3_i32 = arith.constant 3 : i32
    %36 = arith.index_cast %c3_i32 : i32 to index
    %c0_8 = arith.constant 0 : index
    %37 = vector.load %arg2[%36, %c0_8] : memref<8x4xf32, #tpu.memory_space<vmem>>, vector<1x4xf32>
    %38 = vector.broadcast %37 : vector<1x4xf32> to vector<1024x4xf32>
    %39 = arith.subf %0, %38 : vector<1024x4xf32>
    %40 = arith.mulf %39, %39 : vector<1024x4xf32>
    %cst_9 = arith.constant dense<0.000000e+00> : vector<1024xf32>
    %41 = vector.multi_reduction <add>, %40, %cst_9 [1] : vector<1024x4xf32> to vector<1024xf32>
    %42 = vector.shape_cast %41 : vector<1024xf32> to vector<1024x1xf32>
    %43 = arith.cmpf olt, %42, %33 : vector<1024x1xf32>
    %44 = arith.select %43, %42, %33 : vector<1024x1xi1>, vector<1024x1xf32>
    %45 = vector.broadcast %c3_i32 : i32 to vector<1024x1xi32>
    %46 = arith.select %43, %45, %35 : vector<1024x1xi1>, vector<1024x1xi32>
    %c4_i32 = arith.constant 4 : i32
    %47 = arith.index_cast %c4_i32 : i32 to index
    %c0_10 = arith.constant 0 : index
    %48 = vector.load %arg2[%47, %c0_10] : memref<8x4xf32, #tpu.memory_space<vmem>>, vector<1x4xf32>
    %49 = vector.broadcast %48 : vector<1x4xf32> to vector<1024x4xf32>
    %50 = arith.subf %0, %49 : vector<1024x4xf32>
    %51 = arith.mulf %50, %50 : vector<1024x4xf32>
    %cst_11 = arith.constant dense<0.000000e+00> : vector<1024xf32>
    %52 = vector.multi_reduction <add>, %51, %cst_11 [1] : vector<1024x4xf32> to vector<1024xf32>
    %53 = vector.shape_cast %52 : vector<1024xf32> to vector<1024x1xf32>
    %54 = arith.cmpf olt, %53, %44 : vector<1024x1xf32>
    %55 = arith.select %54, %53, %44 : vector<1024x1xi1>, vector<1024x1xf32>
    %56 = vector.broadcast %c4_i32 : i32 to vector<1024x1xi32>
    %57 = arith.select %54, %56, %46 : vector<1024x1xi1>, vector<1024x1xi32>
    %c5_i32 = arith.constant 5 : i32
    %58 = arith.index_cast %c5_i32 : i32 to index
    %c0_12 = arith.constant 0 : index
    %59 = vector.load %arg2[%58, %c0_12] : memref<8x4xf32, #tpu.memory_space<vmem>>, vector<1x4xf32>
    %60 = vector.broadcast %59 : vector<1x4xf32> to vector<1024x4xf32>
    %61 = arith.subf %0, %60 : vector<1024x4xf32>
    %62 = arith.mulf %61, %61 : vector<1024x4xf32>
    %cst_13 = arith.constant dense<0.000000e+00> : vector<1024xf32>
    %63 = vector.multi_reduction <add>, %62, %cst_13 [1] : vector<1024x4xf32> to vector<1024xf32>
    %64 = vector.shape_cast %63 : vector<1024xf32> to vector<1024x1xf32>
    %65 = arith.cmpf olt, %64, %55 : vector<1024x1xf32>
    %66 = arith.select %65, %64, %55 : vector<1024x1xi1>, vector<1024x1xf32>
    %67 = vector.broadcast %c5_i32 : i32 to vector<1024x1xi32>
    %68 = arith.select %65, %67, %57 : vector<1024x1xi1>, vector<1024x1xi32>
    %c6_i32 = arith.constant 6 : i32
    %69 = arith.index_cast %c6_i32 : i32 to index
    %c0_14 = arith.constant 0 : index
    %70 = vector.load %arg2[%69, %c0_14] : memref<8x4xf32, #tpu.memory_space<vmem>>, vector<1x4xf32>
    %71 = vector.broadcast %70 : vector<1x4xf32> to vector<1024x4xf32>
    %72 = arith.subf %0, %71 : vector<1024x4xf32>
    %73 = arith.mulf %72, %72 : vector<1024x4xf32>
    %cst_15 = arith.constant dense<0.000000e+00> : vector<1024xf32>
    %74 = vector.multi_reduction <add>, %73, %cst_15 [1] : vector<1024x4xf32> to vector<1024xf32>
    %75 = vector.shape_cast %74 : vector<1024xf32> to vector<1024x1xf32>
    %76 = arith.cmpf olt, %75, %66 : vector<1024x1xf32>
    %77 = arith.select %76, %75, %66 : vector<1024x1xi1>, vector<1024x1xf32>
    %78 = vector.broadcast %c6_i32 : i32 to vector<1024x1xi32>
    %79 = arith.select %76, %78, %68 : vector<1024x1xi1>, vector<1024x1xi32>
    %c7_i32 = arith.constant 7 : i32
    %80 = arith.index_cast %c7_i32 : i32 to index
    %c0_16 = arith.constant 0 : index
    %81 = vector.load %arg2[%80, %c0_16] : memref<8x4xf32, #tpu.memory_space<vmem>>, vector<1x4xf32>
    %82 = vector.broadcast %81 : vector<1x4xf32> to vector<1024x4xf32>
    %83 = arith.subf %0, %82 : vector<1024x4xf32>
    %84 = arith.mulf %83, %83 : vector<1024x4xf32>
    %cst_17 = arith.constant dense<0.000000e+00> : vector<1024xf32>
    %85 = vector.multi_reduction <add>, %84, %cst_17 [1] : vector<1024x4xf32> to vector<1024xf32>
    %86 = vector.shape_cast %85 : vector<1024xf32> to vector<1024x1xf32>
    %87 = arith.cmpf olt, %86, %77 : vector<1024x1xf32>
    %88 = arith.select %87, %86, %77 : vector<1024x1xi1>, vector<1024x1xf32>
    %89 = vector.broadcast %c7_i32 : i32 to vector<1024x1xi32>
    %90 = arith.select %87, %89, %79 : vector<1024x1xi1>, vector<1024x1xi32>
    %c8_i32 = arith.constant 8 : i32
    %91 = vector.shape_cast %90 : vector<1024x1xi32> to vector<8x128xi32>
    %c0_18 = arith.constant 0 : index
    %c0_19 = arith.constant 0 : index
    %92 = vector.load %arg3[%c0_18, %c0_19] : memref<8x128xi32, #tpu.memory_space<vmem>>, vector<8x128xi32>
    tpu.vector_store %arg3[%c0_18, %c0_19], %91 {strides = array<i32>} : memref<8x128xi32, #tpu.memory_space<vmem>>, vector<8x128xi32>,
    return
  }
  func.func @transform_0(%arg0: i32) -> (i32, i32) {
    %c0_i32 = arith.constant 0 : i32
    %c0_i32_0 = arith.constant 0 : i32
    return %arg0, %c0_i32 : i32, i32
  }
  func.func @transform_1(%arg0: i32) -> (i32, i32) {
    %c0_i32 = arith.constant 0 : i32
    %c0_i32_0 = arith.constant 0 : i32
    %c0_i32_1 = arith.constant 0 : i32
    return %c0_i32, %c0_i32_0 : i32, i32
  }
  func.func @transform_2(%arg0: i32) -> (i32, i32) {
    %c0_i32 = arith.constant 0 : i32
    %c0_i32_0 = arith.constant 0 : i32
    return %arg0, %c0_i32 : i32, i32
  }
}

</mosaic_0001>

<llo_original>
// kernel: tpu_custom_call.1
$region0: #{tpu_custom_call.1}
  #allocation0 [shape = 'u32[]', space=smem, size = 0x4, offset = 0x4, fixed_abs, tag = 'smem constant byte address 0x4 - core index']
  #allocation1 [shape = 'u32[144,128]{1,0:T(1,128)}', space=vmem, size = 0x12000, scoped, tag = 'internal scratch']
  %s0 = inlined_call_operand.vmem [shape: f32[1024,4], index: 0, kind: input, shape index: {}]
  %s1 = inlined_call_operand.vmem [shape: f32[8,4], index: 1, kind: input, shape index: {}]
  %s2 = inlined_call_operand.hbm [shape: s32[8,128], index: 2, kind: output, shape index: {}]
  %s3 = sld [smem:[#allocation0]]
  $region18: #{tpu_custom_call.1} parent=0
    _
  %s5 = ssub.s32 1, %s3
  %s6 = scalar_select 0, %s5, %s3
  $region1: #{tpu_custom_call.1} parent=0
    #allocation2 [shape = 'u8[4096]{0}', space=vmem, size = 0x1000, scoped, tag = 'output window, operand 0, single buffered']
    #allocation3 [shape = 's32[1]{0}', space=sflag, size = 0x4, scoped, tag = 'scoped memory for tpu_custom_call.1']
    %7 = vsyncpa [#allocation3], 0
    // Predicated region
    $region2: #{tpu_custom_call.1} parent=1 // pred_check
      _
    $region3: #{tpu_custom_call.1} parent=1 // pred_check_branch
      %9 = sbr.rel (0) target = $region5
    $region4: #{tpu_custom_call.1} parent=1 // pred_region
      _
    $region5: #{tpu_custom_call.1} parent=1 // pred_fallthru
      _
    // Predicated region
    $region6: #{tpu_custom_call.1} parent=1 // pred_check
      _
    $region7: #{tpu_custom_call.1} parent=1 // pred_check_branch
      %11 = sbr.rel (0) target = $region9
    $region8: #{tpu_custom_call.1} parent=1 // pred_region
      _
    $region9: #{tpu_custom_call.1} parent=1 // pred_fallthru
      _
    %v12 = vld [vmem:[%s0] sm:$0xff]
    %v13 = vld [vmem:[%s0 + $0x8] sm:$0xff]
    %v14 = vld [vmem:[%s0 + $0x10] sm:$0xff]
    %v15 = vld [vmem:[%s0 + $0x18] sm:$0xff]
    %v16 = vld [vmem:[%s0 + $0x20] sm:$0xff]
    %v17 = vld [vmem:[%s0 + $0x28] sm:$0xff]
    %v18 = vld [vmem:[%s0 + $0x30] sm:$0xff]
    %v19 = vld [vmem:[%s0 + $0x38] sm:$0xff]
    %v20 = vld [vmem:[%s0 + $0x40] sm:$0xff]
    %v21 = vld [vmem:[%s0 + $0x48] sm:$0xff]
    %v22 = vld [vmem:[%s0 + $0x50] sm:$0xff]
    %v23 = vld [vmem:[%s0 + $0x58] sm:$0xff]
    %v24 = vld [vmem:[%s0 + $0x60] sm:$0xff]
    %v25 = vld [vmem:[%s0 + $0x68] sm:$0xff]
    %v26 = vld [vmem:[%s0 + $0x70] sm:$0xff]
    %v27 = vld [vmem:[%s0 + $0x78] sm:$0xff]
    %v28 = vld [vmem:[%s0 + $0x80] sm:$0xff]
    %v29 = vld [vmem:[%s0 + $0x88] sm:$0xff]
    %v30 = vld [vmem:[%s0 + $0x90] sm:$0xff]
    %v31 = vld [vmem:[%s0 + $0x98] sm:$0xff]
    %v32 = vld [vmem:[%s0 + $0xa0] sm:$0xff]
    %v33 = vld [vmem:[%s0 + $0xa8] sm:$0xff]
    %v34 = vld [vmem:[%s0 + $0xb0] sm:$0xff]
    %v35 = vld [vmem:[%s0 + $0xb8] sm:$0xff]
    %v36 = vld [vmem:[%s0 + $0xc0] sm:$0xff]
    %v37 = vld [vmem:[%s0 + $0xc8] sm:$0xff]
    %v38 = vld [vmem:[%s0 + $0xd0] sm:$0xff]
    %v39 = vld [vmem:[%s0 + $0xd8] sm:$0xff]
    %v40 = vld [vmem:[%s0 + $0xe0] sm:$0xff]
    %v41 = vld [vmem:[%s0 + $0xe8] sm:$0xff]
    %v42 = vld [vmem:[%s0 + $0xf0] sm:$0xff]
    %v43 = vld [vmem:[%s0 + $0xf8] sm:$0xff]
    %v44 = vld [vmem:[%s0 + $0x100] sm:$0xff]
    %v45 = vld [vmem:[%s0 + $0x108] sm:$0xff]
    %v46 = vld [vmem:[%s0 + $0x110] sm:$0xff]
    %v47 = vld [vmem:[%s0 + $0x118] sm:$0xff]
    %v48 = vld [vmem:[%s0 + $0x120] sm:$0xff]
    %v49 = vld [vmem:[%s0 + $0x128] sm:$0xff]
    %v50 = vld [vmem:[%s0 + $0x130] sm:$0xff]
    %v51 = vld [vmem:[%s0 + $0x138] sm:$0xff]
    %v52 = vld [vmem:[%s0 + $0x140] sm:$0xff]
    %v53 = vld [vmem:[%s0 + $0x148] sm:$0xff]
    %v54 = vld [vmem:[%s0 + $0x150] sm:$0xff]
    %v55 = vld [vmem:[%s0 + $0x158] sm:$0xff]
    %v56 = vld [vmem:[%s0 + $0x160] sm:$0xff]
    %v57 = vld [vmem:[%s0 + $0x168] sm:$0xff]
    %v58 = vld [vmem:[%s0 + $0x170] sm:$0xff]
    %v59 = vld [vmem:[%s0 + $0x178] sm:$0xff]
    %v60 = vld [vmem:[%s0 + $0x180] sm:$0xff]
    %v61 = vld [vmem:[%s0 + $0x188] sm:$0xff]
    %v62 = vld [vmem:[%s0 + $0x190] sm:$0xff]
    %v63 = vld [vmem:[%s0 + $0x198] sm:$0xff]
    %v64 = vld [vmem:[%s0 + $0x1a0] sm:$0xff]
    %v65 = vld [vmem:[%s0 + $0x1a8] sm:$0xff]
    %v66 = vld [vmem:[%s0 + $0x1b0] sm:$0xff]
    %v67 = vld [vmem:[%s0 + $0x1b8] sm:$0xff]
    %v68 = vld [vmem:[%s0 + $0x1c0] sm:$0xff]
    %v69 = vld [vmem:[%s0 + $0x1c8] sm:$0xff]
    %v70 = vld [vmem:[%s0 + $0x1d0] sm:$0xff]
    %v71 = vld [vmem:[%s0 + $0x1d8] sm:$0xff]
    %v72 = vld [vmem:[%s0 + $0x1e0] sm:$0xff]
    %v73 = vld [vmem:[%s0 + $0x1e8] sm:$0xff]
    %v74 = vld [vmem:[%s0 + $0x1f0] sm:$0xff]
    %v75 = vld [vmem:[%s0 + $0x1f8] sm:$0xff]
    %v76 = vld [vmem:[%s0 + $0x200] sm:$0xff]
    %v77 = vld [vmem:[%s0 + $0x208] sm:$0xff]
    %v78 = vld [vmem:[%s0 + $0x210] sm:$0xff]
    %v79 = vld [vmem:[%s0 + $0x218] sm:$0xff]
    %v80 = vld [vmem:[%s0 + $0x220] sm:$0xff]
    %v81 = vld [vmem:[%s0 + $0x228] sm:$0xff]
    %v82 = vld [vmem:[%s0 + $0x230] sm:$0xff]
    %v83 = vld [vmem:[%s0 + $0x238] sm:$0xff]
    %v84 = vld [vmem:[%s0 + $0x240] sm:$0xff]
    %v85 = vld [vmem:[%s0 + $0x248] sm:$0xff]
    %v86 = vld [vmem:[%s0 + $0x250] sm:$0xff]
    %v87 = vld [vmem:[%s0 + $0x258] sm:$0xff]
    %v88 = vld [vmem:[%s0 + $0x260] sm:$0xff]
    %v89 = vld [vmem:[%s0 + $0x268] sm:$0xff]
    %v90 = vld [vmem:[%s0 + $0x270] sm:$0xff]
    %v91 = vld [vmem:[%s0 + $0x278] sm:$0xff]
    %v92 = vld [vmem:[%s0 + $0x280] sm:$0xff]
    %v93 = vld [vmem:[%s0 + $0x288] sm:$0xff]
    %v94 = vld [vmem:[%s0 + $0x290] sm:$0xff]
    %v95 = vld [vmem:[%s0 + $0x298] sm:$0xff]
    %v96 = vld [vmem:[%s0 + $0x2a0] sm:$0xff]
    %v97 = vld [vmem:[%s0 + $0x2a8] sm:$0xff]
    %v98 = vld [vmem:[%s0 + $0x2b0] sm:$0xff]
    %v99 = vld [vmem:[%s0 + $0x2b8] sm:$0xff]
    %v100 = vld [vmem:[%s0 + $0x2c0] sm:$0xff]
    %v101 = vld [vmem:[%s0 + $0x2c8] sm:$0xff]
    %v102 = vld [vmem:[%s0 + $0x2d0] sm:$0xff]
    %v103 = vld [vmem:[%s0 + $0x2d8] sm:$0xff]
    %v104 = vld [vmem:[%s0 + $0x2e0] sm:$0xff]
    %v105 = vld [vmem:[%s0 + $0x2e8] sm:$0xff]
    %v106 = vld [vmem:[%s0 + $0x2f0] sm:$0xff]
    %v107 = vld [vmem:[%s0 + $0x2f8] sm:$0xff]
    %v108 = vld [vmem:[%s0 + $0x300] sm:$0xff]
    %v109 = vld [vmem:[%s0 + $0x308] sm:$0xff]
    %v110 = vld [vmem:[%s0 + $0x310] sm:$0xff]
    %v111 = vld [vmem:[%s0 + $0x318] sm:$0xff]
    %v112 = vld [vmem:[%s0 + $0x320] sm:$0xff]
    %v113 = vld [vmem:[%s0 + $0x328] sm:$0xff]
    %v114 = vld [vmem:[%s0 + $0x330] sm:$0xff]
    %v115 = vld [vmem:[%s0 + $0x338] sm:$0xff]
    %v116 = vld [vmem:[%s0 + $0x340] sm:$0xff]
    %v117 = vld [vmem:[%s0 + $0x348] sm:$0xff]
    %v118 = vld [vmem:[%s0 + $0x350] sm:$0xff]
    %v119 = vld [vmem:[%s0 + $0x358] sm:$0xff]
    %v120 = vld [vmem:[%s0 + $0x360] sm:$0xff]
    %v121 = vld [vmem:[%s0 + $0x368] sm:$0xff]
    %v122 = vld [vmem:[%s0 + $0x370] sm:$0xff]
    %v123 = vld [vmem:[%s0 + $0x378] sm:$0xff]
    %v124 = vld [vmem:[%s0 + $0x380] sm:$0xff]
    %v125 = vld [vmem:[%s0 + $0x388] sm:$0xff]
    %v126 = vld [vmem:[%s0 + $0x390] sm:$0xff]
    %v127 = vld [vmem:[%s0 + $0x398] sm:$0xff]
    %v128 = vld [vmem:[%s0 + $0x3a0] sm:$0xff]
    %v129 = vld [vmem:[%s0 + $0x3a8] sm:$0xff]
    %v130 = vld [vmem:[%s0 + $0x3b0] sm:$0xff]
    %v131 = vld [vmem:[%s0 + $0x3b8] sm:$0xff]
    %v132 = vld [vmem:[%s0 + $0x3c0] sm:$0xff]
    %v133 = vld [vmem:[%s0 + $0x3c8] sm:$0xff]
    %v134 = vld [vmem:[%s0 + $0x3d0] sm:$0xff]
    %v135 = vld [vmem:[%s0 + $0x3d8] sm:$0xff]
    %v136 = vld [vmem:[%s0 + $0x3e0] sm:$0xff]
    %v137 = vld [vmem:[%s0 + $0x3e8] sm:$0xff]
    %v138 = vld [vmem:[%s0 + $0x3f0] sm:$0xff]
    %v139 = vld [vmem:[%s0 + $0x3f8] sm:$0xff]
    %v140 = vld [vmem:[%s1] sm:$0x1]
    %v141 = vlaneseq
    %v142 = vshrl.u32 %v141, 7
    %v143 = vsub.s32 0, %v142
    %v144 = vrot.slane %v140, %v143
    %v145 = vsub.f32 %v12, %v144
    %v146 = vsub.f32 %v13, %v144
    %v147 = vsub.f32 %v14, %v144
    %v148 = vsub.f32 %v15, %v144
    %v149 = vsub.f32 %v16, %v144
    %v150 = vsub.f32 %v17, %v144
    %v151 = vsub.f32 %v18, %v144
    %v152 = vsub.f32 %v19, %v144
    %v153 = vsub.f32 %v20, %v144
    %v154 = vsub.f32 %v21, %v144
    %v155 = vsub.f32 %v22, %v144
    %v156 = vsub.f32 %v23, %v144
    %v157 = vsub.f32 %v24, %v144
    %v158 = vsub.f32 %v25, %v144
    %v159 = vsub.f32 %v26, %v144
    %v160 = vsub.f32 %v27, %v144
    %v161 = vsub.f32 %v28, %v144
    %v162 = vsub.f32 %v29, %v144
    %v163 = vsub.f32 %v30, %v144
    %v164 = vsub.f32 %v31, %v144
    %v165 = vsub.f32 %v32, %v144
    %v166 = vsub.f32 %v33, %v144
    %v167 = vsub.f32 %v34, %v144
    %v168 = vsub.f32 %v35, %v144
    %v169 = vsub.f32 %v36, %v144
    %v170 = vsub.f32 %v37, %v144
    %v171 = vsub.f32 %v38, %v144
    %v172 = vsub.f32 %v39, %v144
    %v173 = vsub.f32 %v40, %v144
    %v174 = vsub.f32 %v41, %v144
    %v175 = vsub.f32 %v42, %v144
    %v176 = vsub.f32 %v43, %v144
    %v177 = vsub.f32 %v44, %v144
    %v178 = vsub.f32 %v45, %v144
    %v179 = vsub.f32 %v46, %v144
    %v180 = vsub.f32 %v47, %v144
    %v181 = vsub.f32 %v48, %v144
    %v182 = vsub.f32 %v49, %v144
    %v183 = vsub.f32 %v50, %v144
    %v184 = vsub.f32 %v51, %v144
    %v185 = vsub.f32 %v52, %v144
    %v186 = vsub.f32 %v53, %v144
    %v187 = vsub.f32 %v54, %v144
    %v188 = vsub.f32 %v55, %v144
    %v189 = vsub.f32 %v56, %v144
    %v190 = vsub.f32 %v57, %v144
    %v191 = vsub.f32 %v58, %v144
    %v192 = vsub.f32 %v59, %v144
    %v193 = vsub.f32 %v60, %v144
    %v194 = vsub.f32 %v61, %v144
    %v195 = vsub.f32 %v62, %v144
    %v196 = vsub.f32 %v63, %v144
    %v197 = vsub.f32 %v64, %v144
    %v198 = vsub.f32 %v65, %v144
    %v199 = vsub.f32 %v66, %v144
    %v200 = vsub.f32 %v67, %v144
    %v201 = vsub.f32 %v68, %v144
    %v202 = vsub.f32 %v69, %v144
    %v203 = vsub.f32 %v70, %v144
    %v204 = vsub.f32 %v71, %v144
    %v205 = vsub.f32 %v72, %v144
    %v206 = vsub.f32 %v73, %v144
    %v207 = vsub.f32 %v74, %v144
    %v208 = vsub.f32 %v75, %v144
    %v209 = vsub.f32 %v76, %v144
    %v210 = vsub.f32 %v77, %v144
    %v211 = vsub.f32 %v78, %v144
    %v212 = vsub.f32 %v79, %v144
    %v213 = vsub.f32 %v80, %v144
    %v214 = vsub.f32 %v81, %v144
    %v215 = vsub.f32 %v82, %v144
    %v216 = vsub.f32 %v83, %v144
    %v217 = vsub.f32 %v84, %v144
    %v218 = vsub.f32 %v85, %v144
    %v219 = vsub.f32 %v86, %v144
    %v220 = vsub.f32 %v87, %v144
    %v221 = vsub.f32 %v88, %v144
    %v222 = vsub.f32 %v89, %v144
    %v223 = vsub.f32 %v90, %v144
    %v224 = vsub.f32 %v91, %v144
    %v225 = vsub.f32 %v92, %v144
    %v226 = vsub.f32 %v93, %v144
    %v227 = vsub.f32 %v94, %v144
    %v228 = vsub.f32 %v95, %v144
    %v229 = vsub.f32 %v96, %v144
    %v230 = vsub.f32 %v97, %v144
    %v231 = vsub.f32 %v98, %v144
    %v232 = vsub.f32 %v99, %v144
    %v233 = vsub.f32 %v100, %v144
    %v234 = vsub.f32 %v101, %v144
    %v235 = vsub.f32 %v102, %v144
    %v236 = vsub.f32 %v103, %v144
    %v237 = vsub.f32 %v104, %v144
    %v238 = vsub.f32 %v105, %v144
    %v239 = vsub.f32 %v106, %v144
    %v240 = vsub.f32 %v107, %v144
    %v241 = vsub.f32 %v108, %v144
    %v242 = vsub.f32 %v109, %v144
    %v243 = vsub.f32 %v110, %v144
    %v244 = vsub.f32 %v111, %v144
    %v245 = vsub.f32 %v112, %v144
    %v246 = vsub.f32 %v113, %v144
    %v247 = vsub.f32 %v114, %v144
    %v248 = vsub.f32 %v115, %v144
    %v249 = vsub.f32 %v116, %v144
    %v250 = vsub.f32 %v117, %v144
    %v251 = vsub.f32 %v118, %v144
    %v252 = vsub.f32 %v119, %v144
    %v253 = vsub.f32 %v120, %v144
    %v254 = vsub.f32 %v121, %v144
    %v255 = vsub.f32 %v122, %v144
    %v256 = vsub.f32 %v123, %v144
    %v257 = vsub.f32 %v124, %v144
    %v258 = vsub.f32 %v125, %v144
    %v259 = vsub.f32 %v126, %v144
    %v260 = vsub.f32 %v127, %v144
    %v261 = vsub.f32 %v128, %v144
    %v262 = vsub.f32 %v129, %v144
    %v263 = vsub.f32 %v130, %v144
    %v264 = vsub.f32 %v131, %v144
    %v265 = vsub.f32 %v132, %v144
    %v266 = vsub.f32 %v133, %v144
    %v267 = vsub.f32 %v134, %v144
    %v268 = vsub.f32 %v135, %v144
    %v269 = vsub.f32 %v136, %v144
    %v270 = vsub.f32 %v137, %v144
    %v271 = vsub.f32 %v138, %v144
    %v272 = vsub.f32 %v139, %v144
    %v273 = vmul.f32 %v145, %v145
    %v274 = vmul.f32 %v146, %v146
    %v275 = vmul.f32 %v147, %v147
    %v276 = vmul.f32 %v148, %v148
    %v277 = vmul.f32 %v149, %v149
    %v278 = vmul.f32 %v150, %v150
    %v279 = vmul.f32 %v151, %v151
    %v280 = vmul.f32 %v152, %v152
    %v281 = vmul.f32 %v153, %v153
    %v282 = vmul.f32 %v154, %v154
    %v283 = vmul.f32 %v155, %v155
    %v284 = vmul.f32 %v156, %v156
    %v285 = vmul.f32 %v157, %v157
    %v286 = vmul.f32 %v158, %v158
    %v287 = vmul.f32 %v159, %v159
    %v288 = vmul.f32 %v160, %v160
    %v289 = vmul.f32 %v161, %v161
    %v290 = vmul.f32 %v162, %v162
    %v291 = vmul.f32 %v163, %v163
    %v292 = vmul.f32 %v164, %v164
    %v293 = vmul.f32 %v165, %v165
    %v294 = vmul.f32 %v166, %v166
    %v295 = vmul.f32 %v167, %v167
    %v296 = vmul.f32 %v168, %v168
    %v297 = vmul.f32 %v169, %v169
    %v298 = vmul.f32 %v170, %v170
    %v299 = vmul.f32 %v171, %v171
    %v300 = vmul.f32 %v172, %v172
    %v301 = vmul.f32 %v173, %v173
    %v302 = vmul.f32 %v174, %v174
    %v303 = vmul.f32 %v175, %v175
    %v304 = vmul.f32 %v176, %v176
    %v305 = vmul.f32 %v177, %v177
    %v306 = vmul.f32 %v178, %v178
    %v307 = vmul.f32 %v179, %v179
    %v308 = vmul.f32 %v180, %v180
    %v309 = vmul.f32 %v181, %v181
    %v310 = vmul.f32 %v182, %v182
    %v311 = vmul.f32 %v183, %v183
    %v312 = vmul.f32 %v184, %v184
    %v313 = vmul.f32 %v185, %v185
    %v314 = vmul.f32 %v186, %v186
    %v315 = vmul.f32 %v187, %v187
    %v316 = vmul.f32 %v188, %v188
    %v317 = vmul.f32 %v189, %v189
    %v318 = vmul.f32 %v190, %v190
    %v319 = vmul.f32 %v191, %v191
    %v320 = vmul.f32 %v192, %v192
    %v321 = vmul.f32 %v193, %v193
    %v322 = vmul.f32 %v194, %v194
    %v323 = vmul.f32 %v195, %v195
    %v324 = vmul.f32 %v196, %v196
    %v325 = vmul.f32 %v197, %v197
    %v326 = vmul.f32 %v198, %v198
    %v327 = vmul.f32 %v199, %v199
    %v328 = vmul.f32 %v200, %v200
    %v329 = vmul.f32 %v201, %v201
    %v330 = vmul.f32 %v202, %v202
    %v331 = vmul.f32 %v203, %v203
    %v332 = vmul.f32 %v204, %v204
    %v333 = vmul.f32 %v205, %v205
    %v334 = vmul.f32 %v206, %v206
    %v335 = vmul.f32 %v207, %v207
    %v336 = vmul.f32 %v208, %v208
    %v337 = vmul.f32 %v209, %v209
    %v338 = vmul.f32 %v210, %v210
    %v339 = vmul.f32 %v211, %v211
    %v340 = vmul.f32 %v212, %v212
    %v341 = vmul.f32 %v213, %v213
    %v342 = vmul.f32 %v214, %v214
    %v343 = vmul.f32 %v215, %v215
    %v344 = vmul.f32 %v216, %v216
    %v345 = vmul.f32 %v217, %v217
    %v346 = vmul.f32 %v218, %v218
    %v347 = vmul.f32 %v219, %v219
    %v348 = vmul.f32 %v220, %v220
    %v349 = vmul.f32 %v221, %v221
    %v350 = vmul.f32 %v222, %v222
    %v351 = vmul.f32 %v223, %v223
    %v352 = vmul.f32 %v224, %v224
    %v353 = vmul.f32 %v225, %v225
    %v354 = vmul.f32 %v226, %v226
    %v355 = vmul.f32 %v227, %v227
    %v356 = vmul.f32 %v228, %v228
    %v357 = vmul.f32 %v229, %v229
    %v358 = vmul.f32 %v230, %v230
    %v359 = vmul.f32 %v231, %v231
    %v360 = vmul.f32 %v232, %v232
    %v361 = vmul.f32 %v233, %v233
    %v362 = vmul.f32 %v234, %v234
    %v363 = vmul.f32 %v235, %v235
    %v364 = vmul.f32 %v236, %v236
    %v365 = vmul.f32 %v237, %v237
    %v366 = vmul.f32 %v238, %v238
    %v367 = vmul.f32 %v239, %v239
    %v368 = vmul.f32 %v240, %v240
    %v369 = vmul.f32 %v241, %v241
    %v370 = vmul.f32 %v242, %v242
    %v371 = vmul.f32 %v243, %v243
    %v372 = vmul.f32 %v244, %v244
    %v373 = vmul.f32 %v245, %v245
    %v374 = vmul.f32 %v246, %v246
    %v375 = vmul.f32 %v247, %v247
    %v376 = vmul.f32 %v248, %v248
    %v377 = vmul.f32 %v249, %v249
    %v378 = vmul.f32 %v250, %v250
    %v379 = vmul.f32 %v251, %v251
    %v380 = vmul.f32 %v252, %v252
    %v381 = vmul.f32 %v253, %v253
    %v382 = vmul.f32 %v254, %v254
    %v383 = vmul.f32 %v255, %v255
    %v384 = vmul.f32 %v256, %v256
    %v385 = vmul.f32 %v257, %v257
    %v386 = vmul.f32 %v258, %v258
    %v387 = vmul.f32 %v259, %v259
    %v388 = vmul.f32 %v260, %v260
    %v389 = vmul.f32 %v261, %v261
    %v390 = vmul.f32 %v262, %v262
    %v391 = vmul.f32 %v263, %v263
    %v392 = vmul.f32 %v264, %v264
    %v393 = vmul.f32 %v265, %v265
    %v394 = vmul.f32 %v266, %v266
    %v395 = vmul.f32 %v267, %v267
    %v396 = vmul.f32 %v268, %v268
    %v397 = vmul.f32 %v269, %v269
    %v398 = vmul.f32 %v270, %v270
    %v399 = vmul.f32 %v271, %v271
    %v400 = vmul.f32 %v272, %v272
    %vm401 = vcmask 31744
    %v402 = vsel %vm401, %v273, 0.0
    %403 = vadd.xlane.f32.xlu0 %v402
    %v404 = vpop.xlane.xlu0 %403
    %v405 = vsel %vm401, %v274, 0.0
    %406 = vadd.xlane.f32.xlu0 %v405
    %v407 = vpop.xlane.xlu0 %406
    %v408 = vsel %vm401, %v275, 0.0
    %409 = vadd.xlane.f32.xlu0 %v408
    %v410 = vpop.xlane.xlu0 %409
    %v411 = vsel %vm401, %v276, 0.0
    %412 = vadd.xlane.f32.xlu0 %v411
    %v413 = vpop.xlane.xlu0 %412
    %v414 = vsel %vm401, %v277, 0.0
    %415 = vadd.xlane.f32.xlu0 %v414
    %v416 = vpop.xlane.xlu0 %415
    %v417 = vsel %vm401, %v278, 0.0
    %418 = vadd.xlane.f32.xlu0 %v417
    %v419 = vpop.xlane.xlu0 %418
    %v420 = vsel %vm401, %v279, 0.0
    %421 = vadd.xlane.f32.xlu0 %v420
    %v422 = vpop.xlane.xlu0 %421
    %v423 = vsel %vm401, %v280, 0.0
    %424 = vadd.xlane.f32.xlu0 %v423
    %v425 = vpop.xlane.xlu0 %424
    %v426 = vsel %vm401, %v281, 0.0
    %427 = vadd.xlane.f32.xlu0 %v426
    %v428 = vpop.xlane.xlu0 %427
    %v429 = vsel %vm401, %v282, 0.0
    %430 = vadd.xlane.f32.xlu0 %v429
    %v431 = vpop.xlane.xlu0 %430
    %v432 = vsel %vm401, %v283, 0.0
    %433 = vadd.xlane.f32.xlu0 %v432
    %v434 = vpop.xlane.xlu0 %433
    %v435 = vsel %vm401, %v284, 0.0
    %436 = vadd.xlane.f32.xlu0 %v435
    %v437 = vpop.xlane.xlu0 %436
    %v438 = vsel %vm401, %v285, 0.0
    %439 = vadd.xlane.f32.xlu0 %v438
    %v440 = vpop.xlane.xlu0 %439
    %v441 = vsel %vm401, %v286, 0.0
    %442 = vadd.xlane.f32.xlu0 %v441
    %v443 = vpop.xlane.xlu0 %442
    %v444 = vsel %vm401, %v287, 0.0
    %445 = vadd.xlane.f32.xlu0 %v444
    %v446 = vpop.xlane.xlu0 %445
    %v447 = vsel %vm401, %v288, 0.0
    %448 = vadd.xlane.f32.xlu0 %v447
    %v449 = vpop.xlane.xlu0 %448
    %v450 = vsel %vm401, %v289, 0.0
    %451 = vadd.xlane.f32.xlu0 %v450
    %v452 = vpop.xlane.xlu0 %451
    %v453 = vsel %vm401, %v290, 0.0
    %454 = vadd.xlane.f32.xlu0 %v453
    %v455 = vpop.xlane.xlu0 %454
    %v456 = vsel %vm401, %v291, 0.0
    %457 = vadd.xlane.f32.xlu0 %v456
    %v458 = vpop.xlane.xlu0 %457
    %v459 = vsel %vm401, %v292, 0.0
    %460 = vadd.xlane.f32.xlu0 %v459
    %v461 = vpop.xlane.xlu0 %460
    %v462 = vsel %vm401, %v293, 0.0
    %463 = vadd.xlane.f32.xlu0 %v462
    %v464 = vpop.xlane.xlu0 %463
    %v465 = vsel %vm401, %v294, 0.0
    %466 = vadd.xlane.f32.xlu0 %v465
    %v467 = vpop.xlane.xlu0 %466
    %v468 = vsel %vm401, %v295, 0.0
    %469 = vadd.xlane.f32.xlu0 %v468
    %v470 = vpop.xlane.xlu0 %469
    %v471 = vsel %vm401, %v296, 0.0
    %472 = vadd.xlane.f32.xlu0 %v471
    %v473 = vpop.xlane.xlu0 %472
    %v474 = vsel %vm401, %v297, 0.0
    %475 = vadd.xlane.f32.xlu0 %v474
    %v476 = vpop.xlane.xlu0 %475
    %v477 = vsel %vm401, %v298, 0.0
    %478 = vadd.xlane.f32.xlu0 %v477
    %v479 = vpop.xlane.xlu0 %478
    %v480 = vsel %vm401, %v299, 0.0
    %481 = vadd.xlane.f32.xlu0 %v480
    %v482 = vpop.xlane.xlu0 %481
    %v483 = vsel %vm401, %v300, 0.0
    %484 = vadd.xlane.f32.xlu0 %v483
    %v485 = vpop.xlane.xlu0 %484
    %v486 = vsel %vm401, %v301, 0.0
    %487 = vadd.xlane.f32.xlu0 %v486
    %v488 = vpop.xlane.xlu0 %487
    %v489 = vsel %vm401, %v302, 0.0
    %490 = vadd.xlane.f32.xlu0 %v489
    %v491 = vpop.xlane.xlu0 %490
    %v492 = vsel %vm401, %v303, 0.0
    %493 = vadd.xlane.f32.xlu0 %v492
    %v494 = vpop.xlane.xlu0 %493
    %v495 = vsel %vm401, %v304, 0.0
    %496 = vadd.xlane.f32.xlu0 %v495
    %v497 = vpop.xlane.xlu0 %496
    %v498 = vsel %vm401, %v305, 0.0
    %499 = vadd.xlane.f32.xlu0 %v498
    %v500 = vpop.xlane.xlu0 %499
    %v501 = vsel %vm401, %v306, 0.0
    %502 = vadd.xlane.f32.xlu0 %v501
    %v503 = vpop.xlane.xlu0 %502
    %v504 = vsel %vm401, %v307, 0.0
    %505 = vadd.xlane.f32.xlu0 %v504
    %v506 = vpop.xlane.xlu0 %505
    %v507 = vsel %vm401, %v308, 0.0
    %508 = vadd.xlane.f32.xlu0 %v507
    %v509 = vpop.xlane.xlu0 %508
    %v510 = vsel %vm401, %v309, 0.0
    %511 = vadd.xlane.f32.xlu0 %v510
    %v512 = vpop.xlane.xlu0 %511
    %v513 = vsel %vm401, %v310, 0.0
    %514 = vadd.xlane.f32.xlu0 %v513
    %v515 = vpop.xlane.xlu0 %514
    %v516 = vsel %vm401, %v311, 0.0
    %517 = vadd.xlane.f32.xlu0 %v516
    %v518 = vpop.xlane.xlu0 %517
    %v519 = vsel %vm401, %v312, 0.0
    %520 = vadd.xlane.f32.xlu0 %v519
    %v521 = vpop.xlane.xlu0 %520
    %v522 = vsel %vm401, %v313, 0.0
    %523 = vadd.xlane.f32.xlu0 %v522
    %v524 = vpop.xlane.xlu0 %523
    %v525 = vsel %vm401, %v314, 0.0
    %526 = vadd.xlane.f32.xlu0 %v525
    %v527 = vpop.xlane.xlu0 %526
    %v528 = vsel %vm401, %v315, 0.0
    %529 = vadd.xlane.f32.xlu0 %v528
    %v530 = vpop.xlane.xlu0 %529
    %v531 = vsel %vm401, %v316, 0.0
    %532 = vadd.xlane.f32.xlu0 %v531
    %v533 = vpop.xlane.xlu0 %532
    %v534 = vsel %vm401, %v317, 0.0
    %535 = vadd.xlane.f32.xlu0 %v534
    %v536 = vpop.xlane.xlu0 %535
    %v537 = vsel %vm401, %v318, 0.0
    %538 = vadd.xlane.f32.xlu0 %v537
    %v539 = vpop.xlane.xlu0 %538
    %v540 = vsel %vm401, %v319, 0.0
    %541 = vadd.xlane.f32.xlu0 %v540
    %v542 = vpop.xlane.xlu0 %541
    %v543 = vsel %vm401, %v320, 0.0
    %544 = vadd.xlane.f32.xlu0 %v543
    %v545 = vpop.xlane.xlu0 %544
    %v546 = vsel %vm401, %v321, 0.0
    %547 = vadd.xlane.f32.xlu0 %v546
    %v548 = vpop.xlane.xlu0 %547
    %v549 = vsel %vm401, %v322, 0.0
    %550 = vadd.xlane.f32.xlu0 %v549
    %v551 = vpop.xlane.xlu0 %550
    %v552 = vsel %vm401, %v323, 0.0
    %553 = vadd.xlane.f32.xlu0 %v552
    %v554 = vpop.xlane.xlu0 %553
    %v555 = vsel %vm401, %v324, 0.0
    %556 = vadd.xlane.f32.xlu0 %v555
    %v557 = vpop.xlane.xlu0 %556
    %v558 = vsel %vm401, %v325, 0.0
    %559 = vadd.xlane.f32.xlu0 %v558
    %v560 = vpop.xlane.xlu0 %559
    %v561 = vsel %vm401, %v326, 0.0
    %562 = vadd.xlane.f32.xlu0 %v561
    %v563 = vpop.xlane.xlu0 %562
    %v564 = vsel %vm401, %v327, 0.0
    %565 = vadd.xlane.f32.xlu0 %v564
    %v566 = vpop.xlane.xlu0 %565
    %v567 = vsel %vm401, %v328, 0.0
    %568 = vadd.xlane.f32.xlu0 %v567
    %v569 = vpop.xlane.xlu0 %568
    %v570 = vsel %vm401, %v329, 0.0
    %571 = vadd.xlane.f32.xlu0 %v570
    %v572 = vpop.xlane.xlu0 %571
    %v573 = vsel %vm401, %v330, 0.0
    %574 = vadd.xlane.f32.xlu0 %v573
    %v575 = vpop.xlane.xlu0 %574
    %v576 = vsel %vm401, %v331, 0.0
    %577 = vadd.xlane.f32.xlu0 %v576
    %v578 = vpop.xlane.xlu0 %577
    %v579 = vsel %vm401, %v332, 0.0
    %580 = vadd.xlane.f32.xlu0 %v579
    %v581 = vpop.xlane.xlu0 %580
    %v582 = vsel %vm401, %v333, 0.0
    %583 = vadd.xlane.f32.xlu0 %v582
    %v584 = vpop.xlane.xlu0 %583
    %v585 = vsel %vm401, %v334, 0.0
    %586 = vadd.xlane.f32.xlu0 %v585
    %v587 = vpop.xlane.xlu0 %586
    %v588 = vsel %vm401, %v335, 0.0
    %589 = vadd.xlane.f32.xlu0 %v588
    %v590 = vpop.xlane.xlu0 %589
    %v591 = vsel %vm401, %v336, 0.0
    %592 = vadd.xlane.f32.xlu0 %v591
    %v593 = vpop.xlane.xlu0 %592
    %v594 = vsel %vm401, %v337, 0.0
    %595 = vadd.xlane.f32.xlu0 %v594
    %v596 = vpop.xlane.xlu0 %595
    %v597 = vsel %vm401, %v338, 0.0
    %598 = vadd.xlane.f32.xlu0 %v597
    %v599 = vpop.xlane.xlu0 %598
    %v600 = vsel %vm401, %v339, 0.0
    %601 = vadd.xlane.f32.xlu0 %v600
    %v602 = vpop.xlane.xlu0 %601
    %v603 = vsel %vm401, %v340, 0.0
    %604 = vadd.xlane.f32.xlu0 %v603
    %v605 = vpop.xlane.xlu0 %604
    %v606 = vsel %vm401, %v341, 0.0
    %607 = vadd.xlane.f32.xlu0 %v606
    %v608 = vpop.xlane.xlu0 %607
    %v609 = vsel %vm401, %v342, 0.0
    %610 = vadd.xlane.f32.xlu0 %v609
    %v611 = vpop.xlane.xlu0 %610
    %v612 = vsel %vm401, %v343, 0.0
    %613 = vadd.xlane.f32.xlu0 %v612
    %v614 = vpop.xlane.xlu0 %613
    %v615 = vsel %vm401, %v344, 0.0
    %616 = vadd.xlane.f32.xlu0 %v615
    %v617 = vpop.xlane.xlu0 %616
    %v618 = vsel %vm401, %v345, 0.0
    %619 = vadd.xlane.f32.xlu0 %v618
    %v620 = vpop.xlane.xlu0 %619
    %v621 = vsel %vm401, %v346, 0.0
    %622 = vadd.xlane.f32.xlu0 %v621
    %v623 = vpop.xlane.xlu0 %622
    %v624 = vsel %vm401, %v347, 0.0
    %625 = vadd.xlane.f32.xlu0 %v624
    %v626 = vpop.xlane.xlu0 %625
    %v627 = vsel %vm401, %v348, 0.0
    %628 = vadd.xlane.f32.xlu0 %v627
    %v629 = vpop.xlane.xlu0 %628
    %v630 = vsel %vm401, %v349, 0.0
    %631 = vadd.xlane.f32.xlu0 %v630
    %v632 = vpop.xlane.xlu0 %631
    %v633 = vsel %vm401, %v350, 0.0
    %634 = vadd.xlane.f32.xlu0 %v633
    %v635 = vpop.xlane.xlu0 %634
    %v636 = vsel %vm401, %v351, 0.0
    %637 = vadd.xlane.f32.xlu0 %v636
    %v638 = vpop.xlane.xlu0 %637
    %v639 = vsel %vm401, %v352, 0.0
    %640 = vadd.xlane.f32.xlu0 %v639
    %v641 = vpop.xlane.xlu0 %640
    %v642 = vsel %vm401, %v353, 0.0
    %643 = vadd.xlane.f32.xlu0 %v642
    %v644 = vpop.xlane.xlu0 %643
    %v645 = vsel %vm401, %v354, 0.0
    %646 = vadd.xlane.f32.xlu0 %v645
    %v647 = vpop.xlane.xlu0 %646
    %v648 = vsel %vm401, %v355, 0.0
    %649 = vadd.xlane.f32.xlu0 %v648
    %v650 = vpop.xlane.xlu0 %649
    %v651 = vsel %vm401, %v356, 0.0
    %652 = vadd.xlane.f32.xlu0 %v651
    %v653 = vpop.xlane.xlu0 %652
    %v654 = vsel %vm401, %v357, 0.0
    %655 = vadd.xlane.f32.xlu0 %v654
    %v656 = vpop.xlane.xlu0 %655
    %v657 = vsel %vm401, %v358, 0.0
    %658 = vadd.xlane.f32.xlu0 %v657
    %v659 = vpop.xlane.xlu0 %658
    %v660 = vsel %vm401, %v359, 0.0
    %661 = vadd.xlane.f32.xlu0 %v660
    %v662 = vpop.xlane.xlu0 %661
    %v663 = vsel %vm401, %v360, 0.0
    %664 = vadd.xlane.f32.xlu0 %v663
    %v665 = vpop.xlane.xlu0 %664
    %v666 = vsel %vm401, %v361, 0.0
    %667 = vadd.xlane.f32.xlu0 %v666
    %v668 = vpop.xlane.xlu0 %667
    %v669 = vsel %vm401, %v362, 0.0
    %670 = vadd.xlane.f32.xlu0 %v669
    %v671 = vpop.xlane.xlu0 %670
    %v672 = vsel %vm401, %v363, 0.0
    %673 = vadd.xlane.f32.xlu0 %v672
    %v674 = vpop.xlane.xlu0 %673
    %v675 = vsel %vm401, %v364, 0.0
    %676 = vadd.xlane.f32.xlu0 %v675
    %v677 = vpop.xlane.xlu0 %676
    %v678 = vsel %vm401, %v365, 0.0
    %679 = vadd.xlane.f32.xlu0 %v678
    %v680 = vpop.xlane.xlu0 %679
    %v681 = vsel %vm401, %v366, 0.0
    %682 = vadd.xlane.f32.xlu0 %v681
    %v683 = vpop.xlane.xlu0 %682
    %v684 = vsel %vm401, %v367, 0.0
    %685 = vadd.xlane.f32.xlu0 %v684
    %v686 = vpop.xlane.xlu0 %685
    %v687 = vsel %vm401, %v368, 0.0
    %688 = vadd.xlane.f32.xlu0 %v687
    %v689 = vpop.xlane.xlu0 %688
    %v690 = vsel %vm401, %v369, 0.0
    %691 = vadd.xlane.f32.xlu0 %v690
    %v692 = vpop.xlane.xlu0 %691
    %v693 = vsel %vm401, %v370, 0.0
    %694 = vadd.xlane.f32.xlu0 %v693
    %v695 = vpop.xlane.xlu0 %694
    %v696 = vsel %vm401, %v371, 0.0
    %697 = vadd.xlane.f32.xlu0 %v696
    %v698 = vpop.xlane.xlu0 %697
    %v699 = vsel %vm401, %v372, 0.0
    %700 = vadd.xlane.f32.xlu0 %v699
    %v701 = vpop.xlane.xlu0 %700
    %v702 = vsel %vm401, %v373, 0.0
    %703 = vadd.xlane.f32.xlu0 %v702
    %v704 = vpop.xlane.xlu0 %703
    %v705 = vsel %vm401, %v374, 0.0
    %706 = vadd.xlane.f32.xlu0 %v705
    %v707 = vpop.xlane.xlu0 %706
    %v708 = vsel %vm401, %v375, 0.0
    %709 = vadd.xlane.f32.xlu0 %v708
    %v710 = vpop.xlane.xlu0 %709
    %v711 = vsel %vm401, %v376, 0.0
    %712 = vadd.xlane.f32.xlu0 %v711
    %v713 = vpop.xlane.xlu0 %712
    %v714 = vsel %vm401, %v377, 0.0
    %715 = vadd.xlane.f32.xlu0 %v714
    %v716 = vpop.xlane.xlu0 %715
    %v717 = vsel %vm401, %v378, 0.0
    %718 = vadd.xlane.f32.xlu0 %v717
    %v719 = vpop.xlane.xlu0 %718
    %v720 = vsel %vm401, %v379, 0.0
    %721 = vadd.xlane.f32.xlu0 %v720
    %v722 = vpop.xlane.xlu0 %721
    %v723 = vsel %vm401, %v380, 0.0
    %724 = vadd.xlane.f32.xlu0 %v723
    %v725 = vpop.xlane.xlu0 %724
    %v726 = vsel %vm401, %v381, 0.0
    %727 = vadd.xlane.f32.xlu0 %v726
    %v728 = vpop.xlane.xlu0 %727
    %v729 = vsel %vm401, %v382, 0.0
    %730 = vadd.xlane.f32.xlu0 %v729
    %v731 = vpop.xlane.xlu0 %730
    %v732 = vsel %vm401, %v383, 0.0
    %733 = vadd.xlane.f32.xlu0 %v732
    %v734 = vpop.xlane.xlu0 %733
    %v735 = vsel %vm401, %v384, 0.0
    %736 = vadd.xlane.f32.xlu0 %v735
    %v737 = vpop.xlane.xlu0 %736
    %v738 = vsel %vm401, %v385, 0.0
    %739 = vadd.xlane.f32.xlu0 %v738
    %v740 = vpop.xlane.xlu0 %739
    %v741 = vsel %vm401, %v386, 0.0
    %742 = vadd.xlane.f32.xlu0 %v741
    %v743 = vpop.xlane.xlu0 %742
    %v744 = vsel %vm401, %v387, 0.0
    %745 = vadd.xlane.f32.xlu0 %v744
    %v746 = vpop.xlane.xlu0 %745
    %v747 = vsel %vm401, %v388, 0.0
    %748 = vadd.xlane.f32.xlu0 %v747
    %v749 = vpop.xlane.xlu0 %748
    %v750 = vsel %vm401, %v389, 0.0
    %751 = vadd.xlane.f32.xlu0 %v750
    %v752 = vpop.xlane.xlu0 %751
    %v753 = vsel %vm401, %v390, 0.0
    %754 = vadd.xlane.f32.xlu0 %v753
    %v755 = vpop.xlane.xlu0 %754
    %v756 = vsel %vm401, %v391, 0.0
    %757 = vadd.xlane.f32.xlu0 %v756
    %v758 = vpop.xlane.xlu0 %757
    %v759 = vsel %vm401, %v392, 0.0
    %760 = vadd.xlane.f32.xlu0 %v759
    %v761 = vpop.xlane.xlu0 %760
    %v762 = vsel %vm401, %v393, 0.0
    %763 = vadd.xlane.f32.xlu0 %v762
    %v764 = vpop.xlane.xlu0 %763
    %v765 = vsel %vm401, %v394, 0.0
    %766 = vadd.xlane.f32.xlu0 %v765
    %v767 = vpop.xlane.xlu0 %766
    %v768 = vsel %vm401, %v395, 0.0
    %769 = vadd.xlane.f32.xlu0 %v768
    %v770 = vpop.xlane.xlu0 %769
    %v771 = vsel %vm401, %v396, 0.0
    %772 = vadd.xlane.f32.xlu0 %v771
    %v773 = vpop.xlane.xlu0 %772
    %v774 = vsel %vm401, %v397, 0.0
    %775 = vadd.xlane.f32.xlu0 %v774
    %v776 = vpop.xlane.xlu0 %775
    %v777 = vsel %vm401, %v398, 0.0
    %778 = vadd.xlane.f32.xlu0 %v777
    %v779 = vpop.xlane.xlu0 %778
    %v780 = vsel %vm401, %v399, 0.0
    %781 = vadd.xlane.f32.xlu0 %v780
    %v782 = vpop.xlane.xlu0 %781
    %v783 = vsel %vm401, %v400, 0.0
    %784 = vadd.xlane.f32.xlu0 %v783
    %v785 = vpop.xlane.xlu0 %784
    %vm786 = vcmp.lt.f32.partialorder %v404, 3.4028235e+38
    %vm787 = vcmp.lt.f32.partialorder %v407, 3.4028235e+38
    %vm788 = vcmp.lt.f32.partialorder %v410, 3.4028235e+38
    %vm789 = vcmp.lt.f32.partialorder %v413, 3.4028235e+38
    %vm790 = vcmp.lt.f32.partialorder %v416, 3.4028235e+38
    %vm791 = vcmp.lt.f32.partialorder %v419, 3.4028235e+38
    %vm792 = vcmp.lt.f32.partialorder %v422, 3.4028235e+38
    %vm793 = vcmp.lt.f32.partialorder %v425, 3.4028235e+38
    %vm794 = vcmp.lt.f32.partialorder %v428, 3.4028235e+38
    %vm795 = vcmp.lt.f32.partialorder %v431, 3.4028235e+38
    %vm796 = vcmp.lt.f32.partialorder %v434, 3.4028235e+38
    %vm797 = vcmp.lt.f32.partialorder %v437, 3.4028235e+38
    %vm798 = vcmp.lt.f32.partialorder %v440, 3.4028235e+38
    %vm799 = vcmp.lt.f32.partialorder %v443, 3.4028235e+38
    %vm800 = vcmp.lt.f32.partialorder %v446, 3.4028235e+38
    %vm801 = vcmp.lt.f32.partialorder %v449, 3.4028235e+38
    %vm802 = vcmp.lt.f32.partialorder %v452, 3.4028235e+38
    %vm803 = vcmp.lt.f32.partialorder %v455, 3.4028235e+38
    %vm804 = vcmp.lt.f32.partialorder %v458, 3.4028235e+38
    %vm805 = vcmp.lt.f32.partialorder %v461, 3.4028235e+38
    %vm806 = vcmp.lt.f32.partialorder %v464, 3.4028235e+38
    %vm807 = vcmp.lt.f32.partialorder %v467, 3.4028235e+38
    %vm808 = vcmp.lt.f32.partialorder %v470, 3.4028235e+38
    %vm809 = vcmp.lt.f32.partialorder %v473, 3.4028235e+38
    %vm810 = vcmp.lt.f32.partialorder %v476, 3.4028235e+38
    %vm811 = vcmp.lt.f32.partialorder %v479, 3.4028235e+38
    %vm812 = vcmp.lt.f32.partialorder %v482, 3.4028235e+38
    %vm813 = vcmp.lt.f32.partialorder %v485, 3.4028235e+38
    %vm814 = vcmp.lt.f32.partialorder %v488, 3.4028235e+38
    %vm815 = vcmp.lt.f32.partialorder %v491, 3.4028235e+38
    %vm816 = vcmp.lt.f32.partialorder %v494, 3.4028235e+38
    %vm817 = vcmp.lt.f32.partialorder %v497, 3.4028235e+38
    %vm818 = vcmp.lt.f32.partialorder %v500, 3.4028235e+38
    %vm819 = vcmp.lt.f32.partialorder %v503, 3.4028235e+38
    %vm820 = vcmp.lt.f32.partialorder %v506, 3.4028235e+38
    %vm821 = vcmp.lt.f32.partialorder %v509, 3.4028235e+38
    %vm822 = vcmp.lt.f32.partialorder %v512, 3.4028235e+38
    %vm823 = vcmp.lt.f32.partialorder %v515, 3.4028235e+38
    %vm824 = vcmp.lt.f32.partialorder %v518, 3.4028235e+38
    %vm825 = vcmp.lt.f32.partialorder %v521, 3.4028235e+38
    %vm826 = vcmp.lt.f32.partialorder %v524, 3.4028235e+38
    %vm827 = vcmp.lt.f32.partialorder %v527, 3.4028235e+38
    %vm828 = vcmp.lt.f32.partialorder %v530, 3.4028235e+38
    %vm829 = vcmp.lt.f32.partialorder %v533, 3.4028235e+38
    %vm830 = vcmp.lt.f32.partialorder %v536, 3.4028235e+38
    %vm831 = vcmp.lt.f32.partialorder %v539, 3.4028235e+38
    %vm832 = vcmp.lt.f32.partialorder %v542, 3.4028235e+38
    %vm833 = vcmp.lt.f32.partialorder %v545, 3.4028235e+38
    %vm834 = vcmp.lt.f32.partialorder %v548, 3.4028235e+38
    %vm835 = vcmp.lt.f32.partialorder %v551, 3.4028235e+38
    %vm836 = vcmp.lt.f32.partialorder %v554, 3.4028235e+38
    %vm837 = vcmp.lt.f32.partialorder %v557, 3.4028235e+38
    %vm838 = vcmp.lt.f32.partialorder %v560, 3.4028235e+38
    %vm839 = vcmp.lt.f32.partialorder %v563, 3.4028235e+38
    %vm840 = vcmp.lt.f32.partialorder %v566, 3.4028235e+38
    %vm841 = vcmp.lt.f32.partialorder %v569, 3.4028235e+38
    %vm842 = vcmp.lt.f32.partialorder %v572, 3.4028235e+38
    %vm843 = vcmp.lt.f32.partialorder %v575, 3.4028235e+38
    %vm844 = vcmp.lt.f32.partialorder %v578, 3.4028235e+38
    %vm845 = vcmp.lt.f32.partialorder %v581, 3.4028235e+38
    %vm846 = vcmp.lt.f32.partialorder %v584, 3.4028235e+38
    %vm847 = vcmp.lt.f32.partialorder %v587, 3.4028235e+38
    %vm848 = vcmp.lt.f32.partialorder %v590, 3.4028235e+38
    %vm849 = vcmp.lt.f32.partialorder %v593, 3.4028235e+38
    %vm850 = vcmp.lt.f32.partialorder %v596, 3.4028235e+38
    %vm851 = vcmp.lt.f32.partialorder %v599, 3.4028235e+38
    %vm852 = vcmp.lt.f32.partialorder %v602, 3.4028235e+38
    %vm853 = vcmp.lt.f32.partialorder %v605, 3.4028235e+38
    %vm854 = vcmp.lt.f32.partialorder %v608, 3.4028235e+38
    %vm855 = vcmp.lt.f32.partialorder %v611, 3.4028235e+38
    %vm856 = vcmp.lt.f32.partialorder %v614, 3.4028235e+38
    %vm857 = vcmp.lt.f32.partialorder %v617, 3.4028235e+38
    %vm858 = vcmp.lt.f32.partialorder %v620, 3.4028235e+38
    %vm859 = vcmp.lt.f32.partialorder %v623, 3.4028235e+38
    %vm860 = vcmp.lt.f32.partialorder %v626, 3.4028235e+38
    %vm861 = vcmp.lt.f32.partialorder %v629, 3.4028235e+38
    %vm862 = vcmp.lt.f32.partialorder %v632, 3.4028235e+38
    %vm863 = vcmp.lt.f32.partialorder %v635, 3.4028235e+38
    %vm864 = vcmp.lt.f32.partialorder %v638, 3.4028235e+38
    %vm865 = vcmp.lt.f32.partialorder %v641, 3.4028235e+38
    %vm866 = vcmp.lt.f32.partialorder %v644, 3.4028235e+38
    %vm867 = vcmp.lt.f32.partialorder %v647, 3.4028235e+38
    %vm868 = vcmp.lt.f32.partialorder %v650, 3.4028235e+38
    %vm869 = vcmp.lt.f32.partialorder %v653, 3.4028235e+38
    %vm870 = vcmp.lt.f32.partialorder %v656, 3.4028235e+38
    %vm871 = vcmp.lt.f32.partialorder %v659, 3.4028235e+38
    %vm872 = vcmp.lt.f32.partialorder %v662, 3.4028235e+38
    %vm873 = vcmp.lt.f32.partialorder %v665, 3.4028235e+38
    %vm874 = vcmp.lt.f32.partialorder %v668, 3.4028235e+38
    %vm875 = vcmp.lt.f32.partialorder %v671, 3.4028235e+38
    %vm876 = vcmp.lt.f32.partialorder %v674, 3.4028235e+38
    %vm877 = vcmp.lt.f32.partialorder %v677, 3.4028235e+38
    %vm878 = vcmp.lt.f32.partialorder %v680, 3.4028235e+38
    %vm879 = vcmp.lt.f32.partialorder %v683, 3.4028235e+38
    %vm880 = vcmp.lt.f32.partialorder %v686, 3.4028235e+38
    %vm881 = vcmp.lt.f32.partialorder %v689, 3.4028235e+38
    %vm882 = vcmp.lt.f32.partialorder %v692, 3.4028235e+38
    %vm883 = vcmp.lt.f32.partialorder %v695, 3.4028235e+38
    %vm884 = vcmp.lt.f32.partialorder %v698, 3.4028235e+38
    %vm885 = vcmp.lt.f32.partialorder %v701, 3.4028235e+38
    %vm886 = vcmp.lt.f32.partialorder %v704, 3.4028235e+38
    %vm887 = vcmp.lt.f32.partialorder %v707, 3.4028235e+38
    %vm888 = vcmp.lt.f32.partialorder %v710, 3.4028235e+38
    %vm889 = vcmp.lt.f32.partialorder %v713, 3.4028235e+38
    %vm890 = vcmp.lt.f32.partialorder %v716, 3.4028235e+38
    %vm891 = vcmp.lt.f32.partialorder %v719, 3.4028235e+38
    %vm892 = vcmp.lt.f32.partialorder %v722, 3.4028235e+38
    %vm893 = vcmp.lt.f32.partialorder %v725, 3.4028235e+38
    %vm894 = vcmp.lt.f32.partialorder %v728, 3.4028235e+38
    %vm895 = vcmp.lt.f32.partialorder %v731, 3.4028235e+38
    %vm896 = vcmp.lt.f32.partialorder %v734, 3.4028235e+38
    %vm897 = vcmp.lt.f32.partialorder %v737, 3.4028235e+38
    %vm898 = vcmp.lt.f32.partialorder %v740, 3.4028235e+38
    %vm899 = vcmp.lt.f32.partialorder %v743, 3.4028235e+38
    %vm900 = vcmp.lt.f32.partialorder %v746, 3.4028235e+38
    %vm901 = vcmp.lt.f32.partialorder %v749, 3.4028235e+38
    %vm902 = vcmp.lt.f32.partialorder %v752, 3.4028235e+38
    %vm903 = vcmp.lt.f32.partialorder %v755, 3.4028235e+38
    %vm904 = vcmp.lt.f32.partialorder %v758, 3.4028235e+38
    %vm905 = vcmp.lt.f32.partialorder %v761, 3.4028235e+38
    %vm906 = vcmp.lt.f32.partialorder %v764, 3.4028235e+38
    %vm907 = vcmp.lt.f32.partialorder %v767, 3.4028235e+38
    %vm908 = vcmp.lt.f32.partialorder %v770, 3.4028235e+38
    %vm909 = vcmp.lt.f32.partialorder %v773, 3.4028235e+38
    %vm910 = vcmp.lt.f32.partialorder %v776, 3.4028235e+38
    %vm911 = vcmp.lt.f32.partialorder %v779, 3.4028235e+38
    %vm912 = vcmp.lt.f32.partialorder %v782, 3.4028235e+38
    %vm913 = vcmp.lt.f32.partialorder %v785, 3.4028235e+38
    %v914 = vsel %vm786, %v404, 3.4028235e+38
    %v915 = vsel %vm787, %v407, 3.4028235e+38
    %v916 = vsel %vm788, %v410, 3.4028235e+38
    %v917 = vsel %vm789, %v413, 3.4028235e+38
    %v918 = vsel %vm790, %v416, 3.4028235e+38
    %v919 = vsel %vm791, %v419, 3.4028235e+38
    %v920 = vsel %vm792, %v422, 3.4028235e+38
    %v921 = vsel %vm793, %v425, 3.4028235e+38
    %v922 = vsel %vm794, %v428, 3.4028235e+38
    %v923 = vsel %vm795, %v431, 3.4028235e+38
    %v924 = vsel %vm796, %v434, 3.4028235e+38
    %v925 = vsel %vm797, %v437, 3.4028235e+38
    %v926 = vsel %vm798, %v440, 3.4028235e+38
    %v927 = vsel %vm799, %v443, 3.4028235e+38
    %v928 = vsel %vm800, %v446, 3.4028235e+38
    %v929 = vsel %vm801, %v449, 3.4028235e+38
    %v930 = vsel %vm802, %v452, 3.4028235e+38
    %v931 = vsel %vm803, %v455, 3.4028235e+38
    %v932 = vsel %vm804, %v458, 3.4028235e+38
    %v933 = vsel %vm805, %v461, 3.4028235e+38
    %v934 = vsel %vm806, %v464, 3.4028235e+38
    %v935 = vsel %vm807, %v467, 3.4028235e+38
    %v936 = vsel %vm808, %v470, 3.4028235e+38
    %v937 = vsel %vm809, %v473, 3.4028235e+38
    %v938 = vsel %vm810, %v476, 3.4028235e+38
    %v939 = vsel %vm811, %v479, 3.4028235e+38
    %v940 = vsel %vm812, %v482, 3.4028235e+38
    %v941 = vsel %vm813, %v485, 3.4028235e+38
    %v942 = vsel %vm814, %v488, 3.4028235e+38
    %v943 = vsel %vm815, %v491, 3.4028235e+38
    %v944 = vsel %vm816, %v494, 3.4028235e+38
    %v945 = vsel %vm817, %v497, 3.4028235e+38
    %v946 = vsel %vm818, %v500, 3.4028235e+38
    %v947 = vsel %vm819, %v503, 3.4028235e+38
    %v948 = vsel %vm820, %v506, 3.4028235e+38
    %v949 = vsel %vm821, %v509, 3.4028235e+38
    %v950 = vsel %vm822, %v512, 3.4028235e+38
    %v951 = vsel %vm823, %v515, 3.4028235e+38
    %v952 = vsel %vm824, %v518, 3.4028235e+38
    %v953 = vsel %vm825, %v521, 3.4028235e+38
    %v954 = vsel %vm826, %v524, 3.4028235e+38
    %v955 = vsel %vm827, %v527, 3.4028235e+38
    %v956 = vsel %vm828, %v530, 3.4028235e+38
    %v957 = vsel %vm829, %v533, 3.4028235e+38
    %v958 = vsel %vm830, %v536, 3.4028235e+38
    %v959 = vsel %vm831, %v539, 3.4028235e+38
    %v960 = vsel %vm832, %v542, 3.4028235e+38
    %v961 = vsel %vm833, %v545, 3.4028235e+38
    %v962 = vsel %vm834, %v548, 3.4028235e+38
    %v963 = vsel %vm835, %v551, 3.4028235e+38
    %v964 = vsel %vm836, %v554, 3.4028235e+38
    %v965 = vsel %vm837, %v557, 3.4028235e+38
    %v966 = vsel %vm838, %v560, 3.4028235e+38
    %v967 = vsel %vm839, %v563, 3.4028235e+38
    %v968 = vsel %vm840, %v566, 3.4028235e+38
    %v969 = vsel %vm841, %v569, 3.4028235e+38
    %v970 = vsel %vm842, %v572, 3.4028235e+38
    %v971 = vsel %vm843, %v575, 3.4028235e+38
    %v972 = vsel %vm844, %v578, 3.4028235e+38
    %v973 = vsel %vm845, %v581, 3.4028235e+38
    %v974 = vsel %vm846, %v584, 3.4028235e+38
    %v975 = vsel %vm847, %v587, 3.4028235e+38
    %v976 = vsel %vm848, %v590, 3.4028235e+38
    %v977 = vsel %vm849, %v593, 3.4028235e+38
    %v978 = vsel %vm850, %v596, 3.4028235e+38
    %v979 = vsel %vm851, %v599, 3.4028235e+38
    %v980 = vsel %vm852, %v602, 3.4028235e+38
    %v981 = vsel %vm853, %v605, 3.4028235e+38
    %v982 = vsel %vm854, %v608, 3.4028235e+38
    %v983 = vsel %vm855, %v611, 3.4028235e+38
    %v984 = vsel %vm856, %v614, 3.4028235e+38
    %v985 = vsel %vm857, %v617, 3.4028235e+38
    %v986 = vsel %vm858, %v620, 3.4028235e+38
    %v987 = vsel %vm859, %v623, 3.4028235e+38
    %v988 = vsel %vm860, %v626, 3.4028235e+38
    %v989 = vsel %vm861, %v629, 3.4028235e+38
    %v990 = vsel %vm862, %v632, 3.4028235e+38
    %v991 = vsel %vm863, %v635, 3.4028235e+38
    %v992 = vsel %vm864, %v638, 3.4028235e+38
    %v993 = vsel %vm865, %v641, 3.4028235e+38
    %v994 = vsel %vm866, %v644, 3.4028235e+38
    %v995 = vsel %vm867, %v647, 3.4028235e+38
    %v996 = vsel %vm868, %v650, 3.4028235e+38
    %v997 = vsel %vm869, %v653, 3.4028235e+38
    %v998 = vsel %vm870, %v656, 3.4028235e+38
    %v999 = vsel %vm871, %v659, 3.4028235e+38
    %v1000 = vsel %vm872, %v662, 3.4028235e+38
    %v1001 = vsel %vm873, %v665, 3.4028235e+38
    %v1002 = vsel %vm874, %v668, 3.4028235e+38
    %v1003 = vsel %vm875, %v671, 3.4028235e+38
    %v1004 = vsel %vm876, %v674, 3.4028235e+38
    %v1005 = vsel %vm877, %v677, 3.4028235e+38
    %v1006 = vsel %vm878, %v680, 3.4028235e+38
    %v1007 = vsel %vm879, %v683, 3.4028235e+38
    %v1008 = vsel %vm880, %v686, 3.4028235e+38
    %v1009 = vsel %vm881, %v689, 3.4028235e+38
    %v1010 = vsel %vm882, %v692, 3.4028235e+38
    %v1011 = vsel %vm883, %v695, 3.4028235e+38
    %v1012 = vsel %vm884, %v698, 3.4028235e+38
    %v1013 = vsel %vm885, %v701, 3.4028235e+38
    %v1014 = vsel %vm886, %v704, 3.4028235e+38
    %v1015 = vsel %vm887, %v707, 3.4028235e+38
    %v1016 = vsel %vm888, %v710, 3.4028235e+38
    %v1017 = vsel %vm889, %v713, 3.4028235e+38
    %v1018 = vsel %vm890, %v716, 3.4028235e+38
    %v1019 = vsel %vm891, %v719, 3.4028235e+38
    %v1020 = vsel %vm892, %v722, 3.4028235e+38
    %v1021 = vsel %vm893, %v725, 3.4028235e+38
    %v1022 = vsel %vm894, %v728, 3.4028235e+38
    %v1023 = vsel %vm895, %v731, 3.4028235e+38
    %v1024 = vsel %vm896, %v734, 3.4028235e+38
    %v1025 = vsel %vm897, %v737, 3.4028235e+38
    %v1026 = vsel %vm898, %v740, 3.4028235e+38
    %v1027 = vsel %vm899, %v743, 3.4028235e+38
    %v1028 = vsel %vm900, %v746, 3.4028235e+38
    %v1029 = vsel %vm901, %v749, 3.4028235e+38
    %v1030 = vsel %vm902, %v752, 3.4028235e+38
    %v1031 = vsel %vm903, %v755, 3.4028235e+38
    %v1032 = vsel %vm904, %v758, 3.4028235e+38
    %v1033 = vsel %vm905, %v761, 3.4028235e+38
    %v1034 = vsel %vm906, %v764, 3.4028235e+38
    %v1035 = vsel %vm907, %v767, 3.4028235e+38
    %v1036 = vsel %vm908, %v770, 3.4028235e+38
    %v1037 = vsel %vm909, %v773, 3.4028235e+38
    %v1038 = vsel %vm910, %v776, 3.4028235e+38
    %v1039 = vsel %vm911, %v779, 3.4028235e+38
    %v1040 = vsel %vm912, %v782, 3.4028235e+38
    %v1041 = vsel %vm913, %v785, 3.4028235e+38
    %v1042 = vld [vmem:[%s1 + $0x1] sm:$0x1]
    %v1043 = vlaneseq
    %v1044 = vshrl.u32 %v1043, 7
    %v1045 = vsub.s32 0, %v1044
    %v1046 = vrot.slane %v1042, %v1045
    %v1047 = vsub.f32 %v12, %v1046
    %v1048 = vsub.f32 %v13, %v1046
    %v1049 = vsub.f32 %v14, %v1046
    %v1050 = vsub.f32 %v15, %v1046
    %v1051 = vsub.f32 %v16, %v1046
    %v1052 = vsub.f32 %v17, %v1046
    %v1053 = vsub.f32 %v18, %v1046
    %v1054 = vsub.f32 %v19, %v1046
    %v1055 = vsub.f32 %v20, %v1046
    %v1056 = vsub.f32 %v21, %v1046
    %v1057 = vsub.f32 %v22, %v1046
    %v1058 = vsub.f32 %v23, %v1046
    %v1059 = vsub.f32 %v24, %v1046
    %v1060 = vsub.f32 %v25, %v1046
    %v1061 = vsub.f32 %v26, %v1046
    %v1062 = vsub.f32 %v27, %v1046
    %v1063 = vsub.f32 %v28, %v1046
    %v1064 = vsub.f32 %v29, %v1046
    %v1065 = vsub.f32 %v30, %v1046
    %v1066 = vsub.f32 %v31, %v1046
    %v1067 = vsub.f32 %v32, %v1046
    %v1068 = vsub.f32 %v33, %v1046
    %v1069 = vsub.f32 %v34, %v1046
    %v1070 = vsub.f32 %v35, %v1046
    %v1071 = vsub.f32 %v36, %v1046
    %v1072 = vsub.f32 %v37, %v1046
    %v1073 = vsub.f32 %v38, %v1046
    %v1074 = vsub.f32 %v39, %v1046
    %v1075 = vsub.f32 %v40, %v1046
    %v1076 = vsub.f32 %v41, %v1046
    %v1077 = vsub.f32 %v42, %v1046
    %v1078 = vsub.f32 %v43, %v1046
    %v1079 = vsub.f32 %v44, %v1046
    %v1080 = vsub.f32 %v45, %v1046
    %v1081 = vsub.f32 %v46, %v1046
    %v1082 = vsub.f32 %v47, %v1046
    %v1083 = vsub.f32 %v48, %v1046
    %v1084 = vsub.f32 %v49, %v1046
    %v1085 = vsub.f32 %v50, %v1046
    %v1086 = vsub.f32 %v51, %v1046
    %v1087 = vsub.f32 %v52, %v1046
    %v1088 = vsub.f32 %v53, %v1046
    %v1089 = vsub.f32 %v54, %v1046
    %v1090 = vsub.f32 %v55, %v1046
    %v1091 = vsub.f32 %v56, %v1046
    %v1092 = vsub.f32 %v57, %v1046
    %v1093 = vsub.f32 %v58, %v1046
    %v1094 = vsub.f32 %v59, %v1046
    %v1095 = vsub.f32 %v60, %v1046
    %v1096 = vsub.f32 %v61, %v1046
    %v1097 = vsub.f32 %v62, %v1046
    %v1098 = vsub.f32 %v63, %v1046
    %v1099 = vsub.f32 %v64, %v1046
    %v1100 = vsub.f32 %v65, %v1046
    %v1101 = vsub.f32 %v66, %v1046
    %v1102 = vsub.f32 %v67, %v1046
    %v1103 = vsub.f32 %v68, %v1046
    %v1104 = vsub.f32 %v69, %v1046
    %v1105 = vsub.f32 %v70, %v1046
    %v1106 = vsub.f32 %v71, %v1046
    %v1107 = vsub.f32 %v72, %v1046
    %v1108 = vsub.f32 %v73, %v1046
    %v1109 = vsub.f32 %v74, %v1046
    %v1110 = vsub.f32 %v75, %v1046
    %v1111 = vsub.f32 %v76, %v1046
    %v1112 = vsub.f32 %v77, %v1046
    %v1113 = vsub.f32 %v78, %v1046
    %v1114 = vsub.f32 %v79, %v1046
    %v1115 = vsub.f32 %v80, %v1046
    %v1116 = vsub.f32 %v81, %v1046
    %v1117 = vsub.f32 %v82, %v1046
    %v1118 = vsub.f32 %v83, %v1046
    %v1119 = vsub.f32 %v84, %v1046
    %v1120 = vsub.f32 %v85, %v1046
    %v1121 = vsub.f32 %v86, %v1046
    %v1122 = vsub.f32 %v87, %v1046
    %v1123 = vsub.f32 %v88, %v1046
    %v1124 = vsub.f32 %v89, %v1046
    %v1125 = vsub.f32 %v90, %v1046
    %v1126 = vsub.f32 %v91, %v1046
    %v1127 = vsub.f32 %v92, %v1046
    %v1128 = vsub.f32 %v93, %v1046
    %v1129 = vsub.f32 %v94, %v1046
    %v1130 = vsub.f32 %v95, %v1046
    %v1131 = vsub.f32 %v96, %v1046
    %v1132 = vsub.f32 %v97, %v1046
    %v1133 = vsub.f32 %v98, %v1046
    %v1134 = vsub.f32 %v99, %v1046
    %v1135 = vsub.f32 %v100, %v1046
    %v1136 = vsub.f32 %v101, %v1046
    %v1137 = vsub.f32 %v102, %v1046
    %v1138 = vsub.f32 %v103, %v1046
    %v1139 = vsub.f32 %v104, %v1046
    %v1140 = vsub.f32 %v105, %v1046
    %v1141 = vsub.f32 %v106, %v1046
    %v1142 = vsub.f32 %v107, %v1046
    %v1143 = vsub.f32 %v108, %v1046
    %v1144 = vsub.f32 %v109, %v1046
    %v1145 = vsub.f32 %v110, %v1046
    %v1146 = vsub.f32 %v111, %v1046
    %v1147 = vsub.f32 %v112, %v1046
    %v1148 = vsub.f32 %v113, %v1046
    %v1149 = vsub.f32 %v114, %v1046
    %v1150 = vsub.f32 %v115, %v1046
    %v1151 = vsub.f32 %v116, %v1046
    %v1152 = vsub.f32 %v117, %v1046
    %v1153 = vsub.f32 %v118, %v1046
    %v1154 = vsub.f32 %v119, %v1046
    %v1155 = vsub.f32 %v120, %v1046
    %v1156 = vsub.f32 %v121, %v1046
    %v1157 = vsub.f32 %v122, %v1046
    %v1158 = vsub.f32 %v123, %v1046
    %v1159 = vsub.f32 %v124, %v1046
    %v1160 = vsub.f32 %v125, %v1046
    %v1161 = vsub.f32 %v126, %v1046
    %v1162 = vsub.f32 %v127, %v1046
    %v1163 = vsub.f32 %v128, %v1046
    %v1164 = vsub.f32 %v129, %v1046
    %v1165 = vsub.f32 %v130, %v1046
    %v1166 = vsub.f32 %v131, %v1046
    %v1167 = vsub.f32 %v132, %v1046
    %v1168 = vsub.f32 %v133, %v1046
    %v1169 = vsub.f32 %v134, %v1046
    %v1170 = vsub.f32 %v135, %v1046
    %v1171 = vsub.f32 %v136, %v1046
    %v1172 = vsub.f32 %v137, %v1046
    %v1173 = vsub.f32 %v138, %v1046
    %v1174 = vsub.f32 %v139, %v1046
    %v1175 = vmul.f32 %v1047, %v1047
    %v1176 = vmul.f32 %v1048, %v1048
    %v1177 = vmul.f32 %v1049, %v1049
    %v1178 = vmul.f32 %v1050, %v1050
    %v1179 = vmul.f32 %v1051, %v1051
    %v1180 = vmul.f32 %v1052, %v1052
    %v1181 = vmul.f32 %v1053, %v1053
    %v1182 = vmul.f32 %v1054, %v1054
    %v1183 = vmul.f32 %v1055, %v1055
    %v1184 = vmul.f32 %v1056, %v1056
    %v1185 = vmul.f32 %v1057, %v1057
    %v1186 = vmul.f32 %v1058, %v1058
    %v1187 = vmul.f32 %v1059, %v1059
    %v1188 = vmul.f32 %v1060, %v1060
    %v1189 = vmul.f32 %v1061, %v1061
    %v1190 = vmul.f32 %v1062, %v1062
    %v1191 = vmul.f32 %v1063, %v1063
    %v1192 = vmul.f32 %v1064, %v1064
    %v1193 = vmul.f32 %v1065, %v1065
    %v1194 = vmul.f32 %v1066, %v1066
    %v1195 = vmul.f32 %v1067, %v1067
    %v1196 = vmul.f32 %v1068, %v1068
    %v1197 = vmul.f32 %v1069, %v1069
    %v1198 = vmul.f32 %v1070, %v1070
    %v1199 = vmul.f32 %v1071, %v1071
    %v1200 = vmul.f32 %v1072, %v1072
    %v1201 = vmul.f32 %v1073, %v1073
    %v1202 = vmul.f32 %v1074, %v1074
    %v1203 = vmul.f32 %v1075, %v1075
    %v1204 = vmul.f32 %v1076, %v1076
    %v1205 = vmul.f32 %v1077, %v1077
    %v1206 = vmul.f32 %v1078, %v1078
    %v1207 = vmul.f32 %v1079, %v1079
    %v1208 = vmul.f32 %v1080, %v1080
    %v1209 = vmul.f32 %v1081, %v1081
    %v1210 = vmul.f32 %v1082, %v1082
    %v1211 = vmul.f32 %v1083, %v1083
    %v1212 = vmul.f32 %v1084, %v1084
    %v1213 = vmul.f32 %v1085, %v1085
    %v1214 = vmul.f32 %v1086, %v1086
    %v1215 = vmul.f32 %v1087, %v1087
    %v1216 = vmul.f32 %v1088, %v1088
    %v1217 = vmul.f32 %v1089, %v1089
    %v1218 = vmul.f32 %v1090, %v1090
    %v1219 = vmul.f32 %v1091, %v1091
    %v1220 = vmul.f32 %v1092, %v1092
    %v1221 = vmul.f32 %v1093, %v1093
    %v1222 = vmul.f32 %v1094, %v1094
    %v1223 = vmul.f32 %v1095, %v1095
    %v1224 = vmul.f32 %v1096, %v1096
    %v1225 = vmul.f32 %v1097, %v1097
    %v1226 = vmul.f32 %v1098, %v1098
    %v1227 = vmul.f32 %v1099, %v1099
    %v1228 = vmul.f32 %v1100, %v1100
    %v1229 = vmul.f32 %v1101, %v1101
    %v1230 = vmul.f32 %v1102, %v1102
    %v1231 = vmul.f32 %v1103, %v1103
    %v1232 = vmul.f32 %v1104, %v1104
    %v1233 = vmul.f32 %v1105, %v1105
    %v1234 = vmul.f32 %v1106, %v1106
    %v1235 = vmul.f32 %v1107, %v1107
    %v1236 = vmul.f32 %v1108, %v1108
    %v1237 = vmul.f32 %v1109, %v1109
    %v1238 = vmul.f32 %v1110, %v1110
    %v1239 = vmul.f32 %v1111, %v1111
    %v1240 = vmul.f32 %v1112, %v1112
    %v1241 = vmul.f32 %v1113, %v1113
    %v1242 = vmul.f32 %v1114, %v1114
    %v1243 = vmul.f32 %v1115, %v1115
    %v1244 = vmul.f32 %v1116, %v1116
    %v1245 = vmul.f32 %v1117, %v1117
    %v1246 = vmul.f32 %v1118, %v1118
    %v1247 = vmul.f32 %v1119, %v1119
    %v1248 = vmul.f32 %v1120, %v1120
    %v1249 = vmul.f32 %v1121, %v1121
    %v1250 = vmul.f32 %v1122, %v1122
    %v1251 = vmul.f32 %v1123, %v1123
    %v1252 = vmul.f32 %v1124, %v1124
    %v1253 = vmul.f32 %v1125, %v1125
    %v1254 = vmul.f32 %v1126, %v1126
    %v1255 = vmul.f32 %v1127, %v1127
    %v1256 = vmul.f32 %v1128, %v1128
    %v1257 = vmul.f32 %v1129, %v1129
    %v1258 = vmul.f32 %v1130, %v1130
    %v1259 = vmul.f32 %v1131, %v1131
    %v1260 = vmul.f32 %v1132, %v1132
    %v1261 = vmul.f32 %v1133, %v1133
    %v1262 = vmul.f32 %v1134, %v1134
    %v1263 = vmul.f32 %v1135, %v1135
    %v1264 = vmul.f32 %v1136, %v1136
    %v1265 = vmul.f32 %v1137, %v1137
    %v1266 = vmul.f32 %v1138, %v1138
    %v1267 = vmul.f32 %v1139, %v1139
    %v1268 = vmul.f32 %v1140, %v1140
    %v1269 = vmul.f32 %v1141, %v1141
    %v1270 = vmul.f32 %v1142, %v1142
    %v1271 = vmul.f32 %v1143, %v1143
    %v1272 = vmul.f32 %v1144, %v1144
    %v1273 = vmul.f32 %v1145, %v1145
    %v1274 = vmul.f32 %v1146, %v1146
    %v1275 = vmul.f32 %v1147, %v1147
    %v1276 = vmul.f32 %v1148, %v1148
    %v1277 = vmul.f32 %v1149, %v1149
    %v1278 = vmul.f32 %v1150, %v1150
    %v1279 = vmul.f32 %v1151, %v1151
    %v1280 = vmul.f32 %v1152, %v1152
    %v1281 = vmul.f32 %v1153, %v1153
    %v1282 = vmul.f32 %v1154, %v1154
    %v1283 = vmul.f32 %v1155, %v1155
    %v1284 = vmul.f32 %v1156, %v1156
    %v1285 = vmul.f32 %v1157, %v1157
    %v1286 = vmul.f32 %v1158, %v1158
    %v1287 = vmul.f32 %v1159, %v1159
    %v1288 = vmul.f32 %v1160, %v1160
    %v1289 = vmul.f32 %v1161, %v1161
    %v1290 = vmul.f32 %v1162, %v1162
    %v1291 = vmul.f32 %v1163, %v1163
    %v1292 = vmul.f32 %v1164, %v1164
    %v1293 = vmul.f32 %v1165, %v1165
    %v1294 = vmul.f32 %v1166, %v1166
    %v1295 = vmul.f32 %v1167, %v1167
    %v1296 = vmul.f32 %v1168, %v1168
    %v1297 = vmul.f32 %v1169, %v1169
    %v1298 = vmul.f32 %v1170, %v1170
    %v1299 = vmul.f32 %v1171, %v1171
    %v1300 = vmul.f32 %v1172, %v1172
    %v1301 = vmul.f32 %v1173, %v1173
    %v1302 = vmul.f32 %v1174, %v1174
    %v1303 = vsel %vm401, %v1175, 0.0
    %1304 = vadd.xlane.f32.xlu0 %v1303
    %v1305 = vpop.xlane.xlu0 %1304
    %v1306 = vsel %vm401, %v1176, 0.0
    %1307 = vadd.xlane.f32.xlu0 %v1306
    %v1308 = vpop.xlane.xlu0 %1307
    %v1309 = vsel %vm401, %v1177, 0.0
    %1310 = vadd.xlane.f32.xlu0 %v1309
    %v1311 = vpop.xlane.xlu0 %1310
    %v1312 = vsel %vm401, %v1178, 0.0
    %1313 = vadd.xlane.f32.xlu0 %v1312
    %v1314 = vpop.xlane.xlu0 %1313
    %v1315 = vsel %vm401, %v1179, 0.0
    %1316 = vadd.xlane.f32.xlu0 %v1315
    %v1317 = vpop.xlane.xlu0 %1316
    %v1318 = vsel %vm401, %v1180, 0.0
    %1319 = vadd.xlane.f32.xlu0 %v1318
    %v1320 = vpop.xlane.xlu0 %1319
    %v1321 = vsel %vm401, %v1181, 0.0
    %1322 = vadd.xlane.f32.xlu0 %v1321
    %v1323 = vpop.xlane.xlu0 %1322
    %v1324 = vsel %vm401, %v1182, 0.0
    %1325 = vadd.xlane.f32.xlu0 %v1324
    %v1326 = vpop.xlane.xlu0 %1325
    %v1327 = vsel %vm401, %v1183, 0.0
    %1328 = vadd.xlane.f32.xlu0 %v1327
    %v1329 = vpop.xlane.xlu0 %1328
    %v1330 = vsel %vm401, %v1184, 0.0
    %1331 = vadd.xlane.f32.xlu0 %v1330
    %v1332 = vpop.xlane.xlu0 %1331
    %v1333 = vsel %vm401, %v1185, 0.0
    %1334 = vadd.xlane.f32.xlu0 %v1333
    %v1335 = vpop.xlane.xlu0 %1334
    %v1336 = vsel %vm401, %v1186, 0.0
    %1337 = vadd.xlane.f32.xlu0 %v1336
    %v1338 = vpop.xlane.xlu0 %1337
    %v1339 = vsel %vm401, %v1187, 0.0
    %1340 = vadd.xlane.f32.xlu0 %v1339
    %v1341 = vpop.xlane.xlu0 %1340
    %v1342 = vsel %vm401, %v1188, 0.0
    %1343 = vadd.xlane.f32.xlu0 %v1342
    %v1344 = vpop.xlane.xlu0 %1343
    %v1345 = vsel %vm401, %v1189, 0.0
    %1346 = vadd.xlane.f32.xlu0 %v1345
    %v1347 = vpop.xlane.xlu0 %1346
    %v1348 = vsel %vm401, %v1190, 0.0
    %1349 = vadd.xlane.f32.xlu0 %v1348
    %v1350 = vpop.xlane.xlu0 %1349
    %v1351 = vsel %vm401, %v1191, 0.0
    %1352 = vadd.xlane.f32.xlu0 %v1351
    %v1353 = vpop.xlane.xlu0 %1352
    %v1354 = vsel %vm401, %v1192, 0.0
    %1355 = vadd.xlane.f32.xlu0 %v1354
    %v1356 = vpop.xlane.xlu0 %1355
    %v1357 = vsel %vm401, %v1193, 0.0
    %1358 = vadd.xlane.f32.xlu0 %v1357
    %v1359 = vpop.xlane.xlu0 %1358
    %v1360 = vsel %vm401, %v1194, 0.0
    %1361 = vadd.xlane.f32.xlu0 %v1360
    %v1362 = vpop.xlane.xlu0 %1361
    %v1363 = vsel %vm401, %v1195, 0.0
    %1364 = vadd.xlane.f32.xlu0 %v1363
    %v1365 = vpop.xlane.xlu0 %1364
    %v1366 = vsel %vm401, %v1196, 0.0
    %1367 = vadd.xlane.f32.xlu0 %v1366
    %v1368 = vpop.xlane.xlu0 %1367
    %v1369 = vsel %vm401, %v1197, 0.0
    %1370 = vadd.xlane.f32.xlu0 %v1369
    %v1371 = vpop.xlane.xlu0 %1370
    %v1372 = vsel %vm401, %v1198, 0.0
    %1373 = vadd.xlane.f32.xlu0 %v1372
    %v1374 = vpop.xlane.xlu0 %1373
    %v1375 = vsel %vm401, %v1199, 0.0
    %1376 = vadd.xlane.f32.xlu0 %v1375
    %v1377 = vpop.xlane.xlu0 %1376
    %v1378 = vsel %vm401, %v1200, 0.0
    %1379 = vadd.xlane.f32.xlu0 %v1378
    %v1380 = vpop.xlane.xlu0 %1379
    %v1381 = vsel %vm401, %v1201, 0.0
    %1382 = vadd.xlane.f32.xlu0 %v1381
    %v1383 = vpop.xlane.xlu0 %1382
    %v1384 = vsel %vm401, %v1202, 0.0
    %1385 = vadd.xlane.f32.xlu0 %v1384
    %v1386 = vpop.xlane.xlu0 %1385
    %v1387 = vsel %vm401, %v1203, 0.0
    %1388 = vadd.xlane.f32.xlu0 %v1387
    %v1389 = vpop.xlane.xlu0 %1388
    %v1390 = vsel %vm401, %v1204, 0.0
    %1391 = vadd.xlane.f32.xlu0 %v1390
    %v1392 = vpop.xlane.xlu0 %1391
    %v1393 = vsel %vm401, %v1205, 0.0
    %1394 = vadd.xlane.f32.xlu0 %v1393
    %v1395 = vpop.xlane.xlu0 %1394
    %v1396 = vsel %vm401, %v1206, 0.0
    %1397 = vadd.xlane.f32.xlu0 %v1396
    %v1398 = vpop.xlane.xlu0 %1397
    %v1399 = vsel %vm401, %v1207, 0.0
    %1400 = vadd.xlane.f32.xlu0 %v1399
    %v1401 = vpop.xlane.xlu0 %1400
    %v1402 = vsel %vm401, %v1208, 0.0
    %1403 = vadd.xlane.f32.xlu0 %v1402
    %v1404 = vpop.xlane.xlu0 %1403
    %v1405 = vsel %vm401, %v1209, 0.0
    %1406 = vadd.xlane.f32.xlu0 %v1405
    %v1407 = vpop.xlane.xlu0 %1406
    %v1408 = vsel %vm401, %v1210, 0.0
    %1409 = vadd.xlane.f32.xlu0 %v1408
    %v1410 = vpop.xlane.xlu0 %1409
    %v1411 = vsel %vm401, %v1211, 0.0
    %1412 = vadd.xlane.f32.xlu0 %v1411
    %v1413 = vpop.xlane.xlu0 %1412
    %v1414 = vsel %vm401, %v1212, 0.0
    %1415 = vadd.xlane.f32.xlu0 %v1414
    %v1416 = vpop.xlane.xlu0 %1415
    %v1417 = vsel %vm401, %v1213, 0.0
    %1418 = vadd.xlane.f32.xlu0 %v1417
    %v1419 = vpop.xlane.xlu0 %1418
    %v1420 = vsel %vm401, %v1214, 0.0
    %1421 = vadd.xlane.f32.xlu0 %v1420
    %v1422 = vpop.xlane.xlu0 %1421
    %v1423 = vsel %vm401, %v1215, 0.0
    %1424 = vadd.xlane.f32.xlu0 %v1423
    %v1425 = vpop.xlane.xlu0 %1424
    %v1426 = vsel %vm401, %v1216, 0.0
    %1427 = vadd.xlane.f32.xlu0 %v1426
    %v1428 = vpop.xlane.xlu0 %1427
    %v1429 = vsel %vm401, %v1217, 0.0
    %1430 = vadd.xlane.f32.xlu0 %v1429
    %v1431 = vpop.xlane.xlu0 %1430
    %v1432 = vsel %vm401, %v1218, 0.0
    %1433 = vadd.xlane.f32.xlu0 %v1432
    %v1434 = vpop.xlane.xlu0 %1433
    %v1435 = vsel %vm401, %v1219, 0.0
    %1436 = vadd.xlane.f32.xlu0 %v1435
    %v1437 = vpop.xlane.xlu0 %1436
    %v1438 = vsel %vm401, %v1220, 0.0
    %1439 = vadd.xlane.f32.xlu0 %v1438
    %v1440 = vpop.xlane.xlu0 %1439
    %v1441 = vsel %vm401, %v1221, 0.0
    %1442 = vadd.xlane.f32.xlu0 %v1441
    %v1443 = vpop.xlane.xlu0 %1442
    %v1444 = vsel %vm401, %v1222, 0.0
    %1445 = vadd.xlane.f32.xlu0 %v1444
    %v1446 = vpop.xlane.xlu0 %1445
    %v1447 = vsel %vm401, %v1223, 0.0
    %1448 = vadd.xlane.f32.xlu0 %v1447
    %v1449 = vpop.xlane.xlu0 %1448
    %v1450 = vsel %vm401, %v1224, 0.0
    %1451 = vadd.xlane.f32.xlu0 %v1450
    %v1452 = vpop.xlane.xlu0 %1451
    %v1453 = vsel %vm401, %v1225, 0.0
    %1454 = vadd.xlane.f32.xlu0 %v1453
    %v1455 = vpop.xlane.xlu0 %1454
    %v1456 = vsel %vm401, %v1226, 0.0
    %1457 = vadd.xlane.f32.xlu0 %v1456
    %v1458 = vpop.xlane.xlu0 %1457
    %v1459 = vsel %vm401, %v1227, 0.0
    %1460 = vadd.xlane.f32.xlu0 %v1459
    %v1461 = vpop.xlane.xlu0 %1460
    %v1462 = vsel %vm401, %v1228, 0.0
    %1463 = vadd.xlane.f32.xlu0 %v1462
    %v1464 = vpop.xlane.xlu0 %1463
    %v1465 = vsel %vm401, %v1229, 0.0
    %1466 = vadd.xlane.f32.xlu0 %v1465
    %v1467 = vpop.xlane.xlu0 %1466
    %v1468 = vsel %vm401, %v1230, 0.0
    %1469 = vadd.xlane.f32.xlu0 %v1468
    %v1470 = vpop.xlane.xlu0 %1469
    %v1471 = vsel %vm401, %v1231, 0.0
    %1472 = vadd.xlane.f32.xlu0 %v1471
    %v1473 = vpop.xlane.xlu0 %1472
    %v1474 = vsel %vm401, %v1232, 0.0
    %1475 = vadd.xlane.f32.xlu0 %v1474
    %v1476 = vpop.xlane.xlu0 %1475
    %v1477 = vsel %vm401, %v1233, 0.0
    %1478 = vadd.xlane.f32.xlu0 %v1477
    %v1479 = vpop.xlane.xlu0 %1478
    %v1480 = vsel %vm401, %v1234, 0.0
    %1481 = vadd.xlane.f32.xlu0 %v1480
    %v1482 = vpop.xlane.xlu0 %1481
    %v1483 = vsel %vm401, %v1235, 0.0
    %1484 = vadd.xlane.f32.xlu0 %v1483
    %v1485 = vpop.xlane.xlu0 %1484
    %v1486 = vsel %vm401, %v1236, 0.0
    %1487 = vadd.xlane.f32.xlu0 %v1486
    %v1488 = vpop.xlane.xlu0 %1487
    %v1489 = vsel %vm401, %v1237, 0.0
    %1490 = vadd.xlane.f32.xlu0 %v1489
    %v1491 = vpop.xlane.xlu0 %1490
    %v1492 = vsel %vm401, %v1238, 0.0
    %1493 = vadd.xlane.f32.xlu0 %v1492
    %v1494 = vpop.xlane.xlu0 %1493
    %v1495 = vsel %vm401, %v1239, 0.0
    %1496 = vadd.xlane.f32.xlu0 %v1495
    %v1497 = vpop.xlane.xlu0 %1496
    %v1498 = vsel %vm401, %v1240, 0.0
    %1499 = vadd.xlane.f32.xlu0 %v1498
    %v1500 = vpop.xlane.xlu0 %1499
    %v1501 = vsel %vm401, %v1241, 0.0
    %1502 = vadd.xlane.f32.xlu0 %v1501
    %v1503 = vpop.xlane.xlu0 %1502
    %v1504 = vsel %vm401, %v1242, 0.0
    %1505 = vadd.xlane.f32.xlu0 %v1504
    %v1506 = vpop.xlane.xlu0 %1505
    %v1507 = vsel %vm401, %v1243, 0.0
    %1508 = vadd.xlane.f32.xlu0 %v1507
    %v1509 = vpop.xlane.xlu0 %1508
    %v1510 = vsel %vm401, %v1244, 0.0
    %1511 = vadd.xlane.f32.xlu0 %v1510
    %v1512 = vpop.xlane.xlu0 %1511
    %v1513 = vsel %vm401, %v1245, 0.0
    %1514 = vadd.xlane.f32.xlu0 %v1513
    %v1515 = vpop.xlane.xlu0 %1514
    %v1516 = vsel %vm401, %v1246, 0.0
    %1517 = vadd.xlane.f32.xlu0 %v1516
    %v1518 = vpop.xlane.xlu0 %1517
    %v1519 = vsel %vm401, %v1247, 0.0
    %1520 = vadd.xlane.f32.xlu0 %v1519
    %v1521 = vpop.xlane.xlu0 %1520
    %v1522 = vsel %vm401, %v1248, 0.0
    %1523 = vadd.xlane.f32.xlu0 %v1522
    %v1524 = vpop.xlane.xlu0 %1523
    %v1525 = vsel %vm401, %v1249, 0.0
    %1526 = vadd.xlane.f32.xlu0 %v1525
    %v1527 = vpop.xlane.xlu0 %1526
    %v1528 = vsel %vm401, %v1250, 0.0
    %1529 = vadd.xlane.f32.xlu0 %v1528
    %v1530 = vpop.xlane.xlu0 %1529
    %v1531 = vsel %vm401, %v1251, 0.0
    %1532 = vadd.xlane.f32.xlu0 %v1531
    %v1533 = vpop.xlane.xlu0 %1532
    %v1534 = vsel %vm401, %v1252, 0.0
    %1535 = vadd.xlane.f32.xlu0 %v1534
    %v1536 = vpop.xlane.xlu0 %1535
    %v1537 = vsel %vm401, %v1253, 0.0
    %1538 = vadd.xlane.f32.xlu0 %v1537
    %v1539 = vpop.xlane.xlu0 %1538
    %v1540 = vsel %vm401, %v1254, 0.0
    %1541 = vadd.xlane.f32.xlu0 %v1540
    %v1542 = vpop.xlane.xlu0 %1541
    %v1543 = vsel %vm401, %v1255, 0.0
    %1544 = vadd.xlane.f32.xlu0 %v1543
    %v1545 = vpop.xlane.xlu0 %1544
    %v1546 = vsel %vm401, %v1256, 0.0
    %1547 = vadd.xlane.f32.xlu0 %v1546
    %v1548 = vpop.xlane.xlu0 %1547
    %v1549 = vsel %vm401, %v1257, 0.0
    %1550 = vadd.xlane.f32.xlu0 %v1549
    %v1551 = vpop.xlane.xlu0 %1550
    %v1552 = vsel %vm401, %v1258, 0.0
    %1553 = vadd.xlane.f32.xlu0 %v1552
    %v1554 = vpop.xlane.xlu0 %1553
    %v1555 = vsel %vm401, %v1259, 0.0
    %1556 = vadd.xlane.f32.xlu0 %v1555
    %v1557 = vpop.xlane.xlu0 %1556
    %v1558 = vsel %vm401, %v1260, 0.0
    %1559 = vadd.xlane.f32.xlu0 %v1558
    %v1560 = vpop.xlane.xlu0 %1559
    %v1561 = vsel %vm401, %v1261, 0.0
    %1562 = vadd.xlane.f32.xlu0 %v1561
    %v1563 = vpop.xlane.xlu0 %1562
    %v1564 = vsel %vm401, %v1262, 0.0
    %1565 = vadd.xlane.f32.xlu0 %v1564
    %v1566 = vpop.xlane.xlu0 %1565
    %v1567 = vsel %vm401, %v1263, 0.0
    %1568 = vadd.xlane.f32.xlu0 %v1567
    %v1569 = vpop.xlane.xlu0 %1568
    %v1570 = vsel %vm401, %v1264, 0.0
    %1571 = vadd.xlane.f32.xlu0 %v1570
    %v1572 = vpop.xlane.xlu0 %1571
    %v1573 = vsel %vm401, %v1265, 0.0
    %1574 = vadd.xlane.f32.xlu0 %v1573
    %v1575 = vpop.xlane.xlu0 %1574
    %v1576 = vsel %vm401, %v1266, 0.0
    %1577 = vadd.xlane.f32.xlu0 %v1576
    %v1578 = vpop.xlane.xlu0 %1577
    %v1579 = vsel %vm401, %v1267, 0.0
    %1580 = vadd.xlane.f32.xlu0 %v1579
    %v1581 = vpop.xlane.xlu0 %1580
    %v1582 = vsel %vm401, %v1268, 0.0
    %1583 = vadd.xlane.f32.xlu0 %v1582
    %v1584 = vpop.xlane.xlu0 %1583
    %v1585 = vsel %vm401, %v1269, 0.0
    %1586 = vadd.xlane.f32.xlu0 %v1585
    %v1587 = vpop.xlane.xlu0 %1586
    %v1588 = vsel %vm401, %v1270, 0.0
    %1589 = vadd.xlane.f32.xlu0 %v1588
    %v1590 = vpop.xlane.xlu0 %1589
    %v1591 = vsel %vm401, %v1271, 0.0
    %1592 = vadd.xlane.f32.xlu0 %v1591
    %v1593 = vpop.xlane.xlu0 %1592
    %v1594 = vsel %vm401, %v1272, 0.0
    %1595 = vadd.xlane.f32.xlu0 %v1594
    %v1596 = vpop.xlane.xlu0 %1595
    %v1597 = vsel %vm401, %v1273, 0.0
    %1598 = vadd.xlane.f32.xlu0 %v1597
    %v1599 = vpop.xlane.xlu0 %1598
    %v1600 = vsel %vm401, %v1274, 0.0
    %1601 = vadd.xlane.f32.xlu0 %v1600
    %v1602 = vpop.xlane.xlu0 %1601
    %v1603 = vsel %vm401, %v1275, 0.0
    %1604 = vadd.xlane.f32.xlu0 %v1603
    %v1605 = vpop.xlane.xlu0 %1604
    %v1606 = vsel %vm401, %v1276, 0.0
    %1607 = vadd.xlane.f32.xlu0 %v1606
    %v1608 = vpop.xlane.xlu0 %1607
    %v1609 = vsel %vm401, %v1277, 0.0
    %1610 = vadd.xlane.f32.xlu0 %v1609
    %v1611 = vpop.xlane.xlu0 %1610
    %v1612 = vsel %vm401, %v1278, 0.0
    %1613 = vadd.xlane.f32.xlu0 %v1612
    %v1614 = vpop.xlane.xlu0 %1613
    %v1615 = vsel %vm401, %v1279, 0.0
    %1616 = vadd.xlane.f32.xlu0 %v1615
    %v1617 = vpop.xlane.xlu0 %1616
    %v1618 = vsel %vm401, %v1280, 0.0
    %1619 = vadd.xlane.f32.xlu0 %v1618
    %v1620 = vpop.xlane.xlu0 %1619
    %v1621 = vsel %vm401, %v1281, 0.0
    %1622 = vadd.xlane.f32.xlu0 %v1621
    %v1623 = vpop.xlane.xlu0 %1622
    %v1624 = vsel %vm401, %v1282, 0.0
    %1625 = vadd.xlane.f32.xlu0 %v1624
    %v1626 = vpop.xlane.xlu0 %1625
    %v1627 = vsel %vm401, %v1283, 0.0
    %1628 = vadd.xlane.f32.xlu0 %v1627
    %v1629 = vpop.xlane.xlu0 %1628
    %v1630 = vsel %vm401, %v1284, 0.0
    %1631 = vadd.xlane.f32.xlu0 %v1630
    %v1632 = vpop.xlane.xlu0 %1631
    %v1633 = vsel %vm401, %v1285, 0.0
    %1634 = vadd.xlane.f32.xlu0 %v1633
    %v1635 = vpop.xlane.xlu0 %1634
    %v1636 = vsel %vm401, %v1286, 0.0
    %1637 = vadd.xlane.f32.xlu0 %v1636
    %v1638 = vpop.xlane.xlu0 %1637
    %v1639 = vsel %vm401, %v1287, 0.0
    %1640 = vadd.xlane.f32.xlu0 %v1639
    %v1641 = vpop.xlane.xlu0 %1640
    %v1642 = vsel %vm401, %v1288, 0.0
    %1643 = vadd.xlane.f32.xlu0 %v1642
    %v1644 = vpop.xlane.xlu0 %1643
    %v1645 = vsel %vm401, %v1289, 0.0
    %1646 = vadd.xlane.f32.xlu0 %v1645
    %v1647 = vpop.xlane.xlu0 %1646
    %v1648 = vsel %vm401, %v1290, 0.0
    %1649 = vadd.xlane.f32.xlu0 %v1648
    %v1650 = vpop.xlane.xlu0 %1649
    %v1651 = vsel %vm401, %v1291, 0.0
    %1652 = vadd.xlane.f32.xlu0 %v1651
    %v1653 = vpop.xlane.xlu0 %1652
    %v1654 = vsel %vm401, %v1292, 0.0
    %1655 = vadd.xlane.f32.xlu0 %v1654
    %v1656 = vpop.xlane.xlu0 %1655
    %v1657 = vsel %vm401, %v1293, 0.0
    %1658 = vadd.xlane.f32.xlu0 %v1657
    %v1659 = vpop.xlane.xlu0 %1658
    %v1660 = vsel %vm401, %v1294, 0.0
    %1661 = vadd.xlane.f32.xlu0 %v1660
    %v1662 = vpop.xlane.xlu0 %1661
    %v1663 = vsel %vm401, %v1295, 0.0
    %1664 = vadd.xlane.f32.xlu0 %v1663
    %v1665 = vpop.xlane.xlu0 %1664
    %v1666 = vsel %vm401, %v1296, 0.0
    %1667 = vadd.xlane.f32.xlu0 %v1666
    %v1668 = vpop.xlane.xlu0 %1667
    %v1669 = vsel %vm401, %v1297, 0.0
    %1670 = vadd.xlane.f32.xlu0 %v1669
    %v1671 = vpop.xlane.xlu0 %1670
    %v1672 = vsel %vm401, %v1298, 0.0
    %1673 = vadd.xlane.f32.xlu0 %v1672
    %v1674 = vpop.xlane.xlu0 %1673
    %v1675 = vsel %vm401, %v1299, 0.0
    %1676 = vadd.xlane.f32.xlu0 %v1675
    %v1677 = vpop.xlane.xlu0 %1676
    %v1678 = vsel %vm401, %v1300, 0.0
    %1679 = vadd.xlane.f32.xlu0 %v1678
    %v1680 = vpop.xlane.xlu0 %1679
    %v1681 = vsel %vm401, %v1301, 0.0
    %1682 = vadd.xlane.f32.xlu0 %v1681
    %v1683 = vpop.xlane.xlu0 %1682
    %v1684 = vsel %vm401, %v1302, 0.0
    %1685 = vadd.xlane.f32.xlu0 %v1684
    %v1686 = vpop.xlane.xlu0 %1685
    %vm1687 = vcmp.lt.f32.partialorder %v1305, %v914
    %vm1688 = vcmp.lt.f32.partialorder %v1308, %v915
    %vm1689 = vcmp.lt.f32.partialorder %v1311, %v916
    %vm1690 = vcmp.lt.f32.partialorder %v1314, %v917
    %vm1691 = vcmp.lt.f32.partialorder %v1317, %v918
    %vm1692 = vcmp.lt.f32.partialorder %v1320, %v919
    %vm1693 = vcmp.lt.f32.partialorder %v1323, %v920
    %vm1694 = vcmp.lt.f32.partialorder %v1326, %v921
    %vm1695 = vcmp.lt.f32.partialorder %v1329, %v922
    %vm1696 = vcmp.lt.f32.partialorder %v1332, %v923
    %vm1697 = vcmp.lt.f32.partialorder %v1335, %v924
    %vm1698 = vcmp.lt.f32.partialorder %v1338, %v925
    %vm1699 = vcmp.lt.f32.partialorder %v1341, %v926
    %vm1700 = vcmp.lt.f32.partialorder %v1344, %v927
    %vm1701 = vcmp.lt.f32.partialorder %v1347, %v928
    %vm1702 = vcmp.lt.f32.partialorder %v1350, %v929
    %vm1703 = vcmp.lt.f32.partialorder %v1353, %v930
    %vm1704 = vcmp.lt.f32.partialorder %v1356, %v931
    %vm1705 = vcmp.lt.f32.partialorder %v1359, %v932
    %vm1706 = vcmp.lt.f32.partialorder %v1362, %v933
    %vm1707 = vcmp.lt.f32.partialorder %v1365, %v934
    %vm1708 = vcmp.lt.f32.partialorder %v1368, %v935
    %vm1709 = vcmp.lt.f32.partialorder %v1371, %v936
    %vm1710 = vcmp.lt.f32.partialorder %v1374, %v937
    %vm1711 = vcmp.lt.f32.partialorder %v1377, %v938
    %vm1712 = vcmp.lt.f32.partialorder %v1380, %v939
    %vm1713 = vcmp.lt.f32.partialorder %v1383, %v940
    %vm1714 = vcmp.lt.f32.partialorder %v1386, %v941
    %vm1715 = vcmp.lt.f32.partialorder %v1389, %v942
    %vm1716 = vcmp.lt.f32.partialorder %v1392, %v943
    %vm1717 = vcmp.lt.f32.partialorder %v1395, %v944
    %vm1718 = vcmp.lt.f32.partialorder %v1398, %v945
    %vm1719 = vcmp.lt.f32.partialorder %v1401, %v946
    %vm1720 = vcmp.lt.f32.partialorder %v1404, %v947
    %vm1721 = vcmp.lt.f32.partialorder %v1407, %v948
    %vm1722 = vcmp.lt.f32.partialorder %v1410, %v949
    %vm1723 = vcmp.lt.f32.partialorder %v1413, %v950
    %vm1724 = vcmp.lt.f32.partialorder %v1416, %v951
    %vm1725 = vcmp.lt.f32.partialorder %v1419, %v952
    %vm1726 = vcmp.lt.f32.partialorder %v1422, %v953
    %vm1727 = vcmp.lt.f32.partialorder %v1425, %v954
    %vm1728 = vcmp.lt.f32.partialorder %v1428, %v955
    %vm1729 = vcmp.lt.f32.partialorder %v1431, %v956
    %vm1730 = vcmp.lt.f32.partialorder %v1434, %v957
    %vm1731 = vcmp.lt.f32.partialorder %v1437, %v958
    %vm1732 = vcmp.lt.f32.partialorder %v1440, %v959
    %vm1733 = vcmp.lt.f32.partialorder %v1443, %v960
    %vm1734 = vcmp.lt.f32.partialorder %v1446, %v961
    %vm1735 = vcmp.lt.f32.partialorder %v1449, %v962
    %vm1736 = vcmp.lt.f32.partialorder %v1452, %v963
    %vm1737 = vcmp.lt.f32.partialorder %v1455, %v964
    %vm1738 = vcmp.lt.f32.partialorder %v1458, %v965
    %vm1739 = vcmp.lt.f32.partialorder %v1461, %v966
    %vm1740 = vcmp.lt.f32.partialorder %v1464, %v967
    %vm1741 = vcmp.lt.f32.partialorder %v1467, %v968
    %vm1742 = vcmp.lt.f32.partialorder %v1470, %v969
    %vm1743 = vcmp.lt.f32.partialorder %v1473, %v970
    %vm1744 = vcmp.lt.f32.partialorder %v1476, %v971
    %vm1745 = vcmp.lt.f32.partialorder %v1479, %v972
    %vm1746 = vcmp.lt.f32.partialorder %v1482, %v973
    %vm1747 = vcmp.lt.f32.partialorder %v1485, %v974
    %vm1748 = vcmp.lt.f32.partialorder %v1488, %v975
    %vm1749 = vcmp.lt.f32.partialorder %v1491, %v976
    %vm1750 = vcmp.lt.f32.partialorder %v1494, %v977
    %vm1751 = vcmp.lt.f32.partialorder %v1497, %v978
    %vm1752 = vcmp.lt.f32.partialorder %v1500, %v979
    %vm1753 = vcmp.lt.f32.partialorder %v1503, %v980
    %vm1754 = vcmp.lt.f32.partialorder %v1506, %v981
    %vm1755 = vcmp.lt.f32.partialorder %v1509, %v982
    %vm1756 = vcmp.lt.f32.partialorder %v1512, %v983
    %vm1757 = vcmp.lt.f32.partialorder %v1515, %v984
    %vm1758 = vcmp.lt.f32.partialorder %v1518, %v985
    %vm1759 = vcmp.lt.f32.partialorder %v1521, %v986
    %vm1760 = vcmp.lt.f32.partialorder %v1524, %v987
    %vm1761 = vcmp.lt.f32.partialorder %v1527, %v988
    %vm1762 = vcmp.lt.f32.partialorder %v1530, %v989
    %vm1763 = vcmp.lt.f32.partialorder %v1533, %v990
    %vm1764 = vcmp.lt.f32.partialorder %v1536, %v991
    %vm1765 = vcmp.lt.f32.partialorder %v1539, %v992
    %vm1766 = vcmp.lt.f32.partialorder %v1542, %v993
    %vm1767 = vcmp.lt.f32.partialorder %v1545, %v994
    %vm1768 = vcmp.lt.f32.partialorder %v1548, %v995
    %vm1769 = vcmp.lt.f32.partialorder %v1551, %v996
    %vm1770 = vcmp.lt.f32.partialorder %v1554, %v997
    %vm1771 = vcmp.lt.f32.partialorder %v1557, %v998
    %vm1772 = vcmp.lt.f32.partialorder %v1560, %v999
    %vm1773 = vcmp.lt.f32.partialorder %v1563, %v1000
    %vm1774 = vcmp.lt.f32.partialorder %v1566, %v1001
    %vm1775 = vcmp.lt.f32.partialorder %v1569, %v1002
    %vm1776 = vcmp.lt.f32.partialorder %v1572, %v1003
    %vm1777 = vcmp.lt.f32.partialorder %v1575, %v1004
    %vm1778 = vcmp.lt.f32.partialorder %v1578, %v1005
    %vm1779 = vcmp.lt.f32.partialorder %v1581, %v1006
    %vm1780 = vcmp.lt.f32.partialorder %v1584, %v1007
    %vm1781 = vcmp.lt.f32.partialorder %v1587, %v1008
    %vm1782 = vcmp.lt.f32.partialorder %v1590, %v1009
    %vm1783 = vcmp.lt.f32.partialorder %v1593, %v1010
    %vm1784 = vcmp.lt.f32.partialorder %v1596, %v1011
    %vm1785 = vcmp.lt.f32.partialorder %v1599, %v1012
    %vm1786 = vcmp.lt.f32.partialorder %v1602, %v1013
    %vm1787 = vcmp.lt.f32.partialorder %v1605, %v1014
    %vm1788 = vcmp.lt.f32.partialorder %v1608, %v1015
    %vm1789 = vcmp.lt.f32.partialorder %v1611, %v1016
    %vm1790 = vcmp.lt.f32.partialorder %v1614, %v1017
    %vm1791 = vcmp.lt.f32.partialorder %v1617, %v1018
    %vm1792 = vcmp.lt.f32.partialorder %v1620, %v1019
    %vm1793 = vcmp.lt.f32.partialorder %v1623, %v1020
    %vm1794 = vcmp.lt.f32.partialorder %v1626, %v1021
    %vm1795 = vcmp.lt.f32.partialorder %v1629, %v1022
    %vm1796 = vcmp.lt.f32.partialorder %v1632, %v1023
    %vm1797 = vcmp.lt.f32.partialorder %v1635, %v1024
    %vm1798 = vcmp.lt.f32.partialorder %v1638, %v1025
    %vm1799 = vcmp.lt.f32.partialorder %v1641, %v1026
    %vm1800 = vcmp.lt.f32.partialorder %v1644, %v1027
    %vm1801 = vcmp.lt.f32.partialorder %v1647, %v1028
    %vm1802 = vcmp.lt.f32.partialorder %v1650, %v1029
    %vm1803 = vcmp.lt.f32.partialorder %v1653, %v1030
    %vm1804 = vcmp.lt.f32.partialorder %v1656, %v1031
    %vm1805 = vcmp.lt.f32.partialorder %v1659, %v1032
    %vm1806 = vcmp.lt.f32.partialorder %v1662, %v1033
    %vm1807 = vcmp.lt.f32.partialorder %v1665, %v1034
    %vm1808 = vcmp.lt.f32.partialorder %v1668, %v1035
    %vm1809 = vcmp.lt.f32.partialorder %v1671, %v1036
    %vm1810 = vcmp.lt.f32.partialorder %v1674, %v1037
    %vm1811 = vcmp.lt.f32.partialorder %v1677, %v1038
    %vm1812 = vcmp.lt.f32.partialorder %v1680, %v1039
    %vm1813 = vcmp.lt.f32.partialorder %v1683, %v1040
    %vm1814 = vcmp.lt.f32.partialorder %v1686, %v1041
    %v1815 = vsel %vm1687, %v1305, %v914
    %v1816 = vsel %vm1688, %v1308, %v915
    %v1817 = vsel %vm1689, %v1311, %v916
    %v1818 = vsel %vm1690, %v1314, %v917
    %v1819 = vsel %vm1691, %v1317, %v918
    %v1820 = vsel %vm1692, %v1320, %v919
    %v1821 = vsel %vm1693, %v1323, %v920
    %v1822 = vsel %vm1694, %v1326, %v921
    %v1823 = vsel %vm1695, %v1329, %v922
    %v1824 = vsel %vm1696, %v1332, %v923
    %v1825 = vsel %vm1697, %v1335, %v924
    %v1826 = vsel %vm1698, %v1338, %v925
    %v1827 = vsel %vm1699, %v1341, %v926
    %v1828 = vsel %vm1700, %v1344, %v927
    %v1829 = vsel %vm1701, %v1347, %v928
    %v1830 = vsel %vm1702, %v1350, %v929
    %v1831 = vsel %vm1703, %v1353, %v930
    %v1832 = vsel %vm1704, %v1356, %v931
    %v1833 = vsel %vm1705, %v1359, %v932
    %v1834 = vsel %vm1706, %v1362, %v933
    %v1835 = vsel %vm1707, %v1365, %v934
    %v1836 = vsel %vm1708, %v1368, %v935
    %v1837 = vsel %vm1709, %v1371, %v936
    %v1838 = vsel %vm1710, %v1374, %v937
    %v1839 = vsel %vm1711, %v1377, %v938
    %v1840 = vsel %vm1712, %v1380, %v939
    %v1841 = vsel %vm1713, %v1383, %v940
    %v1842 = vsel %vm1714, %v1386, %v941
    %v1843 = vsel %vm1715, %v1389, %v942
    %v1844 = vsel %vm1716, %v1392, %v943
    %v1845 = vsel %vm1717, %v1395, %v944
    %v1846 = vsel %vm1718, %v1398, %v945
    %v1847 = vsel %vm1719, %v1401, %v946
    %v1848 = vsel %vm1720, %v1404, %v947
    %v1849 = vsel %vm1721, %v1407, %v948
    %v1850 = vsel %vm1722, %v1410, %v949
    %v1851 = vsel %vm1723, %v1413, %v950
    %v1852 = vsel %vm1724, %v1416, %v951
    %v1853 = vsel %vm1725, %v1419, %v952
    %v1854 = vsel %vm1726, %v1422, %v953
    %v1855 = vsel %vm1727, %v1425, %v954
    %v1856 = vsel %vm1728, %v1428, %v955
    %v1857 = vsel %vm1729, %v1431, %v956
    %v1858 = vsel %vm1730, %v1434, %v957
    %v1859 = vsel %vm1731, %v1437, %v958
    %v1860 = vsel %vm1732, %v1440, %v959
    %v1861 = vsel %vm1733, %v1443, %v960
    %v1862 = vsel %vm1734, %v1446, %v961
    %v1863 = vsel %vm1735, %v1449, %v962
    %v1864 = vsel %vm1736, %v1452, %v963
    %v1865 = vsel %vm1737, %v1455, %v964
    %v1866 = vsel %vm1738, %v1458, %v965
    %v1867 = vsel %vm1739, %v1461, %v966
    %v1868 = vsel %vm1740, %v1464, %v967
    %v1869 = vsel %vm1741, %v1467, %v968
    %v1870 = vsel %vm1742, %v1470, %v969
    %v1871 = vsel %vm1743, %v1473, %v970
    %v1872 = vsel %vm1744, %v1476, %v971
    %v1873 = vsel %vm1745, %v1479, %v972
    %v1874 = vsel %vm1746, %v1482, %v973
    %v1875 = vsel %vm1747, %v1485, %v974
    %v1876 = vsel %vm1748, %v1488, %v975
    %v1877 = vsel %vm1749, %v1491, %v976
    %v1878 = vsel %vm1750, %v1494, %v977
    %v1879 = vsel %vm1751, %v1497, %v978
    %v1880 = vsel %vm1752, %v1500, %v979
    %v1881 = vsel %vm1753, %v1503, %v980
    %v1882 = vsel %vm1754, %v1506, %v981
    %v1883 = vsel %vm1755, %v1509, %v982
    %v1884 = vsel %vm1756, %v1512, %v983
    %v1885 = vsel %vm1757, %v1515, %v984
    %v1886 = vsel %vm1758, %v1518, %v985
    %v1887 = vsel %vm1759, %v1521, %v986
    %v1888 = vsel %vm1760, %v1524, %v987
    %v1889 = vsel %vm1761, %v1527, %v988
    %v1890 = vsel %vm1762, %v1530, %v989
    %v1891 = vsel %vm1763, %v1533, %v990
    %v1892 = vsel %vm1764, %v1536, %v991
    %v1893 = vsel %vm1765, %v1539, %v992
    %v1894 = vsel %vm1766, %v1542, %v993
    %v1895 = vsel %vm1767, %v1545, %v994
    %v1896 = vsel %vm1768, %v1548, %v995
    %v1897 = vsel %vm1769, %v1551, %v996
    %v1898 = vsel %vm1770, %v1554, %v997
    %v1899 = vsel %vm1771, %v1557, %v998
    %v1900 = vsel %vm1772, %v1560, %v999
    %v1901 = vsel %vm1773, %v1563, %v1000
    %v1902 = vsel %vm1774, %v1566, %v1001
    %v1903 = vsel %vm1775, %v1569, %v1002
    %v1904 = vsel %vm1776, %v1572, %v1003
    %v1905 = vsel %vm1777, %v1575, %v1004
    %v1906 = vsel %vm1778, %v1578, %v1005
    %v1907 = vsel %vm1779, %v1581, %v1006
    %v1908 = vsel %vm1780, %v1584, %v1007
    %v1909 = vsel %vm1781, %v1587, %v1008
    %v1910 = vsel %vm1782, %v1590, %v1009
    %v1911 = vsel %vm1783, %v1593, %v1010
    %v1912 = vsel %vm1784, %v1596, %v1011
    %v1913 = vsel %vm1785, %v1599, %v1012
    %v1914 = vsel %vm1786, %v1602, %v1013
    %v1915 = vsel %vm1787, %v1605, %v1014
    %v1916 = vsel %vm1788, %v1608, %v1015
    %v1917 = vsel %vm1789, %v1611, %v1016
    %v1918 = vsel %vm1790, %v1614, %v1017
    %v1919 = vsel %vm1791, %v1617, %v1018
    %v1920 = vsel %vm1792, %v1620, %v1019
    %v1921 = vsel %vm1793, %v1623, %v1020
    %v1922 = vsel %vm1794, %v1626, %v1021
    %v1923 = vsel %vm1795, %v1629, %v1022
    %v1924 = vsel %vm1796, %v1632, %v1023
    %v1925 = vsel %vm1797, %v1635, %v1024
    %v1926 = vsel %vm1798, %v1638, %v1025
    %v1927 = vsel %vm1799, %v1641, %v1026
    %v1928 = vsel %vm1800, %v1644, %v1027
    %v1929 = vsel %vm1801, %v1647, %v1028
    %v1930 = vsel %vm1802, %v1650, %v1029
    %v1931 = vsel %vm1803, %v1653, %v1030
    %v1932 = vsel %vm1804, %v1656, %v1031
    %v1933 = vsel %vm1805, %v1659, %v1032
    %v1934 = vsel %vm1806, %v1662, %v1033
    %v1935 = vsel %vm1807, %v1665, %v1034
    %v1936 = vsel %vm1808, %v1668, %v1035
    %v1937 = vsel %vm1809, %v1671, %v1036
    %v1938 = vsel %vm1810, %v1674, %v1037
    %v1939 = vsel %vm1811, %v1677, %v1038
    %v1940 = vsel %vm1812, %v1680, %v1039
    %v1941 = vsel %vm1813, %v1683, %v1040
    %v1942 = vsel %vm1814, %v1686, %v1041
    %v1943 = vsel %vm1687, 1, 0
    %v1944 = vsel %vm1688, 1, 0
    %v1945 = vsel %vm1689, 1, 0
    %v1946 = vsel %vm1690, 1, 0
    %v1947 = vsel %vm1691, 1, 0
    %v1948 = vsel %vm1692, 1, 0
    %v1949 = vsel %vm1693, 1, 0
    %v1950 = vsel %vm1694, 1, 0
    %v1951 = vsel %vm1695, 1, 0
    %v1952 = vsel %vm1696, 1, 0
    %v1953 = vsel %vm1697, 1, 0
    %v1954 = vsel %vm1698, 1, 0
    %v1955 = vsel %vm1699, 1, 0
    %v1956 = vsel %vm1700, 1, 0
    %v1957 = vsel %vm1701, 1, 0
    %v1958 = vsel %vm1702, 1, 0
    %v1959 = vsel %vm1703, 1, 0
    %v1960 = vsel %vm1704, 1, 0
    %v1961 = vsel %vm1705, 1, 0
    %v1962 = vsel %vm1706, 1, 0
    %v1963 = vsel %vm1707, 1, 0
    %v1964 = vsel %vm1708, 1, 0
    %v1965 = vsel %vm1709, 1, 0
    %v1966 = vsel %vm1710, 1, 0
    %v1967 = vsel %vm1711, 1, 0
    %v1968 = vsel %vm1712, 1, 0
    %v1969 = vsel %vm1713, 1, 0
    %v1970 = vsel %vm1714, 1, 0
    %v1971 = vsel %vm1715, 1, 0
    %v1972 = vsel %vm1716, 1, 0
    %v1973 = vsel %vm1717, 1, 0
    %v1974 = vsel %vm1718, 1, 0
    %v1975 = vsel %vm1719, 1, 0
    %v1976 = vsel %vm1720, 1, 0
    %v1977 = vsel %vm1721, 1, 0
    %v1978 = vsel %vm1722, 1, 0
    %v1979 = vsel %vm1723, 1, 0
    %v1980 = vsel %vm1724, 1, 0
    %v1981 = vsel %vm1725, 1, 0
    %v1982 = vsel %vm1726, 1, 0
    %v1983 = vsel %vm1727, 1, 0
    %v1984 = vsel %vm1728, 1, 0
    %v1985 = vsel %vm1729, 1, 0
    %v1986 = vsel %vm1730, 1, 0
    %v1987 = vsel %vm1731, 1, 0
    %v1988 = vsel %vm1732, 1, 0
    %v1989 = vsel %vm1733, 1, 0
    %v1990 = vsel %vm1734, 1, 0
    %v1991 = vsel %vm1735, 1, 0
    %v1992 = vsel %vm1736, 1, 0
    %v1993 = vsel %vm1737, 1, 0
    %v1994 = vsel %vm1738, 1, 0
    %v1995 = vsel %vm1739, 1, 0
    %v1996 = vsel %vm1740, 1, 0
    %v1997 = vsel %vm1741, 1, 0
    %v1998 = vsel %vm1742, 1, 0
    %v1999 = vsel %vm1743, 1, 0
    %v2000 = vsel %vm1744, 1, 0
    %v2001 = vsel %vm1745, 1, 0
    %v2002 = vsel %vm1746, 1, 0
    %v2003 = vsel %vm1747, 1, 0
    %v2004 = vsel %vm1748, 1, 0
    %v2005 = vsel %vm1749, 1, 0
    %v2006 = vsel %vm1750, 1, 0
    %v2007 = vsel %vm1751, 1, 0
    %v2008 = vsel %vm1752, 1, 0
    %v2009 = vsel %vm1753, 1, 0
    %v2010 = vsel %vm1754, 1, 0
    %v2011 = vsel %vm1755, 1, 0
    %v2012 = vsel %vm1756, 1, 0
    %v2013 = vsel %vm1757, 1, 0
    %v2014 = vsel %vm1758, 1, 0
    %v2015 = vsel %vm1759, 1, 0
    %v2016 = vsel %vm1760, 1, 0
    %v2017 = vsel %vm1761, 1, 0
    %v2018 = vsel %vm1762, 1, 0
    %v2019 = vsel %vm1763, 1, 0
    %v2020 = vsel %vm1764, 1, 0
    %v2021 = vsel %vm1765, 1, 0
    %v2022 = vsel %vm1766, 1, 0
    %v2023 = vsel %vm1767, 1, 0
    %v2024 = vsel %vm1768, 1, 0
    %v2025 = vsel %vm1769, 1, 0
    %v2026 = vsel %vm1770, 1, 0
    %v2027 = vsel %vm1771, 1, 0
    %v2028 = vsel %vm1772, 1, 0
    %v2029 = vsel %vm1773, 1, 0
    %v2030 = vsel %vm1774, 1, 0
    %v2031 = vsel %vm1775, 1, 0
    %v2032 = vsel %vm1776, 1, 0
    %v2033 = vsel %vm1777, 1, 0
    %v2034 = vsel %vm1778, 1, 0
    %v2035 = vsel %vm1779, 1, 0
    %v2036 = vsel %vm1780, 1, 0
    %v2037 = vsel %vm1781, 1, 0
    %v2038 = vsel %vm1782, 1, 0
    %v2039 = vsel %vm1783, 1, 0
    %v2040 = vsel %vm1784, 1, 0
    %v2041 = vsel %vm1785, 1, 0
    %v2042 = vsel %vm1786, 1, 0
    %v2043 = vsel %vm1787, 1, 0
    %v2044 = vsel %vm1788, 1, 0
    %v2045 = vsel %vm1789, 1, 0
    %v2046 = vsel %vm1790, 1, 0
    %v2047 = vsel %vm1791, 1, 0
    %v2048 = vsel %vm1792, 1, 0
    %v2049 = vsel %vm1793, 1, 0
    %v2050 = vsel %vm1794, 1, 0
    %v2051 = vsel %vm1795, 1, 0
    %v2052 = vsel %vm1796, 1, 0
    %v2053 = vsel %vm1797, 1, 0
    %v2054 = vsel %vm1798, 1, 0
    %v2055 = vsel %vm1799, 1, 0
    %v2056 = vsel %vm1800, 1, 0
    %v2057 = vsel %vm1801, 1, 0
    %v2058 = vsel %vm1802, 1, 0
    %v2059 = vsel %vm1803, 1, 0
    %v2060 = vsel %vm1804, 1, 0
    %v2061 = vsel %vm1805, 1, 0
    %v2062 = vsel %vm1806, 1, 0
    %v2063 = vsel %vm1807, 1, 0
    %v2064 = vsel %vm1808, 1, 0
    %v2065 = vsel %vm1809, 1, 0
    %v2066 = vsel %vm1810, 1, 0
    %v2067 = vsel %vm1811, 1, 0
    %v2068 = vsel %vm1812, 1, 0
    %v2069 = vsel %vm1813, 1, 0
    %v2070 = vsel %vm1814, 1, 0
    %v2071 = vld [vmem:[%s1 + $0x2] sm:$0x1]
    %v2072 = vlaneseq
    %v2073 = vshrl.u32 %v2072, 7
    %v2074 = vsub.s32 0, %v2073
    %v2075 = vrot.slane %v2071, %v2074
    %v2076 = vsub.f32 %v12, %v2075
    %v2077 = vsub.f32 %v13, %v2075
    %v2078 = vsub.f32 %v14, %v2075
    %v2079 = vsub.f32 %v15, %v2075
    %v2080 = vsub.f32 %v16, %v2075
    %v2081 = vsub.f32 %v17, %v2075
    %v2082 = vsub.f32 %v18, %v2075
    %v2083 = vsub.f32 %v19, %v2075
    %v2084 = vsub.f32 %v20, %v2075
    %v2085 = vsub.f32 %v21, %v2075
    %v2086 = vsub.f32 %v22, %v2075
    %v2087 = vsub.f32 %v23, %v2075
    %v2088 = vsub.f32 %v24, %v2075
    %v2089 = vsub.f32 %v25, %v2075
    %v2090 = vsub.f32 %v26, %v2075
    %v2091 = vsub.f32 %v27, %v2075
    %v2092 = vsub.f32 %v28, %v2075
    %v2093 = vsub.f32 %v29, %v2075
    %v2094 = vsub.f32 %v30, %v2075
    %v2095 = vsub.f32 %v31, %v2075
    %v2096 = vsub.f32 %v32, %v2075
    %v2097 = vsub.f32 %v33, %v2075
    %v2098 = vsub.f32 %v34, %v2075
    %v2099 = vsub.f32 %v35, %v2075
    %v2100 = vsub.f32 %v36, %v2075
    %v2101 = vsub.f32 %v37, %v2075
    %v2102 = vsub.f32 %v38, %v2075
    %v2103 = vsub.f32 %v39, %v2075
    %v2104 = vsub.f32 %v40, %v2075
    %v2105 = vsub.f32 %v41, %v2075
    %v2106 = vsub.f32 %v42, %v2075
    %v2107 = vsub.f32 %v43, %v2075
    %v2108 = vsub.f32 %v44, %v2075
    %v2109 = vsub.f32 %v45, %v2075
    %v2110 = vsub.f32 %v46, %v2075
    %v2111 = vsub.f32 %v47, %v2075
    %v2112 = vsub.f32 %v48, %v2075
    %v2113 = vsub.f32 %v49, %v2075
    %v2114 = vsub.f32 %v50, %v2075
    %v2115 = vsub.f32 %v51, %v2075
    %v2116 = vsub.f32 %v52, %v2075
    %v2117 = vsub.f32 %v53, %v2075
    %v2118 = vsub.f32 %v54, %v2075
    %v2119 = vsub.f32 %v55, %v2075
    %v2120 = vsub.f32 %v56, %v2075
    %v2121 = vsub.f32 %v57, %v2075
    %v2122 = vsub.f32 %v58, %v2075
    %v2123 = vsub.f32 %v59, %v2075
    %v2124 = vsub.f32 %v60, %v2075
    %v2125 = vsub.f32 %v61, %v2075
    %v2126 = vsub.f32 %v62, %v2075
    %v2127 = vsub.f32 %v63, %v2075
    %v2128 = vsub.f32 %v64, %v2075
    %v2129 = vsub.f32 %v65, %v2075
    %v2130 = vsub.f32 %v66, %v2075
    %v2131 = vsub.f32 %v67, %v2075
    %v2132 = vsub.f32 %v68, %v2075
    %v2133 = vsub.f32 %v69, %v2075
    %v2134 = vsub.f32 %v70, %v2075
    %v2135 = vsub.f32 %v71, %v2075
    %v2136 = vsub.f32 %v72, %v2075
    %v2137 = vsub.f32 %v73, %v2075
    %v2138 = vsub.f32 %v74, %v2075
    %v2139 = vsub.f32 %v75, %v2075
    %v2140 = vsub.f32 %v76, %v2075
    %v2141 = vsub.f32 %v77, %v2075
    %v2142 = vsub.f32 %v78, %v2075
    %v2143 = vsub.f32 %v79, %v2075
    %v2144 = vsub.f32 %v80, %v2075
    %v2145 = vsub.f32 %v81, %v2075
    %v2146 = vsub.f32 %v82, %v2075
    %v2147 = vsub.f32 %v83, %v2075
    %v2148 = vsub.f32 %v84, %v2075
    %v2149 = vsub.f32 %v85, %v2075
    %v2150 = vsub.f32 %v86, %v2075
    %v2151 = vsub.f32 %v87, %v2075
    %v2152 = vsub.f32 %v88, %v2075
    %v2153 = vsub.f32 %v89, %v2075
    %v2154 = vsub.f32 %v90, %v2075
    %v2155 = vsub.f32 %v91, %v2075
    %v2156 = vsub.f32 %v92, %v2075
    %v2157 = vsub.f32 %v93, %v2075
    %v2158 = vsub.f32 %v94, %v2075
    %v2159 = vsub.f32 %v95, %v2075
    %v2160 = vsub.f32 %v96, %v2075
    %v2161 = vsub.f32 %v97, %v2075
    %v2162 = vsub.f32 %v98, %v2075
    %v2163 = vsub.f32 %v99, %v2075
    %v2164 = vsub.f32 %v100, %v2075
    %v2165 = vsub.f32 %v101, %v2075
    %v2166 = vsub.f32 %v102, %v2075
    %v2167 = vsub.f32 %v103, %v2075
    %v2168 = vsub.f32 %v104, %v2075
    %v2169 = vsub.f32 %v105, %v2075
    %v2170 = vsub.f32 %v106, %v2075
    %v2171 = vsub.f32 %v107, %v2075
    %v2172 = vsub.f32 %v108, %v2075
    %v2173 = vsub.f32 %v109, %v2075
    %v2174 = vsub.f32 %v110, %v2075
    %v2175 = vsub.f32 %v111, %v2075
    %v2176 = vsub.f32 %v112, %v2075
    %v2177 = vsub.f32 %v113, %v2075
    %v2178 = vsub.f32 %v114, %v2075
    %v2179 = vsub.f32 %v115, %v2075
    %v2180 = vsub.f32 %v116, %v2075
    %v2181 = vsub.f32 %v117, %v2075
    %v2182 = vsub.f32 %v118, %v2075
    %v2183 = vsub.f32 %v119, %v2075
    %v2184 = vsub.f32 %v120, %v2075
    %v2185 = vsub.f32 %v121, %v2075
    %v2186 = vsub.f32 %v122, %v2075
    %v2187 = vsub.f32 %v123, %v2075
    %v2188 = vsub.f32 %v124, %v2075
    %v2189 = vsub.f32 %v125, %v2075
    %v2190 = vsub.f32 %v126, %v2075
    %v2191 = vsub.f32 %v127, %v2075
    %v2192 = vsub.f32 %v128, %v2075
    %v2193 = vsub.f32 %v129, %v2075
    %v2194 = vsub.f32 %v130, %v2075
    %v2195 = vsub.f32 %v131, %v2075
    %v2196 = vsub.f32 %v132, %v2075
    %v2197 = vsub.f32 %v133, %v2075
    %v2198 = vsub.f32 %v134, %v2075
    %v2199 = vsub.f32 %v135, %v2075
    %v2200 = vsub.f32 %v136, %v2075
    %v2201 = vsub.f32 %v137, %v2075
    %v2202 = vsub.f32 %v138, %v2075
    %v2203 = vsub.f32 %v139, %v2075
    %v2204 = vmul.f32 %v2076, %v2076
    %v2205 = vmul.f32 %v2077, %v2077
    %v2206 = vmul.f32 %v2078, %v2078
    %v2207 = vmul.f32 %v2079, %v2079
    %v2208 = vmul.f32 %v2080, %v2080
    %v2209 = vmul.f32 %v2081, %v2081
    %v2210 = vmul.f32 %v2082, %v2082
    %v2211 = vmul.f32 %v2083, %v2083
    %v2212 = vmul.f32 %v2084, %v2084
    %v2213 = vmul.f32 %v2085, %v2085
    %v2214 = vmul.f32 %v2086, %v2086
    %v2215 = vmul.f32 %v2087, %v2087
    %v2216 = vmul.f32 %v2088, %v2088
    %v2217 = vmul.f32 %v2089, %v2089
    %v2218 = vmul.f32 %v2090, %v2090
    %v2219 = vmul.f32 %v2091, %v2091
    %v2220 = vmul.f32 %v2092, %v2092
    %v2221 = vmul.f32 %v2093, %v2093
    %v2222 = vmul.f32 %v2094, %v2094
    %v2223 = vmul.f32 %v2095, %v2095
    %v2224 = vmul.f32 %v2096, %v2096
    %v2225 = vmul.f32 %v2097, %v2097
    %v2226 = vmul.f32 %v2098, %v2098
    %v2227 = vmul.f32 %v2099, %v2099
    %v2228 = vmul.f32 %v2100, %v2100
    %v2229 = vmul.f32 %v2101, %v2101
    %v2230 = vmul.f32 %v2102, %v2102
    %v2231 = vmul.f32 %v2103, %v2103
    %v2232 = vmul.f32 %v2104, %v2104
    %v2233 = vmul.f32 %v2105, %v2105
    %v2234 = vmul.f32 %v2106, %v2106
    %v2235 = vmul.f32 %v2107, %v2107
    %v2236 = vmul.f32 %v2108, %v2108
    %v2237 = vmul.f32 %v2109, %v2109
    %v2238 = vmul.f32 %v2110, %v2110
    %v2239 = vmul.f32 %v2111, %v2111
    %v2240 = vmul.f32 %v2112, %v2112
    %v2241 = vmul.f32 %v2113, %v2113
    %v2242 = vmul.f32 %v2114, %v2114
    %v2243 = vmul.f32 %v2115, %v2115
    %v2244 = vmul.f32 %v2116, %v2116
    %v2245 = vmul.f32 %v2117, %v2117
    %v2246 = vmul.f32 %v2118, %v2118
    %v2247 = vmul.f32 %v2119, %v2119
    %v2248 = vmul.f32 %v2120, %v2120
    %v2249 = vmul.f32 %v2121, %v2121
    %v2250 = vmul.f32 %v2122, %v2122
    %v2251 = vmul.f32 %v2123, %v2123
    %v2252 = vmul.f32 %v2124, %v2124
    %v2253 = vmul.f32 %v2125, %v2125
    %v2254 = vmul.f32 %v2126, %v2126
    %v2255 = vmul.f32 %v2127, %v2127
    %v2256 = vmul.f32 %v2128, %v2128
    %v2257 = vmul.f32 %v2129, %v2129
    %v2258 = vmul.f32 %v2130, %v2130
    %v2259 = vmul.f32 %v2131, %v2131
    %v2260 = vmul.f32 %v2132, %v2132
    %v2261 = vmul.f32 %v2133, %v2133
    %v2262 = vmul.f32 %v2134, %v2134
    %v2263 = vmul.f32 %v2135, %v2135
    %v2264 = vmul.f32 %v2136, %v2136
    %v2265 = vmul.f32 %v2137, %v2137
    %v2266 = vmul.f32 %v2138, %v2138
    %v2267 = vmul.f32 %v2139, %v2139
    %v2268 = vmul.f32 %v2140, %v2140
    %v2269 = vmul.f32 %v2141, %v2141
    %v2270 = vmul.f32 %v2142, %v2142
    %v2271 = vmul.f32 %v2143, %v2143
    %v2272 = vmul.f32 %v2144, %v2144
    %v2273 = vmul.f32 %v2145, %v2145
    %v2274 = vmul.f32 %v2146, %v2146
    %v2275 = vmul.f32 %v2147, %v2147
    %v2276 = vmul.f32 %v2148, %v2148
    %v2277 = vmul.f32 %v2149, %v2149
    %v2278 = vmul.f32 %v2150, %v2150
    %v2279 = vmul.f32 %v2151, %v2151
    %v2280 = vmul.f32 %v2152, %v2152
    %v2281 = vmul.f32 %v2153, %v2153
    %v2282 = vmul.f32 %v2154, %v2154
    %v2283 = vmul.f32 %v2155, %v2155
    %v2284 = vmul.f32 %v2156, %v2156
    %v2285 = vmul.f32 %v2157, %v2157
    %v2286 = vmul.f32 %v2158, %v2158
    %v2287 = vmul.f32 %v2159, %v2159
    %v2288 = vmul.f32 %v2160, %v2160
    %v2289 = vmul.f32 %v2161, %v2161
    %v2290 = vmul.f32 %v2162, %v2162
    %v2291 = vmul.f32 %v2163, %v2163
    %v2292 = vmul.f32 %v2164, %v2164
    %v2293 = vmul.f32 %v2165, %v2165
    %v2294 = vmul.f32 %v2166, %v2166
    %v2295 = vmul.f32 %v2167, %v2167
    %v2296 = vmul.f32 %v2168, %v2168
    %v2297 = vmul.f32 %v2169, %v2169
    %v2298 = vmul.f32 %v2170, %v2170
    %v2299 = vmul.f32 %v2171, %v2171
    %v2300 = vmul.f32 %v2172, %v2172
    %v2301 = vmul.f32 %v2173, %v2173
    %v2302 = vmul.f32 %v2174, %v2174
    %v2303 = vmul.f32 %v2175, %v2175
    %v2304 = vmul.f32 %v2176, %v2176
    %v2305 = vmul.f32 %v2177, %v2177
    %v2306 = vmul.f32 %v2178, %v2178
    %v2307 = vmul.f32 %v2179, %v2179
    %v2308 = vmul.f32 %v2180, %v2180
    %v2309 = vmul.f32 %v2181, %v2181
    %v2310 = vmul.f32 %v2182, %v2182
    %v2311 = vmul.f32 %v2183, %v2183
    %v2312 = vmul.f32 %v2184, %v2184
    %v2313 = vmul.f32 %v2185, %v2185
    %v2314 = vmul.f32 %v2186, %v2186
    %v2315 = vmul.f32 %v2187, %v2187
    %v2316 = vmul.f32 %v2188, %v2188
    %v2317 = vmul.f32 %v2189, %v2189
    %v2318 = vmul.f32 %v2190, %v2190
    %v2319 = vmul.f32 %v2191, %v2191
    %v2320 = vmul.f32 %v2192, %v2192
    %v2321 = vmul.f32 %v2193, %v2193
    %v2322 = vmul.f32 %v2194, %v2194
    %v2323 = vmul.f32 %v2195, %v2195
    %v2324 = vmul.f32 %v2196, %v2196
    %v2325 = vmul.f32 %v2197, %v2197
    %v2326 = vmul.f32 %v2198, %v2198
    %v2327 = vmul.f32 %v2199, %v2199
    %v2328 = vmul.f32 %v2200, %v2200
    %v2329 = vmul.f32 %v2201, %v2201
    %v2330 = vmul.f32 %v2202, %v2202
    %v2331 = vmul.f32 %v2203, %v2203
    %v2332 = vsel %vm401, %v2204, 0.0
    %2333 = vadd.xlane.f32.xlu0 %v2332
    %v2334 = vpop.xlane.xlu0 %2333
    %v2335 = vsel %vm401, %v2205, 0.0
    %2336 = vadd.xlane.f32.xlu0 %v2335
    %v2337 = vpop.xlane.xlu0 %2336
    %v2338 = vsel %vm401, %v2206, 0.0
    %2339 = vadd.xlane.f32.xlu0 %v2338
    %v2340 = vpop.xlane.xlu0 %2339
    %v2341 = vsel %vm401, %v2207, 0.0
    %2342 = vadd.xlane.f32.xlu0 %v2341
    %v2343 = vpop.xlane.xlu0 %2342
    %v2344 = vsel %vm401, %v2208, 0.0
    %2345 = vadd.xlane.f32.xlu0 %v2344
    %v2346 = vpop.xlane.xlu0 %2345
    %v2347 = vsel %vm401, %v2209, 0.0
    %2348 = vadd.xlane.f32.xlu0 %v2347
    %v2349 = vpop.xlane.xlu0 %2348
    %v2350 = vsel %vm401, %v2210, 0.0
    %2351 = vadd.xlane.f32.xlu0 %v2350
    %v2352 = vpop.xlane.xlu0 %2351
    %v2353 = vsel %vm401, %v2211, 0.0
    %2354 = vadd.xlane.f32.xlu0 %v2353
    %v2355 = vpop.xlane.xlu0 %2354
    %v2356 = vsel %vm401, %v2212, 0.0
    %2357 = vadd.xlane.f32.xlu0 %v2356
    %v2358 = vpop.xlane.xlu0 %2357
    %v2359 = vsel %vm401, %v2213, 0.0
    %2360 = vadd.xlane.f32.xlu0 %v2359
    %v2361 = vpop.xlane.xlu0 %2360
    %v2362 = vsel %vm401, %v2214, 0.0
    %2363 = vadd.xlane.f32.xlu0 %v2362
    %v2364 = vpop.xlane.xlu0 %2363
    %v2365 = vsel %vm401, %v2215, 0.0
    %2366 = vadd.xlane.f32.xlu0 %v2365
    %v2367 = vpop.xlane.xlu0 %2366
    %v2368 = vsel %vm401, %v2216, 0.0
    %2369 = vadd.xlane.f32.xlu0 %v2368
    %v2370 = vpop.xlane.xlu0 %2369
    %v2371 = vsel %vm401, %v2217, 0.0
    %2372 = vadd.xlane.f32.xlu0 %v2371
    %v2373 = vpop.xlane.xlu0 %2372
    %v2374 = vsel %vm401, %v2218, 0.0
    %2375 = vadd.xlane.f32.xlu0 %v2374
    %v2376 = vpop.xlane.xlu0 %2375
    %v2377 = vsel %vm401, %v2219, 0.0
    %2378 = vadd.xlane.f32.xlu0 %v2377
    %v2379 = vpop.xlane.xlu0 %2378
    %v2380 = vsel %vm401, %v2220, 0.0
    %2381 = vadd.xlane.f32.xlu0 %v2380
    %v2382 = vpop.xlane.xlu0 %2381
    %v2383 = vsel %vm401, %v2221, 0.0
    %2384 = vadd.xlane.f32.xlu0 %v2383
    %v2385 = vpop.xlane.xlu0 %2384
    %v2386 = vsel %vm401, %v2222, 0.0
    %2387 = vadd.xlane.f32.xlu0 %v2386
    %v2388 = vpop.xlane.xlu0 %2387
    %v2389 = vsel %vm401, %v2223, 0.0
    %2390 = vadd.xlane.f32.xlu0 %v2389
    %v2391 = vpop.xlane.xlu0 %2390
    %v2392 = vsel %vm401, %v2224, 0.0
    %2393 = vadd.xlane.f32.xlu0 %v2392
    %v2394 = vpop.xlane.xlu0 %2393
    %v2395 = vsel %vm401, %v2225, 0.0
    %2396 = vadd.xlane.f32.xlu0 %v2395
    %v2397 = vpop.xlane.xlu0 %2396
    %v2398 = vsel %vm401, %v2226, 0.0
    %2399 = vadd.xlane.f32.xlu0 %v2398
    %v2400 = vpop.xlane.xlu0 %2399
    %v2401 = vsel %vm401, %v2227, 0.0
    %2402 = vadd.xlane.f32.xlu0 %v2401
    %v2403 = vpop.xlane.xlu0 %2402
    %v2404 = vsel %vm401, %v2228, 0.0
    %2405 = vadd.xlane.f32.xlu0 %v2404
    %v2406 = vpop.xlane.xlu0 %2405
    %v2407 = vsel %vm401, %v2229, 0.0
    %2408 = vadd.xlane.f32.xlu0 %v2407
    %v2409 = vpop.xlane.xlu0 %2408
    %v2410 = vsel %vm401, %v2230, 0.0
    %2411 = vadd.xlane.f32.xlu0 %v2410
    %v2412 = vpop.xlane.xlu0 %2411
    %v2413 = vsel %vm401, %v2231, 0.0
    %2414 = vadd.xlane.f32.xlu0 %v2413
    %v2415 = vpop.xlane.xlu0 %2414
    %v2416 = vsel %vm401, %v2232, 0.0
    %2417 = vadd.xlane.f32.xlu0 %v2416
    %v2418 = vpop.xlane.xlu0 %2417
    %v2419 = vsel %vm401, %v2233, 0.0
    %2420 = vadd.xlane.f32.xlu0 %v2419
    %v2421 = vpop.xlane.xlu0 %2420
    %v2422 = vsel %vm401, %v2234, 0.0
    %2423 = vadd.xlane.f32.xlu0 %v2422
    %v2424 = vpop.xlane.xlu0 %2423
    %v2425 = vsel %vm401, %v2235, 0.0
    %2426 = vadd.xlane.f32.xlu0 %v2425
    %v2427 = vpop.xlane.xlu0 %2426
    %v2428 = vsel %vm401, %v2236, 0.0
    %2429 = vadd.xlane.f32.xlu0 %v2428
    %v2430 = vpop.xlane.xlu0 %2429
    %v2431 = vsel %vm401, %v2237, 0.0
    %2432 = vadd.xlane.f32.xlu0 %v2431
    %v2433 = vpop.xlane.xlu0 %2432
    %v2434 = vsel %vm401, %v2238, 0.0
    %2435 = vadd.xlane.f32.xlu0 %v2434
    %v2436 = vpop.xlane.xlu0 %2435
    %v2437 = vsel %vm401, %v2239, 0.0
    %2438 = vadd.xlane.f32.xlu0 %v2437
    %v2439 = vpop.xlane.xlu0 %2438
    %v2440 = vsel %vm401, %v2240, 0.0
    %2441 = vadd.xlane.f32.xlu0 %v2440
    %v2442 = vpop.xlane.xlu0 %2441
    %v2443 = vsel %vm401, %v2241, 0.0
    %2444 = vadd.xlane.f32.xlu0 %v2443
    %v2445 = vpop.xlane.xlu0 %2444
    %v2446 = vsel %vm401, %v2242, 0.0
    %2447 = vadd.xlane.f32.xlu0 %v2446
    %v2448 = vpop.xlane.xlu0 %2447
    %v2449 = vsel %vm401, %v2243, 0.0
    %2450 = vadd.xlane.f32.xlu0 %v2449
    %v2451 = vpop.xlane.xlu0 %2450
    %v2452 = vsel %vm401, %v2244, 0.0
    %2453 = vadd.xlane.f32.xlu0 %v2452
    %v2454 = vpop.xlane.xlu0 %2453
    %v2455 = vsel %vm401, %v2245, 0.0
    %2456 = vadd.xlane.f32.xlu0 %v2455
    %v2457 = vpop.xlane.xlu0 %2456
    %v2458 = vsel %vm401, %v2246, 0.0
    %2459 = vadd.xlane.f32.xlu0 %v2458
    %v2460 = vpop.xlane.xlu0 %2459
    %v2461 = vsel %vm401, %v2247, 0.0
    %2462 = vadd.xlane.f32.xlu0 %v2461
    %v2463 = vpop.xlane.xlu0 %2462
    %v2464 = vsel %vm401, %v2248, 0.0
    %2465 = vadd.xlane.f32.xlu0 %v2464
    %v2466 = vpop.xlane.xlu0 %2465
    %v2467 = vsel %vm401, %v2249, 0.0
    %2468 = vadd.xlane.f32.xlu0 %v2467
    %v2469 = vpop.xlane.xlu0 %2468
    %v2470 = vsel %vm401, %v2250, 0.0
    %2471 = vadd.xlane.f32.xlu0 %v2470
    %v2472 = vpop.xlane.xlu0 %2471
    %v2473 = vsel %vm401, %v2251, 0.0
    %2474 = vadd.xlane.f32.xlu0 %v2473
    %v2475 = vpop.xlane.xlu0 %2474
    %v2476 = vsel %vm401, %v2252, 0.0
    %2477 = vadd.xlane.f32.xlu0 %v2476
    %v2478 = vpop.xlane.xlu0 %2477
    %v2479 = vsel %vm401, %v2253, 0.0
    %2480 = vadd.xlane.f32.xlu0 %v2479
    %v2481 = vpop.xlane.xlu0 %2480
    %v2482 = vsel %vm401, %v2254, 0.0
    %2483 = vadd.xlane.f32.xlu0 %v2482
    %v2484 = vpop.xlane.xlu0 %2483
    %v2485 = vsel %vm401, %v2255, 0.0
    %2486 = vadd.xlane.f32.xlu0 %v2485
    %v2487 = vpop.xlane.xlu0 %2486
    %v2488 = vsel %vm401, %v2256, 0.0
    %2489 = vadd.xlane.f32.xlu0 %v2488
    %v2490 = vpop.xlane.xlu0 %2489
    %v2491 = vsel %vm401, %v2257, 0.0
    %2492 = vadd.xlane.f32.xlu0 %v2491
    %v2493 = vpop.xlane.xlu0 %2492
    %v2494 = vsel %vm401, %v2258, 0.0
    %2495 = vadd.xlane.f32.xlu0 %v2494
    %v2496 = vpop.xlane.xlu0 %2495
    %v2497 = vsel %vm401, %v2259, 0.0
    %2498 = vadd.xlane.f32.xlu0 %v2497
    %v2499 = vpop.xlane.xlu0 %2498
    %v2500 = vsel %vm401, %v2260, 0.0
    %2501 = vadd.xlane.f32.xlu0 %v2500
    %v2502 = vpop.xlane.xlu0 %2501
    %v2503 = vsel %vm401, %v2261, 0.0
    %2504 = vadd.xlane.f32.xlu0 %v2503
    %v2505 = vpop.xlane.xlu0 %2504
    %v2506 = vsel %vm401, %v2262, 0.0
    %2507 = vadd.xlane.f32.xlu0 %v2506
    %v2508 = vpop.xlane.xlu0 %2507
    %v2509 = vsel %vm401, %v2263, 0.0
    %2510 = vadd.xlane.f32.xlu0 %v2509
    %v2511 = vpop.xlane.xlu0 %2510
    %v2512 = vsel %vm401, %v2264, 0.0
    %2513 = vadd.xlane.f32.xlu0 %v2512
    %v2514 = vpop.xlane.xlu0 %2513
    %v2515 = vsel %vm401, %v2265, 0.0
    %2516 = vadd.xlane.f32.xlu0 %v2515
    %v2517 = vpop.xlane.xlu0 %2516
    %v2518 = vsel %vm401, %v2266, 0.0
    %2519 = vadd.xlane.f32.xlu0 %v2518
    %v2520 = vpop.xlane.xlu0 %2519
    %v2521 = vsel %vm401, %v2267, 0.0
    %2522 = vadd.xlane.f32.xlu0 %v2521
    %v2523 = vpop.xlane.xlu0 %2522
    %v2524 = vsel %vm401, %v2268, 0.0
    %2525 = vadd.xlane.f32.xlu0 %v2524
    %v2526 = vpop.xlane.xlu0 %2525
    %v2527 = vsel %vm401, %v2269, 0.0
    %2528 = vadd.xlane.f32.xlu0 %v2527
    %v2529 = vpop.xlane.xlu0 %2528
    %v2530 = vsel %vm401, %v2270, 0.0
    %2531 = vadd.xlane.f32.xlu0 %v2530
    %v2532 = vpop.xlane.xlu0 %2531
    %v2533 = vsel %vm401, %v2271, 0.0
    %2534 = vadd.xlane.f32.xlu0 %v2533
    %v2535 = vpop.xlane.xlu0 %2534
    %v2536 = vsel %vm401, %v2272, 0.0
    %2537 = vadd.xlane.f32.xlu0 %v2536
    %v2538 = vpop.xlane.xlu0 %2537
    %v2539 = vsel %vm401, %v2273, 0.0
    %2540 = vadd.xlane.f32.xlu0 %v2539
    %v2541 = vpop.xlane.xlu0 %2540
    %v2542 = vsel %vm401, %v2274, 0.0
    %2543 = vadd.xlane.f32.xlu0 %v2542
    %v2544 = vpop.xlane.xlu0 %2543
    %v2545 = vsel %vm401, %v2275, 0.0
    %2546 = vadd.xlane.f32.xlu0 %v2545
    %v2547 = vpop.xlane.xlu0 %2546
    %v2548 = vsel %vm401, %v2276, 0.0
    %2549 = vadd.xlane.f32.xlu0 %v2548
    %v2550 = vpop.xlane.xlu0 %2549
    %v2551 = vsel %vm401, %v2277, 0.0
    %2552 = vadd.xlane.f32.xlu0 %v2551
    %v2553 = vpop.xlane.xlu0 %2552
    %v2554 = vsel %vm401, %v2278, 0.0
    %2555 = vadd.xlane.f32.xlu0 %v2554
    %v2556 = vpop.xlane.xlu0 %2555
    %v2557 = vsel %vm401, %v2279, 0.0
    %2558 = vadd.xlane.f32.xlu0 %v2557
    %v2559 = vpop.xlane.xlu0 %2558
    %v2560 = vsel %vm401, %v2280, 0.0
    %2561 = vadd.xlane.f32.xlu0 %v2560
    %v2562 = vpop.xlane.xlu0 %2561
    %v2563 = vsel %vm401, %v2281, 0.0
    %2564 = vadd.xlane.f32.xlu0 %v2563
    %v2565 = vpop.xlane.xlu0 %2564
    %v2566 = vsel %vm401, %v2282, 0.0
    %2567 = vadd.xlane.f32.xlu0 %v2566
    %v2568 = vpop.xlane.xlu0 %2567
    %v2569 = vsel %vm401, %v2283, 0.0
    %2570 = vadd.xlane.f32.xlu0 %v2569
    %v2571 = vpop.xlane.xlu0 %2570
    %v2572 = vsel %vm401, %v2284, 0.0
    %2573 = vadd.xlane.f32.xlu0 %v2572
    %v2574 = vpop.xlane.xlu0 %2573
    %v2575 = vsel %vm401, %v2285, 0.0
    %2576 = vadd.xlane.f32.xlu0 %v2575
    %v2577 = vpop.xlane.xlu0 %2576
    %v2578 = vsel %vm401, %v2286, 0.0
    %2579 = vadd.xlane.f32.xlu0 %v2578
    %v2580 = vpop.xlane.xlu0 %2579
    %v2581 = vsel %vm401, %v2287, 0.0
    %2582 = vadd.xlane.f32.xlu0 %v2581
    %v2583 = vpop.xlane.xlu0 %2582
    %v2584 = vsel %vm401, %v2288, 0.0
    %2585 = vadd.xlane.f32.xlu0 %v2584
    %v2586 = vpop.xlane.xlu0 %2585
    %v2587 = vsel %vm401, %v2289, 0.0
    %2588 = vadd.xlane.f32.xlu0 %v2587
    %v2589 = vpop.xlane.xlu0 %2588
    %v2590 = vsel %vm401, %v2290, 0.0
    %2591 = vadd.xlane.f32.xlu0 %v2590
    %v2592 = vpop.xlane.xlu0 %2591
    %v2593 = vsel %vm401, %v2291, 0.0
    %2594 = vadd.xlane.f32.xlu0 %v2593
    %v2595 = vpop.xlane.xlu0 %2594
    %v2596 = vsel %vm401, %v2292, 0.0
    %2597 = vadd.xlane.f32.xlu0 %v2596
    %v2598 = vpop.xlane.xlu0 %2597
    %v2599 = vsel %vm401, %v2293, 0.0
    %2600 = vadd.xlane.f32.xlu0 %v2599
    %v2601 = vpop.xlane.xlu0 %2600
    %v2602 = vsel %vm401, %v2294, 0.0
    %2603 = vadd.xlane.f32.xlu0 %v2602
    %v2604 = vpop.xlane.xlu0 %2603
    %v2605 = vsel %vm401, %v2295, 0.0
    %2606 = vadd.xlane.f32.xlu0 %v2605
    %v2607 = vpop.xlane.xlu0 %2606
    %v2608 = vsel %vm401, %v2296, 0.0
    %2609 = vadd.xlane.f32.xlu0 %v2608
    %v2610 = vpop.xlane.xlu0 %2609
    %v2611 = vsel %vm401, %v2297, 0.0
    %2612 = vadd.xlane.f32.xlu0 %v2611
    %v2613 = vpop.xlane.xlu0 %2612
    %v2614 = vsel %vm401, %v2298, 0.0
    %2615 = vadd.xlane.f32.xlu0 %v2614
    %v2616 = vpop.xlane.xlu0 %2615
    %v2617 = vsel %vm401, %v2299, 0.0
    %2618 = vadd.xlane.f32.xlu0 %v2617
    %v2619 = vpop.xlane.xlu0 %2618
    %v2620 = vsel %vm401, %v2300, 0.0
    %2621 = vadd.xlane.f32.xlu0 %v2620
    %v2622 = vpop.xlane.xlu0 %2621
    %v2623 = vsel %vm401, %v2301, 0.0
    %2624 = vadd.xlane.f32.xlu0 %v2623
    %v2625 = vpop.xlane.xlu0 %2624
    %v2626 = vsel %vm401, %v2302, 0.0
    %2627 = vadd.xlane.f32.xlu0 %v2626
    %v2628 = vpop.xlane.xlu0 %2627
    %v2629 = vsel %vm401, %v2303, 0.0
    %2630 = vadd.xlane.f32.xlu0 %v2629
    %v2631 = vpop.xlane.xlu0 %2630
    %v2632 = vsel %vm401, %v2304, 0.0
    %2633 = vadd.xlane.f32.xlu0 %v2632
    %v2634 = vpop.xlane.xlu0 %2633
    %v2635 = vsel %vm401, %v2305, 0.0
    %2636 = vadd.xlane.f32.xlu0 %v2635
    %v2637 = vpop.xlane.xlu0 %2636
    %v2638 = vsel %vm401, %v2306, 0.0
    %2639 = vadd.xlane.f32.xlu0 %v2638
    %v2640 = vpop.xlane.xlu0 %2639
    %v2641 = vsel %vm401, %v2307, 0.0
    %2642 = vadd.xlane.f32.xlu0 %v2641
    %v2643 = vpop.xlane.xlu0 %2642
    %v2644 = vsel %vm401, %v2308, 0.0
    %2645 = vadd.xlane.f32.xlu0 %v2644
    %v2646 = vpop.xlane.xlu0 %2645
    %v2647 = vsel %vm401, %v2309, 0.0
    %2648 = vadd.xlane.f32.xlu0 %v2647
    %v2649 = vpop.xlane.xlu0 %2648
    %v2650 = vsel %vm401, %v2310, 0.0
    %2651 = vadd.xlane.f32.xlu0 %v2650
    %v2652 = vpop.xlane.xlu0 %2651
    %v2653 = vsel %vm401, %v2311, 0.0
    %2654 = vadd.xlane.f32.xlu0 %v2653
    %v2655 = vpop.xlane.xlu0 %2654
    %v2656 = vsel %vm401, %v2312, 0.0
    %2657 = vadd.xlane.f32.xlu0 %v2656
    %v2658 = vpop.xlane.xlu0 %2657
    %v2659 = vsel %vm401, %v2313, 0.0
    %2660 = vadd.xlane.f32.xlu0 %v2659
    %v2661 = vpop.xlane.xlu0 %2660
    %v2662 = vsel %vm401, %v2314, 0.0
    %2663 = vadd.xlane.f32.xlu0 %v2662
    %v2664 = vpop.xlane.xlu0 %2663
    %v2665 = vsel %vm401, %v2315, 0.0
    %2666 = vadd.xlane.f32.xlu0 %v2665
    %v2667 = vpop.xlane.xlu0 %2666
    %v2668 = vsel %vm401, %v2316, 0.0
    %2669 = vadd.xlane.f32.xlu0 %v2668
    %v2670 = vpop.xlane.xlu0 %2669
    %v2671 = vsel %vm401, %v2317, 0.0
    %2672 = vadd.xlane.f32.xlu0 %v2671
    %v2673 = vpop.xlane.xlu0 %2672
    %v2674 = vsel %vm401, %v2318, 0.0
    %2675 = vadd.xlane.f32.xlu0 %v2674
    %v2676 = vpop.xlane.xlu0 %2675
    %v2677 = vsel %vm401, %v2319, 0.0
    %2678 = vadd.xlane.f32.xlu0 %v2677
    %v2679 = vpop.xlane.xlu0 %2678
    %v2680 = vsel %vm401, %v2320, 0.0
    %2681 = vadd.xlane.f32.xlu0 %v2680
    %v2682 = vpop.xlane.xlu0 %2681
    %v2683 = vsel %vm401, %v2321, 0.0
    %2684 = vadd.xlane.f32.xlu0 %v2683
    %v2685 = vpop.xlane.xlu0 %2684
    %v2686 = vsel %vm401, %v2322, 0.0
    %2687 = vadd.xlane.f32.xlu0 %v2686
    %v2688 = vpop.xlane.xlu0 %2687
    %v2689 = vsel %vm401, %v2323, 0.0
    %2690 = vadd.xlane.f32.xlu0 %v2689
    %v2691 = vpop.xlane.xlu0 %2690
    %v2692 = vsel %vm401, %v2324, 0.0
    %2693 = vadd.xlane.f32.xlu0 %v2692
    %v2694 = vpop.xlane.xlu0 %2693
    %v2695 = vsel %vm401, %v2325, 0.0
    %2696 = vadd.xlane.f32.xlu0 %v2695
    %v2697 = vpop.xlane.xlu0 %2696
    %v2698 = vsel %vm401, %v2326, 0.0
    %2699 = vadd.xlane.f32.xlu0 %v2698
    %v2700 = vpop.xlane.xlu0 %2699
    %v2701 = vsel %vm401, %v2327, 0.0
    %2702 = vadd.xlane.f32.xlu0 %v2701
    %v2703 = vpop.xlane.xlu0 %2702
    %v2704 = vsel %vm401, %v2328, 0.0
    %2705 = vadd.xlane.f32.xlu0 %v2704
    %v2706 = vpop.xlane.xlu0 %2705
    %v2707 = vsel %vm401, %v2329, 0.0
    %2708 = vadd.xlane.f32.xlu0 %v2707
    %v2709 = vpop.xlane.xlu0 %2708
    %v2710 = vsel %vm401, %v2330, 0.0
    %2711 = vadd.xlane.f32.xlu0 %v2710
    %v2712 = vpop.xlane.xlu0 %2711
    %v2713 = vsel %vm401, %v2331, 0.0
    %2714 = vadd.xlane.f32.xlu0 %v2713
    %v2715 = vpop.xlane.xlu0 %2714
    %vm2716 = vcmp.lt.f32.partialorder %v2334, %v1815
    %vm2717 = vcmp.lt.f32.partialorder %v2337, %v1816
    %vm2718 = vcmp.lt.f32.partialorder %v2340, %v1817
    %vm2719 = vcmp.lt.f32.partialorder %v2343, %v1818
    %vm2720 = vcmp.lt.f32.partialorder %v2346, %v1819
    %vm2721 = vcmp.lt.f32.partialorder %v2349, %v1820
    %vm2722 = vcmp.lt.f32.partialorder %v2352, %v1821
    %vm2723 = vcmp.lt.f32.partialorder %v2355, %v1822
    %vm2724 = vcmp.lt.f32.partialorder %v2358, %v1823
    %vm2725 = vcmp.lt.f32.partialorder %v2361, %v1824
    %vm2726 = vcmp.lt.f32.partialorder %v2364, %v1825
    %vm2727 = vcmp.lt.f32.partialorder %v2367, %v1826
    %vm2728 = vcmp.lt.f32.partialorder %v2370, %v1827
    %vm2729 = vcmp.lt.f32.partialorder %v2373, %v1828
    %vm2730 = vcmp.lt.f32.partialorder %v2376, %v1829
    %vm2731 = vcmp.lt.f32.partialorder %v2379, %v1830
    %vm2732 = vcmp.lt.f32.partialorder %v2382, %v1831
    %vm2733 = vcmp.lt.f32.partialorder %v2385, %v1832
    %vm2734 = vcmp.lt.f32.partialorder %v2388, %v1833
    %vm2735 = vcmp.lt.f32.partialorder %v2391, %v1834
    %vm2736 = vcmp.lt.f32.partialorder %v2394, %v1835
    %vm2737 = vcmp.lt.f32.partialorder %v2397, %v1836
    %vm2738 = vcmp.lt.f32.partialorder %v2400, %v1837
    %vm2739 = vcmp.lt.f32.partialorder %v2403, %v1838
    %vm2740 = vcmp.lt.f32.partialorder %v2406, %v1839
    %vm2741 = vcmp.lt.f32.partialorder %v2409, %v1840
    %vm2742 = vcmp.lt.f32.partialorder %v2412, %v1841
    %vm2743 = vcmp.lt.f32.partialorder %v2415, %v1842
    %vm2744 = vcmp.lt.f32.partialorder %v2418, %v1843
    %vm2745 = vcmp.lt.f32.partialorder %v2421, %v1844
    %vm2746 = vcmp.lt.f32.partialorder %v2424, %v1845
    %vm2747 = vcmp.lt.f32.partialorder %v2427, %v1846
    %vm2748 = vcmp.lt.f32.partialorder %v2430, %v1847
    %vm2749 = vcmp.lt.f32.partialorder %v2433, %v1848
    %vm2750 = vcmp.lt.f32.partialorder %v2436, %v1849
    %vm2751 = vcmp.lt.f32.partialorder %v2439, %v1850
    %vm2752 = vcmp.lt.f32.partialorder %v2442, %v1851
    %vm2753 = vcmp.lt.f32.partialorder %v2445, %v1852
    %vm2754 = vcmp.lt.f32.partialorder %v2448, %v1853
    %vm2755 = vcmp.lt.f32.partialorder %v2451, %v1854
    %vm2756 = vcmp.lt.f32.partialorder %v2454, %v1855
    %vm2757 = vcmp.lt.f32.partialorder %v2457, %v1856
    %vm2758 = vcmp.lt.f32.partialorder %v2460, %v1857
    %vm2759 = vcmp.lt.f32.partialorder %v2463, %v1858
    %vm2760 = vcmp.lt.f32.partialorder %v2466, %v1859
    %vm2761 = vcmp.lt.f32.partialorder %v2469, %v1860
    %vm2762 = vcmp.lt.f32.partialorder %v2472, %v1861
    %vm2763 = vcmp.lt.f32.partialorder %v2475, %v1862
    %vm2764 = vcmp.lt.f32.partialorder %v2478, %v1863
    %vm2765 = vcmp.lt.f32.partialorder %v2481, %v1864
    %vm2766 = vcmp.lt.f32.partialorder %v2484, %v1865
    %vm2767 = vcmp.lt.f32.partialorder %v2487, %v1866
    %vm2768 = vcmp.lt.f32.partialorder %v2490, %v1867
    %vm2769 = vcmp.lt.f32.partialorder %v2493, %v1868
    %vm2770 = vcmp.lt.f32.partialorder %v2496, %v1869
    %vm2771 = vcmp.lt.f32.partialorder %v2499, %v1870
    %vm2772 = vcmp.lt.f32.partialorder %v2502, %v1871
    %vm2773 = vcmp.lt.f32.partialorder %v2505, %v1872
    %vm2774 = vcmp.lt.f32.partialorder %v2508, %v1873
    %vm2775 = vcmp.lt.f32.partialorder %v2511, %v1874
    %vm2776 = vcmp.lt.f32.partialorder %v2514, %v1875
    %vm2777 = vcmp.lt.f32.partialorder %v2517, %v1876
    %vm2778 = vcmp.lt.f32.partialorder %v2520, %v1877
    %vm2779 = vcmp.lt.f32.partialorder %v2523, %v1878
    %vm2780 = vcmp.lt.f32.partialorder %v2526, %v1879
    %vm2781 = vcmp.lt.f32.partialorder %v2529, %v1880
    %vm2782 = vcmp.lt.f32.partialorder %v2532, %v1881
    %vm2783 = vcmp.lt.f32.partialorder %v2535, %v1882
    %vm2784 = vcmp.lt.f32.partialorder %v2538, %v1883
    %vm2785 = vcmp.lt.f32.partialorder %v2541, %v1884
    %vm2786 = vcmp.lt.f32.partialorder %v2544, %v1885
    %vm2787 = vcmp.lt.f32.partialorder %v2547, %v1886
    %vm2788 = vcmp.lt.f32.partialorder %v2550, %v1887
    %vm2789 = vcmp.lt.f32.partialorder %v2553, %v1888
    %vm2790 = vcmp.lt.f32.partialorder %v2556, %v1889
    %vm2791 = vcmp.lt.f32.partialorder %v2559, %v1890
    %vm2792 = vcmp.lt.f32.partialorder %v2562, %v1891
    %vm2793 = vcmp.lt.f32.partialorder %v2565, %v1892
    %vm2794 = vcmp.lt.f32.partialorder %v2568, %v1893
    %vm2795 = vcmp.lt.f32.partialorder %v2571, %v1894
    %vm2796 = vcmp.lt.f32.partialorder %v2574, %v1895
    %vm2797 = vcmp.lt.f32.partialorder %v2577, %v1896
    %vm2798 = vcmp.lt.f32.partialorder %v2580, %v1897
    %vm2799 = vcmp.lt.f32.partialorder %v2583, %v1898
    %vm2800 = vcmp.lt.f32.partialorder %v2586, %v1899
    %vm2801 = vcmp.lt.f32.partialorder %v2589, %v1900
    %vm2802 = vcmp.lt.f32.partialorder %v2592, %v1901
    %vm2803 = vcmp.lt.f32.partialorder %v2595, %v1902
    %vm2804 = vcmp.lt.f32.partialorder %v2598, %v1903
    %vm2805 = vcmp.lt.f32.partialorder %v2601, %v1904
    %vm2806 = vcmp.lt.f32.partialorder %v2604, %v1905
    %vm2807 = vcmp.lt.f32.partialorder %v2607, %v1906
    %vm2808 = vcmp.lt.f32.partialorder %v2610, %v1907
    %vm2809 = vcmp.lt.f32.partialorder %v2613, %v1908
    %vm2810 = vcmp.lt.f32.partialorder %v2616, %v1909
    %vm2811 = vcmp.lt.f32.partialorder %v2619, %v1910
    %vm2812 = vcmp.lt.f32.partialorder %v2622, %v1911
    %vm2813 = vcmp.lt.f32.partialorder %v2625, %v1912
    %vm2814 = vcmp.lt.f32.partialorder %v2628, %v1913
    %vm2815 = vcmp.lt.f32.partialorder %v2631, %v1914
    %vm2816 = vcmp.lt.f32.partialorder %v2634, %v1915
    %vm2817 = vcmp.lt.f32.partialorder %v2637, %v1916
    %vm2818 = vcmp.lt.f32.partialorder %v2640, %v1917
    %vm2819 = vcmp.lt.f32.partialorder %v2643, %v1918
    %vm2820 = vcmp.lt.f32.partialorder %v2646, %v1919
    %vm2821 = vcmp.lt.f32.partialorder %v2649, %v1920
    %vm2822 = vcmp.lt.f32.partialorder %v2652, %v1921
    %vm2823 = vcmp.lt.f32.partialorder %v2655, %v1922
    %vm2824 = vcmp.lt.f32.partialorder %v2658, %v1923
    %vm2825 = vcmp.lt.f32.partialorder %v2661, %v1924
    %vm2826 = vcmp.lt.f32.partialorder %v2664, %v1925
    %vm2827 = vcmp.lt.f32.partialorder %v2667, %v1926
    %vm2828 = vcmp.lt.f32.partialorder %v2670, %v1927
    %vm2829 = vcmp.lt.f32.partialorder %v2673, %v1928
    %vm2830 = vcmp.lt.f32.partialorder %v2676, %v1929
    %vm2831 = vcmp.lt.f32.partialorder %v2679, %v1930
    %vm2832 = vcmp.lt.f32.partialorder %v2682, %v1931
    %vm2833 = vcmp.lt.f32.partialorder %v2685, %v1932
    %vm2834 = vcmp.lt.f32.partialorder %v2688, %v1933
    %vm2835 = vcmp.lt.f32.partialorder %v2691, %v1934
    %vm2836 = vcmp.lt.f32.partialorder %v2694, %v1935
    %vm2837 = vcmp.lt.f32.partialorder %v2697, %v1936
    %vm2838 = vcmp.lt.f32.partialorder %v2700, %v1937
    %vm2839 = vcmp.lt.f32.partialorder %v2703, %v1938
    %vm2840 = vcmp.lt.f32.partialorder %v2706, %v1939
    %vm2841 = vcmp.lt.f32.partialorder %v2709, %v1940
    %vm2842 = vcmp.lt.f32.partialorder %v2712, %v1941
    %vm2843 = vcmp.lt.f32.partialorder %v2715, %v1942
    %v2844 = vsel %vm2716, %v2334, %v1815
    %v2845 = vsel %vm2717, %v2337, %v1816
    %v2846 = vsel %vm2718, %v2340, %v1817
    %v2847 = vsel %vm2719, %v2343, %v1818
    %v2848 = vsel %vm2720, %v2346, %v1819
    %v2849 = vsel %vm2721, %v2349, %v1820
    %v2850 = vsel %vm2722, %v2352, %v1821
    %v2851 = vsel %vm2723, %v2355, %v1822
    %v2852 = vsel %vm2724, %v2358, %v1823
    %v2853 = vsel %vm2725, %v2361, %v1824
    %v2854 = vsel %vm2726, %v2364, %v1825
    %v2855 = vsel %vm2727, %v2367, %v1826
    %v2856 = vsel %vm2728, %v2370, %v1827
    %v2857 = vsel %vm2729, %v2373, %v1828
    %v2858 = vsel %vm2730, %v2376, %v1829
    %v2859 = vsel %vm2731, %v2379, %v1830
    %v2860 = vsel %vm2732, %v2382, %v1831
    %v2861 = vsel %vm2733, %v2385, %v1832
    %v2862 = vsel %vm2734, %v2388, %v1833
    %v2863 = vsel %vm2735, %v2391, %v1834
    %v2864 = vsel %vm2736, %v2394, %v1835
    %v2865 = vsel %vm2737, %v2397, %v1836
    %v2866 = vsel %vm2738, %v2400, %v1837
    %v2867 = vsel %vm2739, %v2403, %v1838
    %v2868 = vsel %vm2740, %v2406, %v1839
    %v2869 = vsel %vm2741, %v2409, %v1840
    %v2870 = vsel %vm2742, %v2412, %v1841
    %v2871 = vsel %vm2743, %v2415, %v1842
    %v2872 = vsel %vm2744, %v2418, %v1843
    %v2873 = vsel %vm2745, %v2421, %v1844
    %v2874 = vsel %vm2746, %v2424, %v1845
    %v2875 = vsel %vm2747, %v2427, %v1846
    %v2876 = vsel %vm2748, %v2430, %v1847
    %v2877 = vsel %vm2749, %v2433, %v1848
    %v2878 = vsel %vm2750, %v2436, %v1849
    %v2879 = vsel %vm2751, %v2439, %v1850
    %v2880 = vsel %vm2752, %v2442, %v1851
    %v2881 = vsel %vm2753, %v2445, %v1852
    %v2882 = vsel %vm2754, %v2448, %v1853
    %v2883 = vsel %vm2755, %v2451, %v1854
    %v2884 = vsel %vm2756, %v2454, %v1855
    %v2885 = vsel %vm2757, %v2457, %v1856
    %v2886 = vsel %vm2758, %v2460, %v1857
    %v2887 = vsel %vm2759, %v2463, %v1858
    %v2888 = vsel %vm2760, %v2466, %v1859
    %v2889 = vsel %vm2761, %v2469, %v1860
    %v2890 = vsel %vm2762, %v2472, %v1861
    %v2891 = vsel %vm2763, %v2475, %v1862
    %v2892 = vsel %vm2764, %v2478, %v1863
    %v2893 = vsel %vm2765, %v2481, %v1864
    %v2894 = vsel %vm2766, %v2484, %v1865
    %v2895 = vsel %vm2767, %v2487, %v1866
    %v2896 = vsel %vm2768, %v2490, %v1867
    %v2897 = vsel %vm2769, %v2493, %v1868
    %v2898 = vsel %vm2770, %v2496, %v1869
    %v2899 = vsel %vm2771, %v2499, %v1870
    %v2900 = vsel %vm2772, %v2502, %v1871
    %v2901 = vsel %vm2773, %v2505, %v1872
    %v2902 = vsel %vm2774, %v2508, %v1873
    %v2903 = vsel %vm2775, %v2511, %v1874
    %v2904 = vsel %vm2776, %v2514, %v1875
    %v2905 = vsel %vm2777, %v2517, %v1876
    %v2906 = vsel %vm2778, %v2520, %v1877
    %v2907 = vsel %vm2779, %v2523, %v1878
    %v2908 = vsel %vm2780, %v2526, %v1879
    %v2909 = vsel %vm2781, %v2529, %v1880
    %v2910 = vsel %vm2782, %v2532, %v1881
    %v2911 = vsel %vm2783, %v2535, %v1882
    %v2912 = vsel %vm2784, %v2538, %v1883
    %v2913 = vsel %vm2785, %v2541, %v1884
    %v2914 = vsel %vm2786, %v2544, %v1885
    %v2915 = vsel %vm2787, %v2547, %v1886
    %v2916 = vsel %vm2788, %v2550, %v1887
    %v2917 = vsel %vm2789, %v2553, %v1888
    %v2918 = vsel %vm2790, %v2556, %v1889
    %v2919 = vsel %vm2791, %v2559, %v1890
    %v2920 = vsel %vm2792, %v2562, %v1891
    %v2921 = vsel %vm2793, %v2565, %v1892
    %v2922 = vsel %vm2794, %v2568, %v1893
    %v2923 = vsel %vm2795, %v2571, %v1894
    %v2924 = vsel %vm2796, %v2574, %v1895
    %v2925 = vsel %vm2797, %v2577, %v1896
    %v2926 = vsel %vm2798, %v2580, %v1897
    %v2927 = vsel %vm2799, %v2583, %v1898
    %v2928 = vsel %vm2800, %v2586, %v1899
    %v2929 = vsel %vm2801, %v2589, %v1900
    %v2930 = vsel %vm2802, %v2592, %v1901
    %v2931 = vsel %vm2803, %v2595, %v1902
    %v2932 = vsel %vm2804, %v2598, %v1903
    %v2933 = vsel %vm2805, %v2601, %v1904
    %v2934 = vsel %vm2806, %v2604, %v1905
    %v2935 = vsel %vm2807, %v2607, %v1906
    %v2936 = vsel %vm2808, %v2610, %v1907
    %v2937 = vsel %vm2809, %v2613, %v1908
    %v2938 = vsel %vm2810, %v2616, %v1909
    %v2939 = vsel %vm2811, %v2619, %v1910
    %v2940 = vsel %vm2812, %v2622, %v1911
    %v2941 = vsel %vm2813, %v2625, %v1912
    %v2942 = vsel %vm2814, %v2628, %v1913
    %v2943 = vsel %vm2815, %v2631, %v1914
    %v2944 = vsel %vm2816, %v2634, %v1915
    %v2945 = vsel %vm2817, %v2637, %v1916
    %v2946 = vsel %vm2818, %v2640, %v1917
    %v2947 = vsel %vm2819, %v2643, %v1918
    %v2948 = vsel %vm2820, %v2646, %v1919
    %v2949 = vsel %vm2821, %v2649, %v1920
    %v2950 = vsel %vm2822, %v2652, %v1921
    %v2951 = vsel %vm2823, %v2655, %v1922
    %v2952 = vsel %vm2824, %v2658, %v1923
    %v2953 = vsel %vm2825, %v2661, %v1924
    %v2954 = vsel %vm2826, %v2664, %v1925
    %v2955 = vsel %vm2827, %v2667, %v1926
    %v2956 = vsel %vm2828, %v2670, %v1927
    %v2957 = vsel %vm2829, %v2673, %v1928
    %v2958 = vsel %vm2830, %v2676, %v1929
    %v2959 = vsel %vm2831, %v2679, %v1930
    %v2960 = vsel %vm2832, %v2682, %v1931
    %v2961 = vsel %vm2833, %v2685, %v1932
    %v2962 = vsel %vm2834, %v2688, %v1933
    %v2963 = vsel %vm2835, %v2691, %v1934
    %v2964 = vsel %vm2836, %v2694, %v1935
    %v2965 = vsel %vm2837, %v2697, %v1936
    %v2966 = vsel %vm2838, %v2700, %v1937
    %v2967 = vsel %vm2839, %v2703, %v1938
    %v2968 = vsel %vm2840, %v2706, %v1939
    %v2969 = vsel %vm2841, %v2709, %v1940
    %v2970 = vsel %vm2842, %v2712, %v1941
    %v2971 = vsel %vm2843, %v2715, %v1942
    %v2972 = vsel %vm2716, 2, %v1943
    %v2973 = vsel %vm2717, 2, %v1944
    %v2974 = vsel %vm2718, 2, %v1945
    %v2975 = vsel %vm2719, 2, %v1946
    %v2976 = vsel %vm2720, 2, %v1947
    %v2977 = vsel %vm2721, 2, %v1948
    %v2978 = vsel %vm2722, 2, %v1949
    %v2979 = vsel %vm2723, 2, %v1950
    %v2980 = vsel %vm2724, 2, %v1951
    %v2981 = vsel %vm2725, 2, %v1952
    %v2982 = vsel %vm2726, 2, %v1953
    %v2983 = vsel %vm2727, 2, %v1954
    %v2984 = vsel %vm2728, 2, %v1955
    %v2985 = vsel %vm2729, 2, %v1956
    %v2986 = vsel %vm2730, 2, %v1957
    %v2987 = vsel %vm2731, 2, %v1958
    %v2988 = vsel %vm2732, 2, %v1959
    %v2989 = vsel %vm2733, 2, %v1960
    %v2990 = vsel %vm2734, 2, %v1961
    %v2991 = vsel %vm2735, 2, %v1962
    %v2992 = vsel %vm2736, 2, %v1963
    %v2993 = vsel %vm2737, 2, %v1964
    %v2994 = vsel %vm2738, 2, %v1965
    %v2995 = vsel %vm2739, 2, %v1966
    %v2996 = vsel %vm2740, 2, %v1967
    %v2997 = vsel %vm2741, 2, %v1968
    %v2998 = vsel %vm2742, 2, %v1969
    %v2999 = vsel %vm2743, 2, %v1970
    %v3000 = vsel %vm2744, 2, %v1971
    %v3001 = vsel %vm2745, 2, %v1972
    %v3002 = vsel %vm2746, 2, %v1973
    %v3003 = vsel %vm2747, 2, %v1974
    %v3004 = vsel %vm2748, 2, %v1975
    %v3005 = vsel %vm2749, 2, %v1976
    %v3006 = vsel %vm2750, 2, %v1977
    %v3007 = vsel %vm2751, 2, %v1978
    %v3008 = vsel %vm2752, 2, %v1979
    %v3009 = vsel %vm2753, 2, %v1980
    %v3010 = vsel %vm2754, 2, %v1981
    %v3011 = vsel %vm2755, 2, %v1982
    %v3012 = vsel %vm2756, 2, %v1983
    %v3013 = vsel %vm2757, 2, %v1984
    %v3014 = vsel %vm2758, 2, %v1985
    %v3015 = vsel %vm2759, 2, %v1986
    %v3016 = vsel %vm2760, 2, %v1987
    %v3017 = vsel %vm2761, 2, %v1988
    %v3018 = vsel %vm2762, 2, %v1989
    %v3019 = vsel %vm2763, 2, %v1990
    %v3020 = vsel %vm2764, 2, %v1991
    %v3021 = vsel %vm2765, 2, %v1992
    %v3022 = vsel %vm2766, 2, %v1993
    %v3023 = vsel %vm2767, 2, %v1994
    %v3024 = vsel %vm2768, 2, %v1995
    %v3025 = vsel %vm2769, 2, %v1996
    %v3026 = vsel %vm2770, 2, %v1997
    %v3027 = vsel %vm2771, 2, %v1998
    %v3028 = vsel %vm2772, 2, %v1999
    %v3029 = vsel %vm2773, 2, %v2000
    %v3030 = vsel %vm2774, 2, %v2001
    %v3031 = vsel %vm2775, 2, %v2002
    %v3032 = vsel %vm2776, 2, %v2003
    %v3033 = vsel %vm2777, 2, %v2004
    %v3034 = vsel %vm2778, 2, %v2005
    %v3035 = vsel %vm2779, 2, %v2006
    %v3036 = vsel %vm2780, 2, %v2007
    %v3037 = vsel %vm2781, 2, %v2008
    %v3038 = vsel %vm2782, 2, %v2009
    %v3039 = vsel %vm2783, 2, %v2010
    %v3040 = vsel %vm2784, 2, %v2011
    %v3041 = vsel %vm2785, 2, %v2012
    %v3042 = vsel %vm2786, 2, %v2013
    %v3043 = vsel %vm2787, 2, %v2014
    %v3044 = vsel %vm2788, 2, %v2015
    %v3045 = vsel %vm2789, 2, %v2016
    %v3046 = vsel %vm2790, 2, %v2017
    %v3047 = vsel %vm2791, 2, %v2018
    %v3048 = vsel %vm2792, 2, %v2019
    %v3049 = vsel %vm2793, 2, %v2020
    %v3050 = vsel %vm2794, 2, %v2021
    %v3051 = vsel %vm2795, 2, %v2022
    %v3052 = vsel %vm2796, 2, %v2023
    %v3053 = vsel %vm2797, 2, %v2024
    %v3054 = vsel %vm2798, 2, %v2025
    %v3055 = vsel %vm2799, 2, %v2026
    %v3056 = vsel %vm2800, 2, %v2027
    %v3057 = vsel %vm2801, 2, %v2028
    %v3058 = vsel %vm2802, 2, %v2029
    %v3059 = vsel %vm2803, 2, %v2030
    %v3060 = vsel %vm2804, 2, %v2031
    %v3061 = vsel %vm2805, 2, %v2032
    %v3062 = vsel %vm2806, 2, %v2033
    %v3063 = vsel %vm2807, 2, %v2034
    %v3064 = vsel %vm2808, 2, %v2035
    %v3065 = vsel %vm2809, 2, %v2036
    %v3066 = vsel %vm2810, 2, %v2037
    %v3067 = vsel %vm2811, 2, %v2038
    %v3068 = vsel %vm2812, 2, %v2039
    %v3069 = vsel %vm2813, 2, %v2040
    %v3070 = vsel %vm2814, 2, %v2041
    %v3071 = vsel %vm2815, 2, %v2042
    %v3072 = vsel %vm2816, 2, %v2043
    %v3073 = vsel %vm2817, 2, %v2044
    %v3074 = vsel %vm2818, 2, %v2045
    %v3075 = vsel %vm2819, 2, %v2046
    %v3076 = vsel %vm2820, 2, %v2047
    %v3077 = vsel %vm2821, 2, %v2048
    %v3078 = vsel %vm2822, 2, %v2049
    %v3079 = vsel %vm2823, 2, %v2050
    %v3080 = vsel %vm2824, 2, %v2051
    %v3081 = vsel %vm2825, 2, %v2052
    %v3082 = vsel %vm2826, 2, %v2053
    %v3083 = vsel %vm2827, 2, %v2054
    %v3084 = vsel %vm2828, 2, %v2055
    %v3085 = vsel %vm2829, 2, %v2056
    %v3086 = vsel %vm2830, 2, %v2057
    %v3087 = vsel %vm2831, 2, %v2058
    %v3088 = vsel %vm2832, 2, %v2059
    %v3089 = vsel %vm2833, 2, %v2060
    %v3090 = vsel %vm2834, 2, %v2061
    %v3091 = vsel %vm2835, 2, %v2062
    %v3092 = vsel %vm2836, 2, %v2063
    %v3093 = vsel %vm2837, 2, %v2064
    %v3094 = vsel %vm2838, 2, %v2065
    %v3095 = vsel %vm2839, 2, %v2066
    %v3096 = vsel %vm2840, 2, %v2067
    %v3097 = vsel %vm2841, 2, %v2068
    %v3098 = vsel %vm2842, 2, %v2069
    %v3099 = vsel %vm2843, 2, %v2070
    %v3100 = vld [vmem:[%s1 + $0x3] sm:$0x1]
    %v3101 = vlaneseq
    %v3102 = vshrl.u32 %v3101, 7
    %v3103 = vsub.s32 0, %v3102
    %v3104 = vrot.slane %v3100, %v3103
    %v3105 = vsub.f32 %v12, %v3104
    %v3106 = vsub.f32 %v13, %v3104
    %v3107 = vsub.f32 %v14, %v3104
    %v3108 = vsub.f32 %v15, %v3104
    %v3109 = vsub.f32 %v16, %v3104
    %v3110 = vsub.f32 %v17, %v3104
    %v3111 = vsub.f32 %v18, %v3104
    %v3112 = vsub.f32 %v19, %v3104
    %v3113 = vsub.f32 %v20, %v3104
    %v3114 = vsub.f32 %v21, %v3104
    %v3115 = vsub.f32 %v22, %v3104
    %v3116 = vsub.f32 %v23, %v3104
    %v3117 = vsub.f32 %v24, %v3104
    %v3118 = vsub.f32 %v25, %v3104
    %v3119 = vsub.f32 %v26, %v3104
    %v3120 = vsub.f32 %v27, %v3104
    %v3121 = vsub.f32 %v28, %v3104
    %v3122 = vsub.f32 %v29, %v3104
    %v3123 = vsub.f32 %v30, %v3104
    %v3124 = vsub.f32 %v31, %v3104
    %v3125 = vsub.f32 %v32, %v3104
    %v3126 = vsub.f32 %v33, %v3104
    %v3127 = vsub.f32 %v34, %v3104
    %v3128 = vsub.f32 %v35, %v3104
    %v3129 = vsub.f32 %v36, %v3104
    %v3130 = vsub.f32 %v37, %v3104
    %v3131 = vsub.f32 %v38, %v3104
    %v3132 = vsub.f32 %v39, %v3104
    %v3133 = vsub.f32 %v40, %v3104
    %v3134 = vsub.f32 %v41, %v3104
    %v3135 = vsub.f32 %v42, %v3104
    %v3136 = vsub.f32 %v43, %v3104
    %v3137 = vsub.f32 %v44, %v3104
    %v3138 = vsub.f32 %v45, %v3104
    %v3139 = vsub.f32 %v46, %v3104
    %v3140 = vsub.f32 %v47, %v3104
    %v3141 = vsub.f32 %v48, %v3104
    %v3142 = vsub.f32 %v49, %v3104
    %v3143 = vsub.f32 %v50, %v3104
    %v3144 = vsub.f32 %v51, %v3104
    %v3145 = vsub.f32 %v52, %v3104
    %v3146 = vsub.f32 %v53, %v3104
    %v3147 = vsub.f32 %v54, %v3104
    %v3148 = vsub.f32 %v55, %v3104
    %v3149 = vsub.f32 %v56, %v3104
    %v3150 = vsub.f32 %v57, %v3104
    %v3151 = vsub.f32 %v58, %v3104
    %v3152 = vsub.f32 %v59, %v3104
    %v3153 = vsub.f32 %v60, %v3104
    %v3154 = vsub.f32 %v61, %v3104
    %v3155 = vsub.f32 %v62, %v3104
    %v3156 = vsub.f32 %v63, %v3104
    %v3157 = vsub.f32 %v64, %v3104
    %v3158 = vsub.f32 %v65, %v3104
    %v3159 = vsub.f32 %v66, %v3104
    %v3160 = vsub.f32 %v67, %v3104
    %v3161 = vsub.f32 %v68, %v3104
    %v3162 = vsub.f32 %v69, %v3104
    %v3163 = vsub.f32 %v70, %v3104
    %v3164 = vsub.f32 %v71, %v3104
    %v3165 = vsub.f32 %v72, %v3104
    %v3166 = vsub.f32 %v73, %v3104
    %v3167 = vsub.f32 %v74, %v3104
    %v3168 = vsub.f32 %v75, %v3104
    %v3169 = vsub.f32 %v76, %v3104
    %v3170 = vsub.f32 %v77, %v3104
    %v3171 = vsub.f32 %v78, %v3104
    %v3172 = vsub.f32 %v79, %v3104
    %v3173 = vsub.f32 %v80, %v3104
    %v3174 = vsub.f32 %v81, %v3104
    %v3175 = vsub.f32 %v82, %v3104
    %v3176 = vsub.f32 %v83, %v3104
    %v3177 = vsub.f32 %v84, %v3104
    %v3178 = vsub.f32 %v85, %v3104
    %v3179 = vsub.f32 %v86, %v3104
    %v3180 = vsub.f32 %v87, %v3104
    %v3181 = vsub.f32 %v88, %v3104
    %v3182 = vsub.f32 %v89, %v3104
    %v3183 = vsub.f32 %v90, %v3104
    %v3184 = vsub.f32 %v91, %v3104
    %v3185 = vsub.f32 %v92, %v3104
    %v3186 = vsub.f32 %v93, %v3104
    %v3187 = vsub.f32 %v94, %v3104
    %v3188 = vsub.f32 %v95, %v3104
    %v3189 = vsub.f32 %v96, %v3104
    %v3190 = vsub.f32 %v97, %v3104
    %v3191 = vsub.f32 %v98, %v3104
    %v3192 = vsub.f32 %v99, %v3104
    %v3193 = vsub.f32 %v100, %v3104
    %v3194 = vsub.f32 %v101, %v3104
    %v3195 = vsub.f32 %v102, %v3104
    %v3196 = vsub.f32 %v103, %v3104
    %v3197 = vsub.f32 %v104, %v3104
    %v3198 = vsub.f32 %v105, %v3104
    %v3199 = vsub.f32 %v106, %v3104
    %v3200 = vsub.f32 %v107, %v3104
    %v3201 = vsub.f32 %v108, %v3104
    %v3202 = vsub.f32 %v109, %v3104
    %v3203 = vsub.f32 %v110, %v3104
    %v3204 = vsub.f32 %v111, %v3104
    %v3205 = vsub.f32 %v112, %v3104
    %v3206 = vsub.f32 %v113, %v3104
    %v3207 = vsub.f32 %v114, %v3104
    %v3208 = vsub.f32 %v115, %v3104
    %v3209 = vsub.f32 %v116, %v3104
    %v3210 = vsub.f32 %v117, %v3104
    %v3211 = vsub.f32 %v118, %v3104
    %v3212 = vsub.f32 %v119, %v3104
    %v3213 = vsub.f32 %v120, %v3104
    %v3214 = vsub.f32 %v121, %v3104
    %v3215 = vsub.f32 %v122, %v3104
    %v3216 = vsub.f32 %v123, %v3104
    %v3217 = vsub.f32 %v124, %v3104
    %v3218 = vsub.f32 %v125, %v3104
    %v3219 = vsub.f32 %v126, %v3104
    %v3220 = vsub.f32 %v127, %v3104
    %v3221 = vsub.f32 %v128, %v3104
    %v3222 = vsub.f32 %v129, %v3104
    %v3223 = vsub.f32 %v130, %v3104
    %v3224 = vsub.f32 %v131, %v3104
    %v3225 = vsub.f32 %v132, %v3104
    %v3226 = vsub.f32 %v133, %v3104
    %v3227 = vsub.f32 %v134, %v3104
    %v3228 = vsub.f32 %v135, %v3104
    %v3229 = vsub.f32 %v136, %v3104
    %v3230 = vsub.f32 %v137, %v3104
    %v3231 = vsub.f32 %v138, %v3104
    %v3232 = vsub.f32 %v139, %v3104
    %v3233 = vmul.f32 %v3105, %v3105
    %v3234 = vmul.f32 %v3106, %v3106
    %v3235 = vmul.f32 %v3107, %v3107
    %v3236 = vmul.f32 %v3108, %v3108
    %v3237 = vmul.f32 %v3109, %v3109
    %v3238 = vmul.f32 %v3110, %v3110
    %v3239 = vmul.f32 %v3111, %v3111
    %v3240 = vmul.f32 %v3112, %v3112
    %v3241 = vmul.f32 %v3113, %v3113
    %v3242 = vmul.f32 %v3114, %v3114
    %v3243 = vmul.f32 %v3115, %v3115
    %v3244 = vmul.f32 %v3116, %v3116
    %v3245 = vmul.f32 %v3117, %v3117
    %v3246 = vmul.f32 %v3118, %v3118
    %v3247 = vmul.f32 %v3119, %v3119
    %v3248 = vmul.f32 %v3120, %v3120
    %v3249 = vmul.f32 %v3121, %v3121
    %v3250 = vmul.f32 %v3122, %v3122
    %v3251 = vmul.f32 %v3123, %v3123
    %v3252 = vmul.f32 %v3124, %v3124
    %v3253 = vmul.f32 %v3125, %v3125
    %v3254 = vmul.f32 %v3126, %v3126
    %v3255 = vmul.f32 %v3127, %v3127
    %v3256 = vmul.f32 %v3128, %v3128
    %v3257 = vmul.f32 %v3129, %v3129
    %v3258 = vmul.f32 %v3130, %v3130
    %v3259 = vmul.f32 %v3131, %v3131
    %v3260 = vmul.f32 %v3132, %v3132
    %v3261 = vmul.f32 %v3133, %v3133
    %v3262 = vmul.f32 %v3134, %v3134
    %v3263 = vmul.f32 %v3135, %v3135
    %v3264 = vmul.f32 %v3136, %v3136
    %v3265 = vmul.f32 %v3137, %v3137
    %v3266 = vmul.f32 %v3138, %v3138
    %v3267 = vmul.f32 %v3139, %v3139
    %v3268 = vmul.f32 %v3140, %v3140
    %v3269 = vmul.f32 %v3141, %v3141
    %v3270 = vmul.f32 %v3142, %v3142
    %v3271 = vmul.f32 %v3143, %v3143
    %v3272 = vmul.f32 %v3144, %v3144
    %v3273 = vmul.f32 %v3145, %v3145
    %v3274 = vmul.f32 %v3146, %v3146
    %v3275 = vmul.f32 %v3147, %v3147
    %v3276 = vmul.f32 %v3148, %v3148
    %v3277 = vmul.f32 %v3149, %v3149
    %v3278 = vmul.f32 %v3150, %v3150
    %v3279 = vmul.f32 %v3151, %v3151
    %v3280 = vmul.f32 %v3152, %v3152
    %v3281 = vmul.f32 %v3153, %v3153
    %v3282 = vmul.f32 %v3154, %v3154
    %v3283 = vmul.f32 %v3155, %v3155
    %v3284 = vmul.f32 %v3156, %v3156
    %v3285 = vmul.f32 %v3157, %v3157
    %v3286 = vmul.f32 %v3158, %v3158
    %v3287 = vmul.f32 %v3159, %v3159
    %v3288 = vmul.f32 %v3160, %v3160
    %v3289 = vmul.f32 %v3161, %v3161
    %v3290 = vmul.f32 %v3162, %v3162
    %v3291 = vmul.f32 %v3163, %v3163
    %v3292 = vmul.f32 %v3164, %v3164
    %v3293 = vmul.f32 %v3165, %v3165
    %v3294 = vmul.f32 %v3166, %v3166
    %v3295 = vmul.f32 %v3167, %v3167
    %v3296 = vmul.f32 %v3168, %v3168
    %v3297 = vmul.f32 %v3169, %v3169
    %v3298 = vmul.f32 %v3170, %v3170
    %v3299 = vmul.f32 %v3171, %v3171
    %v3300 = vmul.f32 %v3172, %v3172
    %v3301 = vmul.f32 %v3173, %v3173
    %v3302 = vmul.f32 %v3174, %v3174
    %v3303 = vmul.f32 %v3175, %v3175
    %v3304 = vmul.f32 %v3176, %v3176
    %v3305 = vmul.f32 %v3177, %v3177
    %v3306 = vmul.f32 %v3178, %v3178
    %v3307 = vmul.f32 %v3179, %v3179
    %v3308 = vmul.f32 %v3180, %v3180
    %v3309 = vmul.f32 %v3181, %v3181
    %v3310 = vmul.f32 %v3182, %v3182
    %v3311 = vmul.f32 %v3183, %v3183
    %v3312 = vmul.f32 %v3184, %v3184
    %v3313 = vmul.f32 %v3185, %v3185
    %v3314 = vmul.f32 %v3186, %v3186
    %v3315 = vmul.f32 %v3187, %v3187
    %v3316 = vmul.f32 %v3188, %v3188
    %v3317 = vmul.f32 %v3189, %v3189
    %v3318 = vmul.f32 %v3190, %v3190
    %v3319 = vmul.f32 %v3191, %v3191
    %v3320 = vmul.f32 %v3192, %v3192
    %v3321 = vmul.f32 %v3193, %v3193
    %v3322 = vmul.f32 %v3194, %v3194
    %v3323 = vmul.f32 %v3195, %v3195
    %v3324 = vmul.f32 %v3196, %v3196
    %v3325 = vmul.f32 %v3197, %v3197
    %v3326 = vmul.f32 %v3198, %v3198
    %v3327 = vmul.f32 %v3199, %v3199
    %v3328 = vmul.f32 %v3200, %v3200
    %v3329 = vmul.f32 %v3201, %v3201
    %v3330 = vmul.f32 %v3202, %v3202
    %v3331 = vmul.f32 %v3203, %v3203
    %v3332 = vmul.f32 %v3204, %v3204
    %v3333 = vmul.f32 %v3205, %v3205
    %v3334 = vmul.f32 %v3206, %v3206
    %v3335 = vmul.f32 %v3207, %v3207
    %v3336 = vmul.f32 %v3208, %v3208
    %v3337 = vmul.f32 %v3209, %v3209
    %v3338 = vmul.f32 %v3210, %v3210
    %v3339 = vmul.f32 %v3211, %v3211
    %v3340 = vmul.f32 %v3212, %v3212
    %v3341 = vmul.f32 %v3213, %v3213
    %v3342 = vmul.f32 %v3214, %v3214
    %v3343 = vmul.f32 %v3215, %v3215
    %v3344 = vmul.f32 %v3216, %v3216
    %v3345 = vmul.f32 %v3217, %v3217
    %v3346 = vmul.f32 %v3218, %v3218
    %v3347 = vmul.f32 %v3219, %v3219
    %v3348 = vmul.f32 %v3220, %v3220
    %v3349 = vmul.f32 %v3221, %v3221
    %v3350 = vmul.f32 %v3222, %v3222
    %v3351 = vmul.f32 %v3223, %v3223
    %v3352 = vmul.f32 %v3224, %v3224
    %v3353 = vmul.f32 %v3225, %v3225
    %v3354 = vmul.f32 %v3226, %v3226
    %v3355 = vmul.f32 %v3227, %v3227
    %v3356 = vmul.f32 %v3228, %v3228
    %v3357 = vmul.f32 %v3229, %v3229
    %v3358 = vmul.f32 %v3230, %v3230
    %v3359 = vmul.f32 %v3231, %v3231
    %v3360 = vmul.f32 %v3232, %v3232
    %v3361 = vsel %vm401, %v3233, 0.0
    %3362 = vadd.xlane.f32.xlu0 %v3361
    %v3363 = vpop.xlane.xlu0 %3362
    %v3364 = vsel %vm401, %v3234, 0.0
    %3365 = vadd.xlane.f32.xlu0 %v3364
    %v3366 = vpop.xlane.xlu0 %3365
    %v3367 = vsel %vm401, %v3235, 0.0
    %3368 = vadd.xlane.f32.xlu0 %v3367
    %v3369 = vpop.xlane.xlu0 %3368
    %v3370 = vsel %vm401, %v3236, 0.0
    %3371 = vadd.xlane.f32.xlu0 %v3370
    %v3372 = vpop.xlane.xlu0 %3371
    %v3373 = vsel %vm401, %v3237, 0.0
    %3374 = vadd.xlane.f32.xlu0 %v3373
    %v3375 = vpop.xlane.xlu0 %3374
    %v3376 = vsel %vm401, %v3238, 0.0
    %3377 = vadd.xlane.f32.xlu0 %v3376
    %v3378 = vpop.xlane.xlu0 %3377
    %v3379 = vsel %vm401, %v3239, 0.0
    %3380 = vadd.xlane.f32.xlu0 %v3379
    %v3381 = vpop.xlane.xlu0 %3380
    %v3382 = vsel %vm401, %v3240, 0.0
    %3383 = vadd.xlane.f32.xlu0 %v3382
    %v3384 = vpop.xlane.xlu0 %3383
    %v3385 = vsel %vm401, %v3241, 0.0
    %3386 = vadd.xlane.f32.xlu0 %v3385
    %v3387 = vpop.xlane.xlu0 %3386
    %v3388 = vsel %vm401, %v3242, 0.0
    %3389 = vadd.xlane.f32.xlu0 %v3388
    %v3390 = vpop.xlane.xlu0 %3389
    %v3391 = vsel %vm401, %v3243, 0.0
    %3392 = vadd.xlane.f32.xlu0 %v3391
    %v3393 = vpop.xlane.xlu0 %3392
    %v3394 = vsel %vm401, %v3244, 0.0
    %3395 = vadd.xlane.f32.xlu0 %v3394
    %v3396 = vpop.xlane.xlu0 %3395
    %v3397 = vsel %vm401, %v3245, 0.0
    %3398 = vadd.xlane.f32.xlu0 %v3397
    %v3399 = vpop.xlane.xlu0 %3398
    %v3400 = vsel %vm401, %v3246, 0.0
    %3401 = vadd.xlane.f32.xlu0 %v3400
    %v3402 = vpop.xlane.xlu0 %3401
    %v3403 = vsel %vm401, %v3247, 0.0
    %3404 = vadd.xlane.f32.xlu0 %v3403
    %v3405 = vpop.xlane.xlu0 %3404
    %v3406 = vsel %vm401, %v3248, 0.0
    %3407 = vadd.xlane.f32.xlu0 %v3406
    %v3408 = vpop.xlane.xlu0 %3407
    %v3409 = vsel %vm401, %v3249, 0.0
    %3410 = vadd.xlane.f32.xlu0 %v3409
    %v3411 = vpop.xlane.xlu0 %3410
    %v3412 = vsel %vm401, %v3250, 0.0
    %3413 = vadd.xlane.f32.xlu0 %v3412
    %v3414 = vpop.xlane.xlu0 %3413
    %v3415 = vsel %vm401, %v3251, 0.0
    %3416 = vadd.xlane.f32.xlu0 %v3415
    %v3417 = vpop.xlane.xlu0 %3416
    %v3418 = vsel %vm401, %v3252, 0.0
    %3419 = vadd.xlane.f32.xlu0 %v3418
    %v3420 = vpop.xlane.xlu0 %3419
    %v3421 = vsel %vm401, %v3253, 0.0
    %3422 = vadd.xlane.f32.xlu0 %v3421
    %v3423 = vpop.xlane.xlu0 %3422
    %v3424 = vsel %vm401, %v3254, 0.0
    %3425 = vadd.xlane.f32.xlu0 %v3424
    %v3426 = vpop.xlane.xlu0 %3425
    %v3427 = vsel %vm401, %v3255, 0.0
    %3428 = vadd.xlane.f32.xlu0 %v3427
    %v3429 = vpop.xlane.xlu0 %3428
    %v3430 = vsel %vm401, %v3256, 0.0
    %3431 = vadd.xlane.f32.xlu0 %v3430
    %v3432 = vpop.xlane.xlu0 %3431
    %v3433 = vsel %vm401, %v3257, 0.0
    %3434 = vadd.xlane.f32.xlu0 %v3433
    %v3435 = vpop.xlane.xlu0 %3434
    %v3436 = vsel %vm401, %v3258, 0.0
    %3437 = vadd.xlane.f32.xlu0 %v3436
    %v3438 = vpop.xlane.xlu0 %3437
    %v3439 = vsel %vm401, %v3259, 0.0
    %3440 = vadd.xlane.f32.xlu0 %v3439
    %v3441 = vpop.xlane.xlu0 %3440
    %v3442 = vsel %vm401, %v3260, 0.0
    %3443 = vadd.xlane.f32.xlu0 %v3442
    %v3444 = vpop.xlane.xlu0 %3443
    %v3445 = vsel %vm401, %v3261, 0.0
    %3446 = vadd.xlane.f32.xlu0 %v3445
    %v3447 = vpop.xlane.xlu0 %3446
    %v3448 = vsel %vm401, %v3262, 0.0
    %3449 = vadd.xlane.f32.xlu0 %v3448
    %v3450 = vpop.xlane.xlu0 %3449
    %v3451 = vsel %vm401, %v3263, 0.0
    %3452 = vadd.xlane.f32.xlu0 %v3451
    %v3453 = vpop.xlane.xlu0 %3452
    %v3454 = vsel %vm401, %v3264, 0.0
    %3455 = vadd.xlane.f32.xlu0 %v3454
    %v3456 = vpop.xlane.xlu0 %3455
    %v3457 = vsel %vm401, %v3265, 0.0
    %3458 = vadd.xlane.f32.xlu0 %v3457
    %v3459 = vpop.xlane.xlu0 %3458
    %v3460 = vsel %vm401, %v3266, 0.0
    %3461 = vadd.xlane.f32.xlu0 %v3460
    %v3462 = vpop.xlane.xlu0 %3461
    %v3463 = vsel %vm401, %v3267, 0.0
    %3464 = vadd.xlane.f32.xlu0 %v3463
    %v3465 = vpop.xlane.xlu0 %3464
    %v3466 = vsel %vm401, %v3268, 0.0
    %3467 = vadd.xlane.f32.xlu0 %v3466
    %v3468 = vpop.xlane.xlu0 %3467
    %v3469 = vsel %vm401, %v3269, 0.0
    %3470 = vadd.xlane.f32.xlu0 %v3469
    %v3471 = vpop.xlane.xlu0 %3470
    %v3472 = vsel %vm401, %v3270, 0.0
    %3473 = vadd.xlane.f32.xlu0 %v3472
    %v3474 = vpop.xlane.xlu0 %3473
    %v3475 = vsel %vm401, %v3271, 0.0
    %3476 = vadd.xlane.f32.xlu0 %v3475
    %v3477 = vpop.xlane.xlu0 %3476
    %v3478 = vsel %vm401, %v3272, 0.0
    %3479 = vadd.xlane.f32.xlu0 %v3478
    %v3480 = vpop.xlane.xlu0 %3479
    %v3481 = vsel %vm401, %v3273, 0.0
    %3482 = vadd.xlane.f32.xlu0 %v3481
    %v3483 = vpop.xlane.xlu0 %3482
    %v3484 = vsel %vm401, %v3274, 0.0
    %3485 = vadd.xlane.f32.xlu0 %v3484
    %v3486 = vpop.xlane.xlu0 %3485
    %v3487 = vsel %vm401, %v3275, 0.0
    %3488 = vadd.xlane.f32.xlu0 %v3487
    %v3489 = vpop.xlane.xlu0 %3488
    %v3490 = vsel %vm401, %v3276, 0.0
    %3491 = vadd.xlane.f32.xlu0 %v3490
    %v3492 = vpop.xlane.xlu0 %3491
    %v3493 = vsel %vm401, %v3277, 0.0
    %3494 = vadd.xlane.f32.xlu0 %v3493
    %v3495 = vpop.xlane.xlu0 %3494
    %v3496 = vsel %vm401, %v3278, 0.0
    %3497 = vadd.xlane.f32.xlu0 %v3496
    %v3498 = vpop.xlane.xlu0 %3497
    %v3499 = vsel %vm401, %v3279, 0.0
    %3500 = vadd.xlane.f32.xlu0 %v3499
    %v3501 = vpop.xlane.xlu0 %3500
    %v3502 = vsel %vm401, %v3280, 0.0
    %3503 = vadd.xlane.f32.xlu0 %v3502
    %v3504 = vpop.xlane.xlu0 %3503
    %v3505 = vsel %vm401, %v3281, 0.0
    %3506 = vadd.xlane.f32.xlu0 %v3505
    %v3507 = vpop.xlane.xlu0 %3506
    %v3508 = vsel %vm401, %v3282, 0.0
    %3509 = vadd.xlane.f32.xlu0 %v3508
    %v3510 = vpop.xlane.xlu0 %3509
    %v3511 = vsel %vm401, %v3283, 0.0
    %3512 = vadd.xlane.f32.xlu0 %v3511
    %v3513 = vpop.xlane.xlu0 %3512
    %v3514 = vsel %vm401, %v3284, 0.0
    %3515 = vadd.xlane.f32.xlu0 %v3514
    %v3516 = vpop.xlane.xlu0 %3515
    %v3517 = vsel %vm401, %v3285, 0.0
    %3518 = vadd.xlane.f32.xlu0 %v3517
    %v3519 = vpop.xlane.xlu0 %3518
    %v3520 = vsel %vm401, %v3286, 0.0
    %3521 = vadd.xlane.f32.xlu0 %v3520
    %v3522 = vpop.xlane.xlu0 %3521
    %v3523 = vsel %vm401, %v3287, 0.0
    %3524 = vadd.xlane.f32.xlu0 %v3523
    %v3525 = vpop.xlane.xlu0 %3524
    %v3526 = vsel %vm401, %v3288, 0.0
    %3527 = vadd.xlane.f32.xlu0 %v3526
    %v3528 = vpop.xlane.xlu0 %3527
    %v3529 = vsel %vm401, %v3289, 0.0
    %3530 = vadd.xlane.f32.xlu0 %v3529
    %v3531 = vpop.xlane.xlu0 %3530
    %v3532 = vsel %vm401, %v3290, 0.0
    %3533 = vadd.xlane.f32.xlu0 %v3532
    %v3534 = vpop.xlane.xlu0 %3533
    %v3535 = vsel %vm401, %v3291, 0.0
    %3536 = vadd.xlane.f32.xlu0 %v3535
    %v3537 = vpop.xlane.xlu0 %3536
    %v3538 = vsel %vm401, %v3292, 0.0
    %3539 = vadd.xlane.f32.xlu0 %v3538
    %v3540 = vpop.xlane.xlu0 %3539
    %v3541 = vsel %vm401, %v3293, 0.0
    %3542 = vadd.xlane.f32.xlu0 %v3541
    %v3543 = vpop.xlane.xlu0 %3542
    %v3544 = vsel %vm401, %v3294, 0.0
    %3545 = vadd.xlane.f32.xlu0 %v3544
    %v3546 = vpop.xlane.xlu0 %3545
    %v3547 = vsel %vm401, %v3295, 0.0
    %3548 = vadd.xlane.f32.xlu0 %v3547
    %v3549 = vpop.xlane.xlu0 %3548
    %v3550 = vsel %vm401, %v3296, 0.0
    %3551 = vadd.xlane.f32.xlu0 %v3550
    %v3552 = vpop.xlane.xlu0 %3551
    %v3553 = vsel %vm401, %v3297, 0.0
    %3554 = vadd.xlane.f32.xlu0 %v3553
    %v3555 = vpop.xlane.xlu0 %3554
    %v3556 = vsel %vm401, %v3298, 0.0
    %3557 = vadd.xlane.f32.xlu0 %v3556
    %v3558 = vpop.xlane.xlu0 %3557
    %v3559 = vsel %vm401, %v3299, 0.0
    %3560 = vadd.xlane.f32.xlu0 %v3559
    %v3561 = vpop.xlane.xlu0 %3560
    %v3562 = vsel %vm401, %v3300, 0.0
    %3563 = vadd.xlane.f32.xlu0 %v3562
    %v3564 = vpop.xlane.xlu0 %3563
    %v3565 = vsel %vm401, %v3301, 0.0
    %3566 = vadd.xlane.f32.xlu0 %v3565
    %v3567 = vpop.xlane.xlu0 %3566
    %v3568 = vsel %vm401, %v3302, 0.0
    %3569 = vadd.xlane.f32.xlu0 %v3568
    %v3570 = vpop.xlane.xlu0 %3569
    %v3571 = vsel %vm401, %v3303, 0.0
    %3572 = vadd.xlane.f32.xlu0 %v3571
    %v3573 = vpop.xlane.xlu0 %3572
    %v3574 = vsel %vm401, %v3304, 0.0
    %3575 = vadd.xlane.f32.xlu0 %v3574
    %v3576 = vpop.xlane.xlu0 %3575
    %v3577 = vsel %vm401, %v3305, 0.0
    %3578 = vadd.xlane.f32.xlu0 %v3577
    %v3579 = vpop.xlane.xlu0 %3578
    %v3580 = vsel %vm401, %v3306, 0.0
    %3581 = vadd.xlane.f32.xlu0 %v3580
    %v3582 = vpop.xlane.xlu0 %3581
    %v3583 = vsel %vm401, %v3307, 0.0
    %3584 = vadd.xlane.f32.xlu0 %v3583
    %v3585 = vpop.xlane.xlu0 %3584
    %v3586 = vsel %vm401, %v3308, 0.0
    %3587 = vadd.xlane.f32.xlu0 %v3586
    %v3588 = vpop.xlane.xlu0 %3587
    %v3589 = vsel %vm401, %v3309, 0.0
    %3590 = vadd.xlane.f32.xlu0 %v3589
    %v3591 = vpop.xlane.xlu0 %3590
    %v3592 = vsel %vm401, %v3310, 0.0
    %3593 = vadd.xlane.f32.xlu0 %v3592
    %v3594 = vpop.xlane.xlu0 %3593
    %v3595 = vsel %vm401, %v3311, 0.0
    %3596 = vadd.xlane.f32.xlu0 %v3595
    %v3597 = vpop.xlane.xlu0 %3596
    %v3598 = vsel %vm401, %v3312, 0.0
    %3599 = vadd.xlane.f32.xlu0 %v3598
    %v3600 = vpop.xlane.xlu0 %3599
    %v3601 = vsel %vm401, %v3313, 0.0
    %3602 = vadd.xlane.f32.xlu0 %v3601
    %v3603 = vpop.xlane.xlu0 %3602
    %v3604 = vsel %vm401, %v3314, 0.0
    %3605 = vadd.xlane.f32.xlu0 %v3604
    %v3606 = vpop.xlane.xlu0 %3605
    %v3607 = vsel %vm401, %v3315, 0.0
    %3608 = vadd.xlane.f32.xlu0 %v3607
    %v3609 = vpop.xlane.xlu0 %3608
    %v3610 = vsel %vm401, %v3316, 0.0
    %3611 = vadd.xlane.f32.xlu0 %v3610
    %v3612 = vpop.xlane.xlu0 %3611
    %v3613 = vsel %vm401, %v3317, 0.0
    %3614 = vadd.xlane.f32.xlu0 %v3613
    %v3615 = vpop.xlane.xlu0 %3614
    %v3616 = vsel %vm401, %v3318, 0.0
    %3617 = vadd.xlane.f32.xlu0 %v3616
    %v3618 = vpop.xlane.xlu0 %3617
    %v3619 = vsel %vm401, %v3319, 0.0
    %3620 = vadd.xlane.f32.xlu0 %v3619
    %v3621 = vpop.xlane.xlu0 %3620
    %v3622 = vsel %vm401, %v3320, 0.0
    %3623 = vadd.xlane.f32.xlu0 %v3622
    %v3624 = vpop.xlane.xlu0 %3623
    %v3625 = vsel %vm401, %v3321, 0.0
    %3626 = vadd.xlane.f32.xlu0 %v3625
    %v3627 = vpop.xlane.xlu0 %3626
    %v3628 = vsel %vm401, %v3322, 0.0
    %3629 = vadd.xlane.f32.xlu0 %v3628
    %v3630 = vpop.xlane.xlu0 %3629
    %v3631 = vsel %vm401, %v3323, 0.0
    %3632 = vadd.xlane.f32.xlu0 %v3631
    %v3633 = vpop.xlane.xlu0 %3632
    %v3634 = vsel %vm401, %v3324, 0.0
    %3635 = vadd.xlane.f32.xlu0 %v3634
    %v3636 = vpop.xlane.xlu0 %3635
    %v3637 = vsel %vm401, %v3325, 0.0
    %3638 = vadd.xlane.f32.xlu0 %v3637
    %v3639 = vpop.xlane.xlu0 %3638
    %v3640 = vsel %vm401, %v3326, 0.0
    %3641 = vadd.xlane.f32.xlu0 %v3640
    %v3642 = vpop.xlane.xlu0 %3641
    %v3643 = vsel %vm401, %v3327, 0.0
    %3644 = vadd.xlane.f32.xlu0 %v3643
    %v3645 = vpop.xlane.xlu0 %3644
    %v3646 = vsel %vm401, %v3328, 0.0
    %3647 = vadd.xlane.f32.xlu0 %v3646
    %v3648 = vpop.xlane.xlu0 %3647
    %v3649 = vsel %vm401, %v3329, 0.0
    %3650 = vadd.xlane.f32.xlu0 %v3649
    %v3651 = vpop.xlane.xlu0 %3650
    %v3652 = vsel %vm401, %v3330, 0.0
    %3653 = vadd.xlane.f32.xlu0 %v3652
    %v3654 = vpop.xlane.xlu0 %3653
    %v3655 = vsel %vm401, %v3331, 0.0
    %3656 = vadd.xlane.f32.xlu0 %v3655
    %v3657 = vpop.xlane.xlu0 %3656
    %v3658 = vsel %vm401, %v3332, 0.0
    %3659 = vadd.xlane.f32.xlu0 %v3658
    %v3660 = vpop.xlane.xlu0 %3659
    %v3661 = vsel %vm401, %v3333, 0.0
    %3662 = vadd.xlane.f32.xlu0 %v3661
    %v3663 = vpop.xlane.xlu0 %3662
    %v3664 = vsel %vm401, %v3334, 0.0
    %3665 = vadd.xlane.f32.xlu0 %v3664
    %v3666 = vpop.xlane.xlu0 %3665
    %v3667 = vsel %vm401, %v3335, 0.0
    %3668 = vadd.xlane.f32.xlu0 %v3667
    %v3669 = vpop.xlane.xlu0 %3668
    %v3670 = vsel %vm401, %v3336, 0.0
    %3671 = vadd.xlane.f32.xlu0 %v3670
    %v3672 = vpop.xlane.xlu0 %3671
    %v3673 = vsel %vm401, %v3337, 0.0
    %3674 = vadd.xlane.f32.xlu0 %v3673
    %v3675 = vpop.xlane.xlu0 %3674
    %v3676 = vsel %vm401, %v3338, 0.0
    %3677 = vadd.xlane.f32.xlu0 %v3676
    %v3678 = vpop.xlane.xlu0 %3677
    %v3679 = vsel %vm401, %v3339, 0.0
    %3680 = vadd.xlane.f32.xlu0 %v3679
    %v3681 = vpop.xlane.xlu0 %3680
    %v3682 = vsel %vm401, %v3340, 0.0
    %3683 = vadd.xlane.f32.xlu0 %v3682
    %v3684 = vpop.xlane.xlu0 %3683
    %v3685 = vsel %vm401, %v3341, 0.0
    %3686 = vadd.xlane.f32.xlu0 %v3685
    %v3687 = vpop.xlane.xlu0 %3686
    %v3688 = vsel %vm401, %v3342, 0.0
    %3689 = vadd.xlane.f32.xlu0 %v3688
    %v3690 = vpop.xlane.xlu0 %3689
    %v3691 = vsel %vm401, %v3343, 0.0
    %3692 = vadd.xlane.f32.xlu0 %v3691
    %v3693 = vpop.xlane.xlu0 %3692
    %v3694 = vsel %vm401, %v3344, 0.0
    %3695 = vadd.xlane.f32.xlu0 %v3694
    %v3696 = vpop.xlane.xlu0 %3695
    %v3697 = vsel %vm401, %v3345, 0.0
    %3698 = vadd.xlane.f32.xlu0 %v3697
    %v3699 = vpop.xlane.xlu0 %3698
    %v3700 = vsel %vm401, %v3346, 0.0
    %3701 = vadd.xlane.f32.xlu0 %v3700
    %v3702 = vpop.xlane.xlu0 %3701
    %v3703 = vsel %vm401, %v3347, 0.0
    %3704 = vadd.xlane.f32.xlu0 %v3703
    %v3705 = vpop.xlane.xlu0 %3704
    %v3706 = vsel %vm401, %v3348, 0.0
    %3707 = vadd.xlane.f32.xlu0 %v3706
    %v3708 = vpop.xlane.xlu0 %3707
    %v3709 = vsel %vm401, %v3349, 0.0
    %3710 = vadd.xlane.f32.xlu0 %v3709
    %v3711 = vpop.xlane.xlu0 %3710
    %v3712 = vsel %vm401, %v3350, 0.0
    %3713 = vadd.xlane.f32.xlu0 %v3712
    %v3714 = vpop.xlane.xlu0 %3713
    %v3715 = vsel %vm401, %v3351, 0.0
    %3716 = vadd.xlane.f32.xlu0 %v3715
    %v3717 = vpop.xlane.xlu0 %3716
    %v3718 = vsel %vm401, %v3352, 0.0
    %3719 = vadd.xlane.f32.xlu0 %v3718
    %v3720 = vpop.xlane.xlu0 %3719
    %v3721 = vsel %vm401, %v3353, 0.0
    %3722 = vadd.xlane.f32.xlu0 %v3721
    %v3723 = vpop.xlane.xlu0 %3722
    %v3724 = vsel %vm401, %v3354, 0.0
    %3725 = vadd.xlane.f32.xlu0 %v3724
    %v3726 = vpop.xlane.xlu0 %3725
    %v3727 = vsel %vm401, %v3355, 0.0
    %3728 = vadd.xlane.f32.xlu0 %v3727
    %v3729 = vpop.xlane.xlu0 %3728
    %v3730 = vsel %vm401, %v3356, 0.0
    %3731 = vadd.xlane.f32.xlu0 %v3730
    %v3732 = vpop.xlane.xlu0 %3731
    %v3733 = vsel %vm401, %v3357, 0.0
    %3734 = vadd.xlane.f32.xlu0 %v3733
    %v3735 = vpop.xlane.xlu0 %3734
    %v3736 = vsel %vm401, %v3358, 0.0
    %3737 = vadd.xlane.f32.xlu0 %v3736
    %v3738 = vpop.xlane.xlu0 %3737
    %v3739 = vsel %vm401, %v3359, 0.0
    %3740 = vadd.xlane.f32.xlu0 %v3739
    %v3741 = vpop.xlane.xlu0 %3740
    %v3742 = vsel %vm401, %v3360, 0.0
    %3743 = vadd.xlane.f32.xlu0 %v3742
    %v3744 = vpop.xlane.xlu0 %3743
    %vm3745 = vcmp.lt.f32.partialorder %v3363, %v2844
    %vm3746 = vcmp.lt.f32.partialorder %v3366, %v2845
    %vm3747 = vcmp.lt.f32.partialorder %v3369, %v2846
    %vm3748 = vcmp.lt.f32.partialorder %v3372, %v2847
    %vm3749 = vcmp.lt.f32.partialorder %v3375, %v2848
    %vm3750 = vcmp.lt.f32.partialorder %v3378, %v2849
    %vm3751 = vcmp.lt.f32.partialorder %v3381, %v2850
    %vm3752 = vcmp.lt.f32.partialorder %v3384, %v2851
    %vm3753 = vcmp.lt.f32.partialorder %v3387, %v2852
    %vm3754 = vcmp.lt.f32.partialorder %v3390, %v2853
    %vm3755 = vcmp.lt.f32.partialorder %v3393, %v2854
    %vm3756 = vcmp.lt.f32.partialorder %v3396, %v2855
    %vm3757 = vcmp.lt.f32.partialorder %v3399, %v2856
    %vm3758 = vcmp.lt.f32.partialorder %v3402, %v2857
    %vm3759 = vcmp.lt.f32.partialorder %v3405, %v2858
    %vm3760 = vcmp.lt.f32.partialorder %v3408, %v2859
    %vm3761 = vcmp.lt.f32.partialorder %v3411, %v2860
    %vm3762 = vcmp.lt.f32.partialorder %v3414, %v2861
    %vm3763 = vcmp.lt.f32.partialorder %v3417, %v2862
    %vm3764 = vcmp.lt.f32.partialorder %v3420, %v2863
    %vm3765 = vcmp.lt.f32.partialorder %v3423, %v2864
    %vm3766 = vcmp.lt.f32.partialorder %v3426, %v2865
    %vm3767 = vcmp.lt.f32.partialorder %v3429, %v2866
    %vm3768 = vcmp.lt.f32.partialorder %v3432, %v2867
    %vm3769 = vcmp.lt.f32.partialorder %v3435, %v2868
    %vm3770 = vcmp.lt.f32.partialorder %v3438, %v2869
    %vm3771 = vcmp.lt.f32.partialorder %v3441, %v2870
    %vm3772 = vcmp.lt.f32.partialorder %v3444, %v2871
    %vm3773 = vcmp.lt.f32.partialorder %v3447, %v2872
    %vm3774 = vcmp.lt.f32.partialorder %v3450, %v2873
    %vm3775 = vcmp.lt.f32.partialorder %v3453, %v2874
    %vm3776 = vcmp.lt.f32.partialorder %v3456, %v2875
    %vm3777 = vcmp.lt.f32.partialorder %v3459, %v2876
    %vm3778 = vcmp.lt.f32.partialorder %v3462, %v2877
    %vm3779 = vcmp.lt.f32.partialorder %v3465, %v2878
    %vm3780 = vcmp.lt.f32.partialorder %v3468, %v2879
    %vm3781 = vcmp.lt.f32.partialorder %v3471, %v2880
    %vm3782 = vcmp.lt.f32.partialorder %v3474, %v2881
    %vm3783 = vcmp.lt.f32.partialorder %v3477, %v2882
    %vm3784 = vcmp.lt.f32.partialorder %v3480, %v2883
    %vm3785 = vcmp.lt.f32.partialorder %v3483, %v2884
    %vm3786 = vcmp.lt.f32.partialorder %v3486, %v2885
    %vm3787 = vcmp.lt.f32.partialorder %v3489, %v2886
    %vm3788 = vcmp.lt.f32.partialorder %v3492, %v2887
    %vm3789 = vcmp.lt.f32.partialorder %v3495, %v2888
    %vm3790 = vcmp.lt.f32.partialorder %v3498, %v2889
    %vm3791 = vcmp.lt.f32.partialorder %v3501, %v2890
    %vm3792 = vcmp.lt.f32.partialorder %v3504, %v2891
    %vm3793 = vcmp.lt.f32.partialorder %v3507, %v2892
    %vm3794 = vcmp.lt.f32.partialorder %v3510, %v2893
    %vm3795 = vcmp.lt.f32.partialorder %v3513, %v2894
    %vm3796 = vcmp.lt.f32.partialorder %v3516, %v2895
    %vm3797 = vcmp.lt.f32.partialorder %v3519, %v2896
    %vm3798 = vcmp.lt.f32.partialorder %v3522, %v2897
    %vm3799 = vcmp.lt.f32.partialorder %v3525, %v2898
    %vm3800 = vcmp.lt.f32.partialorder %v3528, %v2899
    %vm3801 = vcmp.lt.f32.partialorder %v3531, %v2900
    %vm3802 = vcmp.lt.f32.partialorder %v3534, %v2901
    %vm3803 = vcmp.lt.f32.partialorder %v3537, %v2902
    %vm3804 = vcmp.lt.f32.partialorder %v3540, %v2903
    %vm3805 = vcmp.lt.f32.partialorder %v3543, %v2904
    %vm3806 = vcmp.lt.f32.partialorder %v3546, %v2905
    %vm3807 = vcmp.lt.f32.partialorder %v3549, %v2906
    %vm3808 = vcmp.lt.f32.partialorder %v3552, %v2907
    %vm3809 = vcmp.lt.f32.partialorder %v3555, %v2908
    %vm3810 = vcmp.lt.f32.partialorder %v3558, %v2909
    %vm3811 = vcmp.lt.f32.partialorder %v3561, %v2910
    %vm3812 = vcmp.lt.f32.partialorder %v3564, %v2911
    %vm3813 = vcmp.lt.f32.partialorder %v3567, %v2912
    %vm3814 = vcmp.lt.f32.partialorder %v3570, %v2913
    %vm3815 = vcmp.lt.f32.partialorder %v3573, %v2914
    %vm3816 = vcmp.lt.f32.partialorder %v3576, %v2915
    %vm3817 = vcmp.lt.f32.partialorder %v3579, %v2916
    %vm3818 = vcmp.lt.f32.partialorder %v3582, %v2917
    %vm3819 = vcmp.lt.f32.partialorder %v3585, %v2918
    %vm3820 = vcmp.lt.f32.partialorder %v3588, %v2919
    %vm3821 = vcmp.lt.f32.partialorder %v3591, %v2920
    %vm3822 = vcmp.lt.f32.partialorder %v3594, %v2921
    %vm3823 = vcmp.lt.f32.partialorder %v3597, %v2922
    %vm3824 = vcmp.lt.f32.partialorder %v3600, %v2923
    %vm3825 = vcmp.lt.f32.partialorder %v3603, %v2924
    %vm3826 = vcmp.lt.f32.partialorder %v3606, %v2925
    %vm3827 = vcmp.lt.f32.partialorder %v3609, %v2926
    %vm3828 = vcmp.lt.f32.partialorder %v3612, %v2927
    %vm3829 = vcmp.lt.f32.partialorder %v3615, %v2928
    %vm3830 = vcmp.lt.f32.partialorder %v3618, %v2929
    %vm3831 = vcmp.lt.f32.partialorder %v3621, %v2930
    %vm3832 = vcmp.lt.f32.partialorder %v3624, %v2931
    %vm3833 = vcmp.lt.f32.partialorder %v3627, %v2932
    %vm3834 = vcmp.lt.f32.partialorder %v3630, %v2933
    %vm3835 = vcmp.lt.f32.partialorder %v3633, %v2934
    %vm3836 = vcmp.lt.f32.partialorder %v3636, %v2935
    %vm3837 = vcmp.lt.f32.partialorder %v3639, %v2936
    %vm3838 = vcmp.lt.f32.partialorder %v3642, %v2937
    %vm3839 = vcmp.lt.f32.partialorder %v3645, %v2938
    %vm3840 = vcmp.lt.f32.partialorder %v3648, %v2939
    %vm3841 = vcmp.lt.f32.partialorder %v3651, %v2940
    %vm3842 = vcmp.lt.f32.partialorder %v3654, %v2941
    %vm3843 = vcmp.lt.f32.partialorder %v3657, %v2942
    %vm3844 = vcmp.lt.f32.partialorder %v3660, %v2943
    %vm3845 = vcmp.lt.f32.partialorder %v3663, %v2944
    %vm3846 = vcmp.lt.f32.partialorder %v3666, %v2945
    %vm3847 = vcmp.lt.f32.partialorder %v3669, %v2946
    %vm3848 = vcmp.lt.f32.partialorder %v3672, %v2947
    %vm3849 = vcmp.lt.f32.partialorder %v3675, %v2948
    %vm3850 = vcmp.lt.f32.partialorder %v3678, %v2949
    %vm3851 = vcmp.lt.f32.partialorder %v3681, %v2950
    %vm3852 = vcmp.lt.f32.partialorder %v3684, %v2951
    %vm3853 = vcmp.lt.f32.partialorder %v3687, %v2952
    %vm3854 = vcmp.lt.f32.partialorder %v3690, %v2953
    %vm3855 = vcmp.lt.f32.partialorder %v3693, %v2954
    %vm3856 = vcmp.lt.f32.partialorder %v3696, %v2955
    %vm3857 = vcmp.lt.f32.partialorder %v3699, %v2956
    %vm3858 = vcmp.lt.f32.partialorder %v3702, %v2957
    %vm3859 = vcmp.lt.f32.partialorder %v3705, %v2958
    %vm3860 = vcmp.lt.f32.partialorder %v3708, %v2959
    %vm3861 = vcmp.lt.f32.partialorder %v3711, %v2960
    %vm3862 = vcmp.lt.f32.partialorder %v3714, %v2961
    %vm3863 = vcmp.lt.f32.partialorder %v3717, %v2962
    %vm3864 = vcmp.lt.f32.partialorder %v3720, %v2963
    %vm3865 = vcmp.lt.f32.partialorder %v3723, %v2964
    %vm3866 = vcmp.lt.f32.partialorder %v3726, %v2965
    %vm3867 = vcmp.lt.f32.partialorder %v3729, %v2966
    %vm3868 = vcmp.lt.f32.partialorder %v3732, %v2967
    %vm3869 = vcmp.lt.f32.partialorder %v3735, %v2968
    %vm3870 = vcmp.lt.f32.partialorder %v3738, %v2969
    %vm3871 = vcmp.lt.f32.partialorder %v3741, %v2970
    %vm3872 = vcmp.lt.f32.partialorder %v3744, %v2971
    %v3873 = vsel %vm3745, %v3363, %v2844
    %v3874 = vsel %vm3746, %v3366, %v2845
    %v3875 = vsel %vm3747, %v3369, %v2846
    %v3876 = vsel %vm3748, %v3372, %v2847
    %v3877 = vsel %vm3749, %v3375, %v2848
    %v3878 = vsel %vm3750, %v3378, %v2849
    %v3879 = vsel %vm3751, %v3381, %v2850
    %v3880 = vsel %vm3752, %v3384, %v2851
    %v3881 = vsel %vm3753, %v3387, %v2852
    %v3882 = vsel %vm3754, %v3390, %v2853
    %v3883 = vsel %vm3755, %v3393, %v2854
    %v3884 = vsel %vm3756, %v3396, %v2855
    %v3885 = vsel %vm3757, %v3399, %v2856
    %v3886 = vsel %vm3758, %v3402, %v2857
    %v3887 = vsel %vm3759, %v3405, %v2858
    %v3888 = vsel %vm3760, %v3408, %v2859
    %v3889 = vsel %vm3761, %v3411, %v2860
    %v3890 = vsel %vm3762, %v3414, %v2861
    %v3891 = vsel %vm3763, %v3417, %v2862
    %v3892 = vsel %vm3764, %v3420, %v2863
    %v3893 = vsel %vm3765, %v3423, %v2864
    %v3894 = vsel %vm3766, %v3426, %v2865
    %v3895 = vsel %vm3767, %v3429, %v2866
    %v3896 = vsel %vm3768, %v3432, %v2867
    %v3897 = vsel %vm3769, %v3435, %v2868
    %v3898 = vsel %vm3770, %v3438, %v2869
    %v3899 = vsel %vm3771, %v3441, %v2870
    %v3900 = vsel %vm3772, %v3444, %v2871
    %v3901 = vsel %vm3773, %v3447, %v2872
    %v3902 = vsel %vm3774, %v3450, %v2873
    %v3903 = vsel %vm3775, %v3453, %v2874
    %v3904 = vsel %vm3776, %v3456, %v2875
    %v3905 = vsel %vm3777, %v3459, %v2876
    %v3906 = vsel %vm3778, %v3462, %v2877
    %v3907 = vsel %vm3779, %v3465, %v2878
    %v3908 = vsel %vm3780, %v3468, %v2879
    %v3909 = vsel %vm3781, %v3471, %v2880
    %v3910 = vsel %vm3782, %v3474, %v2881
    %v3911 = vsel %vm3783, %v3477, %v2882
    %v3912 = vsel %vm3784, %v3480, %v2883
    %v3913 = vsel %vm3785, %v3483, %v2884
    %v3914 = vsel %vm3786, %v3486, %v2885
    %v3915 = vsel %vm3787, %v3489, %v2886
    %v3916 = vsel %vm3788, %v3492, %v2887
    %v3917 = vsel %vm3789, %v3495, %v2888
    %v3918 = vsel %vm3790, %v3498, %v2889
    %v3919 = vsel %vm3791, %v3501, %v2890
    %v3920 = vsel %vm3792, %v3504, %v2891
    %v3921 = vsel %vm3793, %v3507, %v2892
    %v3922 = vsel %vm3794, %v3510, %v2893
    %v3923 = vsel %vm3795, %v3513, %v2894
    %v3924 = vsel %vm3796, %v3516, %v2895
    %v3925 = vsel %vm3797, %v3519, %v2896
    %v3926 = vsel %vm3798, %v3522, %v2897
    %v3927 = vsel %vm3799, %v3525, %v2898
    %v3928 = vsel %vm3800, %v3528, %v2899
    %v3929 = vsel %vm3801, %v3531, %v2900
    %v3930 = vsel %vm3802, %v3534, %v2901
    %v3931 = vsel %vm3803, %v3537, %v2902
    %v3932 = vsel %vm3804, %v3540, %v2903
    %v3933 = vsel %vm3805, %v3543, %v2904
    %v3934 = vsel %vm3806, %v3546, %v2905
    %v3935 = vsel %vm3807, %v3549, %v2906
    %v3936 = vsel %vm3808, %v3552, %v2907
    %v3937 = vsel %vm3809, %v3555, %v2908
    %v3938 = vsel %vm3810, %v3558, %v2909
    %v3939 = vsel %vm3811, %v3561, %v2910
    %v3940 = vsel %vm3812, %v3564, %v2911
    %v3941 = vsel %vm3813, %v3567, %v2912
    %v3942 = vsel %vm3814, %v3570, %v2913
    %v3943 = vsel %vm3815, %v3573, %v2914
    %v3944 = vsel %vm3816, %v3576, %v2915
    %v3945 = vsel %vm3817, %v3579, %v2916
    %v3946 = vsel %vm3818, %v3582, %v2917
    %v3947 = vsel %vm3819, %v3585, %v2918
    %v3948 = vsel %vm3820, %v3588, %v2919
    %v3949 = vsel %vm3821, %v3591, %v2920
    %v3950 = vsel %vm3822, %v3594, %v2921
    %v3951 = vsel %vm3823, %v3597, %v2922
    %v3952 = vsel %vm3824, %v3600, %v2923
    %v3953 = vsel %vm3825, %v3603, %v2924
    %v3954 = vsel %vm3826, %v3606, %v2925
    %v3955 = vsel %vm3827, %v3609, %v2926
    %v3956 = vsel %vm3828, %v3612, %v2927
    %v3957 = vsel %vm3829, %v3615, %v2928
    %v3958 = vsel %vm3830, %v3618, %v2929
    %v3959 = vsel %vm3831, %v3621, %v2930
    %v3960 = vsel %vm3832, %v3624, %v2931
    %v3961 = vsel %vm3833, %v3627, %v2932
    %v3962 = vsel %vm3834, %v3630, %v2933
    %v3963 = vsel %vm3835, %v3633, %v2934
    %v3964 = vsel %vm3836, %v3636, %v2935
    %v3965 = vsel %vm3837, %v3639, %v2936
    %v3966 = vsel %vm3838, %v3642, %v2937
    %v3967 = vsel %vm3839, %v3645, %v2938
    %v3968 = vsel %vm3840, %v3648, %v2939
    %v3969 = vsel %vm3841, %v3651, %v2940
    %v3970 = vsel %vm3842, %v3654, %v2941
    %v3971 = vsel %vm3843, %v3657, %v2942
    %v3972 = vsel %vm3844, %v3660, %v2943
    %v3973 = vsel %vm3845, %v3663, %v2944
    %v3974 = vsel %vm3846, %v3666, %v2945
    %v3975 = vsel %vm3847, %v3669, %v2946
    %v3976 = vsel %vm3848, %v3672, %v2947
    %v3977 = vsel %vm3849, %v3675, %v2948
    %v3978 = vsel %vm3850, %v3678, %v2949
    %v3979 = vsel %vm3851, %v3681, %v2950
    %v3980 = vsel %vm3852, %v3684, %v2951
    %v3981 = vsel %vm3853, %v3687, %v2952
    %v3982 = vsel %vm3854, %v3690, %v2953
    %v3983 = vsel %vm3855, %v3693, %v2954
    %v3984 = vsel %vm3856, %v3696, %v2955
    %v3985 = vsel %vm3857, %v3699, %v2956
    %v3986 = vsel %vm3858, %v3702, %v2957
    %v3987 = vsel %vm3859, %v3705, %v2958
    %v3988 = vsel %vm3860, %v3708, %v2959
    %v3989 = vsel %vm3861, %v3711, %v2960
    %v3990 = vsel %vm3862, %v3714, %v2961
    %v3991 = vsel %vm3863, %v3717, %v2962
    %v3992 = vsel %vm3864, %v3720, %v2963
    %v3993 = vsel %vm3865, %v3723, %v2964
    %v3994 = vsel %vm3866, %v3726, %v2965
    %v3995 = vsel %vm3867, %v3729, %v2966
    %v3996 = vsel %vm3868, %v3732, %v2967
    %v3997 = vsel %vm3869, %v3735, %v2968
    %v3998 = vsel %vm3870, %v3738, %v2969
    %v3999 = vsel %vm3871, %v3741, %v2970
    %v4000 = vsel %vm3872, %v3744, %v2971
    %v4001 = vsel %vm3745, 3, %v2972
    %v4002 = vsel %vm3746, 3, %v2973
    %v4003 = vsel %vm3747, 3, %v2974
    %v4004 = vsel %vm3748, 3, %v2975
    %v4005 = vsel %vm3749, 3, %v2976
    %v4006 = vsel %vm3750, 3, %v2977
    %v4007 = vsel %vm3751, 3, %v2978
    %v4008 = vsel %vm3752, 3, %v2979
    %v4009 = vsel %vm3753, 3, %v2980
    %v4010 = vsel %vm3754, 3, %v2981
    %v4011 = vsel %vm3755, 3, %v2982
    %v4012 = vsel %vm3756, 3, %v2983
    %v4013 = vsel %vm3757, 3, %v2984
    %v4014 = vsel %vm3758, 3, %v2985
    %v4015 = vsel %vm3759, 3, %v2986
    %v4016 = vsel %vm3760, 3, %v2987
    %v4017 = vsel %vm3761, 3, %v2988
    %v4018 = vsel %vm3762, 3, %v2989
    %v4019 = vsel %vm3763, 3, %v2990
    %v4020 = vsel %vm3764, 3, %v2991
    %v4021 = vsel %vm3765, 3, %v2992
    %v4022 = vsel %vm3766, 3, %v2993
    %v4023 = vsel %vm3767, 3, %v2994
    %v4024 = vsel %vm3768, 3, %v2995
    %v4025 = vsel %vm3769, 3, %v2996
    %v4026 = vsel %vm3770, 3, %v2997
    %v4027 = vsel %vm3771, 3, %v2998
    %v4028 = vsel %vm3772, 3, %v2999
    %v4029 = vsel %vm3773, 3, %v3000
    %v4030 = vsel %vm3774, 3, %v3001
    %v4031 = vsel %vm3775, 3, %v3002
    %v4032 = vsel %vm3776, 3, %v3003
    %v4033 = vsel %vm3777, 3, %v3004
    %v4034 = vsel %vm3778, 3, %v3005
    %v4035 = vsel %vm3779, 3, %v3006
    %v4036 = vsel %vm3780, 3, %v3007
    %v4037 = vsel %vm3781, 3, %v3008
    %v4038 = vsel %vm3782, 3, %v3009
    %v4039 = vsel %vm3783, 3, %v3010
    %v4040 = vsel %vm3784, 3, %v3011
    %v4041 = vsel %vm3785, 3, %v3012
    %v4042 = vsel %vm3786, 3, %v3013
    %v4043 = vsel %vm3787, 3, %v3014
    %v4044 = vsel %vm3788, 3, %v3015
    %v4045 = vsel %vm3789, 3, %v3016
    %v4046 = vsel %vm3790, 3, %v3017
    %v4047 = vsel %vm3791, 3, %v3018
    %v4048 = vsel %vm3792, 3, %v3019
    %v4049 = vsel %vm3793, 3, %v3020
    %v4050 = vsel %vm3794, 3, %v3021
    %v4051 = vsel %vm3795, 3, %v3022
    %v4052 = vsel %vm3796, 3, %v3023
    %v4053 = vsel %vm3797, 3, %v3024
    %v4054 = vsel %vm3798, 3, %v3025
    %v4055 = vsel %vm3799, 3, %v3026
    %v4056 = vsel %vm3800, 3, %v3027
    %v4057 = vsel %vm3801, 3, %v3028
    %v4058 = vsel %vm3802, 3, %v3029
    %v4059 = vsel %vm3803, 3, %v3030
    %v4060 = vsel %vm3804, 3, %v3031
    %v4061 = vsel %vm3805, 3, %v3032
    %v4062 = vsel %vm3806, 3, %v3033
    %v4063 = vsel %vm3807, 3, %v3034
    %v4064 = vsel %vm3808, 3, %v3035
    %v4065 = vsel %vm3809, 3, %v3036
    %v4066 = vsel %vm3810, 3, %v3037
    %v4067 = vsel %vm3811, 3, %v3038
    %v4068 = vsel %vm3812, 3, %v3039
    %v4069 = vsel %vm3813, 3, %v3040
    %v4070 = vsel %vm3814, 3, %v3041
    %v4071 = vsel %vm3815, 3, %v3042
    %v4072 = vsel %vm3816, 3, %v3043
    %v4073 = vsel %vm3817, 3, %v3044
    %v4074 = vsel %vm3818, 3, %v3045
    %v4075 = vsel %vm3819, 3, %v3046
    %v4076 = vsel %vm3820, 3, %v3047
    %v4077 = vsel %vm3821, 3, %v3048
    %v4078 = vsel %vm3822, 3, %v3049
    %v4079 = vsel %vm3823, 3, %v3050
    %v4080 = vsel %vm3824, 3, %v3051
    %v4081 = vsel %vm3825, 3, %v3052
    %v4082 = vsel %vm3826, 3, %v3053
    %v4083 = vsel %vm3827, 3, %v3054
    %v4084 = vsel %vm3828, 3, %v3055
    %v4085 = vsel %vm3829, 3, %v3056
    %v4086 = vsel %vm3830, 3, %v3057
    %v4087 = vsel %vm3831, 3, %v3058
    %v4088 = vsel %vm3832, 3, %v3059
    %v4089 = vsel %vm3833, 3, %v3060
    %v4090 = vsel %vm3834, 3, %v3061
    %v4091 = vsel %vm3835, 3, %v3062
    %v4092 = vsel %vm3836, 3, %v3063
    %v4093 = vsel %vm3837, 3, %v3064
    %v4094 = vsel %vm3838, 3, %v3065
    %v4095 = vsel %vm3839, 3, %v3066
    %v4096 = vsel %vm3840, 3, %v3067
    %v4097 = vsel %vm3841, 3, %v3068
    %v4098 = vsel %vm3842, 3, %v3069
    %v4099 = vsel %vm3843, 3, %v3070
    %v4100 = vsel %vm3844, 3, %v3071
    %v4101 = vsel %vm3845, 3, %v3072
    %v4102 = vsel %vm3846, 3, %v3073
    %v4103 = vsel %vm3847, 3, %v3074
    %v4104 = vsel %vm3848, 3, %v3075
    %v4105 = vsel %vm3849, 3, %v3076
    %v4106 = vsel %vm3850, 3, %v3077
    %v4107 = vsel %vm3851, 3, %v3078
    %v4108 = vsel %vm3852, 3, %v3079
    %v4109 = vsel %vm3853, 3, %v3080
    %v4110 = vsel %vm3854, 3, %v3081
    %v4111 = vsel %vm3855, 3, %v3082
    %v4112 = vsel %vm3856, 3, %v3083
    %v4113 = vsel %vm3857, 3, %v3084
    %v4114 = vsel %vm3858, 3, %v3085
    %v4115 = vsel %vm3859, 3, %v3086
    %v4116 = vsel %vm3860, 3, %v3087
    %v4117 = vsel %vm3861, 3, %v3088
    %v4118 = vsel %vm3862, 3, %v3089
    %v4119 = vsel %vm3863, 3, %v3090
    %v4120 = vsel %vm3864, 3, %v3091
    %v4121 = vsel %vm3865, 3, %v3092
    %v4122 = vsel %vm3866, 3, %v3093
    %v4123 = vsel %vm3867, 3, %v3094
    %v4124 = vsel %vm3868, 3, %v3095
    %v4125 = vsel %vm3869, 3, %v3096
    %v4126 = vsel %vm3870, 3, %v3097
    %v4127 = vsel %vm3871, 3, %v3098
    %v4128 = vsel %vm3872, 3, %v3099
    %v4129 = vld [vmem:[%s1 + $0x4] sm:$0x1]
    %v4130 = vlaneseq
    %v4131 = vshrl.u32 %v4130, 7
    %v4132 = vsub.s32 0, %v4131
    %v4133 = vrot.slane %v4129, %v4132
    %v4134 = vsub.f32 %v12, %v4133
    %v4135 = vsub.f32 %v13, %v4133
    %v4136 = vsub.f32 %v14, %v4133
    %v4137 = vsub.f32 %v15, %v4133
    %v4138 = vsub.f32 %v16, %v4133
    %v4139 = vsub.f32 %v17, %v4133
    %v4140 = vsub.f32 %v18, %v4133
    %v4141 = vsub.f32 %v19, %v4133
    %v4142 = vsub.f32 %v20, %v4133
    %v4143 = vsub.f32 %v21, %v4133
    %v4144 = vsub.f32 %v22, %v4133
    %v4145 = vsub.f32 %v23, %v4133
    %v4146 = vsub.f32 %v24, %v4133
    %v4147 = vsub.f32 %v25, %v4133
    %v4148 = vsub.f32 %v26, %v4133
    %v4149 = vsub.f32 %v27, %v4133
    %v4150 = vsub.f32 %v28, %v4133
    %v4151 = vsub.f32 %v29, %v4133
    %v4152 = vsub.f32 %v30, %v4133
    %v4153 = vsub.f32 %v31, %v4133
    %v4154 = vsub.f32 %v32, %v4133
    %v4155 = vsub.f32 %v33, %v4133
    %v4156 = vsub.f32 %v34, %v4133
    %v4157 = vsub.f32 %v35, %v4133
    %v4158 = vsub.f32 %v36, %v4133
    %v4159 = vsub.f32 %v37, %v4133
    %v4160 = vsub.f32 %v38, %v4133
    %v4161 = vsub.f32 %v39, %v4133
    %v4162 = vsub.f32 %v40, %v4133
    %v4163 = vsub.f32 %v41, %v4133
    %v4164 = vsub.f32 %v42, %v4133
    %v4165 = vsub.f32 %v43, %v4133
    %v4166 = vsub.f32 %v44, %v4133
    %v4167 = vsub.f32 %v45, %v4133
    %v4168 = vsub.f32 %v46, %v4133
    %v4169 = vsub.f32 %v47, %v4133
    %v4170 = vsub.f32 %v48, %v4133
    %v4171 = vsub.f32 %v49, %v4133
    %v4172 = vsub.f32 %v50, %v4133
    %v4173 = vsub.f32 %v51, %v4133
    %v4174 = vsub.f32 %v52, %v4133
    %v4175 = vsub.f32 %v53, %v4133
    %v4176 = vsub.f32 %v54, %v4133
    %v4177 = vsub.f32 %v55, %v4133
    %v4178 = vsub.f32 %v56, %v4133
    %v4179 = vsub.f32 %v57, %v4133
    %v4180 = vsub.f32 %v58, %v4133
    %v4181 = vsub.f32 %v59, %v4133
    %v4182 = vsub.f32 %v60, %v4133
    %v4183 = vsub.f32 %v61, %v4133
    %v4184 = vsub.f32 %v62, %v4133
    %v4185 = vsub.f32 %v63, %v4133
    %v4186 = vsub.f32 %v64, %v4133
    %v4187 = vsub.f32 %v65, %v4133
    %v4188 = vsub.f32 %v66, %v4133
    %v4189 = vsub.f32 %v67, %v4133
    %v4190 = vsub.f32 %v68, %v4133
    %v4191 = vsub.f32 %v69, %v4133
    %v4192 = vsub.f32 %v70, %v4133
    %v4193 = vsub.f32 %v71, %v4133
    %v4194 = vsub.f32 %v72, %v4133
    %v4195 = vsub.f32 %v73, %v4133
    %v4196 = vsub.f32 %v74, %v4133
    %v4197 = vsub.f32 %v75, %v4133
    %v4198 = vsub.f32 %v76, %v4133
    %v4199 = vsub.f32 %v77, %v4133
    %v4200 = vsub.f32 %v78, %v4133
    %v4201 = vsub.f32 %v79, %v4133
    %v4202 = vsub.f32 %v80, %v4133
    %v4203 = vsub.f32 %v81, %v4133
    %v4204 = vsub.f32 %v82, %v4133
    %v4205 = vsub.f32 %v83, %v4133
    %v4206 = vsub.f32 %v84, %v4133
    %v4207 = vsub.f32 %v85, %v4133
    %v4208 = vsub.f32 %v86, %v4133
    %v4209 = vsub.f32 %v87, %v4133
    %v4210 = vsub.f32 %v88, %v4133
    %v4211 = vsub.f32 %v89, %v4133
    %v4212 = vsub.f32 %v90, %v4133
    %v4213 = vsub.f32 %v91, %v4133
    %v4214 = vsub.f32 %v92, %v4133
    %v4215 = vsub.f32 %v93, %v4133
    %v4216 = vsub.f32 %v94, %v4133
    %v4217 = vsub.f32 %v95, %v4133
    %v4218 = vsub.f32 %v96, %v4133
    %v4219 = vsub.f32 %v97, %v4133
    %v4220 = vsub.f32 %v98, %v4133
    %v4221 = vsub.f32 %v99, %v4133
    %v4222 = vsub.f32 %v100, %v4133
    %v4223 = vsub.f32 %v101, %v4133
    %v4224 = vsub.f32 %v102, %v4133
    %v4225 = vsub.f32 %v103, %v4133
    %v4226 = vsub.f32 %v104, %v4133
    %v4227 = vsub.f32 %v105, %v4133
    %v4228 = vsub.f32 %v106, %v4133
    %v4229 = vsub.f32 %v107, %v4133
    %v4230 = vsub.f32 %v108, %v4133
    %v4231 = vsub.f32 %v109, %v4133
    %v4232 = vsub.f32 %v110, %v4133
    %v4233 = vsub.f32 %v111, %v4133
    %v4234 = vsub.f32 %v112, %v4133
    %v4235 = vsub.f32 %v113, %v4133
    %v4236 = vsub.f32 %v114, %v4133
    %v4237 = vsub.f32 %v115, %v4133
    %v4238 = vsub.f32 %v116, %v4133
    %v4239 = vsub.f32 %v117, %v4133
    %v4240 = vsub.f32 %v118, %v4133
    %v4241 = vsub.f32 %v119, %v4133
    %v4242 = vsub.f32 %v120, %v4133
    %v4243 = vsub.f32 %v121, %v4133
    %v4244 = vsub.f32 %v122, %v4133
    %v4245 = vsub.f32 %v123, %v4133
    %v4246 = vsub.f32 %v124, %v4133
    %v4247 = vsub.f32 %v125, %v4133
    %v4248 = vsub.f32 %v126, %v4133
    %v4249 = vsub.f32 %v127, %v4133
    %v4250 = vsub.f32 %v128, %v4133
    %v4251 = vsub.f32 %v129, %v4133
    %v4252 = vsub.f32 %v130, %v4133
    %v4253 = vsub.f32 %v131, %v4133
    %v4254 = vsub.f32 %v132, %v4133
    %v4255 = vsub.f32 %v133, %v4133
    %v4256 = vsub.f32 %v134, %v4133
    %v4257 = vsub.f32 %v135, %v4133
    %v4258 = vsub.f32 %v136, %v4133
    %v4259 = vsub.f32 %v137, %v4133
    %v4260 = vsub.f32 %v138, %v4133
    %v4261 = vsub.f32 %v139, %v4133
    %v4262 = vmul.f32 %v4134, %v4134
    %v4263 = vmul.f32 %v4135, %v4135
    %v4264 = vmul.f32 %v4136, %v4136
    %v4265 = vmul.f32 %v4137, %v4137
    %v4266 = vmul.f32 %v4138, %v4138
    %v4267 = vmul.f32 %v4139, %v4139
    %v4268 = vmul.f32 %v4140, %v4140
    %v4269 = vmul.f32 %v4141, %v4141
    %v4270 = vmul.f32 %v4142, %v4142
    %v4271 = vmul.f32 %v4143, %v4143
    %v4272 = vmul.f32 %v4144, %v4144
    %v4273 = vmul.f32 %v4145, %v4145
    %v4274 = vmul.f32 %v4146, %v4146
    %v4275 = vmul.f32 %v4147, %v4147
    %v4276 = vmul.f32 %v4148, %v4148
    %v4277 = vmul.f32 %v4149, %v4149
    %v4278 = vmul.f32 %v4150, %v4150
    %v4279 = vmul.f32 %v4151, %v4151
    %v4280 = vmul.f32 %v4152, %v4152
    %v4281 = vmul.f32 %v4153, %v4153
    %v4282 = vmul.f32 %v4154, %v4154
    %v4283 = vmul.f32 %v4155, %v4155
    %v4284 = vmul.f32 %v4156, %v4156
    %v4285 = vmul.f32 %v4157, %v4157
    %v4286 = vmul.f32 %v4158, %v4158
    %v4287 = vmul.f32 %v4159, %v4159
    %v4288 = vmul.f32 %v4160, %v4160
    %v4289 = vmul.f32 %v4161, %v4161
    %v4290 = vmul.f32 %v4162, %v4162
    %v4291 = vmul.f32 %v4163, %v4163
    %v4292 = vmul.f32 %v4164, %v4164
    %v4293 = vmul.f32 %v4165, %v4165
    %v4294 = vmul.f32 %v4166, %v4166
    %v4295 = vmul.f32 %v4167, %v4167
    %v4296 = vmul.f32 %v4168, %v4168
    %v4297 = vmul.f32 %v4169, %v4169
    %v4298 = vmul.f32 %v4170, %v4170
    %v4299 = vmul.f32 %v4171, %v4171
    %v4300 = vmul.f32 %v4172, %v4172
    %v4301 = vmul.f32 %v4173, %v4173
    %v4302 = vmul.f32 %v4174, %v4174
    %v4303 = vmul.f32 %v4175, %v4175
    %v4304 = vmul.f32 %v4176, %v4176
    %v4305 = vmul.f32 %v4177, %v4177
    %v4306 = vmul.f32 %v4178, %v4178
    %v4307 = vmul.f32 %v4179, %v4179
    %v4308 = vmul.f32 %v4180, %v4180
    %v4309 = vmul.f32 %v4181, %v4181
    %v4310 = vmul.f32 %v4182, %v4182
    %v4311 = vmul.f32 %v4183, %v4183
    %v4312 = vmul.f32 %v4184, %v4184
    %v4313 = vmul.f32 %v4185, %v4185
    %v4314 = vmul.f32 %v4186, %v4186
    %v4315 = vmul.f32 %v4187, %v4187
    %v4316 = vmul.f32 %v4188, %v4188
    %v4317 = vmul.f32 %v4189, %v4189
    %v4318 = vmul.f32 %v4190, %v4190
    %v4319 = vmul.f32 %v4191, %v4191
    %v4320 = vmul.f32 %v4192, %v4192
    %v4321 = vmul.f32 %v4193, %v4193
    %v4322 = vmul.f32 %v4194, %v4194
    %v4323 = vmul.f32 %v4195, %v4195
    %v4324 = vmul.f32 %v4196, %v4196
    %v4325 = vmul.f32 %v4197, %v4197
    %v4326 = vmul.f32 %v4198, %v4198
    %v4327 = vmul.f32 %v4199, %v4199
    %v4328 = vmul.f32 %v4200, %v4200
    %v4329 = vmul.f32 %v4201, %v4201
    %v4330 = vmul.f32 %v4202, %v4202
    %v4331 = vmul.f32 %v4203, %v4203
    %v4332 = vmul.f32 %v4204, %v4204
    %v4333 = vmul.f32 %v4205, %v4205
    %v4334 = vmul.f32 %v4206, %v4206
    %v4335 = vmul.f32 %v4207, %v4207
    %v4336 = vmul.f32 %v4208, %v4208
    %v4337 = vmul.f32 %v4209, %v4209
    %v4338 = vmul.f32 %v4210, %v4210
    %v4339 = vmul.f32 %v4211, %v4211
    %v4340 = vmul.f32 %v4212, %v4212
    %v4341 = vmul.f32 %v4213, %v4213
    %v4342 = vmul.f32 %v4214, %v4214
    %v4343 = vmul.f32 %v4215, %v4215
    %v4344 = vmul.f32 %v4216, %v4216
    %v4345 = vmul.f32 %v4217, %v4217
    %v4346 = vmul.f32 %v4218, %v4218
    %v4347 = vmul.f32 %v4219, %v4219
    %v4348 = vmul.f32 %v4220, %v4220
    %v4349 = vmul.f32 %v4221, %v4221
    %v4350 = vmul.f32 %v4222, %v4222
    %v4351 = vmul.f32 %v4223, %v4223
    %v4352 = vmul.f32 %v4224, %v4224
    %v4353 = vmul.f32 %v4225, %v4225
    %v4354 = vmul.f32 %v4226, %v4226
    %v4355 = vmul.f32 %v4227, %v4227
    %v4356 = vmul.f32 %v4228, %v4228
    %v4357 = vmul.f32 %v4229, %v4229
    %v4358 = vmul.f32 %v4230, %v4230
    %v4359 = vmul.f32 %v4231, %v4231
    %v4360 = vmul.f32 %v4232, %v4232
    %v4361 = vmul.f32 %v4233, %v4233
    %v4362 = vmul.f32 %v4234, %v4234
    %v4363 = vmul.f32 %v4235, %v4235
    %v4364 = vmul.f32 %v4236, %v4236
    %v4365 = vmul.f32 %v4237, %v4237
    %v4366 = vmul.f32 %v4238, %v4238
    %v4367 = vmul.f32 %v4239, %v4239
    %v4368 = vmul.f32 %v4240, %v4240
    %v4369 = vmul.f32 %v4241, %v4241
    %v4370 = vmul.f32 %v4242, %v4242
    %v4371 = vmul.f32 %v4243, %v4243
    %v4372 = vmul.f32 %v4244, %v4244
    %v4373 = vmul.f32 %v4245, %v4245
    %v4374 = vmul.f32 %v4246, %v4246
    %v4375 = vmul.f32 %v4247, %v4247
    %v4376 = vmul.f32 %v4248, %v4248
    %v4377 = vmul.f32 %v4249, %v4249
    %v4378 = vmul.f32 %v4250, %v4250
    %v4379 = vmul.f32 %v4251, %v4251
    %v4380 = vmul.f32 %v4252, %v4252
    %v4381 = vmul.f32 %v4253, %v4253
    %v4382 = vmul.f32 %v4254, %v4254
    %v4383 = vmul.f32 %v4255, %v4255
    %v4384 = vmul.f32 %v4256, %v4256
    %v4385 = vmul.f32 %v4257, %v4257
    %v4386 = vmul.f32 %v4258, %v4258
    %v4387 = vmul.f32 %v4259, %v4259
    %v4388 = vmul.f32 %v4260, %v4260
    %v4389 = vmul.f32 %v4261, %v4261
    %v4390 = vsel %vm401, %v4262, 0.0
    %4391 = vadd.xlane.f32.xlu0 %v4390
    %v4392 = vpop.xlane.xlu0 %4391
    %v4393 = vsel %vm401, %v4263, 0.0
    %4394 = vadd.xlane.f32.xlu0 %v4393
    %v4395 = vpop.xlane.xlu0 %4394
    %v4396 = vsel %vm401, %v4264, 0.0
    %4397 = vadd.xlane.f32.xlu0 %v4396
    %v4398 = vpop.xlane.xlu0 %4397
    %v4399 = vsel %vm401, %v4265, 0.0
    %4400 = vadd.xlane.f32.xlu0 %v4399
    %v4401 = vpop.xlane.xlu0 %4400
    %v4402 = vsel %vm401, %v4266, 0.0
    %4403 = vadd.xlane.f32.xlu0 %v4402
    %v4404 = vpop.xlane.xlu0 %4403
    %v4405 = vsel %vm401, %v4267, 0.0
    %4406 = vadd.xlane.f32.xlu0 %v4405
    %v4407 = vpop.xlane.xlu0 %4406
    %v4408 = vsel %vm401, %v4268, 0.0
    %4409 = vadd.xlane.f32.xlu0 %v4408
    %v4410 = vpop.xlane.xlu0 %4409
    %v4411 = vsel %vm401, %v4269, 0.0
    %4412 = vadd.xlane.f32.xlu0 %v4411
    %v4413 = vpop.xlane.xlu0 %4412
    %v4414 = vsel %vm401, %v4270, 0.0
    %4415 = vadd.xlane.f32.xlu0 %v4414
    %v4416 = vpop.xlane.xlu0 %4415
    %v4417 = vsel %vm401, %v4271, 0.0
    %4418 = vadd.xlane.f32.xlu0 %v4417
    %v4419 = vpop.xlane.xlu0 %4418
    %v4420 = vsel %vm401, %v4272, 0.0
    %4421 = vadd.xlane.f32.xlu0 %v4420
    %v4422 = vpop.xlane.xlu0 %4421
    %v4423 = vsel %vm401, %v4273, 0.0
    %4424 = vadd.xlane.f32.xlu0 %v4423
    %v4425 = vpop.xlane.xlu0 %4424
    %v4426 = vsel %vm401, %v4274, 0.0
    %4427 = vadd.xlane.f32.xlu0 %v4426
    %v4428 = vpop.xlane.xlu0 %4427
    %v4429 = vsel %vm401, %v4275, 0.0
    %4430 = vadd.xlane.f32.xlu0 %v4429
    %v4431 = vpop.xlane.xlu0 %4430
    %v4432 = vsel %vm401, %v4276, 0.0
    %4433 = vadd.xlane.f32.xlu0 %v4432
    %v4434 = vpop.xlane.xlu0 %4433
    %v4435 = vsel %vm401, %v4277, 0.0
    %4436 = vadd.xlane.f32.xlu0 %v4435
    %v4437 = vpop.xlane.xlu0 %4436
    %v4438 = vsel %vm401, %v4278, 0.0
    %4439 = vadd.xlane.f32.xlu0 %v4438
    %v4440 = vpop.xlane.xlu0 %4439
    %v4441 = vsel %vm401, %v4279, 0.0
    %4442 = vadd.xlane.f32.xlu0 %v4441
    %v4443 = vpop.xlane.xlu0 %4442
    %v4444 = vsel %vm401, %v4280, 0.0
    %4445 = vadd.xlane.f32.xlu0 %v4444
    %v4446 = vpop.xlane.xlu0 %4445
    %v4447 = vsel %vm401, %v4281, 0.0
    %4448 = vadd.xlane.f32.xlu0 %v4447
    %v4449 = vpop.xlane.xlu0 %4448
    %v4450 = vsel %vm401, %v4282, 0.0
    %4451 = vadd.xlane.f32.xlu0 %v4450
    %v4452 = vpop.xlane.xlu0 %4451
    %v4453 = vsel %vm401, %v4283, 0.0
    %4454 = vadd.xlane.f32.xlu0 %v4453
    %v4455 = vpop.xlane.xlu0 %4454
    %v4456 = vsel %vm401, %v4284, 0.0
    %4457 = vadd.xlane.f32.xlu0 %v4456
    %v4458 = vpop.xlane.xlu0 %4457
    %v4459 = vsel %vm401, %v4285, 0.0
    %4460 = vadd.xlane.f32.xlu0 %v4459
    %v4461 = vpop.xlane.xlu0 %4460
    %v4462 = vsel %vm401, %v4286, 0.0
    %4463 = vadd.xlane.f32.xlu0 %v4462
    %v4464 = vpop.xlane.xlu0 %4463
    %v4465 = vsel %vm401, %v4287, 0.0
    %4466 = vadd.xlane.f32.xlu0 %v4465
    %v4467 = vpop.xlane.xlu0 %4466
    %v4468 = vsel %vm401, %v4288, 0.0
    %4469 = vadd.xlane.f32.xlu0 %v4468
    %v4470 = vpop.xlane.xlu0 %4469
    %v4471 = vsel %vm401, %v4289, 0.0
    %4472 = vadd.xlane.f32.xlu0 %v4471
    %v4473 = vpop.xlane.xlu0 %4472
    %v4474 = vsel %vm401, %v4290, 0.0
    %4475 = vadd.xlane.f32.xlu0 %v4474
    %v4476 = vpop.xlane.xlu0 %4475
    %v4477 = vsel %vm401, %v4291, 0.0
    %4478 = vadd.xlane.f32.xlu0 %v4477
    %v4479 = vpop.xlane.xlu0 %4478
    %v4480 = vsel %vm401, %v4292, 0.0
    %4481 = vadd.xlane.f32.xlu0 %v4480
    %v4482 = vpop.xlane.xlu0 %4481
    %v4483 = vsel %vm401, %v4293, 0.0
    %4484 = vadd.xlane.f32.xlu0 %v4483
    %v4485 = vpop.xlane.xlu0 %4484
    %v4486 = vsel %vm401, %v4294, 0.0
    %4487 = vadd.xlane.f32.xlu0 %v4486
    %v4488 = vpop.xlane.xlu0 %4487
    %v4489 = vsel %vm401, %v4295, 0.0
    %4490 = vadd.xlane.f32.xlu0 %v4489
    %v4491 = vpop.xlane.xlu0 %4490
    %v4492 = vsel %vm401, %v4296, 0.0
    %4493 = vadd.xlane.f32.xlu0 %v4492
    %v4494 = vpop.xlane.xlu0 %4493
    %v4495 = vsel %vm401, %v4297, 0.0
    %4496 = vadd.xlane.f32.xlu0 %v4495
    %v4497 = vpop.xlane.xlu0 %4496
    %v4498 = vsel %vm401, %v4298, 0.0
    %4499 = vadd.xlane.f32.xlu0 %v4498
    %v4500 = vpop.xlane.xlu0 %4499
    %v4501 = vsel %vm401, %v4299, 0.0
    %4502 = vadd.xlane.f32.xlu0 %v4501
    %v4503 = vpop.xlane.xlu0 %4502
    %v4504 = vsel %vm401, %v4300, 0.0
    %4505 = vadd.xlane.f32.xlu0 %v4504
    %v4506 = vpop.xlane.xlu0 %4505
    %v4507 = vsel %vm401, %v4301, 0.0
    %4508 = vadd.xlane.f32.xlu0 %v4507
    %v4509 = vpop.xlane.xlu0 %4508
    %v4510 = vsel %vm401, %v4302, 0.0
    %4511 = vadd.xlane.f32.xlu0 %v4510
    %v4512 = vpop.xlane.xlu0 %4511
    %v4513 = vsel %vm401, %v4303, 0.0
    %4514 = vadd.xlane.f32.xlu0 %v4513
    %v4515 = vpop.xlane.xlu0 %4514
    %v4516 = vsel %vm401, %v4304, 0.0
    %4517 = vadd.xlane.f32.xlu0 %v4516
    %v4518 = vpop.xlane.xlu0 %4517
    %v4519 = vsel %vm401, %v4305, 0.0
    %4520 = vadd.xlane.f32.xlu0 %v4519
    %v4521 = vpop.xlane.xlu0 %4520
    %v4522 = vsel %vm401, %v4306, 0.0
    %4523 = vadd.xlane.f32.xlu0 %v4522
    %v4524 = vpop.xlane.xlu0 %4523
    %v4525 = vsel %vm401, %v4307, 0.0
    %4526 = vadd.xlane.f32.xlu0 %v4525
    %v4527 = vpop.xlane.xlu0 %4526
    %v4528 = vsel %vm401, %v4308, 0.0
    %4529 = vadd.xlane.f32.xlu0 %v4528
    %v4530 = vpop.xlane.xlu0 %4529
    %v4531 = vsel %vm401, %v4309, 0.0
    %4532 = vadd.xlane.f32.xlu0 %v4531
    %v4533 = vpop.xlane.xlu0 %4532
    %v4534 = vsel %vm401, %v4310, 0.0
    %4535 = vadd.xlane.f32.xlu0 %v4534
    %v4536 = vpop.xlane.xlu0 %4535
    %v4537 = vsel %vm401, %v4311, 0.0
    %4538 = vadd.xlane.f32.xlu0 %v4537
    %v4539 = vpop.xlane.xlu0 %4538
    %v4540 = vsel %vm401, %v4312, 0.0
    %4541 = vadd.xlane.f32.xlu0 %v4540
    %v4542 = vpop.xlane.xlu0 %4541
    %v4543 = vsel %vm401, %v4313, 0.0
    %4544 = vadd.xlane.f32.xlu0 %v4543
    %v4545 = vpop.xlane.xlu0 %4544
    %v4546 = vsel %vm401, %v4314, 0.0
    %4547 = vadd.xlane.f32.xlu0 %v4546
    %v4548 = vpop.xlane.xlu0 %4547
    %v4549 = vsel %vm401, %v4315, 0.0
    %4550 = vadd.xlane.f32.xlu0 %v4549
    %v4551 = vpop.xlane.xlu0 %4550
    %v4552 = vsel %vm401, %v4316, 0.0
    %4553 = vadd.xlane.f32.xlu0 %v4552
    %v4554 = vpop.xlane.xlu0 %4553
    %v4555 = vsel %vm401, %v4317, 0.0
    %4556 = vadd.xlane.f32.xlu0 %v4555
    %v4557 = vpop.xlane.xlu0 %4556
    %v4558 = vsel %vm401, %v4318, 0.0
    %4559 = vadd.xlane.f32.xlu0 %v4558
    %v4560 = vpop.xlane.xlu0 %4559
    %v4561 = vsel %vm401, %v4319, 0.0
    %4562 = vadd.xlane.f32.xlu0 %v4561
    %v4563 = vpop.xlane.xlu0 %4562
    %v4564 = vsel %vm401, %v4320, 0.0
    %4565 = vadd.xlane.f32.xlu0 %v4564
    %v4566 = vpop.xlane.xlu0 %4565
    %v4567 = vsel %vm401, %v4321, 0.0
    %4568 = vadd.xlane.f32.xlu0 %v4567
    %v4569 = vpop.xlane.xlu0 %4568
    %v4570 = vsel %vm401, %v4322, 0.0
    %4571 = vadd.xlane.f32.xlu0 %v4570
    %v4572 = vpop.xlane.xlu0 %4571
    %v4573 = vsel %vm401, %v4323, 0.0
    %4574 = vadd.xlane.f32.xlu0 %v4573
    %v4575 = vpop.xlane.xlu0 %4574
    %v4576 = vsel %vm401, %v4324, 0.0
    %4577 = vadd.xlane.f32.xlu0 %v4576
    %v4578 = vpop.xlane.xlu0 %4577
    %v4579 = vsel %vm401, %v4325, 0.0
    %4580 = vadd.xlane.f32.xlu0 %v4579
    %v4581 = vpop.xlane.xlu0 %4580
    %v4582 = vsel %vm401, %v4326, 0.0
    %4583 = vadd.xlane.f32.xlu0 %v4582
    %v4584 = vpop.xlane.xlu0 %4583
    %v4585 = vsel %vm401, %v4327, 0.0
    %4586 = vadd.xlane.f32.xlu0 %v4585
    %v4587 = vpop.xlane.xlu0 %4586
    %v4588 = vsel %vm401, %v4328, 0.0
    %4589 = vadd.xlane.f32.xlu0 %v4588
    %v4590 = vpop.xlane.xlu0 %4589
    %v4591 = vsel %vm401, %v4329, 0.0
    %4592 = vadd.xlane.f32.xlu0 %v4591
    %v4593 = vpop.xlane.xlu0 %4592
    %v4594 = vsel %vm401, %v4330, 0.0
    %4595 = vadd.xlane.f32.xlu0 %v4594
    %v4596 = vpop.xlane.xlu0 %4595
    %v4597 = vsel %vm401, %v4331, 0.0
    %4598 = vadd.xlane.f32.xlu0 %v4597
    %v4599 = vpop.xlane.xlu0 %4598
    %v4600 = vsel %vm401, %v4332, 0.0
    %4601 = vadd.xlane.f32.xlu0 %v4600
    %v4602 = vpop.xlane.xlu0 %4601
    %v4603 = vsel %vm401, %v4333, 0.0
    %4604 = vadd.xlane.f32.xlu0 %v4603
    %v4605 = vpop.xlane.xlu0 %4604
    %v4606 = vsel %vm401, %v4334, 0.0
    %4607 = vadd.xlane.f32.xlu0 %v4606
    %v4608 = vpop.xlane.xlu0 %4607
    %v4609 = vsel %vm401, %v4335, 0.0
    %4610 = vadd.xlane.f32.xlu0 %v4609
    %v4611 = vpop.xlane.xlu0 %4610
    %v4612 = vsel %vm401, %v4336, 0.0
    %4613 = vadd.xlane.f32.xlu0 %v4612
    %v4614 = vpop.xlane.xlu0 %4613
    %v4615 = vsel %vm401, %v4337, 0.0
    %4616 = vadd.xlane.f32.xlu0 %v4615
    %v4617 = vpop.xlane.xlu0 %4616
    %v4618 = vsel %vm401, %v4338, 0.0
    %4619 = vadd.xlane.f32.xlu0 %v4618
    %v4620 = vpop.xlane.xlu0 %4619
    %v4621 = vsel %vm401, %v4339, 0.0
    %4622 = vadd.xlane.f32.xlu0 %v4621
    %v4623 = vpop.xlane.xlu0 %4622
    %v4624 = vsel %vm401, %v4340, 0.0
    %4625 = vadd.xlane.f32.xlu0 %v4624
    %v4626 = vpop.xlane.xlu0 %4625
    %v4627 = vsel %vm401, %v4341, 0.0
    %4628 = vadd.xlane.f32.xlu0 %v4627
    %v4629 = vpop.xlane.xlu0 %4628
    %v4630 = vsel %vm401, %v4342, 0.0
    %4631 = vadd.xlane.f32.xlu0 %v4630
    %v4632 = vpop.xlane.xlu0 %4631
    %v4633 = vsel %vm401, %v4343, 0.0
    %4634 = vadd.xlane.f32.xlu0 %v4633
    %v4635 = vpop.xlane.xlu0 %4634
    %v4636 = vsel %vm401, %v4344, 0.0
    %4637 = vadd.xlane.f32.xlu0 %v4636
    %v4638 = vpop.xlane.xlu0 %4637
    %v4639 = vsel %vm401, %v4345, 0.0
    %4640 = vadd.xlane.f32.xlu0 %v4639
    %v4641 = vpop.xlane.xlu0 %4640
    %v4642 = vsel %vm401, %v4346, 0.0
    %4643 = vadd.xlane.f32.xlu0 %v4642
    %v4644 = vpop.xlane.xlu0 %4643
    %v4645 = vsel %vm401, %v4347, 0.0
    %4646 = vadd.xlane.f32.xlu0 %v4645
    %v4647 = vpop.xlane.xlu0 %4646
    %v4648 = vsel %vm401, %v4348, 0.0
    %4649 = vadd.xlane.f32.xlu0 %v4648
    %v4650 = vpop.xlane.xlu0 %4649
    %v4651 = vsel %vm401, %v4349, 0.0
    %4652 = vadd.xlane.f32.xlu0 %v4651
    %v4653 = vpop.xlane.xlu0 %4652
    %v4654 = vsel %vm401, %v4350, 0.0
    %4655 = vadd.xlane.f32.xlu0 %v4654
    %v4656 = vpop.xlane.xlu0 %4655
    %v4657 = vsel %vm401, %v4351, 0.0
    %4658 = vadd.xlane.f32.xlu0 %v4657
    %v4659 = vpop.xlane.xlu0 %4658
    %v4660 = vsel %vm401, %v4352, 0.0
    %4661 = vadd.xlane.f32.xlu0 %v4660
    %v4662 = vpop.xlane.xlu0 %4661
    %v4663 = vsel %vm401, %v4353, 0.0
    %4664 = vadd.xlane.f32.xlu0 %v4663
    %v4665 = vpop.xlane.xlu0 %4664
    %v4666 = vsel %vm401, %v4354, 0.0
    %4667 = vadd.xlane.f32.xlu0 %v4666
    %v4668 = vpop.xlane.xlu0 %4667
    %v4669 = vsel %vm401, %v4355, 0.0
    %4670 = vadd.xlane.f32.xlu0 %v4669
    %v4671 = vpop.xlane.xlu0 %4670
    %v4672 = vsel %vm401, %v4356, 0.0
    %4673 = vadd.xlane.f32.xlu0 %v4672
    %v4674 = vpop.xlane.xlu0 %4673
    %v4675 = vsel %vm401, %v4357, 0.0
    %4676 = vadd.xlane.f32.xlu0 %v4675
    %v4677 = vpop.xlane.xlu0 %4676
    %v4678 = vsel %vm401, %v4358, 0.0
    %4679 = vadd.xlane.f32.xlu0 %v4678
    %v4680 = vpop.xlane.xlu0 %4679
    %v4681 = vsel %vm401, %v4359, 0.0
    %4682 = vadd.xlane.f32.xlu0 %v4681
    %v4683 = vpop.xlane.xlu0 %4682
    %v4684 = vsel %vm401, %v4360, 0.0
    %4685 = vadd.xlane.f32.xlu0 %v4684
    %v4686 = vpop.xlane.xlu0 %4685
    %v4687 = vsel %vm401, %v4361, 0.0
    %4688 = vadd.xlane.f32.xlu0 %v4687
    %v4689 = vpop.xlane.xlu0 %4688
    %v4690 = vsel %vm401, %v4362, 0.0
    %4691 = vadd.xlane.f32.xlu0 %v4690
    %v4692 = vpop.xlane.xlu0 %4691
    %v4693 = vsel %vm401, %v4363, 0.0
    %4694 = vadd.xlane.f32.xlu0 %v4693
    %v4695 = vpop.xlane.xlu0 %4694
    %v4696 = vsel %vm401, %v4364, 0.0
    %4697 = vadd.xlane.f32.xlu0 %v4696
    %v4698 = vpop.xlane.xlu0 %4697
    %v4699 = vsel %vm401, %v4365, 0.0
    %4700 = vadd.xlane.f32.xlu0 %v4699
    %v4701 = vpop.xlane.xlu0 %4700
    %v4702 = vsel %vm401, %v4366, 0.0
    %4703 = vadd.xlane.f32.xlu0 %v4702
    %v4704 = vpop.xlane.xlu0 %4703
    %v4705 = vsel %vm401, %v4367, 0.0
    %4706 = vadd.xlane.f32.xlu0 %v4705
    %v4707 = vpop.xlane.xlu0 %4706
    %v4708 = vsel %vm401, %v4368, 0.0
    %4709 = vadd.xlane.f32.xlu0 %v4708
    %v4710 = vpop.xlane.xlu0 %4709
    %v4711 = vsel %vm401, %v4369, 0.0
    %4712 = vadd.xlane.f32.xlu0 %v4711
    %v4713 = vpop.xlane.xlu0 %4712
    %v4714 = vsel %vm401, %v4370, 0.0
    %4715 = vadd.xlane.f32.xlu0 %v4714
    %v4716 = vpop.xlane.xlu0 %4715
    %v4717 = vsel %vm401, %v4371, 0.0
    %4718 = vadd.xlane.f32.xlu0 %v4717
    %v4719 = vpop.xlane.xlu0 %4718
    %v4720 = vsel %vm401, %v4372, 0.0
    %4721 = vadd.xlane.f32.xlu0 %v4720
    %v4722 = vpop.xlane.xlu0 %4721
    %v4723 = vsel %vm401, %v4373, 0.0
    %4724 = vadd.xlane.f32.xlu0 %v4723
    %v4725 = vpop.xlane.xlu0 %4724
    %v4726 = vsel %vm401, %v4374, 0.0
    %4727 = vadd.xlane.f32.xlu0 %v4726
    %v4728 = vpop.xlane.xlu0 %4727
    %v4729 = vsel %vm401, %v4375, 0.0
    %4730 = vadd.xlane.f32.xlu0 %v4729
    %v4731 = vpop.xlane.xlu0 %4730
    %v4732 = vsel %vm401, %v4376, 0.0
    %4733 = vadd.xlane.f32.xlu0 %v4732
    %v4734 = vpop.xlane.xlu0 %4733
    %v4735 = vsel %vm401, %v4377, 0.0
    %4736 = vadd.xlane.f32.xlu0 %v4735
    %v4737 = vpop.xlane.xlu0 %4736
    %v4738 = vsel %vm401, %v4378, 0.0
    %4739 = vadd.xlane.f32.xlu0 %v4738
    %v4740 = vpop.xlane.xlu0 %4739
    %v4741 = vsel %vm401, %v4379, 0.0
    %4742 = vadd.xlane.f32.xlu0 %v4741
    %v4743 = vpop.xlane.xlu0 %4742
    %v4744 = vsel %vm401, %v4380, 0.0
    %4745 = vadd.xlane.f32.xlu0 %v4744
    %v4746 = vpop.xlane.xlu0 %4745
    %v4747 = vsel %vm401, %v4381, 0.0
    %4748 = vadd.xlane.f32.xlu0 %v4747
    %v4749 = vpop.xlane.xlu0 %4748
    %v4750 = vsel %vm401, %v4382, 0.0
    %4751 = vadd.xlane.f32.xlu0 %v4750
    %v4752 = vpop.xlane.xlu0 %4751
    %v4753 = vsel %vm401, %v4383, 0.0
    %4754 = vadd.xlane.f32.xlu0 %v4753
    %v4755 = vpop.xlane.xlu0 %4754
    %v4756 = vsel %vm401, %v4384, 0.0
    %4757 = vadd.xlane.f32.xlu0 %v4756
    %v4758 = vpop.xlane.xlu0 %4757
    %v4759 = vsel %vm401, %v4385, 0.0
    %4760 = vadd.xlane.f32.xlu0 %v4759
    %v4761 = vpop.xlane.xlu0 %4760
    %v4762 = vsel %vm401, %v4386, 0.0
    %4763 = vadd.xlane.f32.xlu0 %v4762
    %v4764 = vpop.xlane.xlu0 %4763
    %v4765 = vsel %vm401, %v4387, 0.0
    %4766 = vadd.xlane.f32.xlu0 %v4765
    %v4767 = vpop.xlane.xlu0 %4766
    %v4768 = vsel %vm401, %v4388, 0.0
    %4769 = vadd.xlane.f32.xlu0 %v4768
    %v4770 = vpop.xlane.xlu0 %4769
    %v4771 = vsel %vm401, %v4389, 0.0
    %4772 = vadd.xlane.f32.xlu0 %v4771
    %v4773 = vpop.xlane.xlu0 %4772
    %vm4774 = vcmp.lt.f32.partialorder %v4392, %v3873
    %vm4775 = vcmp.lt.f32.partialorder %v4395, %v3874
    %vm4776 = vcmp.lt.f32.partialorder %v4398, %v3875
    %vm4777 = vcmp.lt.f32.partialorder %v4401, %v3876
    %vm4778 = vcmp.lt.f32.partialorder %v4404, %v3877
    %vm4779 = vcmp.lt.f32.partialorder %v4407, %v3878
    %vm4780 = vcmp.lt.f32.partialorder %v4410, %v3879
    %vm4781 = vcmp.lt.f32.partialorder %v4413, %v3880
    %vm4782 = vcmp.lt.f32.partialorder %v4416, %v3881
    %vm4783 = vcmp.lt.f32.partialorder %v4419, %v3882
    %vm4784 = vcmp.lt.f32.partialorder %v4422, %v3883
    %vm4785 = vcmp.lt.f32.partialorder %v4425, %v3884
    %vm4786 = vcmp.lt.f32.partialorder %v4428, %v3885
    %vm4787 = vcmp.lt.f32.partialorder %v4431, %v3886
    %vm4788 = vcmp.lt.f32.partialorder %v4434, %v3887
    %vm4789 = vcmp.lt.f32.partialorder %v4437, %v3888
    %vm4790 = vcmp.lt.f32.partialorder %v4440, %v3889
    %vm4791 = vcmp.lt.f32.partialorder %v4443, %v3890
    %vm4792 = vcmp.lt.f32.partialorder %v4446, %v3891
    %vm4793 = vcmp.lt.f32.partialorder %v4449, %v3892
    %vm4794 = vcmp.lt.f32.partialorder %v4452, %v3893
    %vm4795 = vcmp.lt.f32.partialorder %v4455, %v3894
    %vm4796 = vcmp.lt.f32.partialorder %v4458, %v3895
    %vm4797 = vcmp.lt.f32.partialorder %v4461, %v3896
    %vm4798 = vcmp.lt.f32.partialorder %v4464, %v3897
    %vm4799 = vcmp.lt.f32.partialorder %v4467, %v3898
    %vm4800 = vcmp.lt.f32.partialorder %v4470, %v3899
    %vm4801 = vcmp.lt.f32.partialorder %v4473, %v3900
    %vm4802 = vcmp.lt.f32.partialorder %v4476, %v3901
    %vm4803 = vcmp.lt.f32.partialorder %v4479, %v3902
    %vm4804 = vcmp.lt.f32.partialorder %v4482, %v3903
    %vm4805 = vcmp.lt.f32.partialorder %v4485, %v3904
    %vm4806 = vcmp.lt.f32.partialorder %v4488, %v3905
    %vm4807 = vcmp.lt.f32.partialorder %v4491, %v3906
    %vm4808 = vcmp.lt.f32.partialorder %v4494, %v3907
    %vm4809 = vcmp.lt.f32.partialorder %v4497, %v3908
    %vm4810 = vcmp.lt.f32.partialorder %v4500, %v3909
    %vm4811 = vcmp.lt.f32.partialorder %v4503, %v3910
    %vm4812 = vcmp.lt.f32.partialorder %v4506, %v3911
    %vm4813 = vcmp.lt.f32.partialorder %v4509, %v3912
    %vm4814 = vcmp.lt.f32.partialorder %v4512, %v3913
    %vm4815 = vcmp.lt.f32.partialorder %v4515, %v3914
    %vm4816 = vcmp.lt.f32.partialorder %v4518, %v3915
    %vm4817 = vcmp.lt.f32.partialorder %v4521, %v3916
    %vm4818 = vcmp.lt.f32.partialorder %v4524, %v3917
    %vm4819 = vcmp.lt.f32.partialorder %v4527, %v3918
    %vm4820 = vcmp.lt.f32.partialorder %v4530, %v3919
    %vm4821 = vcmp.lt.f32.partialorder %v4533, %v3920
    %vm4822 = vcmp.lt.f32.partialorder %v4536, %v3921
    %vm4823 = vcmp.lt.f32.partialorder %v4539, %v3922
    %vm4824 = vcmp.lt.f32.partialorder %v4542, %v3923
    %vm4825 = vcmp.lt.f32.partialorder %v4545, %v3924
    %vm4826 = vcmp.lt.f32.partialorder %v4548, %v3925
    %vm4827 = vcmp.lt.f32.partialorder %v4551, %v3926
    %vm4828 = vcmp.lt.f32.partialorder %v4554, %v3927
    %vm4829 = vcmp.lt.f32.partialorder %v4557, %v3928
    %vm4830 = vcmp.lt.f32.partialorder %v4560, %v3929
    %vm4831 = vcmp.lt.f32.partialorder %v4563, %v3930
    %vm4832 = vcmp.lt.f32.partialorder %v4566, %v3931
    %vm4833 = vcmp.lt.f32.partialorder %v4569, %v3932
    %vm4834 = vcmp.lt.f32.partialorder %v4572, %v3933
    %vm4835 = vcmp.lt.f32.partialorder %v4575, %v3934
    %vm4836 = vcmp.lt.f32.partialorder %v4578, %v3935
    %vm4837 = vcmp.lt.f32.partialorder %v4581, %v3936
    %vm4838 = vcmp.lt.f32.partialorder %v4584, %v3937
    %vm4839 = vcmp.lt.f32.partialorder %v4587, %v3938
    %vm4840 = vcmp.lt.f32.partialorder %v4590, %v3939
    %vm4841 = vcmp.lt.f32.partialorder %v4593, %v3940
    %vm4842 = vcmp.lt.f32.partialorder %v4596, %v3941
    %vm4843 = vcmp.lt.f32.partialorder %v4599, %v3942
    %vm4844 = vcmp.lt.f32.partialorder %v4602, %v3943
    %vm4845 = vcmp.lt.f32.partialorder %v4605, %v3944
    %vm4846 = vcmp.lt.f32.partialorder %v4608, %v3945
    %vm4847 = vcmp.lt.f32.partialorder %v4611, %v3946
    %vm4848 = vcmp.lt.f32.partialorder %v4614, %v3947
    %vm4849 = vcmp.lt.f32.partialorder %v4617, %v3948
    %vm4850 = vcmp.lt.f32.partialorder %v4620, %v3949
    %vm4851 = vcmp.lt.f32.partialorder %v4623, %v3950
    %vm4852 = vcmp.lt.f32.partialorder %v4626, %v3951
    %vm4853 = vcmp.lt.f32.partialorder %v4629, %v3952
    %vm4854 = vcmp.lt.f32.partialorder %v4632, %v3953
    %vm4855 = vcmp.lt.f32.partialorder %v4635, %v3954
    %vm4856 = vcmp.lt.f32.partialorder %v4638, %v3955
    %vm4857 = vcmp.lt.f32.partialorder %v4641, %v3956
    %vm4858 = vcmp.lt.f32.partialorder %v4644, %v3957
    %vm4859 = vcmp.lt.f32.partialorder %v4647, %v3958
    %vm4860 = vcmp.lt.f32.partialorder %v4650, %v3959
    %vm4861 = vcmp.lt.f32.partialorder %v4653, %v3960
    %vm4862 = vcmp.lt.f32.partialorder %v4656, %v3961
    %vm4863 = vcmp.lt.f32.partialorder %v4659, %v3962
    %vm4864 = vcmp.lt.f32.partialorder %v4662, %v3963
    %vm4865 = vcmp.lt.f32.partialorder %v4665, %v3964
    %vm4866 = vcmp.lt.f32.partialorder %v4668, %v3965
    %vm4867 = vcmp.lt.f32.partialorder %v4671, %v3966
    %vm4868 = vcmp.lt.f32.partialorder %v4674, %v3967
    %vm4869 = vcmp.lt.f32.partialorder %v4677, %v3968
    %vm4870 = vcmp.lt.f32.partialorder %v4680, %v3969
    %vm4871 = vcmp.lt.f32.partialorder %v4683, %v3970
    %vm4872 = vcmp.lt.f32.partialorder %v4686, %v3971
    %vm4873 = vcmp.lt.f32.partialorder %v4689, %v3972
    %vm4874 = vcmp.lt.f32.partialorder %v4692, %v3973
    %vm4875 = vcmp.lt.f32.partialorder %v4695, %v3974
    %vm4876 = vcmp.lt.f32.partialorder %v4698, %v3975
    %vm4877 = vcmp.lt.f32.partialorder %v4701, %v3976
    %vm4878 = vcmp.lt.f32.partialorder %v4704, %v3977
    %vm4879 = vcmp.lt.f32.partialorder %v4707, %v3978
    %vm4880 = vcmp.lt.f32.partialorder %v4710, %v3979
    %vm4881 = vcmp.lt.f32.partialorder %v4713, %v3980
    %vm4882 = vcmp.lt.f32.partialorder %v4716, %v3981
    %vm4883 = vcmp.lt.f32.partialorder %v4719, %v3982
    %vm4884 = vcmp.lt.f32.partialorder %v4722, %v3983
    %vm4885 = vcmp.lt.f32.partialorder %v4725, %v3984
    %vm4886 = vcmp.lt.f32.partialorder %v4728, %v3985
    %vm4887 = vcmp.lt.f32.partialorder %v4731, %v3986
    %vm4888 = vcmp.lt.f32.partialorder %v4734, %v3987
    %vm4889 = vcmp.lt.f32.partialorder %v4737, %v3988
    %vm4890 = vcmp.lt.f32.partialorder %v4740, %v3989
    %vm4891 = vcmp.lt.f32.partialorder %v4743, %v3990
    %vm4892 = vcmp.lt.f32.partialorder %v4746, %v3991
    %vm4893 = vcmp.lt.f32.partialorder %v4749, %v3992
    %vm4894 = vcmp.lt.f32.partialorder %v4752, %v3993
    %vm4895 = vcmp.lt.f32.partialorder %v4755, %v3994
    %vm4896 = vcmp.lt.f32.partialorder %v4758, %v3995
    %vm4897 = vcmp.lt.f32.partialorder %v4761, %v3996
    %vm4898 = vcmp.lt.f32.partialorder %v4764, %v3997
    %vm4899 = vcmp.lt.f32.partialorder %v4767, %v3998
    %vm4900 = vcmp.lt.f32.partialorder %v4770, %v3999
    %vm4901 = vcmp.lt.f32.partialorder %v4773, %v4000
    %v4902 = vsel %vm4774, %v4392, %v3873
    %v4903 = vsel %vm4775, %v4395, %v3874
    %v4904 = vsel %vm4776, %v4398, %v3875
    %v4905 = vsel %vm4777, %v4401, %v3876
    %v4906 = vsel %vm4778, %v4404, %v3877
    %v4907 = vsel %vm4779, %v4407, %v3878
    %v4908 = vsel %vm4780, %v4410, %v3879
    %v4909 = vsel %vm4781, %v4413, %v3880
    %v4910 = vsel %vm4782, %v4416, %v3881
    %v4911 = vsel %vm4783, %v4419, %v3882
    %v4912 = vsel %vm4784, %v4422, %v3883
    %v4913 = vsel %vm4785, %v4425, %v3884
    %v4914 = vsel %vm4786, %v4428, %v3885
    %v4915 = vsel %vm4787, %v4431, %v3886
    %v4916 = vsel %vm4788, %v4434, %v3887
    %v4917 = vsel %vm4789, %v4437, %v3888
    %v4918 = vsel %vm4790, %v4440, %v3889
    %v4919 = vsel %vm4791, %v4443, %v3890
    %v4920 = vsel %vm4792, %v4446, %v3891
    %v4921 = vsel %vm4793, %v4449, %v3892
    %v4922 = vsel %vm4794, %v4452, %v3893
    %v4923 = vsel %vm4795, %v4455, %v3894
    %v4924 = vsel %vm4796, %v4458, %v3895
    %v4925 = vsel %vm4797, %v4461, %v3896
    %v4926 = vsel %vm4798, %v4464, %v3897
    %v4927 = vsel %vm4799, %v4467, %v3898
    %v4928 = vsel %vm4800, %v4470, %v3899
    %v4929 = vsel %vm4801, %v4473, %v3900
    %v4930 = vsel %vm4802, %v4476, %v3901
    %v4931 = vsel %vm4803, %v4479, %v3902
    %v4932 = vsel %vm4804, %v4482, %v3903
    %v4933 = vsel %vm4805, %v4485, %v3904
    %v4934 = vsel %vm4806, %v4488, %v3905
    %v4935 = vsel %vm4807, %v4491, %v3906
    %v4936 = vsel %vm4808, %v4494, %v3907
    %v4937 = vsel %vm4809, %v4497, %v3908
    %v4938 = vsel %vm4810, %v4500, %v3909
    %v4939 = vsel %vm4811, %v4503, %v3910
    %v4940 = vsel %vm4812, %v4506, %v3911
    %v4941 = vsel %vm4813, %v4509, %v3912
    %v4942 = vsel %vm4814, %v4512, %v3913
    %v4943 = vsel %vm4815, %v4515, %v3914
    %v4944 = vsel %vm4816, %v4518, %v3915
    %v4945 = vsel %vm4817, %v4521, %v3916
    %v4946 = vsel %vm4818, %v4524, %v3917
    %v4947 = vsel %vm4819, %v4527, %v3918
    %v4948 = vsel %vm4820, %v4530, %v3919
    %v4949 = vsel %vm4821, %v4533, %v3920
    %v4950 = vsel %vm4822, %v4536, %v3921
    %v4951 = vsel %vm4823, %v4539, %v3922
    %v4952 = vsel %vm4824, %v4542, %v3923
    %v4953 = vsel %vm4825, %v4545, %v3924
    %v4954 = vsel %vm4826, %v4548, %v3925
    %v4955 = vsel %vm4827, %v4551, %v3926
    %v4956 = vsel %vm4828, %v4554, %v3927
    %v4957 = vsel %vm4829, %v4557, %v3928
    %v4958 = vsel %vm4830, %v4560, %v3929
    %v4959 = vsel %vm4831, %v4563, %v3930
    %v4960 = vsel %vm4832, %v4566, %v3931
    %v4961 = vsel %vm4833, %v4569, %v3932
    %v4962 = vsel %vm4834, %v4572, %v3933
    %v4963 = vsel %vm4835, %v4575, %v3934
    %v4964 = vsel %vm4836, %v4578, %v3935
    %v4965 = vsel %vm4837, %v4581, %v3936
    %v4966 = vsel %vm4838, %v4584, %v3937
    %v4967 = vsel %vm4839, %v4587, %v3938
    %v4968 = vsel %vm4840, %v4590, %v3939
    %v4969 = vsel %vm4841, %v4593, %v3940
    %v4970 = vsel %vm4842, %v4596, %v3941
    %v4971 = vsel %vm4843, %v4599, %v3942
    %v4972 = vsel %vm4844, %v4602, %v3943
    %v4973 = vsel %vm4845, %v4605, %v3944
    %v4974 = vsel %vm4846, %v4608, %v3945
    %v4975 = vsel %vm4847, %v4611, %v3946
    %v4976 = vsel %vm4848, %v4614, %v3947
    %v4977 = vsel %vm4849, %v4617, %v3948
    %v4978 = vsel %vm4850, %v4620, %v3949
    %v4979 = vsel %vm4851, %v4623, %v3950
    %v4980 = vsel %vm4852, %v4626, %v3951
    %v4981 = vsel %vm4853, %v4629, %v3952
    %v4982 = vsel %vm4854, %v4632, %v3953
    %v4983 = vsel %vm4855, %v4635, %v3954
    %v4984 = vsel %vm4856, %v4638, %v3955
    %v4985 = vsel %vm4857, %v4641, %v3956
    %v4986 = vsel %vm4858, %v4644, %v3957
    %v4987 = vsel %vm4859, %v4647, %v3958
    %v4988 = vsel %vm4860, %v4650, %v3959
    %v4989 = vsel %vm4861, %v4653, %v3960
    %v4990 = vsel %vm4862, %v4656, %v3961
    %v4991 = vsel %vm4863, %v4659, %v3962
    %v4992 = vsel %vm4864, %v4662, %v3963
    %v4993 = vsel %vm4865, %v4665, %v3964
    %v4994 = vsel %vm4866, %v4668, %v3965
    %v4995 = vsel %vm4867, %v4671, %v3966
    %v4996 = vsel %vm4868, %v4674, %v3967
    %v4997 = vsel %vm4869, %v4677, %v3968
    %v4998 = vsel %vm4870, %v4680, %v3969
    %v4999 = vsel %vm4871, %v4683, %v3970
    %v5000 = vsel %vm4872, %v4686, %v3971
    %v5001 = vsel %vm4873, %v4689, %v3972
    %v5002 = vsel %vm4874, %v4692, %v3973
    %v5003 = vsel %vm4875, %v4695, %v3974
    %v5004 = vsel %vm4876, %v4698, %v3975
    %v5005 = vsel %vm4877, %v4701, %v3976
    %v5006 = vsel %vm4878, %v4704, %v3977
    %v5007 = vsel %vm4879, %v4707, %v3978
    %v5008 = vsel %vm4880, %v4710, %v3979
    %v5009 = vsel %vm4881, %v4713, %v3980
    %v5010 = vsel %vm4882, %v4716, %v3981
    %v5011 = vsel %vm4883, %v4719, %v3982
    %v5012 = vsel %vm4884, %v4722, %v3983
    %v5013 = vsel %vm4885, %v4725, %v3984
    %v5014 = vsel %vm4886, %v4728, %v3985
    %v5015 = vsel %vm4887, %v4731, %v3986
    %v5016 = vsel %vm4888, %v4734, %v3987
    %v5017 = vsel %vm4889, %v4737, %v3988
    %v5018 = vsel %vm4890, %v4740, %v3989
    %v5019 = vsel %vm4891, %v4743, %v3990
    %v5020 = vsel %vm4892, %v4746, %v3991
    %v5021 = vsel %vm4893, %v4749, %v3992
    %v5022 = vsel %vm4894, %v4752, %v3993
    %v5023 = vsel %vm4895, %v4755, %v3994
    %v5024 = vsel %vm4896, %v4758, %v3995
    %v5025 = vsel %vm4897, %v4761, %v3996
    %v5026 = vsel %vm4898, %v4764, %v3997
    %v5027 = vsel %vm4899, %v4767, %v3998
    %v5028 = vsel %vm4900, %v4770, %v3999
    %v5029 = vsel %vm4901, %v4773, %v4000
    %v5030 = vsel %vm4774, 4, %v4001
    %v5031 = vsel %vm4775, 4, %v4002
    %v5032 = vsel %vm4776, 4, %v4003
    %v5033 = vsel %vm4777, 4, %v4004
    %v5034 = vsel %vm4778, 4, %v4005
    %v5035 = vsel %vm4779, 4, %v4006
    %v5036 = vsel %vm4780, 4, %v4007
    %v5037 = vsel %vm4781, 4, %v4008
    %v5038 = vsel %vm4782, 4, %v4009
    %v5039 = vsel %vm4783, 4, %v4010
    %v5040 = vsel %vm4784, 4, %v4011
    %v5041 = vsel %vm4785, 4, %v4012
    %v5042 = vsel %vm4786, 4, %v4013
    %v5043 = vsel %vm4787, 4, %v4014
    %v5044 = vsel %vm4788, 4, %v4015
    %v5045 = vsel %vm4789, 4, %v4016
    %v5046 = vsel %vm4790, 4, %v4017
    %v5047 = vsel %vm4791, 4, %v4018
    %v5048 = vsel %vm4792, 4, %v4019
    %v5049 = vsel %vm4793, 4, %v4020
    %v5050 = vsel %vm4794, 4, %v4021
    %v5051 = vsel %vm4795, 4, %v4022
    %v5052 = vsel %vm4796, 4, %v4023
    %v5053 = vsel %vm4797, 4, %v4024
    %v5054 = vsel %vm4798, 4, %v4025
    %v5055 = vsel %vm4799, 4, %v4026
    %v5056 = vsel %vm4800, 4, %v4027
    %v5057 = vsel %vm4801, 4, %v4028
    %v5058 = vsel %vm4802, 4, %v4029
    %v5059 = vsel %vm4803, 4, %v4030
    %v5060 = vsel %vm4804, 4, %v4031
    %v5061 = vsel %vm4805, 4, %v4032
    %v5062 = vsel %vm4806, 4, %v4033
    %v5063 = vsel %vm4807, 4, %v4034
    %v5064 = vsel %vm4808, 4, %v4035
    %v5065 = vsel %vm4809, 4, %v4036
    %v5066 = vsel %vm4810, 4, %v4037
    %v5067 = vsel %vm4811, 4, %v4038
    %v5068 = vsel %vm4812, 4, %v4039
    %v5069 = vsel %vm4813, 4, %v4040
    %v5070 = vsel %vm4814, 4, %v4041
    %v5071 = vsel %vm4815, 4, %v4042
    %v5072 = vsel %vm4816, 4, %v4043
    %v5073 = vsel %vm4817, 4, %v4044
    %v5074 = vsel %vm4818, 4, %v4045
    %v5075 = vsel %vm4819, 4, %v4046
    %v5076 = vsel %vm4820, 4, %v4047
    %v5077 = vsel %vm4821, 4, %v4048
    %v5078 = vsel %vm4822, 4, %v4049
    %v5079 = vsel %vm4823, 4, %v4050
    %v5080 = vsel %vm4824, 4, %v4051
    %v5081 = vsel %vm4825, 4, %v4052
    %v5082 = vsel %vm4826, 4, %v4053
    %v5083 = vsel %vm4827, 4, %v4054
    %v5084 = vsel %vm4828, 4, %v4055
    %v5085 = vsel %vm4829, 4, %v4056
    %v5086 = vsel %vm4830, 4, %v4057
    %v5087 = vsel %vm4831, 4, %v4058
    %v5088 = vsel %vm4832, 4, %v4059
    %v5089 = vsel %vm4833, 4, %v4060
    %v5090 = vsel %vm4834, 4, %v4061
    %v5091 = vsel %vm4835, 4, %v4062
    %v5092 = vsel %vm4836, 4, %v4063
    %v5093 = vsel %vm4837, 4, %v4064
    %v5094 = vsel %vm4838, 4, %v4065
    %v5095 = vsel %vm4839, 4, %v4066
    %v5096 = vsel %vm4840, 4, %v4067
    %v5097 = vsel %vm4841, 4, %v4068
    %v5098 = vsel %vm4842, 4, %v4069
    %v5099 = vsel %vm4843, 4, %v4070
    %v5100 = vsel %vm4844, 4, %v4071
    %v5101 = vsel %vm4845, 4, %v4072
    %v5102 = vsel %vm4846, 4, %v4073
    %v5103 = vsel %vm4847, 4, %v4074
    %v5104 = vsel %vm4848, 4, %v4075
    %v5105 = vsel %vm4849, 4, %v4076
    %v5106 = vsel %vm4850, 4, %v4077
    %v5107 = vsel %vm4851, 4, %v4078
    %v5108 = vsel %vm4852, 4, %v4079
    %v5109 = vsel %vm4853, 4, %v4080
    %v5110 = vsel %vm4854, 4, %v4081
    %v5111 = vsel %vm4855, 4, %v4082
    %v5112 = vsel %vm4856, 4, %v4083
    %v5113 = vsel %vm4857, 4, %v4084
    %v5114 = vsel %vm4858, 4, %v4085
    %v5115 = vsel %vm4859, 4, %v4086
    %v5116 = vsel %vm4860, 4, %v4087
    %v5117 = vsel %vm4861, 4, %v4088
    %v5118 = vsel %vm4862, 4, %v4089
    %v5119 = vsel %vm4863, 4, %v4090
    %v5120 = vsel %vm4864, 4, %v4091
    %v5121 = vsel %vm4865, 4, %v4092
    %v5122 = vsel %vm4866, 4, %v4093
    %v5123 = vsel %vm4867, 4, %v4094
    %v5124 = vsel %vm4868, 4, %v4095
    %v5125 = vsel %vm4869, 4, %v4096
    %v5126 = vsel %vm4870, 4, %v4097
    %v5127 = vsel %vm4871, 4, %v4098
    %v5128 = vsel %vm4872, 4, %v4099
    %v5129 = vsel %vm4873, 4, %v4100
    %v5130 = vsel %vm4874, 4, %v4101
    %v5131 = vsel %vm4875, 4, %v4102
    %v5132 = vsel %vm4876, 4, %v4103
    %v5133 = vsel %vm4877, 4, %v4104
    %v5134 = vsel %vm4878, 4, %v4105
    %v5135 = vsel %vm4879, 4, %v4106
    %v5136 = vsel %vm4880, 4, %v4107
    %v5137 = vsel %vm4881, 4, %v4108
    %v5138 = vsel %vm4882, 4, %v4109
    %v5139 = vsel %vm4883, 4, %v4110
    %v5140 = vsel %vm4884, 4, %v4111
    %v5141 = vsel %vm4885, 4, %v4112
    %v5142 = vsel %vm4886, 4, %v4113
    %v5143 = vsel %vm4887, 4, %v4114
    %v5144 = vsel %vm4888, 4, %v4115
    %v5145 = vsel %vm4889, 4, %v4116
    %v5146 = vsel %vm4890, 4, %v4117
    %v5147 = vsel %vm4891, 4, %v4118
    %v5148 = vsel %vm4892, 4, %v4119
    %v5149 = vsel %vm4893, 4, %v4120
    %v5150 = vsel %vm4894, 4, %v4121
    %v5151 = vsel %vm4895, 4, %v4122
    %v5152 = vsel %vm4896, 4, %v4123
    %v5153 = vsel %vm4897, 4, %v4124
    %v5154 = vsel %vm4898, 4, %v4125
    %v5155 = vsel %vm4899, 4, %v4126
    %v5156 = vsel %vm4900, 4, %v4127
    %v5157 = vsel %vm4901, 4, %v4128
    %v5158 = vld [vmem:[%s1 + $0x5] sm:$0x1]
    %v5159 = vlaneseq
    %v5160 = vshrl.u32 %v5159, 7
    %v5161 = vsub.s32 0, %v5160
    %v5162 = vrot.slane %v5158, %v5161
    %v5163 = vsub.f32 %v12, %v5162
    %v5164 = vsub.f32 %v13, %v5162
    %v5165 = vsub.f32 %v14, %v5162
    %v5166 = vsub.f32 %v15, %v5162
    %v5167 = vsub.f32 %v16, %v5162
    %v5168 = vsub.f32 %v17, %v5162
    %v5169 = vsub.f32 %v18, %v5162
    %v5170 = vsub.f32 %v19, %v5162
    %v5171 = vsub.f32 %v20, %v5162
    %v5172 = vsub.f32 %v21, %v5162
    %v5173 = vsub.f32 %v22, %v5162
    %v5174 = vsub.f32 %v23, %v5162
    %v5175 = vsub.f32 %v24, %v5162
    %v5176 = vsub.f32 %v25, %v5162
    %v5177 = vsub.f32 %v26, %v5162
    %v5178 = vsub.f32 %v27, %v5162
    %v5179 = vsub.f32 %v28, %v5162
    %v5180 = vsub.f32 %v29, %v5162
    %v5181 = vsub.f32 %v30, %v5162
    %v5182 = vsub.f32 %v31, %v5162
    %v5183 = vsub.f32 %v32, %v5162
    %v5184 = vsub.f32 %v33, %v5162
    %v5185 = vsub.f32 %v34, %v5162
    %v5186 = vsub.f32 %v35, %v5162
    %v5187 = vsub.f32 %v36, %v5162
    %v5188 = vsub.f32 %v37, %v5162
    %v5189 = vsub.f32 %v38, %v5162
    %v5190 = vsub.f32 %v39, %v5162
    %v5191 = vsub.f32 %v40, %v5162
    %v5192 = vsub.f32 %v41, %v5162
    %v5193 = vsub.f32 %v42, %v5162
    %v5194 = vsub.f32 %v43, %v5162
    %v5195 = vsub.f32 %v44, %v5162
    %v5196 = vsub.f32 %v45, %v5162
    %v5197 = vsub.f32 %v46, %v5162
    %v5198 = vsub.f32 %v47, %v5162
    %v5199 = vsub.f32 %v48, %v5162
    %v5200 = vsub.f32 %v49, %v5162
    %v5201 = vsub.f32 %v50, %v5162
    %v5202 = vsub.f32 %v51, %v5162
    %v5203 = vsub.f32 %v52, %v5162
    %v5204 = vsub.f32 %v53, %v5162
    %v5205 = vsub.f32 %v54, %v5162
    %v5206 = vsub.f32 %v55, %v5162
    %v5207 = vsub.f32 %v56, %v5162
    %v5208 = vsub.f32 %v57, %v5162
    %v5209 = vsub.f32 %v58, %v5162
    %v5210 = vsub.f32 %v59, %v5162
    %v5211 = vsub.f32 %v60, %v5162
    %v5212 = vsub.f32 %v61, %v5162
    %v5213 = vsub.f32 %v62, %v5162
    %v5214 = vsub.f32 %v63, %v5162
    %v5215 = vsub.f32 %v64, %v5162
    %v5216 = vsub.f32 %v65, %v5162
    %v5217 = vsub.f32 %v66, %v5162
    %v5218 = vsub.f32 %v67, %v5162
    %v5219 = vsub.f32 %v68, %v5162
    %v5220 = vsub.f32 %v69, %v5162
    %v5221 = vsub.f32 %v70, %v5162
    %v5222 = vsub.f32 %v71, %v5162
    %v5223 = vsub.f32 %v72, %v5162
    %v5224 = vsub.f32 %v73, %v5162
    %v5225 = vsub.f32 %v74, %v5162
    %v5226 = vsub.f32 %v75, %v5162
    %v5227 = vsub.f32 %v76, %v5162
    %v5228 = vsub.f32 %v77, %v5162
    %v5229 = vsub.f32 %v78, %v5162
    %v5230 = vsub.f32 %v79, %v5162
    %v5231 = vsub.f32 %v80, %v5162
    %v5232 = vsub.f32 %v81, %v5162
    %v5233 = vsub.f32 %v82, %v5162
    %v5234 = vsub.f32 %v83, %v5162
    %v5235 = vsub.f32 %v84, %v5162
    %v5236 = vsub.f32 %v85, %v5162
    %v5237 = vsub.f32 %v86, %v5162
    %v5238 = vsub.f32 %v87, %v5162
    %v5239 = vsub.f32 %v88, %v5162
    %v5240 = vsub.f32 %v89, %v5162
    %v5241 = vsub.f32 %v90, %v5162
    %v5242 = vsub.f32 %v91, %v5162
    %v5243 = vsub.f32 %v92, %v5162
    %v5244 = vsub.f32 %v93, %v5162
    %v5245 = vsub.f32 %v94, %v5162
    %v5246 = vsub.f32 %v95, %v5162
    %v5247 = vsub.f32 %v96, %v5162
    %v5248 = vsub.f32 %v97, %v5162
    %v5249 = vsub.f32 %v98, %v5162
    %v5250 = vsub.f32 %v99, %v5162
    %v5251 = vsub.f32 %v100, %v5162
    %v5252 = vsub.f32 %v101, %v5162
    %v5253 = vsub.f32 %v102, %v5162
    %v5254 = vsub.f32 %v103, %v5162
    %v5255 = vsub.f32 %v104, %v5162
    %v5256 = vsub.f32 %v105, %v5162
    %v5257 = vsub.f32 %v106, %v5162
    %v5258 = vsub.f32 %v107, %v5162
    %v5259 = vsub.f32 %v108, %v5162
    %v5260 = vsub.f32 %v109, %v5162
    %v5261 = vsub.f32 %v110, %v5162
    %v5262 = vsub.f32 %v111, %v5162
    %v5263 = vsub.f32 %v112, %v5162
    %v5264 = vsub.f32 %v113, %v5162
    %v5265 = vsub.f32 %v114, %v5162
    %v5266 = vsub.f32 %v115, %v5162
    %v5267 = vsub.f32 %v116, %v5162
    %v5268 = vsub.f32 %v117, %v5162
    %v5269 = vsub.f32 %v118, %v5162
    %v5270 = vsub.f32 %v119, %v5162
    %v5271 = vsub.f32 %v120, %v5162
    %v5272 = vsub.f32 %v121, %v5162
    %v5273 = vsub.f32 %v122, %v5162
    %v5274 = vsub.f32 %v123, %v5162
    %v5275 = vsub.f32 %v124, %v5162
    %v5276 = vsub.f32 %v125, %v5162
    %v5277 = vsub.f32 %v126, %v5162
    %v5278 = vsub.f32 %v127, %v5162
    %v5279 = vsub.f32 %v128, %v5162
    %v5280 = vsub.f32 %v129, %v5162
    %v5281 = vsub.f32 %v130, %v5162
    %v5282 = vsub.f32 %v131, %v5162
    %v5283 = vsub.f32 %v132, %v5162
    %v5284 = vsub.f32 %v133, %v5162
    %v5285 = vsub.f32 %v134, %v5162
    %v5286 = vsub.f32 %v135, %v5162
    %v5287 = vsub.f32 %v136, %v5162
    %v5288 = vsub.f32 %v137, %v5162
    %v5289 = vsub.f32 %v138, %v5162
    %v5290 = vsub.f32 %v139, %v5162
    %v5291 = vmul.f32 %v5163, %v5163
    %v5292 = vmul.f32 %v5164, %v5164
    %v5293 = vmul.f32 %v5165, %v5165
    %v5294 = vmul.f32 %v5166, %v5166
    %v5295 = vmul.f32 %v5167, %v5167
    %v5296 = vmul.f32 %v5168, %v5168
    %v5297 = vmul.f32 %v5169, %v5169
    %v5298 = vmul.f32 %v5170, %v5170
    %v5299 = vmul.f32 %v5171, %v5171
    %v5300 = vmul.f32 %v5172, %v5172
    %v5301 = vmul.f32 %v5173, %v5173
    %v5302 = vmul.f32 %v5174, %v5174
    %v5303 = vmul.f32 %v5175, %v5175
    %v5304 = vmul.f32 %v5176, %v5176
    %v5305 = vmul.f32 %v5177, %v5177
    %v5306 = vmul.f32 %v5178, %v5178
    %v5307 = vmul.f32 %v5179, %v5179
    %v5308 = vmul.f32 %v5180, %v5180
    %v5309 = vmul.f32 %v5181, %v5181
    %v5310 = vmul.f32 %v5182, %v5182
    %v5311 = vmul.f32 %v5183, %v5183
    %v5312 = vmul.f32 %v5184, %v5184
    %v5313 = vmul.f32 %v5185, %v5185
    %v5314 = vmul.f32 %v5186, %v5186
    %v5315 = vmul.f32 %v5187, %v5187
    %v5316 = vmul.f32 %v5188, %v5188
    %v5317 = vmul.f32 %v5189, %v5189
    %v5318 = vmul.f32 %v5190, %v5190
    %v5319 = vmul.f32 %v5191, %v5191
    %v5320 = vmul.f32 %v5192, %v5192
    %v5321 = vmul.f32 %v5193, %v5193
    %v5322 = vmul.f32 %v5194, %v5194
    %v5323 = vmul.f32 %v5195, %v5195
    %v5324 = vmul.f32 %v5196, %v5196
    %v5325 = vmul.f32 %v5197, %v5197
    %v5326 = vmul.f32 %v5198, %v5198
    %v5327 = vmul.f32 %v5199, %v5199
    %v5328 = vmul.f32 %v5200, %v5200
    %v5329 = vmul.f32 %v5201, %v5201
    %v5330 = vmul.f32 %v5202, %v5202
    %v5331 = vmul.f32 %v5203, %v5203
    %v5332 = vmul.f32 %v5204, %v5204
    %v5333 = vmul.f32 %v5205, %v5205
    %v5334 = vmul.f32 %v5206, %v5206
    %v5335 = vmul.f32 %v5207, %v5207
    %v5336 = vmul.f32 %v5208, %v5208
    %v5337 = vmul.f32 %v5209, %v5209
    %v5338 = vmul.f32 %v5210, %v5210
    %v5339 = vmul.f32 %v5211, %v5211
    %v5340 = vmul.f32 %v5212, %v5212
    %v5341 = vmul.f32 %v5213, %v5213
    %v5342 = vmul.f32 %v5214, %v5214
    %v5343 = vmul.f32 %v5215, %v5215
    %v5344 = vmul.f32 %v5216, %v5216
    %v5345 = vmul.f32 %v5217, %v5217
    %v5346 = vmul.f32 %v5218, %v5218
    %v5347 = vmul.f32 %v5219, %v5219
    %v5348 = vmul.f32 %v5220, %v5220
    %v5349 = vmul.f32 %v5221, %v5221
    %v5350 = vmul.f32 %v5222, %v5222
    %v5351 = vmul.f32 %v5223, %v5223
    %v5352 = vmul.f32 %v5224, %v5224
    %v5353 = vmul.f32 %v5225, %v5225
    %v5354 = vmul.f32 %v5226, %v5226
    %v5355 = vmul.f32 %v5227, %v5227
    %v5356 = vmul.f32 %v5228, %v5228
    %v5357 = vmul.f32 %v5229, %v5229
    %v5358 = vmul.f32 %v5230, %v5230
    %v5359 = vmul.f32 %v5231, %v5231
    %v5360 = vmul.f32 %v5232, %v5232
    %v5361 = vmul.f32 %v5233, %v5233
    %v5362 = vmul.f32 %v5234, %v5234
    %v5363 = vmul.f32 %v5235, %v5235
    %v5364 = vmul.f32 %v5236, %v5236
    %v5365 = vmul.f32 %v5237, %v5237
    %v5366 = vmul.f32 %v5238, %v5238
    %v5367 = vmul.f32 %v5239, %v5239
    %v5368 = vmul.f32 %v5240, %v5240
    %v5369 = vmul.f32 %v5241, %v5241
    %v5370 = vmul.f32 %v5242, %v5242
    %v5371 = vmul.f32 %v5243, %v5243
    %v5372 = vmul.f32 %v5244, %v5244
    %v5373 = vmul.f32 %v5245, %v5245
    %v5374 = vmul.f32 %v5246, %v5246
    %v5375 = vmul.f32 %v5247, %v5247
    %v5376 = vmul.f32 %v5248, %v5248
    %v5377 = vmul.f32 %v5249, %v5249
    %v5378 = vmul.f32 %v5250, %v5250
    %v5379 = vmul.f32 %v5251, %v5251
    %v5380 = vmul.f32 %v5252, %v5252
    %v5381 = vmul.f32 %v5253, %v5253
    %v5382 = vmul.f32 %v5254, %v5254
    %v5383 = vmul.f32 %v5255, %v5255
    %v5384 = vmul.f32 %v5256, %v5256
    %v5385 = vmul.f32 %v5257, %v5257
    %v5386 = vmul.f32 %v5258, %v5258
    %v5387 = vmul.f32 %v5259, %v5259
    %v5388 = vmul.f32 %v5260, %v5260
    %v5389 = vmul.f32 %v5261, %v5261
    %v5390 = vmul.f32 %v5262, %v5262
    %v5391 = vmul.f32 %v5263, %v5263
    %v5392 = vmul.f32 %v5264, %v5264
    %v5393 = vmul.f32 %v5265, %v5265
    %v5394 = vmul.f32 %v5266, %v5266
    %v5395 = vmul.f32 %v5267, %v5267
    %v5396 = vmul.f32 %v5268, %v5268
    %v5397 = vmul.f32 %v5269, %v5269
    %v5398 = vmul.f32 %v5270, %v5270
    %v5399 = vmul.f32 %v5271, %v5271
    %v5400 = vmul.f32 %v5272, %v5272
    %v5401 = vmul.f32 %v5273, %v5273
    %v5402 = vmul.f32 %v5274, %v5274
    %v5403 = vmul.f32 %v5275, %v5275
    %v5404 = vmul.f32 %v5276, %v5276
    %v5405 = vmul.f32 %v5277, %v5277
    %v5406 = vmul.f32 %v5278, %v5278
    %v5407 = vmul.f32 %v5279, %v5279
    %v5408 = vmul.f32 %v5280, %v5280
    %v5409 = vmul.f32 %v5281, %v5281
    %v5410 = vmul.f32 %v5282, %v5282
    %v5411 = vmul.f32 %v5283, %v5283
    %v5412 = vmul.f32 %v5284, %v5284
    %v5413 = vmul.f32 %v5285, %v5285
    %v5414 = vmul.f32 %v5286, %v5286
    %v5415 = vmul.f32 %v5287, %v5287
    %v5416 = vmul.f32 %v5288, %v5288
    %v5417 = vmul.f32 %v5289, %v5289
    %v5418 = vmul.f32 %v5290, %v5290
    %v5419 = vsel %vm401, %v5291, 0.0
    %5420 = vadd.xlane.f32.xlu0 %v5419
    %v5421 = vpop.xlane.xlu0 %5420
    %v5422 = vsel %vm401, %v5292, 0.0
    %5423 = vadd.xlane.f32.xlu0 %v5422
    %v5424 = vpop.xlane.xlu0 %5423
    %v5425 = vsel %vm401, %v5293, 0.0
    %5426 = vadd.xlane.f32.xlu0 %v5425
    %v5427 = vpop.xlane.xlu0 %5426
    %v5428 = vsel %vm401, %v5294, 0.0
    %5429 = vadd.xlane.f32.xlu0 %v5428
    %v5430 = vpop.xlane.xlu0 %5429
    %v5431 = vsel %vm401, %v5295, 0.0
    %5432 = vadd.xlane.f32.xlu0 %v5431
    %v5433 = vpop.xlane.xlu0 %5432
    %v5434 = vsel %vm401, %v5296, 0.0
    %5435 = vadd.xlane.f32.xlu0 %v5434
    %v5436 = vpop.xlane.xlu0 %5435
    %v5437 = vsel %vm401, %v5297, 0.0
    %5438 = vadd.xlane.f32.xlu0 %v5437
    %v5439 = vpop.xlane.xlu0 %5438
    %v5440 = vsel %vm401, %v5298, 0.0
    %5441 = vadd.xlane.f32.xlu0 %v5440
    %v5442 = vpop.xlane.xlu0 %5441
    %v5443 = vsel %vm401, %v5299, 0.0
    %5444 = vadd.xlane.f32.xlu0 %v5443
    %v5445 = vpop.xlane.xlu0 %5444
    %v5446 = vsel %vm401, %v5300, 0.0
    %5447 = vadd.xlane.f32.xlu0 %v5446
    %v5448 = vpop.xlane.xlu0 %5447
    %v5449 = vsel %vm401, %v5301, 0.0
    %5450 = vadd.xlane.f32.xlu0 %v5449
    %v5451 = vpop.xlane.xlu0 %5450
    %v5452 = vsel %vm401, %v5302, 0.0
    %5453 = vadd.xlane.f32.xlu0 %v5452
    %v5454 = vpop.xlane.xlu0 %5453
    %v5455 = vsel %vm401, %v5303, 0.0
    %5456 = vadd.xlane.f32.xlu0 %v5455
    %v5457 = vpop.xlane.xlu0 %5456
    %v5458 = vsel %vm401, %v5304, 0.0
    %5459 = vadd.xlane.f32.xlu0 %v5458
    %v5460 = vpop.xlane.xlu0 %5459
    %v5461 = vsel %vm401, %v5305, 0.0
    %5462 = vadd.xlane.f32.xlu0 %v5461
    %v5463 = vpop.xlane.xlu0 %5462
    %v5464 = vsel %vm401, %v5306, 0.0
    %5465 = vadd.xlane.f32.xlu0 %v5464
    %v5466 = vpop.xlane.xlu0 %5465
    %v5467 = vsel %vm401, %v5307, 0.0
    %5468 = vadd.xlane.f32.xlu0 %v5467
    %v5469 = vpop.xlane.xlu0 %5468
    %v5470 = vsel %vm401, %v5308, 0.0
    %5471 = vadd.xlane.f32.xlu0 %v5470
    %v5472 = vpop.xlane.xlu0 %5471
    %v5473 = vsel %vm401, %v5309, 0.0
    %5474 = vadd.xlane.f32.xlu0 %v5473
    %v5475 = vpop.xlane.xlu0 %5474
    %v5476 = vsel %vm401, %v5310, 0.0
    %5477 = vadd.xlane.f32.xlu0 %v5476
    %v5478 = vpop.xlane.xlu0 %5477
    %v5479 = vsel %vm401, %v5311, 0.0
    %5480 = vadd.xlane.f32.xlu0 %v5479
    %v5481 = vpop.xlane.xlu0 %5480
    %v5482 = vsel %vm401, %v5312, 0.0
    %5483 = vadd.xlane.f32.xlu0 %v5482
    %v5484 = vpop.xlane.xlu0 %5483
    %v5485 = vsel %vm401, %v5313, 0.0
    %5486 = vadd.xlane.f32.xlu0 %v5485
    %v5487 = vpop.xlane.xlu0 %5486
    %v5488 = vsel %vm401, %v5314, 0.0
    %5489 = vadd.xlane.f32.xlu0 %v5488
    %v5490 = vpop.xlane.xlu0 %5489
    %v5491 = vsel %vm401, %v5315, 0.0
    %5492 = vadd.xlane.f32.xlu0 %v5491
    %v5493 = vpop.xlane.xlu0 %5492
    %v5494 = vsel %vm401, %v5316, 0.0
    %5495 = vadd.xlane.f32.xlu0 %v5494
    %v5496 = vpop.xlane.xlu0 %5495
    %v5497 = vsel %vm401, %v5317, 0.0
    %5498 = vadd.xlane.f32.xlu0 %v5497
    %v5499 = vpop.xlane.xlu0 %5498
    %v5500 = vsel %vm401, %v5318, 0.0
    %5501 = vadd.xlane.f32.xlu0 %v5500
    %v5502 = vpop.xlane.xlu0 %5501
    %v5503 = vsel %vm401, %v5319, 0.0
    %5504 = vadd.xlane.f32.xlu0 %v5503
    %v5505 = vpop.xlane.xlu0 %5504
    %v5506 = vsel %vm401, %v5320, 0.0
    %5507 = vadd.xlane.f32.xlu0 %v5506
    %v5508 = vpop.xlane.xlu0 %5507
    %v5509 = vsel %vm401, %v5321, 0.0
    %5510 = vadd.xlane.f32.xlu0 %v5509
    %v5511 = vpop.xlane.xlu0 %5510
    %v5512 = vsel %vm401, %v5322, 0.0
    %5513 = vadd.xlane.f32.xlu0 %v5512
    %v5514 = vpop.xlane.xlu0 %5513
    %v5515 = vsel %vm401, %v5323, 0.0
    %5516 = vadd.xlane.f32.xlu0 %v5515
    %v5517 = vpop.xlane.xlu0 %5516
    %v5518 = vsel %vm401, %v5324, 0.0
    %5519 = vadd.xlane.f32.xlu0 %v5518
    %v5520 = vpop.xlane.xlu0 %5519
    %v5521 = vsel %vm401, %v5325, 0.0
    %5522 = vadd.xlane.f32.xlu0 %v5521
    %v5523 = vpop.xlane.xlu0 %5522
    %v5524 = vsel %vm401, %v5326, 0.0
    %5525 = vadd.xlane.f32.xlu0 %v5524
    %v5526 = vpop.xlane.xlu0 %5525
    %v5527 = vsel %vm401, %v5327, 0.0
    %5528 = vadd.xlane.f32.xlu0 %v5527
    %v5529 = vpop.xlane.xlu0 %5528
    %v5530 = vsel %vm401, %v5328, 0.0
    %5531 = vadd.xlane.f32.xlu0 %v5530
    %v5532 = vpop.xlane.xlu0 %5531
    %v5533 = vsel %vm401, %v5329, 0.0
    %5534 = vadd.xlane.f32.xlu0 %v5533
    %v5535 = vpop.xlane.xlu0 %5534
    %v5536 = vsel %vm401, %v5330, 0.0
    %5537 = vadd.xlane.f32.xlu0 %v5536
    %v5538 = vpop.xlane.xlu0 %5537
    %v5539 = vsel %vm401, %v5331, 0.0
    %5540 = vadd.xlane.f32.xlu0 %v5539
    %v5541 = vpop.xlane.xlu0 %5540
    %v5542 = vsel %vm401, %v5332, 0.0
    %5543 = vadd.xlane.f32.xlu0 %v5542
    %v5544 = vpop.xlane.xlu0 %5543
    %v5545 = vsel %vm401, %v5333, 0.0
    %5546 = vadd.xlane.f32.xlu0 %v5545
    %v5547 = vpop.xlane.xlu0 %5546
    %v5548 = vsel %vm401, %v5334, 0.0
    %5549 = vadd.xlane.f32.xlu0 %v5548
    %v5550 = vpop.xlane.xlu0 %5549
    %v5551 = vsel %vm401, %v5335, 0.0
    %5552 = vadd.xlane.f32.xlu0 %v5551
    %v5553 = vpop.xlane.xlu0 %5552
    %v5554 = vsel %vm401, %v5336, 0.0
    %5555 = vadd.xlane.f32.xlu0 %v5554
    %v5556 = vpop.xlane.xlu0 %5555
    %v5557 = vsel %vm401, %v5337, 0.0
    %5558 = vadd.xlane.f32.xlu0 %v5557
    %v5559 = vpop.xlane.xlu0 %5558
    %v5560 = vsel %vm401, %v5338, 0.0
    %5561 = vadd.xlane.f32.xlu0 %v5560
    %v5562 = vpop.xlane.xlu0 %5561
    %v5563 = vsel %vm401, %v5339, 0.0
    %5564 = vadd.xlane.f32.xlu0 %v5563
    %v5565 = vpop.xlane.xlu0 %5564
    %v5566 = vsel %vm401, %v5340, 0.0
    %5567 = vadd.xlane.f32.xlu0 %v5566
    %v5568 = vpop.xlane.xlu0 %5567
    %v5569 = vsel %vm401, %v5341, 0.0
    %5570 = vadd.xlane.f32.xlu0 %v5569
    %v5571 = vpop.xlane.xlu0 %5570
    %v5572 = vsel %vm401, %v5342, 0.0
    %5573 = vadd.xlane.f32.xlu0 %v5572
    %v5574 = vpop.xlane.xlu0 %5573
    %v5575 = vsel %vm401, %v5343, 0.0
    %5576 = vadd.xlane.f32.xlu0 %v5575
    %v5577 = vpop.xlane.xlu0 %5576
    %v5578 = vsel %vm401, %v5344, 0.0
    %5579 = vadd.xlane.f32.xlu0 %v5578
    %v5580 = vpop.xlane.xlu0 %5579
    %v5581 = vsel %vm401, %v5345, 0.0
    %5582 = vadd.xlane.f32.xlu0 %v5581
    %v5583 = vpop.xlane.xlu0 %5582
    %v5584 = vsel %vm401, %v5346, 0.0
    %5585 = vadd.xlane.f32.xlu0 %v5584
    %v5586 = vpop.xlane.xlu0 %5585
    %v5587 = vsel %vm401, %v5347, 0.0
    %5588 = vadd.xlane.f32.xlu0 %v5587
    %v5589 = vpop.xlane.xlu0 %5588
    %v5590 = vsel %vm401, %v5348, 0.0
    %5591 = vadd.xlane.f32.xlu0 %v5590
    %v5592 = vpop.xlane.xlu0 %5591
    %v5593 = vsel %vm401, %v5349, 0.0
    %5594 = vadd.xlane.f32.xlu0 %v5593
    %v5595 = vpop.xlane.xlu0 %5594
    %v5596 = vsel %vm401, %v5350, 0.0
    %5597 = vadd.xlane.f32.xlu0 %v5596
    %v5598 = vpop.xlane.xlu0 %5597
    %v5599 = vsel %vm401, %v5351, 0.0
    %5600 = vadd.xlane.f32.xlu0 %v5599
    %v5601 = vpop.xlane.xlu0 %5600
    %v5602 = vsel %vm401, %v5352, 0.0
    %5603 = vadd.xlane.f32.xlu0 %v5602
    %v5604 = vpop.xlane.xlu0 %5603
    %v5605 = vsel %vm401, %v5353, 0.0
    %5606 = vadd.xlane.f32.xlu0 %v5605
    %v5607 = vpop.xlane.xlu0 %5606
    %v5608 = vsel %vm401, %v5354, 0.0
    %5609 = vadd.xlane.f32.xlu0 %v5608
    %v5610 = vpop.xlane.xlu0 %5609
    %v5611 = vsel %vm401, %v5355, 0.0
    %5612 = vadd.xlane.f32.xlu0 %v5611
    %v5613 = vpop.xlane.xlu0 %5612
    %v5614 = vsel %vm401, %v5356, 0.0
    %5615 = vadd.xlane.f32.xlu0 %v5614
    %v5616 = vpop.xlane.xlu0 %5615
    %v5617 = vsel %vm401, %v5357, 0.0
    %5618 = vadd.xlane.f32.xlu0 %v5617
    %v5619 = vpop.xlane.xlu0 %5618
    %v5620 = vsel %vm401, %v5358, 0.0
    %5621 = vadd.xlane.f32.xlu0 %v5620
    %v5622 = vpop.xlane.xlu0 %5621
    %v5623 = vsel %vm401, %v5359, 0.0
    %5624 = vadd.xlane.f32.xlu0 %v5623
    %v5625 = vpop.xlane.xlu0 %5624
    %v5626 = vsel %vm401, %v5360, 0.0
    %5627 = vadd.xlane.f32.xlu0 %v5626
    %v5628 = vpop.xlane.xlu0 %5627
    %v5629 = vsel %vm401, %v5361, 0.0
    %5630 = vadd.xlane.f32.xlu0 %v5629
    %v5631 = vpop.xlane.xlu0 %5630
    %v5632 = vsel %vm401, %v5362, 0.0
    %5633 = vadd.xlane.f32.xlu0 %v5632
    %v5634 = vpop.xlane.xlu0 %5633
    %v5635 = vsel %vm401, %v5363, 0.0
    %5636 = vadd.xlane.f32.xlu0 %v5635
    %v5637 = vpop.xlane.xlu0 %5636
    %v5638 = vsel %vm401, %v5364, 0.0
    %5639 = vadd.xlane.f32.xlu0 %v5638
    %v5640 = vpop.xlane.xlu0 %5639
    %v5641 = vsel %vm401, %v5365, 0.0
    %5642 = vadd.xlane.f32.xlu0 %v5641
    %v5643 = vpop.xlane.xlu0 %5642
    %v5644 = vsel %vm401, %v5366, 0.0
    %5645 = vadd.xlane.f32.xlu0 %v5644
    %v5646 = vpop.xlane.xlu0 %5645
    %v5647 = vsel %vm401, %v5367, 0.0
    %5648 = vadd.xlane.f32.xlu0 %v5647
    %v5649 = vpop.xlane.xlu0 %5648
    %v5650 = vsel %vm401, %v5368, 0.0
    %5651 = vadd.xlane.f32.xlu0 %v5650
    %v5652 = vpop.xlane.xlu0 %5651
    %v5653 = vsel %vm401, %v5369, 0.0
    %5654 = vadd.xlane.f32.xlu0 %v5653
    %v5655 = vpop.xlane.xlu0 %5654
    %v5656 = vsel %vm401, %v5370, 0.0
    %5657 = vadd.xlane.f32.xlu0 %v5656
    %v5658 = vpop.xlane.xlu0 %5657
    %v5659 = vsel %vm401, %v5371, 0.0
    %5660 = vadd.xlane.f32.xlu0 %v5659
    %v5661 = vpop.xlane.xlu0 %5660
    %v5662 = vsel %vm401, %v5372, 0.0
    %5663 = vadd.xlane.f32.xlu0 %v5662
    %v5664 = vpop.xlane.xlu0 %5663
    %v5665 = vsel %vm401, %v5373, 0.0
    %5666 = vadd.xlane.f32.xlu0 %v5665
    %v5667 = vpop.xlane.xlu0 %5666
    %v5668 = vsel %vm401, %v5374, 0.0
    %5669 = vadd.xlane.f32.xlu0 %v5668
    %v5670 = vpop.xlane.xlu0 %5669
    %v5671 = vsel %vm401, %v5375, 0.0
    %5672 = vadd.xlane.f32.xlu0 %v5671
    %v5673 = vpop.xlane.xlu0 %5672
    %v5674 = vsel %vm401, %v5376, 0.0
    %5675 = vadd.xlane.f32.xlu0 %v5674
    %v5676 = vpop.xlane.xlu0 %5675
    %v5677 = vsel %vm401, %v5377, 0.0
    %5678 = vadd.xlane.f32.xlu0 %v5677
    %v5679 = vpop.xlane.xlu0 %5678
    %v5680 = vsel %vm401, %v5378, 0.0
    %5681 = vadd.xlane.f32.xlu0 %v5680
    %v5682 = vpop.xlane.xlu0 %5681
    %v5683 = vsel %vm401, %v5379, 0.0
    %5684 = vadd.xlane.f32.xlu0 %v5683
    %v5685 = vpop.xlane.xlu0 %5684
    %v5686 = vsel %vm401, %v5380, 0.0
    %5687 = vadd.xlane.f32.xlu0 %v5686
    %v5688 = vpop.xlane.xlu0 %5687
    %v5689 = vsel %vm401, %v5381, 0.0
    %5690 = vadd.xlane.f32.xlu0 %v5689
    %v5691 = vpop.xlane.xlu0 %5690
    %v5692 = vsel %vm401, %v5382, 0.0
    %5693 = vadd.xlane.f32.xlu0 %v5692
    %v5694 = vpop.xlane.xlu0 %5693
    %v5695 = vsel %vm401, %v5383, 0.0
    %5696 = vadd.xlane.f32.xlu0 %v5695
    %v5697 = vpop.xlane.xlu0 %5696
    %v5698 = vsel %vm401, %v5384, 0.0
    %5699 = vadd.xlane.f32.xlu0 %v5698
    %v5700 = vpop.xlane.xlu0 %5699
    %v5701 = vsel %vm401, %v5385, 0.0
    %5702 = vadd.xlane.f32.xlu0 %v5701
    %v5703 = vpop.xlane.xlu0 %5702
    %v5704 = vsel %vm401, %v5386, 0.0
    %5705 = vadd.xlane.f32.xlu0 %v5704
    %v5706 = vpop.xlane.xlu0 %5705
    %v5707 = vsel %vm401, %v5387, 0.0
    %5708 = vadd.xlane.f32.xlu0 %v5707
    %v5709 = vpop.xlane.xlu0 %5708
    %v5710 = vsel %vm401, %v5388, 0.0
    %5711 = vadd.xlane.f32.xlu0 %v5710
    %v5712 = vpop.xlane.xlu0 %5711
    %v5713 = vsel %vm401, %v5389, 0.0
    %5714 = vadd.xlane.f32.xlu0 %v5713
    %v5715 = vpop.xlane.xlu0 %5714
    %v5716 = vsel %vm401, %v5390, 0.0
    %5717 = vadd.xlane.f32.xlu0 %v5716
    %v5718 = vpop.xlane.xlu0 %5717
    %v5719 = vsel %vm401, %v5391, 0.0
    %5720 = vadd.xlane.f32.xlu0 %v5719
    %v5721 = vpop.xlane.xlu0 %5720
    %v5722 = vsel %vm401, %v5392, 0.0
    %5723 = vadd.xlane.f32.xlu0 %v5722
    %v5724 = vpop.xlane.xlu0 %5723
    %v5725 = vsel %vm401, %v5393, 0.0
    %5726 = vadd.xlane.f32.xlu0 %v5725
    %v5727 = vpop.xlane.xlu0 %5726
    %v5728 = vsel %vm401, %v5394, 0.0
    %5729 = vadd.xlane.f32.xlu0 %v5728
    %v5730 = vpop.xlane.xlu0 %5729
    %v5731 = vsel %vm401, %v5395, 0.0
    %5732 = vadd.xlane.f32.xlu0 %v5731
    %v5733 = vpop.xlane.xlu0 %5732
    %v5734 = vsel %vm401, %v5396, 0.0
    %5735 = vadd.xlane.f32.xlu0 %v5734
    %v5736 = vpop.xlane.xlu0 %5735
    %v5737 = vsel %vm401, %v5397, 0.0
    %5738 = vadd.xlane.f32.xlu0 %v5737
    %v5739 = vpop.xlane.xlu0 %5738
    %v5740 = vsel %vm401, %v5398, 0.0
    %5741 = vadd.xlane.f32.xlu0 %v5740
    %v5742 = vpop.xlane.xlu0 %5741
    %v5743 = vsel %vm401, %v5399, 0.0
    %5744 = vadd.xlane.f32.xlu0 %v5743
    %v5745 = vpop.xlane.xlu0 %5744
    %v5746 = vsel %vm401, %v5400, 0.0
    %5747 = vadd.xlane.f32.xlu0 %v5746
    %v5748 = vpop.xlane.xlu0 %5747
    %v5749 = vsel %vm401, %v5401, 0.0
    %5750 = vadd.xlane.f32.xlu0 %v5749
    %v5751 = vpop.xlane.xlu0 %5750
    %v5752 = vsel %vm401, %v5402, 0.0
    %5753 = vadd.xlane.f32.xlu0 %v5752
    %v5754 = vpop.xlane.xlu0 %5753
    %v5755 = vsel %vm401, %v5403, 0.0
    %5756 = vadd.xlane.f32.xlu0 %v5755
    %v5757 = vpop.xlane.xlu0 %5756
    %v5758 = vsel %vm401, %v5404, 0.0
    %5759 = vadd.xlane.f32.xlu0 %v5758
    %v5760 = vpop.xlane.xlu0 %5759
    %v5761 = vsel %vm401, %v5405, 0.0
    %5762 = vadd.xlane.f32.xlu0 %v5761
    %v5763 = vpop.xlane.xlu0 %5762
    %v5764 = vsel %vm401, %v5406, 0.0
    %5765 = vadd.xlane.f32.xlu0 %v5764
    %v5766 = vpop.xlane.xlu0 %5765
    %v5767 = vsel %vm401, %v5407, 0.0
    %5768 = vadd.xlane.f32.xlu0 %v5767
    %v5769 = vpop.xlane.xlu0 %5768
    %v5770 = vsel %vm401, %v5408, 0.0
    %5771 = vadd.xlane.f32.xlu0 %v5770
    %v5772 = vpop.xlane.xlu0 %5771
    %v5773 = vsel %vm401, %v5409, 0.0
    %5774 = vadd.xlane.f32.xlu0 %v5773
    %v5775 = vpop.xlane.xlu0 %5774
    %v5776 = vsel %vm401, %v5410, 0.0
    %5777 = vadd.xlane.f32.xlu0 %v5776
    %v5778 = vpop.xlane.xlu0 %5777
    %v5779 = vsel %vm401, %v5411, 0.0
    %5780 = vadd.xlane.f32.xlu0 %v5779
    %v5781 = vpop.xlane.xlu0 %5780
    %v5782 = vsel %vm401, %v5412, 0.0
    %5783 = vadd.xlane.f32.xlu0 %v5782
    %v5784 = vpop.xlane.xlu0 %5783
    %v5785 = vsel %vm401, %v5413, 0.0
    %5786 = vadd.xlane.f32.xlu0 %v5785
    %v5787 = vpop.xlane.xlu0 %5786
    %v5788 = vsel %vm401, %v5414, 0.0
    %5789 = vadd.xlane.f32.xlu0 %v5788
    %v5790 = vpop.xlane.xlu0 %5789
    %v5791 = vsel %vm401, %v5415, 0.0
    %5792 = vadd.xlane.f32.xlu0 %v5791
    %v5793 = vpop.xlane.xlu0 %5792
    %v5794 = vsel %vm401, %v5416, 0.0
    %5795 = vadd.xlane.f32.xlu0 %v5794
    %v5796 = vpop.xlane.xlu0 %5795
    %v5797 = vsel %vm401, %v5417, 0.0
    %5798 = vadd.xlane.f32.xlu0 %v5797
    %v5799 = vpop.xlane.xlu0 %5798
    %v5800 = vsel %vm401, %v5418, 0.0
    %5801 = vadd.xlane.f32.xlu0 %v5800
    %v5802 = vpop.xlane.xlu0 %5801
    %vm5803 = vcmp.lt.f32.partialorder %v5421, %v4902
    %vm5804 = vcmp.lt.f32.partialorder %v5424, %v4903
    %vm5805 = vcmp.lt.f32.partialorder %v5427, %v4904
    %vm5806 = vcmp.lt.f32.partialorder %v5430, %v4905
    %vm5807 = vcmp.lt.f32.partialorder %v5433, %v4906
    %vm5808 = vcmp.lt.f32.partialorder %v5436, %v4907
    %vm5809 = vcmp.lt.f32.partialorder %v5439, %v4908
    %vm5810 = vcmp.lt.f32.partialorder %v5442, %v4909
    %vm5811 = vcmp.lt.f32.partialorder %v5445, %v4910
    %vm5812 = vcmp.lt.f32.partialorder %v5448, %v4911
    %vm5813 = vcmp.lt.f32.partialorder %v5451, %v4912
    %vm5814 = vcmp.lt.f32.partialorder %v5454, %v4913
    %vm5815 = vcmp.lt.f32.partialorder %v5457, %v4914
    %vm5816 = vcmp.lt.f32.partialorder %v5460, %v4915
    %vm5817 = vcmp.lt.f32.partialorder %v5463, %v4916
    %vm5818 = vcmp.lt.f32.partialorder %v5466, %v4917
    %vm5819 = vcmp.lt.f32.partialorder %v5469, %v4918
    %vm5820 = vcmp.lt.f32.partialorder %v5472, %v4919
    %vm5821 = vcmp.lt.f32.partialorder %v5475, %v4920
    %vm5822 = vcmp.lt.f32.partialorder %v5478, %v4921
    %vm5823 = vcmp.lt.f32.partialorder %v5481, %v4922
    %vm5824 = vcmp.lt.f32.partialorder %v5484, %v4923
    %vm5825 = vcmp.lt.f32.partialorder %v5487, %v4924
    %vm5826 = vcmp.lt.f32.partialorder %v5490, %v4925
    %vm5827 = vcmp.lt.f32.partialorder %v5493, %v4926
    %vm5828 = vcmp.lt.f32.partialorder %v5496, %v4927
    %vm5829 = vcmp.lt.f32.partialorder %v5499, %v4928
    %vm5830 = vcmp.lt.f32.partialorder %v5502, %v4929
    %vm5831 = vcmp.lt.f32.partialorder %v5505, %v4930
    %vm5832 = vcmp.lt.f32.partialorder %v5508, %v4931
    %vm5833 = vcmp.lt.f32.partialorder %v5511, %v4932
    %vm5834 = vcmp.lt.f32.partialorder %v5514, %v4933
    %vm5835 = vcmp.lt.f32.partialorder %v5517, %v4934
    %vm5836 = vcmp.lt.f32.partialorder %v5520, %v4935
    %vm5837 = vcmp.lt.f32.partialorder %v5523, %v4936
    %vm5838 = vcmp.lt.f32.partialorder %v5526, %v4937
    %vm5839 = vcmp.lt.f32.partialorder %v5529, %v4938
    %vm5840 = vcmp.lt.f32.partialorder %v5532, %v4939
    %vm5841 = vcmp.lt.f32.partialorder %v5535, %v4940
    %vm5842 = vcmp.lt.f32.partialorder %v5538, %v4941
    %vm5843 = vcmp.lt.f32.partialorder %v5541, %v4942
    %vm5844 = vcmp.lt.f32.partialorder %v5544, %v4943
    %vm5845 = vcmp.lt.f32.partialorder %v5547, %v4944
    %vm5846 = vcmp.lt.f32.partialorder %v5550, %v4945
    %vm5847 = vcmp.lt.f32.partialorder %v5553, %v4946
    %vm5848 = vcmp.lt.f32.partialorder %v5556, %v4947
    %vm5849 = vcmp.lt.f32.partialorder %v5559, %v4948
    %vm5850 = vcmp.lt.f32.partialorder %v5562, %v4949
    %vm5851 = vcmp.lt.f32.partialorder %v5565, %v4950
    %vm5852 = vcmp.lt.f32.partialorder %v5568, %v4951
    %vm5853 = vcmp.lt.f32.partialorder %v5571, %v4952
    %vm5854 = vcmp.lt.f32.partialorder %v5574, %v4953
    %vm5855 = vcmp.lt.f32.partialorder %v5577, %v4954
    %vm5856 = vcmp.lt.f32.partialorder %v5580, %v4955
    %vm5857 = vcmp.lt.f32.partialorder %v5583, %v4956
    %vm5858 = vcmp.lt.f32.partialorder %v5586, %v4957
    %vm5859 = vcmp.lt.f32.partialorder %v5589, %v4958
    %vm5860 = vcmp.lt.f32.partialorder %v5592, %v4959
    %vm5861 = vcmp.lt.f32.partialorder %v5595, %v4960
    %vm5862 = vcmp.lt.f32.partialorder %v5598, %v4961
    %vm5863 = vcmp.lt.f32.partialorder %v5601, %v4962
    %vm5864 = vcmp.lt.f32.partialorder %v5604, %v4963
    %vm5865 = vcmp.lt.f32.partialorder %v5607, %v4964
    %vm5866 = vcmp.lt.f32.partialorder %v5610, %v4965
    %vm5867 = vcmp.lt.f32.partialorder %v5613, %v4966
    %vm5868 = vcmp.lt.f32.partialorder %v5616, %v4967
    %vm5869 = vcmp.lt.f32.partialorder %v5619, %v4968
    %vm5870 = vcmp.lt.f32.partialorder %v5622, %v4969
    %vm5871 = vcmp.lt.f32.partialorder %v5625, %v4970
    %vm5872 = vcmp.lt.f32.partialorder %v5628, %v4971
    %vm5873 = vcmp.lt.f32.partialorder %v5631, %v4972
    %vm5874 = vcmp.lt.f32.partialorder %v5634, %v4973
    %vm5875 = vcmp.lt.f32.partialorder %v5637, %v4974
    %vm5876 = vcmp.lt.f32.partialorder %v5640, %v4975
    %vm5877 = vcmp.lt.f32.partialorder %v5643, %v4976
    %vm5878 = vcmp.lt.f32.partialorder %v5646, %v4977
    %vm5879 = vcmp.lt.f32.partialorder %v5649, %v4978
    %vm5880 = vcmp.lt.f32.partialorder %v5652, %v4979
    %vm5881 = vcmp.lt.f32.partialorder %v5655, %v4980
    %vm5882 = vcmp.lt.f32.partialorder %v5658, %v4981
    %vm5883 = vcmp.lt.f32.partialorder %v5661, %v4982
    %vm5884 = vcmp.lt.f32.partialorder %v5664, %v4983
    %vm5885 = vcmp.lt.f32.partialorder %v5667, %v4984
    %vm5886 = vcmp.lt.f32.partialorder %v5670, %v4985
    %vm5887 = vcmp.lt.f32.partialorder %v5673, %v4986
    %vm5888 = vcmp.lt.f32.partialorder %v5676, %v4987
    %vm5889 = vcmp.lt.f32.partialorder %v5679, %v4988
    %vm5890 = vcmp.lt.f32.partialorder %v5682, %v4989
    %vm5891 = vcmp.lt.f32.partialorder %v5685, %v4990
    %vm5892 = vcmp.lt.f32.partialorder %v5688, %v4991
    %vm5893 = vcmp.lt.f32.partialorder %v5691, %v4992
    %vm5894 = vcmp.lt.f32.partialorder %v5694, %v4993
    %vm5895 = vcmp.lt.f32.partialorder %v5697, %v4994
    %vm5896 = vcmp.lt.f32.partialorder %v5700, %v4995
    %vm5897 = vcmp.lt.f32.partialorder %v5703, %v4996
    %vm5898 = vcmp.lt.f32.partialorder %v5706, %v4997
    %vm5899 = vcmp.lt.f32.partialorder %v5709, %v4998
    %vm5900 = vcmp.lt.f32.partialorder %v5712, %v4999
    %vm5901 = vcmp.lt.f32.partialorder %v5715, %v5000
    %vm5902 = vcmp.lt.f32.partialorder %v5718, %v5001
    %vm5903 = vcmp.lt.f32.partialorder %v5721, %v5002
    %vm5904 = vcmp.lt.f32.partialorder %v5724, %v5003
    %vm5905 = vcmp.lt.f32.partialorder %v5727, %v5004
    %vm5906 = vcmp.lt.f32.partialorder %v5730, %v5005
    %vm5907 = vcmp.lt.f32.partialorder %v5733, %v5006
    %vm5908 = vcmp.lt.f32.partialorder %v5736, %v5007
    %vm5909 = vcmp.lt.f32.partialorder %v5739, %v5008
    %vm5910 = vcmp.lt.f32.partialorder %v5742, %v5009
    %vm5911 = vcmp.lt.f32.partialorder %v5745, %v5010
    %vm5912 = vcmp.lt.f32.partialorder %v5748, %v5011
    %vm5913 = vcmp.lt.f32.partialorder %v5751, %v5012
    %vm5914 = vcmp.lt.f32.partialorder %v5754, %v5013
    %vm5915 = vcmp.lt.f32.partialorder %v5757, %v5014
    %vm5916 = vcmp.lt.f32.partialorder %v5760, %v5015
    %vm5917 = vcmp.lt.f32.partialorder %v5763, %v5016
    %vm5918 = vcmp.lt.f32.partialorder %v5766, %v5017
    %vm5919 = vcmp.lt.f32.partialorder %v5769, %v5018
    %vm5920 = vcmp.lt.f32.partialorder %v5772, %v5019
    %vm5921 = vcmp.lt.f32.partialorder %v5775, %v5020
    %vm5922 = vcmp.lt.f32.partialorder %v5778, %v5021
    %vm5923 = vcmp.lt.f32.partialorder %v5781, %v5022
    %vm5924 = vcmp.lt.f32.partialorder %v5784, %v5023
    %vm5925 = vcmp.lt.f32.partialorder %v5787, %v5024
    %vm5926 = vcmp.lt.f32.partialorder %v5790, %v5025
    %vm5927 = vcmp.lt.f32.partialorder %v5793, %v5026
    %vm5928 = vcmp.lt.f32.partialorder %v5796, %v5027
    %vm5929 = vcmp.lt.f32.partialorder %v5799, %v5028
    %vm5930 = vcmp.lt.f32.partialorder %v5802, %v5029
    %v5931 = vsel %vm5803, %v5421, %v4902
    %v5932 = vsel %vm5804, %v5424, %v4903
    %v5933 = vsel %vm5805, %v5427, %v4904
    %v5934 = vsel %vm5806, %v5430, %v4905
    %v5935 = vsel %vm5807, %v5433, %v4906
    %v5936 = vsel %vm5808, %v5436, %v4907
    %v5937 = vsel %vm5809, %v5439, %v4908
    %v5938 = vsel %vm5810, %v5442, %v4909
    %v5939 = vsel %vm5811, %v5445, %v4910
    %v5940 = vsel %vm5812, %v5448, %v4911
    %v5941 = vsel %vm5813, %v5451, %v4912
    %v5942 = vsel %vm5814, %v5454, %v4913
    %v5943 = vsel %vm5815, %v5457, %v4914
    %v5944 = vsel %vm5816, %v5460, %v4915
    %v5945 = vsel %vm5817, %v5463, %v4916
    %v5946 = vsel %vm5818, %v5466, %v4917
    %v5947 = vsel %vm5819, %v5469, %v4918
    %v5948 = vsel %vm5820, %v5472, %v4919
    %v5949 = vsel %vm5821, %v5475, %v4920
    %v5950 = vsel %vm5822, %v5478, %v4921
    %v5951 = vsel %vm5823, %v5481, %v4922
    %v5952 = vsel %vm5824, %v5484, %v4923
    %v5953 = vsel %vm5825, %v5487, %v4924
    %v5954 = vsel %vm5826, %v5490, %v4925
    %v5955 = vsel %vm5827, %v5493, %v4926
    %v5956 = vsel %vm5828, %v5496, %v4927
    %v5957 = vsel %vm5829, %v5499, %v4928
    %v5958 = vsel %vm5830, %v5502, %v4929
    %v5959 = vsel %vm5831, %v5505, %v4930
    %v5960 = vsel %vm5832, %v5508, %v4931
    %v5961 = vsel %vm5833, %v5511, %v4932
    %v5962 = vsel %vm5834, %v5514, %v4933
    %v5963 = vsel %vm5835, %v5517, %v4934
    %v5964 = vsel %vm5836, %v5520, %v4935
    %v5965 = vsel %vm5837, %v5523, %v4936
    %v5966 = vsel %vm5838, %v5526, %v4937
    %v5967 = vsel %vm5839, %v5529, %v4938
    %v5968 = vsel %vm5840, %v5532, %v4939
    %v5969 = vsel %vm5841, %v5535, %v4940
    %v5970 = vsel %vm5842, %v5538, %v4941
    %v5971 = vsel %vm5843, %v5541, %v4942
    %v5972 = vsel %vm5844, %v5544, %v4943
    %v5973 = vsel %vm5845, %v5547, %v4944
    %v5974 = vsel %vm5846, %v5550, %v4945
    %v5975 = vsel %vm5847, %v5553, %v4946
    %v5976 = vsel %vm5848, %v5556, %v4947
    %v5977 = vsel %vm5849, %v5559, %v4948
    %v5978 = vsel %vm5850, %v5562, %v4949
    %v5979 = vsel %vm5851, %v5565, %v4950
    %v5980 = vsel %vm5852, %v5568, %v4951
    %v5981 = vsel %vm5853, %v5571, %v4952
    %v5982 = vsel %vm5854, %v5574, %v4953
    %v5983 = vsel %vm5855, %v5577, %v4954
    %v5984 = vsel %vm5856, %v5580, %v4955
    %v5985 = vsel %vm5857, %v5583, %v4956
    %v5986 = vsel %vm5858, %v5586, %v4957
    %v5987 = vsel %vm5859, %v5589, %v4958
    %v5988 = vsel %vm5860, %v5592, %v4959
    %v5989 = vsel %vm5861, %v5595, %v4960
    %v5990 = vsel %vm5862, %v5598, %v4961
    %v5991 = vsel %vm5863, %v5601, %v4962
    %v5992 = vsel %vm5864, %v5604, %v4963
    %v5993 = vsel %vm5865, %v5607, %v4964
    %v5994 = vsel %vm5866, %v5610, %v4965
    %v5995 = vsel %vm5867, %v5613, %v4966
    %v5996 = vsel %vm5868, %v5616, %v4967
    %v5997 = vsel %vm5869, %v5619, %v4968
    %v5998 = vsel %vm5870, %v5622, %v4969
    %v5999 = vsel %vm5871, %v5625, %v4970
    %v6000 = vsel %vm5872, %v5628, %v4971
    %v6001 = vsel %vm5873, %v5631, %v4972
    %v6002 = vsel %vm5874, %v5634, %v4973
    %v6003 = vsel %vm5875, %v5637, %v4974
    %v6004 = vsel %vm5876, %v5640, %v4975
    %v6005 = vsel %vm5877, %v5643, %v4976
    %v6006 = vsel %vm5878, %v5646, %v4977
    %v6007 = vsel %vm5879, %v5649, %v4978
    %v6008 = vsel %vm5880, %v5652, %v4979
    %v6009 = vsel %vm5881, %v5655, %v4980
    %v6010 = vsel %vm5882, %v5658, %v4981
    %v6011 = vsel %vm5883, %v5661, %v4982
    %v6012 = vsel %vm5884, %v5664, %v4983
    %v6013 = vsel %vm5885, %v5667, %v4984
    %v6014 = vsel %vm5886, %v5670, %v4985
    %v6015 = vsel %vm5887, %v5673, %v4986
    %v6016 = vsel %vm5888, %v5676, %v4987
    %v6017 = vsel %vm5889, %v5679, %v4988
    %v6018 = vsel %vm5890, %v5682, %v4989
    %v6019 = vsel %vm5891, %v5685, %v4990
    %v6020 = vsel %vm5892, %v5688, %v4991
    %v6021 = vsel %vm5893, %v5691, %v4992
    %v6022 = vsel %vm5894, %v5694, %v4993
    %v6023 = vsel %vm5895, %v5697, %v4994
    %v6024 = vsel %vm5896, %v5700, %v4995
    %v6025 = vsel %vm5897, %v5703, %v4996
    %v6026 = vsel %vm5898, %v5706, %v4997
    %v6027 = vsel %vm5899, %v5709, %v4998
    %v6028 = vsel %vm5900, %v5712, %v4999
    %v6029 = vsel %vm5901, %v5715, %v5000
    %v6030 = vsel %vm5902, %v5718, %v5001
    %v6031 = vsel %vm5903, %v5721, %v5002
    %v6032 = vsel %vm5904, %v5724, %v5003
    %v6033 = vsel %vm5905, %v5727, %v5004
    %v6034 = vsel %vm5906, %v5730, %v5005
    %v6035 = vsel %vm5907, %v5733, %v5006
    %v6036 = vsel %vm5908, %v5736, %v5007
    %v6037 = vsel %vm5909, %v5739, %v5008
    %v6038 = vsel %vm5910, %v5742, %v5009
    %v6039 = vsel %vm5911, %v5745, %v5010
    %v6040 = vsel %vm5912, %v5748, %v5011
    %v6041 = vsel %vm5913, %v5751, %v5012
    %v6042 = vsel %vm5914, %v5754, %v5013
    %v6043 = vsel %vm5915, %v5757, %v5014
    %v6044 = vsel %vm5916, %v5760, %v5015
    %v6045 = vsel %vm5917, %v5763, %v5016
    %v6046 = vsel %vm5918, %v5766, %v5017
    %v6047 = vsel %vm5919, %v5769, %v5018
    %v6048 = vsel %vm5920, %v5772, %v5019
    %v6049 = vsel %vm5921, %v5775, %v5020
    %v6050 = vsel %vm5922, %v5778, %v5021
    %v6051 = vsel %vm5923, %v5781, %v5022
    %v6052 = vsel %vm5924, %v5784, %v5023
    %v6053 = vsel %vm5925, %v5787, %v5024
    %v6054 = vsel %vm5926, %v5790, %v5025
    %v6055 = vsel %vm5927, %v5793, %v5026
    %v6056 = vsel %vm5928, %v5796, %v5027
    %v6057 = vsel %vm5929, %v5799, %v5028
    %v6058 = vsel %vm5930, %v5802, %v5029
    %v6059 = vsel %vm5803, 5, %v5030
    %v6060 = vsel %vm5804, 5, %v5031
    %v6061 = vsel %vm5805, 5, %v5032
    %v6062 = vsel %vm5806, 5, %v5033
    %v6063 = vsel %vm5807, 5, %v5034
    %v6064 = vsel %vm5808, 5, %v5035
    %v6065 = vsel %vm5809, 5, %v5036
    %v6066 = vsel %vm5810, 5, %v5037
    %v6067 = vsel %vm5811, 5, %v5038
    %v6068 = vsel %vm5812, 5, %v5039
    %v6069 = vsel %vm5813, 5, %v5040
    %v6070 = vsel %vm5814, 5, %v5041
    %v6071 = vsel %vm5815, 5, %v5042
    %v6072 = vsel %vm5816, 5, %v5043
    %v6073 = vsel %vm5817, 5, %v5044
    %v6074 = vsel %vm5818, 5, %v5045
    %v6075 = vsel %vm5819, 5, %v5046
    %v6076 = vsel %vm5820, 5, %v5047
    %v6077 = vsel %vm5821, 5, %v5048
    %v6078 = vsel %vm5822, 5, %v5049
    %v6079 = vsel %vm5823, 5, %v5050
    %v6080 = vsel %vm5824, 5, %v5051
    %v6081 = vsel %vm5825, 5, %v5052
    %v6082 = vsel %vm5826, 5, %v5053
    %v6083 = vsel %vm5827, 5, %v5054
    %v6084 = vsel %vm5828, 5, %v5055
    %v6085 = vsel %vm5829, 5, %v5056
    %v6086 = vsel %vm5830, 5, %v5057
    %v6087 = vsel %vm5831, 5, %v5058
    %v6088 = vsel %vm5832, 5, %v5059
    %v6089 = vsel %vm5833, 5, %v5060
    %v6090 = vsel %vm5834, 5, %v5061
    %v6091 = vsel %vm5835, 5, %v5062
    %v6092 = vsel %vm5836, 5, %v5063
    %v6093 = vsel %vm5837, 5, %v5064
    %v6094 = vsel %vm5838, 5, %v5065
    %v6095 = vsel %vm5839, 5, %v5066
    %v6096 = vsel %vm5840, 5, %v5067
    %v6097 = vsel %vm5841, 5, %v5068
    %v6098 = vsel %vm5842, 5, %v5069
    %v6099 = vsel %vm5843, 5, %v5070
    %v6100 = vsel %vm5844, 5, %v5071
    %v6101 = vsel %vm5845, 5, %v5072
    %v6102 = vsel %vm5846, 5, %v5073
    %v6103 = vsel %vm5847, 5, %v5074
    %v6104 = vsel %vm5848, 5, %v5075
    %v6105 = vsel %vm5849, 5, %v5076
    %v6106 = vsel %vm5850, 5, %v5077
    %v6107 = vsel %vm5851, 5, %v5078
    %v6108 = vsel %vm5852, 5, %v5079
    %v6109 = vsel %vm5853, 5, %v5080
    %v6110 = vsel %vm5854, 5, %v5081
    %v6111 = vsel %vm5855, 5, %v5082
    %v6112 = vsel %vm5856, 5, %v5083
    %v6113 = vsel %vm5857, 5, %v5084
    %v6114 = vsel %vm5858, 5, %v5085
    %v6115 = vsel %vm5859, 5, %v5086
    %v6116 = vsel %vm5860, 5, %v5087
    %v6117 = vsel %vm5861, 5, %v5088
    %v6118 = vsel %vm5862, 5, %v5089
    %v6119 = vsel %vm5863, 5, %v5090
    %v6120 = vsel %vm5864, 5, %v5091
    %v6121 = vsel %vm5865, 5, %v5092
    %v6122 = vsel %vm5866, 5, %v5093
    %v6123 = vsel %vm5867, 5, %v5094
    %v6124 = vsel %vm5868, 5, %v5095
    %v6125 = vsel %vm5869, 5, %v5096
    %v6126 = vsel %vm5870, 5, %v5097
    %v6127 = vsel %vm5871, 5, %v5098
    %v6128 = vsel %vm5872, 5, %v5099
    %v6129 = vsel %vm5873, 5, %v5100
    %v6130 = vsel %vm5874, 5, %v5101
    %v6131 = vsel %vm5875, 5, %v5102
    %v6132 = vsel %vm5876, 5, %v5103
    %v6133 = vsel %vm5877, 5, %v5104
    %v6134 = vsel %vm5878, 5, %v5105
    %v6135 = vsel %vm5879, 5, %v5106
    %v6136 = vsel %vm5880, 5, %v5107
    %v6137 = vsel %vm5881, 5, %v5108
    %v6138 = vsel %vm5882, 5, %v5109
    %v6139 = vsel %vm5883, 5, %v5110
    %v6140 = vsel %vm5884, 5, %v5111
    %v6141 = vsel %vm5885, 5, %v5112
    %v6142 = vsel %vm5886, 5, %v5113
    %v6143 = vsel %vm5887, 5, %v5114
    %v6144 = vsel %vm5888, 5, %v5115
    %v6145 = vsel %vm5889, 5, %v5116
    %v6146 = vsel %vm5890, 5, %v5117
    %v6147 = vsel %vm5891, 5, %v5118
    %v6148 = vsel %vm5892, 5, %v5119
    %v6149 = vsel %vm5893, 5, %v5120
    %v6150 = vsel %vm5894, 5, %v5121
    %v6151 = vsel %vm5895, 5, %v5122
    %v6152 = vsel %vm5896, 5, %v5123
    %v6153 = vsel %vm5897, 5, %v5124
    %v6154 = vsel %vm5898, 5, %v5125
    %v6155 = vsel %vm5899, 5, %v5126
    %v6156 = vsel %vm5900, 5, %v5127
    %v6157 = vsel %vm5901, 5, %v5128
    %v6158 = vsel %vm5902, 5, %v5129
    %v6159 = vsel %vm5903, 5, %v5130
    %v6160 = vsel %vm5904, 5, %v5131
    %v6161 = vsel %vm5905, 5, %v5132
    %v6162 = vsel %vm5906, 5, %v5133
    %v6163 = vsel %vm5907, 5, %v5134
    %v6164 = vsel %vm5908, 5, %v5135
    %v6165 = vsel %vm5909, 5, %v5136
    %v6166 = vsel %vm5910, 5, %v5137
    %v6167 = vsel %vm5911, 5, %v5138
    %v6168 = vsel %vm5912, 5, %v5139
    %v6169 = vsel %vm5913, 5, %v5140
    %v6170 = vsel %vm5914, 5, %v5141
    %v6171 = vsel %vm5915, 5, %v5142
    %v6172 = vsel %vm5916, 5, %v5143
    %v6173 = vsel %vm5917, 5, %v5144
    %v6174 = vsel %vm5918, 5, %v5145
    %v6175 = vsel %vm5919, 5, %v5146
    %v6176 = vsel %vm5920, 5, %v5147
    %v6177 = vsel %vm5921, 5, %v5148
    %v6178 = vsel %vm5922, 5, %v5149
    %v6179 = vsel %vm5923, 5, %v5150
    %v6180 = vsel %vm5924, 5, %v5151
    %v6181 = vsel %vm5925, 5, %v5152
    %v6182 = vsel %vm5926, 5, %v5153
    %v6183 = vsel %vm5927, 5, %v5154
    %v6184 = vsel %vm5928, 5, %v5155
    %v6185 = vsel %vm5929, 5, %v5156
    %v6186 = vsel %vm5930, 5, %v5157
    %v6187 = vld [vmem:[%s1 + $0x6] sm:$0x1]
    %v6188 = vlaneseq
    %v6189 = vshrl.u32 %v6188, 7
    %v6190 = vsub.s32 0, %v6189
    %v6191 = vrot.slane %v6187, %v6190
    %v6192 = vsub.f32 %v12, %v6191
    %v6193 = vsub.f32 %v13, %v6191
    %v6194 = vsub.f32 %v14, %v6191
    %v6195 = vsub.f32 %v15, %v6191
    %v6196 = vsub.f32 %v16, %v6191
    %v6197 = vsub.f32 %v17, %v6191
    %v6198 = vsub.f32 %v18, %v6191
    %v6199 = vsub.f32 %v19, %v6191
    %v6200 = vsub.f32 %v20, %v6191
    %v6201 = vsub.f32 %v21, %v6191
    %v6202 = vsub.f32 %v22, %v6191
    %v6203 = vsub.f32 %v23, %v6191
    %v6204 = vsub.f32 %v24, %v6191
    %v6205 = vsub.f32 %v25, %v6191
    %v6206 = vsub.f32 %v26, %v6191
    %v6207 = vsub.f32 %v27, %v6191
    %v6208 = vsub.f32 %v28, %v6191
    %v6209 = vsub.f32 %v29, %v6191
    %v6210 = vsub.f32 %v30, %v6191
    %v6211 = vsub.f32 %v31, %v6191
    %v6212 = vsub.f32 %v32, %v6191
    %v6213 = vsub.f32 %v33, %v6191
    %v6214 = vsub.f32 %v34, %v6191
    %v6215 = vsub.f32 %v35, %v6191
    %v6216 = vsub.f32 %v36, %v6191
    %v6217 = vsub.f32 %v37, %v6191
    %v6218 = vsub.f32 %v38, %v6191
    %v6219 = vsub.f32 %v39, %v6191
    %v6220 = vsub.f32 %v40, %v6191
    %v6221 = vsub.f32 %v41, %v6191
    %v6222 = vsub.f32 %v42, %v6191
    %v6223 = vsub.f32 %v43, %v6191
    %v6224 = vsub.f32 %v44, %v6191
    %v6225 = vsub.f32 %v45, %v6191
    %v6226 = vsub.f32 %v46, %v6191
    %v6227 = vsub.f32 %v47, %v6191
    %v6228 = vsub.f32 %v48, %v6191
    %v6229 = vsub.f32 %v49, %v6191
    %v6230 = vsub.f32 %v50, %v6191
    %v6231 = vsub.f32 %v51, %v6191
    %v6232 = vsub.f32 %v52, %v6191
    %v6233 = vsub.f32 %v53, %v6191
    %v6234 = vsub.f32 %v54, %v6191
    %v6235 = vsub.f32 %v55, %v6191
    %v6236 = vsub.f32 %v56, %v6191
    %v6237 = vsub.f32 %v57, %v6191
    %v6238 = vsub.f32 %v58, %v6191
    %v6239 = vsub.f32 %v59, %v6191
    %v6240 = vsub.f32 %v60, %v6191
    %v6241 = vsub.f32 %v61, %v6191
    %v6242 = vsub.f32 %v62, %v6191
    %v6243 = vsub.f32 %v63, %v6191
    %v6244 = vsub.f32 %v64, %v6191
    %v6245 = vsub.f32 %v65, %v6191
    %v6246 = vsub.f32 %v66, %v6191
    %v6247 = vsub.f32 %v67, %v6191
    %v6248 = vsub.f32 %v68, %v6191
    %v6249 = vsub.f32 %v69, %v6191
    %v6250 = vsub.f32 %v70, %v6191
    %v6251 = vsub.f32 %v71, %v6191
    %v6252 = vsub.f32 %v72, %v6191
    %v6253 = vsub.f32 %v73, %v6191
    %v6254 = vsub.f32 %v74, %v6191
    %v6255 = vsub.f32 %v75, %v6191
    %v6256 = vsub.f32 %v76, %v6191
    %v6257 = vsub.f32 %v77, %v6191
    %v6258 = vsub.f32 %v78, %v6191
    %v6259 = vsub.f32 %v79, %v6191
    %v6260 = vsub.f32 %v80, %v6191
    %v6261 = vsub.f32 %v81, %v6191
    %v6262 = vsub.f32 %v82, %v6191
    %v6263 = vsub.f32 %v83, %v6191
    %v6264 = vsub.f32 %v84, %v6191
    %v6265 = vsub.f32 %v85, %v6191
    %v6266 = vsub.f32 %v86, %v6191
    %v6267 = vsub.f32 %v87, %v6191
    %v6268 = vsub.f32 %v88, %v6191
    %v6269 = vsub.f32 %v89, %v6191
    %v6270 = vsub.f32 %v90, %v6191
    %v6271 = vsub.f32 %v91, %v6191
    %v6272 = vsub.f32 %v92, %v6191
    %v6273 = vsub.f32 %v93, %v6191
    %v6274 = vsub.f32 %v94, %v6191
    %v6275 = vsub.f32 %v95, %v6191
    %v6276 = vsub.f32 %v96, %v6191
    %v6277 = vsub.f32 %v97, %v6191
    %v6278 = vsub.f32 %v98, %v6191
    %v6279 = vsub.f32 %v99, %v6191
    %v6280 = vsub.f32 %v100, %v6191
    %v6281 = vsub.f32 %v101, %v6191
    %v6282 = vsub.f32 %v102, %v6191
    %v6283 = vsub.f32 %v103, %v6191
    %v6284 = vsub.f32 %v104, %v6191
    %v6285 = vsub.f32 %v105, %v6191
    %v6286 = vsub.f32 %v106, %v6191
    %v6287 = vsub.f32 %v107, %v6191
    %v6288 = vsub.f32 %v108, %v6191
    %v6289 = vsub.f32 %v109, %v6191
    %v6290 = vsub.f32 %v110, %v6191
    %v6291 = vsub.f32 %v111, %v6191
    %v6292 = vsub.f32 %v112, %v6191
    %v6293 = vsub.f32 %v113, %v6191
    %v6294 = vsub.f32 %v114, %v6191
    %v6295 = vsub.f32 %v115, %v6191
    %v6296 = vsub.f32 %v116, %v6191
    %v6297 = vsub.f32 %v117, %v6191
    %v6298 = vsub.f32 %v118, %v6191
    %v6299 = vsub.f32 %v119, %v6191
    %v6300 = vsub.f32 %v120, %v6191
    %v6301 = vsub.f32 %v121, %v6191
    %v6302 = vsub.f32 %v122, %v6191
    %v6303 = vsub.f32 %v123, %v6191
    %v6304 = vsub.f32 %v124, %v6191
    %v6305 = vsub.f32 %v125, %v6191
    %v6306 = vsub.f32 %v126, %v6191
    %v6307 = vsub.f32 %v127, %v6191
    %v6308 = vsub.f32 %v128, %v6191
    %v6309 = vsub.f32 %v129, %v6191
    %v6310 = vsub.f32 %v130, %v6191
    %v6311 = vsub.f32 %v131, %v6191
    %v6312 = vsub.f32 %v132, %v6191
    %v6313 = vsub.f32 %v133, %v6191
    %v6314 = vsub.f32 %v134, %v6191
    %v6315 = vsub.f32 %v135, %v6191
    %v6316 = vsub.f32 %v136, %v6191
    %v6317 = vsub.f32 %v137, %v6191
    %v6318 = vsub.f32 %v138, %v6191
    %v6319 = vsub.f32 %v139, %v6191
    %v6320 = vmul.f32 %v6192, %v6192
    %v6321 = vmul.f32 %v6193, %v6193
    %v6322 = vmul.f32 %v6194, %v6194
    %v6323 = vmul.f32 %v6195, %v6195
    %v6324 = vmul.f32 %v6196, %v6196
    %v6325 = vmul.f32 %v6197, %v6197
    %v6326 = vmul.f32 %v6198, %v6198
    %v6327 = vmul.f32 %v6199, %v6199
    %v6328 = vmul.f32 %v6200, %v6200
    %v6329 = vmul.f32 %v6201, %v6201
    %v6330 = vmul.f32 %v6202, %v6202
    %v6331 = vmul.f32 %v6203, %v6203
    %v6332 = vmul.f32 %v6204, %v6204
    %v6333 = vmul.f32 %v6205, %v6205
    %v6334 = vmul.f32 %v6206, %v6206
    %v6335 = vmul.f32 %v6207, %v6207
    %v6336 = vmul.f32 %v6208, %v6208
    %v6337 = vmul.f32 %v6209, %v6209
    %v6338 = vmul.f32 %v6210, %v6210
    %v6339 = vmul.f32 %v6211, %v6211
    %v6340 = vmul.f32 %v6212, %v6212
    %v6341 = vmul.f32 %v6213, %v6213
    %v6342 = vmul.f32 %v6214, %v6214
    %v6343 = vmul.f32 %v6215, %v6215
    %v6344 = vmul.f32 %v6216, %v6216
    %v6345 = vmul.f32 %v6217, %v6217
    %v6346 = vmul.f32 %v6218, %v6218
    %v6347 = vmul.f32 %v6219, %v6219
    %v6348 = vmul.f32 %v6220, %v6220
    %v6349 = vmul.f32 %v6221, %v6221
    %v6350 = vmul.f32 %v6222, %v6222
    %v6351 = vmul.f32 %v6223, %v6223
    %v6352 = vmul.f32 %v6224, %v6224
    %v6353 = vmul.f32 %v6225, %v6225
    %v6354 = vmul.f32 %v6226, %v6226
    %v6355 = vmul.f32 %v6227, %v6227
    %v6356 = vmul.f32 %v6228, %v6228
    %v6357 = vmul.f32 %v6229, %v6229
    %v6358 = vmul.f32 %v6230, %v6230
    %v6359 = vmul.f32 %v6231, %v6231
    %v6360 = vmul.f32 %v6232, %v6232
    %v6361 = vmul.f32 %v6233, %v6233
    %v6362 = vmul.f32 %v6234, %v6234
    %v6363 = vmul.f32 %v6235, %v6235
    %v6364 = vmul.f32 %v6236, %v6236
    %v6365 = vmul.f32 %v6237, %v6237
    %v6366 = vmul.f32 %v6238, %v6238
    %v6367 = vmul.f32 %v6239, %v6239
    %v6368 = vmul.f32 %v6240, %v6240
    %v6369 = vmul.f32 %v6241, %v6241
    %v6370 = vmul.f32 %v6242, %v6242
    %v6371 = vmul.f32 %v6243, %v6243
    %v6372 = vmul.f32 %v6244, %v6244
    %v6373 = vmul.f32 %v6245, %v6245
    %v6374 = vmul.f32 %v6246, %v6246
    %v6375 = vmul.f32 %v6247, %v6247
    %v6376 = vmul.f32 %v6248, %v6248
    %v6377 = vmul.f32 %v6249, %v6249
    %v6378 = vmul.f32 %v6250, %v6250
    %v6379 = vmul.f32 %v6251, %v6251
    %v6380 = vmul.f32 %v6252, %v6252
    %v6381 = vmul.f32 %v6253, %v6253
    %v6382 = vmul.f32 %v6254, %v6254
    %v6383 = vmul.f32 %v6255, %v6255
    %v6384 = vmul.f32 %v6256, %v6256
    %v6385 = vmul.f32 %v6257, %v6257
    %v6386 = vmul.f32 %v6258, %v6258
    %v6387 = vmul.f32 %v6259, %v6259
    %v6388 = vmul.f32 %v6260, %v6260
    %v6389 = vmul.f32 %v6261, %v6261
    %v6390 = vmul.f32 %v6262, %v6262
    %v6391 = vmul.f32 %v6263, %v6263
    %v6392 = vmul.f32 %v6264, %v6264
    %v6393 = vmul.f32 %v6265, %v6265
    %v6394 = vmul.f32 %v6266, %v6266
    %v6395 = vmul.f32 %v6267, %v6267
    %v6396 = vmul.f32 %v6268, %v6268
    %v6397 = vmul.f32 %v6269, %v6269
    %v6398 = vmul.f32 %v6270, %v6270
    %v6399 = vmul.f32 %v6271, %v6271
    %v6400 = vmul.f32 %v6272, %v6272
    %v6401 = vmul.f32 %v6273, %v6273
    %v6402 = vmul.f32 %v6274, %v6274
    %v6403 = vmul.f32 %v6275, %v6275
    %v6404 = vmul.f32 %v6276, %v6276
    %v6405 = vmul.f32 %v6277, %v6277
    %v6406 = vmul.f32 %v6278, %v6278
    %v6407 = vmul.f32 %v6279, %v6279
    %v6408 = vmul.f32 %v6280, %v6280
    %v6409 = vmul.f32 %v6281, %v6281
    %v6410 = vmul.f32 %v6282, %v6282
    %v6411 = vmul.f32 %v6283, %v6283
    %v6412 = vmul.f32 %v6284, %v6284
    %v6413 = vmul.f32 %v6285, %v6285
    %v6414 = vmul.f32 %v6286, %v6286
    %v6415 = vmul.f32 %v6287, %v6287
    %v6416 = vmul.f32 %v6288, %v6288
    %v6417 = vmul.f32 %v6289, %v6289
    %v6418 = vmul.f32 %v6290, %v6290
    %v6419 = vmul.f32 %v6291, %v6291
    %v6420 = vmul.f32 %v6292, %v6292
    %v6421 = vmul.f32 %v6293, %v6293
    %v6422 = vmul.f32 %v6294, %v6294
    %v6423 = vmul.f32 %v6295, %v6295
    %v6424 = vmul.f32 %v6296, %v6296
    %v6425 = vmul.f32 %v6297, %v6297
    %v6426 = vmul.f32 %v6298, %v6298
    %v6427 = vmul.f32 %v6299, %v6299
    %v6428 = vmul.f32 %v6300, %v6300
    %v6429 = vmul.f32 %v6301, %v6301
    %v6430 = vmul.f32 %v6302, %v6302
    %v6431 = vmul.f32 %v6303, %v6303
    %v6432 = vmul.f32 %v6304, %v6304
    %v6433 = vmul.f32 %v6305, %v6305
    %v6434 = vmul.f32 %v6306, %v6306
    %v6435 = vmul.f32 %v6307, %v6307
    %v6436 = vmul.f32 %v6308, %v6308
    %v6437 = vmul.f32 %v6309, %v6309
    %v6438 = vmul.f32 %v6310, %v6310
    %v6439 = vmul.f32 %v6311, %v6311
    %v6440 = vmul.f32 %v6312, %v6312
    %v6441 = vmul.f32 %v6313, %v6313
    %v6442 = vmul.f32 %v6314, %v6314
    %v6443 = vmul.f32 %v6315, %v6315
    %v6444 = vmul.f32 %v6316, %v6316
    %v6445 = vmul.f32 %v6317, %v6317
    %v6446 = vmul.f32 %v6318, %v6318
    %v6447 = vmul.f32 %v6319, %v6319
    %v6448 = vsel %vm401, %v6320, 0.0
    %6449 = vadd.xlane.f32.xlu0 %v6448
    %v6450 = vpop.xlane.xlu0 %6449
    %v6451 = vsel %vm401, %v6321, 0.0
    %6452 = vadd.xlane.f32.xlu0 %v6451
    %v6453 = vpop.xlane.xlu0 %6452
    %v6454 = vsel %vm401, %v6322, 0.0
    %6455 = vadd.xlane.f32.xlu0 %v6454
    %v6456 = vpop.xlane.xlu0 %6455
    %v6457 = vsel %vm401, %v6323, 0.0
    %6458 = vadd.xlane.f32.xlu0 %v6457
    %v6459 = vpop.xlane.xlu0 %6458
    %v6460 = vsel %vm401, %v6324, 0.0
    %6461 = vadd.xlane.f32.xlu0 %v6460
    %v6462 = vpop.xlane.xlu0 %6461
    %v6463 = vsel %vm401, %v6325, 0.0
    %6464 = vadd.xlane.f32.xlu0 %v6463
    %v6465 = vpop.xlane.xlu0 %6464
    %v6466 = vsel %vm401, %v6326, 0.0
    %6467 = vadd.xlane.f32.xlu0 %v6466
    %v6468 = vpop.xlane.xlu0 %6467
    %v6469 = vsel %vm401, %v6327, 0.0
    %6470 = vadd.xlane.f32.xlu0 %v6469
    %v6471 = vpop.xlane.xlu0 %6470
    %v6472 = vsel %vm401, %v6328, 0.0
    %6473 = vadd.xlane.f32.xlu0 %v6472
    %v6474 = vpop.xlane.xlu0 %6473
    %v6475 = vsel %vm401, %v6329, 0.0
    %6476 = vadd.xlane.f32.xlu0 %v6475
    %v6477 = vpop.xlane.xlu0 %6476
    %v6478 = vsel %vm401, %v6330, 0.0
    %6479 = vadd.xlane.f32.xlu0 %v6478
    %v6480 = vpop.xlane.xlu0 %6479
    %v6481 = vsel %vm401, %v6331, 0.0
    %6482 = vadd.xlane.f32.xlu0 %v6481
    %v6483 = vpop.xlane.xlu0 %6482
    %v6484 = vsel %vm401, %v6332, 0.0
    %6485 = vadd.xlane.f32.xlu0 %v6484
    %v6486 = vpop.xlane.xlu0 %6485
    %v6487 = vsel %vm401, %v6333, 0.0
    %6488 = vadd.xlane.f32.xlu0 %v6487
    %v6489 = vpop.xlane.xlu0 %6488
    %v6490 = vsel %vm401, %v6334, 0.0
    %6491 = vadd.xlane.f32.xlu0 %v6490
    %v6492 = vpop.xlane.xlu0 %6491
    %v6493 = vsel %vm401, %v6335, 0.0
    %6494 = vadd.xlane.f32.xlu0 %v6493
    %v6495 = vpop.xlane.xlu0 %6494
    %v6496 = vsel %vm401, %v6336, 0.0
    %6497 = vadd.xlane.f32.xlu0 %v6496
    %v6498 = vpop.xlane.xlu0 %6497
    %v6499 = vsel %vm401, %v6337, 0.0
    %6500 = vadd.xlane.f32.xlu0 %v6499
    %v6501 = vpop.xlane.xlu0 %6500
    %v6502 = vsel %vm401, %v6338, 0.0
    %6503 = vadd.xlane.f32.xlu0 %v6502
    %v6504 = vpop.xlane.xlu0 %6503
    %v6505 = vsel %vm401, %v6339, 0.0
    %6506 = vadd.xlane.f32.xlu0 %v6505
    %v6507 = vpop.xlane.xlu0 %6506
    %v6508 = vsel %vm401, %v6340, 0.0
    %6509 = vadd.xlane.f32.xlu0 %v6508
    %v6510 = vpop.xlane.xlu0 %6509
    %v6511 = vsel %vm401, %v6341, 0.0
    %6512 = vadd.xlane.f32.xlu0 %v6511
    %v6513 = vpop.xlane.xlu0 %6512
    %v6514 = vsel %vm401, %v6342, 0.0
    %6515 = vadd.xlane.f32.xlu0 %v6514
    %v6516 = vpop.xlane.xlu0 %6515
    %v6517 = vsel %vm401, %v6343, 0.0
    %6518 = vadd.xlane.f32.xlu0 %v6517
    %v6519 = vpop.xlane.xlu0 %6518
    %v6520 = vsel %vm401, %v6344, 0.0
    %6521 = vadd.xlane.f32.xlu0 %v6520
    %v6522 = vpop.xlane.xlu0 %6521
    %v6523 = vsel %vm401, %v6345, 0.0
    %6524 = vadd.xlane.f32.xlu0 %v6523
    %v6525 = vpop.xlane.xlu0 %6524
    %v6526 = vsel %vm401, %v6346, 0.0
    %6527 = vadd.xlane.f32.xlu0 %v6526
    %v6528 = vpop.xlane.xlu0 %6527
    %v6529 = vsel %vm401, %v6347, 0.0
    %6530 = vadd.xlane.f32.xlu0 %v6529
    %v6531 = vpop.xlane.xlu0 %6530
    %v6532 = vsel %vm401, %v6348, 0.0
    %6533 = vadd.xlane.f32.xlu0 %v6532
    %v6534 = vpop.xlane.xlu0 %6533
    %v6535 = vsel %vm401, %v6349, 0.0
    %6536 = vadd.xlane.f32.xlu0 %v6535
    %v6537 = vpop.xlane.xlu0 %6536
    %v6538 = vsel %vm401, %v6350, 0.0
    %6539 = vadd.xlane.f32.xlu0 %v6538
    %v6540 = vpop.xlane.xlu0 %6539
    %v6541 = vsel %vm401, %v6351, 0.0
    %6542 = vadd.xlane.f32.xlu0 %v6541
    %v6543 = vpop.xlane.xlu0 %6542
    %v6544 = vsel %vm401, %v6352, 0.0
    %6545 = vadd.xlane.f32.xlu0 %v6544
    %v6546 = vpop.xlane.xlu0 %6545
    %v6547 = vsel %vm401, %v6353, 0.0
    %6548 = vadd.xlane.f32.xlu0 %v6547
    %v6549 = vpop.xlane.xlu0 %6548
    %v6550 = vsel %vm401, %v6354, 0.0
    %6551 = vadd.xlane.f32.xlu0 %v6550
    %v6552 = vpop.xlane.xlu0 %6551
    %v6553 = vsel %vm401, %v6355, 0.0
    %6554 = vadd.xlane.f32.xlu0 %v6553
    %v6555 = vpop.xlane.xlu0 %6554
    %v6556 = vsel %vm401, %v6356, 0.0
    %6557 = vadd.xlane.f32.xlu0 %v6556
    %v6558 = vpop.xlane.xlu0 %6557
    %v6559 = vsel %vm401, %v6357, 0.0
    %6560 = vadd.xlane.f32.xlu0 %v6559
    %v6561 = vpop.xlane.xlu0 %6560
    %v6562 = vsel %vm401, %v6358, 0.0
    %6563 = vadd.xlane.f32.xlu0 %v6562
    %v6564 = vpop.xlane.xlu0 %6563
    %v6565 = vsel %vm401, %v6359, 0.0
    %6566 = vadd.xlane.f32.xlu0 %v6565
    %v6567 = vpop.xlane.xlu0 %6566
    %v6568 = vsel %vm401, %v6360, 0.0
    %6569 = vadd.xlane.f32.xlu0 %v6568
    %v6570 = vpop.xlane.xlu0 %6569
    %v6571 = vsel %vm401, %v6361, 0.0
    %6572 = vadd.xlane.f32.xlu0 %v6571
    %v6573 = vpop.xlane.xlu0 %6572
    %v6574 = vsel %vm401, %v6362, 0.0
    %6575 = vadd.xlane.f32.xlu0 %v6574
    %v6576 = vpop.xlane.xlu0 %6575
    %v6577 = vsel %vm401, %v6363, 0.0
    %6578 = vadd.xlane.f32.xlu0 %v6577
    %v6579 = vpop.xlane.xlu0 %6578
    %v6580 = vsel %vm401, %v6364, 0.0
    %6581 = vadd.xlane.f32.xlu0 %v6580
    %v6582 = vpop.xlane.xlu0 %6581
    %v6583 = vsel %vm401, %v6365, 0.0
    %6584 = vadd.xlane.f32.xlu0 %v6583
    %v6585 = vpop.xlane.xlu0 %6584
    %v6586 = vsel %vm401, %v6366, 0.0
    %6587 = vadd.xlane.f32.xlu0 %v6586
    %v6588 = vpop.xlane.xlu0 %6587
    %v6589 = vsel %vm401, %v6367, 0.0
    %6590 = vadd.xlane.f32.xlu0 %v6589
    %v6591 = vpop.xlane.xlu0 %6590
    %v6592 = vsel %vm401, %v6368, 0.0
    %6593 = vadd.xlane.f32.xlu0 %v6592
    %v6594 = vpop.xlane.xlu0 %6593
    %v6595 = vsel %vm401, %v6369, 0.0
    %6596 = vadd.xlane.f32.xlu0 %v6595
    %v6597 = vpop.xlane.xlu0 %6596
    %v6598 = vsel %vm401, %v6370, 0.0
    %6599 = vadd.xlane.f32.xlu0 %v6598
    %v6600 = vpop.xlane.xlu0 %6599
    %v6601 = vsel %vm401, %v6371, 0.0
    %6602 = vadd.xlane.f32.xlu0 %v6601
    %v6603 = vpop.xlane.xlu0 %6602
    %v6604 = vsel %vm401, %v6372, 0.0
    %6605 = vadd.xlane.f32.xlu0 %v6604
    %v6606 = vpop.xlane.xlu0 %6605
    %v6607 = vsel %vm401, %v6373, 0.0
    %6608 = vadd.xlane.f32.xlu0 %v6607
    %v6609 = vpop.xlane.xlu0 %6608
    %v6610 = vsel %vm401, %v6374, 0.0
    %6611 = vadd.xlane.f32.xlu0 %v6610
    %v6612 = vpop.xlane.xlu0 %6611
    %v6613 = vsel %vm401, %v6375, 0.0
    %6614 = vadd.xlane.f32.xlu0 %v6613
    %v6615 = vpop.xlane.xlu0 %6614
    %v6616 = vsel %vm401, %v6376, 0.0
    %6617 = vadd.xlane.f32.xlu0 %v6616
    %v6618 = vpop.xlane.xlu0 %6617
    %v6619 = vsel %vm401, %v6377, 0.0
    %6620 = vadd.xlane.f32.xlu0 %v6619
    %v6621 = vpop.xlane.xlu0 %6620
    %v6622 = vsel %vm401, %v6378, 0.0
    %6623 = vadd.xlane.f32.xlu0 %v6622
    %v6624 = vpop.xlane.xlu0 %6623
    %v6625 = vsel %vm401, %v6379, 0.0
    %6626 = vadd.xlane.f32.xlu0 %v6625
    %v6627 = vpop.xlane.xlu0 %6626
    %v6628 = vsel %vm401, %v6380, 0.0
    %6629 = vadd.xlane.f32.xlu0 %v6628
    %v6630 = vpop.xlane.xlu0 %6629
    %v6631 = vsel %vm401, %v6381, 0.0
    %6632 = vadd.xlane.f32.xlu0 %v6631
    %v6633 = vpop.xlane.xlu0 %6632
    %v6634 = vsel %vm401, %v6382, 0.0
    %6635 = vadd.xlane.f32.xlu0 %v6634
    %v6636 = vpop.xlane.xlu0 %6635
    %v6637 = vsel %vm401, %v6383, 0.0
    %6638 = vadd.xlane.f32.xlu0 %v6637
    %v6639 = vpop.xlane.xlu0 %6638
    %v6640 = vsel %vm401, %v6384, 0.0
    %6641 = vadd.xlane.f32.xlu0 %v6640
    %v6642 = vpop.xlane.xlu0 %6641
    %v6643 = vsel %vm401, %v6385, 0.0
    %6644 = vadd.xlane.f32.xlu0 %v6643
    %v6645 = vpop.xlane.xlu0 %6644
    %v6646 = vsel %vm401, %v6386, 0.0
    %6647 = vadd.xlane.f32.xlu0 %v6646
    %v6648 = vpop.xlane.xlu0 %6647
    %v6649 = vsel %vm401, %v6387, 0.0
    %6650 = vadd.xlane.f32.xlu0 %v6649
    %v6651 = vpop.xlane.xlu0 %6650
    %v6652 = vsel %vm401, %v6388, 0.0
    %6653 = vadd.xlane.f32.xlu0 %v6652
    %v6654 = vpop.xlane.xlu0 %6653
    %v6655 = vsel %vm401, %v6389, 0.0
    %6656 = vadd.xlane.f32.xlu0 %v6655
    %v6657 = vpop.xlane.xlu0 %6656
    %v6658 = vsel %vm401, %v6390, 0.0
    %6659 = vadd.xlane.f32.xlu0 %v6658
    %v6660 = vpop.xlane.xlu0 %6659
    %v6661 = vsel %vm401, %v6391, 0.0
    %6662 = vadd.xlane.f32.xlu0 %v6661
    %v6663 = vpop.xlane.xlu0 %6662
    %v6664 = vsel %vm401, %v6392, 0.0
    %6665 = vadd.xlane.f32.xlu0 %v6664
    %v6666 = vpop.xlane.xlu0 %6665
    %v6667 = vsel %vm401, %v6393, 0.0
    %6668 = vadd.xlane.f32.xlu0 %v6667
    %v6669 = vpop.xlane.xlu0 %6668
    %v6670 = vsel %vm401, %v6394, 0.0
    %6671 = vadd.xlane.f32.xlu0 %v6670
    %v6672 = vpop.xlane.xlu0 %6671
    %v6673 = vsel %vm401, %v6395, 0.0
    %6674 = vadd.xlane.f32.xlu0 %v6673
    %v6675 = vpop.xlane.xlu0 %6674
    %v6676 = vsel %vm401, %v6396, 0.0
    %6677 = vadd.xlane.f32.xlu0 %v6676
    %v6678 = vpop.xlane.xlu0 %6677
    %v6679 = vsel %vm401, %v6397, 0.0
    %6680 = vadd.xlane.f32.xlu0 %v6679
    %v6681 = vpop.xlane.xlu0 %6680
    %v6682 = vsel %vm401, %v6398, 0.0
    %6683 = vadd.xlane.f32.xlu0 %v6682
    %v6684 = vpop.xlane.xlu0 %6683
    %v6685 = vsel %vm401, %v6399, 0.0
    %6686 = vadd.xlane.f32.xlu0 %v6685
    %v6687 = vpop.xlane.xlu0 %6686
    %v6688 = vsel %vm401, %v6400, 0.0
    %6689 = vadd.xlane.f32.xlu0 %v6688
    %v6690 = vpop.xlane.xlu0 %6689
    %v6691 = vsel %vm401, %v6401, 0.0
    %6692 = vadd.xlane.f32.xlu0 %v6691
    %v6693 = vpop.xlane.xlu0 %6692
    %v6694 = vsel %vm401, %v6402, 0.0
    %6695 = vadd.xlane.f32.xlu0 %v6694
    %v6696 = vpop.xlane.xlu0 %6695
    %v6697 = vsel %vm401, %v6403, 0.0
    %6698 = vadd.xlane.f32.xlu0 %v6697
    %v6699 = vpop.xlane.xlu0 %6698
    %v6700 = vsel %vm401, %v6404, 0.0
    %6701 = vadd.xlane.f32.xlu0 %v6700
    %v6702 = vpop.xlane.xlu0 %6701
    %v6703 = vsel %vm401, %v6405, 0.0
    %6704 = vadd.xlane.f32.xlu0 %v6703
    %v6705 = vpop.xlane.xlu0 %6704
    %v6706 = vsel %vm401, %v6406, 0.0
    %6707 = vadd.xlane.f32.xlu0 %v6706
    %v6708 = vpop.xlane.xlu0 %6707
    %v6709 = vsel %vm401, %v6407, 0.0
    %6710 = vadd.xlane.f32.xlu0 %v6709
    %v6711 = vpop.xlane.xlu0 %6710
    %v6712 = vsel %vm401, %v6408, 0.0
    %6713 = vadd.xlane.f32.xlu0 %v6712
    %v6714 = vpop.xlane.xlu0 %6713
    %v6715 = vsel %vm401, %v6409, 0.0
    %6716 = vadd.xlane.f32.xlu0 %v6715
    %v6717 = vpop.xlane.xlu0 %6716
    %v6718 = vsel %vm401, %v6410, 0.0
    %6719 = vadd.xlane.f32.xlu0 %v6718
    %v6720 = vpop.xlane.xlu0 %6719
    %v6721 = vsel %vm401, %v6411, 0.0
    %6722 = vadd.xlane.f32.xlu0 %v6721
    %v6723 = vpop.xlane.xlu0 %6722
    %v6724 = vsel %vm401, %v6412, 0.0
    %6725 = vadd.xlane.f32.xlu0 %v6724
    %v6726 = vpop.xlane.xlu0 %6725
    %v6727 = vsel %vm401, %v6413, 0.0
    %6728 = vadd.xlane.f32.xlu0 %v6727
    %v6729 = vpop.xlane.xlu0 %6728
    %v6730 = vsel %vm401, %v6414, 0.0
    %6731 = vadd.xlane.f32.xlu0 %v6730
    %v6732 = vpop.xlane.xlu0 %6731
    %v6733 = vsel %vm401, %v6415, 0.0
    %6734 = vadd.xlane.f32.xlu0 %v6733
    %v6735 = vpop.xlane.xlu0 %6734
    %v6736 = vsel %vm401, %v6416, 0.0
    %6737 = vadd.xlane.f32.xlu0 %v6736
    %v6738 = vpop.xlane.xlu0 %6737
    %v6739 = vsel %vm401, %v6417, 0.0
    %6740 = vadd.xlane.f32.xlu0 %v6739
    %v6741 = vpop.xlane.xlu0 %6740
    %v6742 = vsel %vm401, %v6418, 0.0
    %6743 = vadd.xlane.f32.xlu0 %v6742
    %v6744 = vpop.xlane.xlu0 %6743
    %v6745 = vsel %vm401, %v6419, 0.0
    %6746 = vadd.xlane.f32.xlu0 %v6745
    %v6747 = vpop.xlane.xlu0 %6746
    %v6748 = vsel %vm401, %v6420, 0.0
    %6749 = vadd.xlane.f32.xlu0 %v6748
    %v6750 = vpop.xlane.xlu0 %6749
    %v6751 = vsel %vm401, %v6421, 0.0
    %6752 = vadd.xlane.f32.xlu0 %v6751
    %v6753 = vpop.xlane.xlu0 %6752
    %v6754 = vsel %vm401, %v6422, 0.0
    %6755 = vadd.xlane.f32.xlu0 %v6754
    %v6756 = vpop.xlane.xlu0 %6755
    %v6757 = vsel %vm401, %v6423, 0.0
    %6758 = vadd.xlane.f32.xlu0 %v6757
    %v6759 = vpop.xlane.xlu0 %6758
    %v6760 = vsel %vm401, %v6424, 0.0
    %6761 = vadd.xlane.f32.xlu0 %v6760
    %v6762 = vpop.xlane.xlu0 %6761
    %v6763 = vsel %vm401, %v6425, 0.0
    %6764 = vadd.xlane.f32.xlu0 %v6763
    %v6765 = vpop.xlane.xlu0 %6764
    %v6766 = vsel %vm401, %v6426, 0.0
    %6767 = vadd.xlane.f32.xlu0 %v6766
    %v6768 = vpop.xlane.xlu0 %6767
    %v6769 = vsel %vm401, %v6427, 0.0
    %6770 = vadd.xlane.f32.xlu0 %v6769
    %v6771 = vpop.xlane.xlu0 %6770
    %v6772 = vsel %vm401, %v6428, 0.0
    %6773 = vadd.xlane.f32.xlu0 %v6772
    %v6774 = vpop.xlane.xlu0 %6773
    %v6775 = vsel %vm401, %v6429, 0.0
    %6776 = vadd.xlane.f32.xlu0 %v6775
    %v6777 = vpop.xlane.xlu0 %6776
    %v6778 = vsel %vm401, %v6430, 0.0
    %6779 = vadd.xlane.f32.xlu0 %v6778
    %v6780 = vpop.xlane.xlu0 %6779
    %v6781 = vsel %vm401, %v6431, 0.0
    %6782 = vadd.xlane.f32.xlu0 %v6781
    %v6783 = vpop.xlane.xlu0 %6782
    %v6784 = vsel %vm401, %v6432, 0.0
    %6785 = vadd.xlane.f32.xlu0 %v6784
    %v6786 = vpop.xlane.xlu0 %6785
    %v6787 = vsel %vm401, %v6433, 0.0
    %6788 = vadd.xlane.f32.xlu0 %v6787
    %v6789 = vpop.xlane.xlu0 %6788
    %v6790 = vsel %vm401, %v6434, 0.0
    %6791 = vadd.xlane.f32.xlu0 %v6790
    %v6792 = vpop.xlane.xlu0 %6791
    %v6793 = vsel %vm401, %v6435, 0.0
    %6794 = vadd.xlane.f32.xlu0 %v6793
    %v6795 = vpop.xlane.xlu0 %6794
    %v6796 = vsel %vm401, %v6436, 0.0
    %6797 = vadd.xlane.f32.xlu0 %v6796
    %v6798 = vpop.xlane.xlu0 %6797
    %v6799 = vsel %vm401, %v6437, 0.0
    %6800 = vadd.xlane.f32.xlu0 %v6799
    %v6801 = vpop.xlane.xlu0 %6800
    %v6802 = vsel %vm401, %v6438, 0.0
    %6803 = vadd.xlane.f32.xlu0 %v6802
    %v6804 = vpop.xlane.xlu0 %6803
    %v6805 = vsel %vm401, %v6439, 0.0
    %6806 = vadd.xlane.f32.xlu0 %v6805
    %v6807 = vpop.xlane.xlu0 %6806
    %v6808 = vsel %vm401, %v6440, 0.0
    %6809 = vadd.xlane.f32.xlu0 %v6808
    %v6810 = vpop.xlane.xlu0 %6809
    %v6811 = vsel %vm401, %v6441, 0.0
    %6812 = vadd.xlane.f32.xlu0 %v6811
    %v6813 = vpop.xlane.xlu0 %6812
    %v6814 = vsel %vm401, %v6442, 0.0
    %6815 = vadd.xlane.f32.xlu0 %v6814
    %v6816 = vpop.xlane.xlu0 %6815
    %v6817 = vsel %vm401, %v6443, 0.0
    %6818 = vadd.xlane.f32.xlu0 %v6817
    %v6819 = vpop.xlane.xlu0 %6818
    %v6820 = vsel %vm401, %v6444, 0.0
    %6821 = vadd.xlane.f32.xlu0 %v6820
    %v6822 = vpop.xlane.xlu0 %6821
    %v6823 = vsel %vm401, %v6445, 0.0
    %6824 = vadd.xlane.f32.xlu0 %v6823
    %v6825 = vpop.xlane.xlu0 %6824
    %v6826 = vsel %vm401, %v6446, 0.0
    %6827 = vadd.xlane.f32.xlu0 %v6826
    %v6828 = vpop.xlane.xlu0 %6827
    %v6829 = vsel %vm401, %v6447, 0.0
    %6830 = vadd.xlane.f32.xlu0 %v6829
    %v6831 = vpop.xlane.xlu0 %6830
    %vm6832 = vcmp.lt.f32.partialorder %v6450, %v5931
    %vm6833 = vcmp.lt.f32.partialorder %v6453, %v5932
    %vm6834 = vcmp.lt.f32.partialorder %v6456, %v5933
    %vm6835 = vcmp.lt.f32.partialorder %v6459, %v5934
    %vm6836 = vcmp.lt.f32.partialorder %v6462, %v5935
    %vm6837 = vcmp.lt.f32.partialorder %v6465, %v5936
    %vm6838 = vcmp.lt.f32.partialorder %v6468, %v5937
    %vm6839 = vcmp.lt.f32.partialorder %v6471, %v5938
    %vm6840 = vcmp.lt.f32.partialorder %v6474, %v5939
    %vm6841 = vcmp.lt.f32.partialorder %v6477, %v5940
    %vm6842 = vcmp.lt.f32.partialorder %v6480, %v5941
    %vm6843 = vcmp.lt.f32.partialorder %v6483, %v5942
    %vm6844 = vcmp.lt.f32.partialorder %v6486, %v5943
    %vm6845 = vcmp.lt.f32.partialorder %v6489, %v5944
    %vm6846 = vcmp.lt.f32.partialorder %v6492, %v5945
    %vm6847 = vcmp.lt.f32.partialorder %v6495, %v5946
    %vm6848 = vcmp.lt.f32.partialorder %v6498, %v5947
    %vm6849 = vcmp.lt.f32.partialorder %v6501, %v5948
    %vm6850 = vcmp.lt.f32.partialorder %v6504, %v5949
    %vm6851 = vcmp.lt.f32.partialorder %v6507, %v5950
    %vm6852 = vcmp.lt.f32.partialorder %v6510, %v5951
    %vm6853 = vcmp.lt.f32.partialorder %v6513, %v5952
    %vm6854 = vcmp.lt.f32.partialorder %v6516, %v5953
    %vm6855 = vcmp.lt.f32.partialorder %v6519, %v5954
    %vm6856 = vcmp.lt.f32.partialorder %v6522, %v5955
    %vm6857 = vcmp.lt.f32.partialorder %v6525, %v5956
    %vm6858 = vcmp.lt.f32.partialorder %v6528, %v5957
    %vm6859 = vcmp.lt.f32.partialorder %v6531, %v5958
    %vm6860 = vcmp.lt.f32.partialorder %v6534, %v5959
    %vm6861 = vcmp.lt.f32.partialorder %v6537, %v5960
    %vm6862 = vcmp.lt.f32.partialorder %v6540, %v5961
    %vm6863 = vcmp.lt.f32.partialorder %v6543, %v5962
    %vm6864 = vcmp.lt.f32.partialorder %v6546, %v5963
    %vm6865 = vcmp.lt.f32.partialorder %v6549, %v5964
    %vm6866 = vcmp.lt.f32.partialorder %v6552, %v5965
    %vm6867 = vcmp.lt.f32.partialorder %v6555, %v5966
    %vm6868 = vcmp.lt.f32.partialorder %v6558, %v5967
    %vm6869 = vcmp.lt.f32.partialorder %v6561, %v5968
    %vm6870 = vcmp.lt.f32.partialorder %v6564, %v5969
    %vm6871 = vcmp.lt.f32.partialorder %v6567, %v5970
    %vm6872 = vcmp.lt.f32.partialorder %v6570, %v5971
    %vm6873 = vcmp.lt.f32.partialorder %v6573, %v5972
    %vm6874 = vcmp.lt.f32.partialorder %v6576, %v5973
    %vm6875 = vcmp.lt.f32.partialorder %v6579, %v5974
    %vm6876 = vcmp.lt.f32.partialorder %v6582, %v5975
    %vm6877 = vcmp.lt.f32.partialorder %v6585, %v5976
    %vm6878 = vcmp.lt.f32.partialorder %v6588, %v5977
    %vm6879 = vcmp.lt.f32.partialorder %v6591, %v5978
    %vm6880 = vcmp.lt.f32.partialorder %v6594, %v5979
    %vm6881 = vcmp.lt.f32.partialorder %v6597, %v5980
    %vm6882 = vcmp.lt.f32.partialorder %v6600, %v5981
    %vm6883 = vcmp.lt.f32.partialorder %v6603, %v5982
    %vm6884 = vcmp.lt.f32.partialorder %v6606, %v5983
    %vm6885 = vcmp.lt.f32.partialorder %v6609, %v5984
    %vm6886 = vcmp.lt.f32.partialorder %v6612, %v5985
    %vm6887 = vcmp.lt.f32.partialorder %v6615, %v5986
    %vm6888 = vcmp.lt.f32.partialorder %v6618, %v5987
    %vm6889 = vcmp.lt.f32.partialorder %v6621, %v5988
    %vm6890 = vcmp.lt.f32.partialorder %v6624, %v5989
    %vm6891 = vcmp.lt.f32.partialorder %v6627, %v5990
    %vm6892 = vcmp.lt.f32.partialorder %v6630, %v5991
    %vm6893 = vcmp.lt.f32.partialorder %v6633, %v5992
    %vm6894 = vcmp.lt.f32.partialorder %v6636, %v5993
    %vm6895 = vcmp.lt.f32.partialorder %v6639, %v5994
    %vm6896 = vcmp.lt.f32.partialorder %v6642, %v5995
    %vm6897 = vcmp.lt.f32.partialorder %v6645, %v5996
    %vm6898 = vcmp.lt.f32.partialorder %v6648, %v5997
    %vm6899 = vcmp.lt.f32.partialorder %v6651, %v5998
    %vm6900 = vcmp.lt.f32.partialorder %v6654, %v5999
    %vm6901 = vcmp.lt.f32.partialorder %v6657, %v6000
    %vm6902 = vcmp.lt.f32.partialorder %v6660, %v6001
    %vm6903 = vcmp.lt.f32.partialorder %v6663, %v6002
    %vm6904 = vcmp.lt.f32.partialorder %v6666, %v6003
    %vm6905 = vcmp.lt.f32.partialorder %v6669, %v6004
    %vm6906 = vcmp.lt.f32.partialorder %v6672, %v6005
    %vm6907 = vcmp.lt.f32.partialorder %v6675, %v6006
    %vm6908 = vcmp.lt.f32.partialorder %v6678, %v6007
    %vm6909 = vcmp.lt.f32.partialorder %v6681, %v6008
    %vm6910 = vcmp.lt.f32.partialorder %v6684, %v6009
    %vm6911 = vcmp.lt.f32.partialorder %v6687, %v6010
    %vm6912 = vcmp.lt.f32.partialorder %v6690, %v6011
    %vm6913 = vcmp.lt.f32.partialorder %v6693, %v6012
    %vm6914 = vcmp.lt.f32.partialorder %v6696, %v6013
    %vm6915 = vcmp.lt.f32.partialorder %v6699, %v6014
    %vm6916 = vcmp.lt.f32.partialorder %v6702, %v6015
    %vm6917 = vcmp.lt.f32.partialorder %v6705, %v6016
    %vm6918 = vcmp.lt.f32.partialorder %v6708, %v6017
    %vm6919 = vcmp.lt.f32.partialorder %v6711, %v6018
    %vm6920 = vcmp.lt.f32.partialorder %v6714, %v6019
    %vm6921 = vcmp.lt.f32.partialorder %v6717, %v6020
    %vm6922 = vcmp.lt.f32.partialorder %v6720, %v6021
    %vm6923 = vcmp.lt.f32.partialorder %v6723, %v6022
    %vm6924 = vcmp.lt.f32.partialorder %v6726, %v6023
    %vm6925 = vcmp.lt.f32.partialorder %v6729, %v6024
    %vm6926 = vcmp.lt.f32.partialorder %v6732, %v6025
    %vm6927 = vcmp.lt.f32.partialorder %v6735, %v6026
    %vm6928 = vcmp.lt.f32.partialorder %v6738, %v6027
    %vm6929 = vcmp.lt.f32.partialorder %v6741, %v6028
    %vm6930 = vcmp.lt.f32.partialorder %v6744, %v6029
    %vm6931 = vcmp.lt.f32.partialorder %v6747, %v6030
    %vm6932 = vcmp.lt.f32.partialorder %v6750, %v6031
    %vm6933 = vcmp.lt.f32.partialorder %v6753, %v6032
    %vm6934 = vcmp.lt.f32.partialorder %v6756, %v6033
    %vm6935 = vcmp.lt.f32.partialorder %v6759, %v6034
    %vm6936 = vcmp.lt.f32.partialorder %v6762, %v6035
    %vm6937 = vcmp.lt.f32.partialorder %v6765, %v6036
    %vm6938 = vcmp.lt.f32.partialorder %v6768, %v6037
    %vm6939 = vcmp.lt.f32.partialorder %v6771, %v6038
    %vm6940 = vcmp.lt.f32.partialorder %v6774, %v6039
    %vm6941 = vcmp.lt.f32.partialorder %v6777, %v6040
    %vm6942 = vcmp.lt.f32.partialorder %v6780, %v6041
    %vm6943 = vcmp.lt.f32.partialorder %v6783, %v6042
    %vm6944 = vcmp.lt.f32.partialorder %v6786, %v6043
    %vm6945 = vcmp.lt.f32.partialorder %v6789, %v6044
    %vm6946 = vcmp.lt.f32.partialorder %v6792, %v6045
    %vm6947 = vcmp.lt.f32.partialorder %v6795, %v6046
    %vm6948 = vcmp.lt.f32.partialorder %v6798, %v6047
    %vm6949 = vcmp.lt.f32.partialorder %v6801, %v6048
    %vm6950 = vcmp.lt.f32.partialorder %v6804, %v6049
    %vm6951 = vcmp.lt.f32.partialorder %v6807, %v6050
    %vm6952 = vcmp.lt.f32.partialorder %v6810, %v6051
    %vm6953 = vcmp.lt.f32.partialorder %v6813, %v6052
    %vm6954 = vcmp.lt.f32.partialorder %v6816, %v6053
    %vm6955 = vcmp.lt.f32.partialorder %v6819, %v6054
    %vm6956 = vcmp.lt.f32.partialorder %v6822, %v6055
    %vm6957 = vcmp.lt.f32.partialorder %v6825, %v6056
    %vm6958 = vcmp.lt.f32.partialorder %v6828, %v6057
    %vm6959 = vcmp.lt.f32.partialorder %v6831, %v6058
    %v6960 = vsel %vm6832, %v6450, %v5931
    %v6961 = vsel %vm6833, %v6453, %v5932
    %v6962 = vsel %vm6834, %v6456, %v5933
    %v6963 = vsel %vm6835, %v6459, %v5934
    %v6964 = vsel %vm6836, %v6462, %v5935
    %v6965 = vsel %vm6837, %v6465, %v5936
    %v6966 = vsel %vm6838, %v6468, %v5937
    %v6967 = vsel %vm6839, %v6471, %v5938
    %v6968 = vsel %vm6840, %v6474, %v5939
    %v6969 = vsel %vm6841, %v6477, %v5940
    %v6970 = vsel %vm6842, %v6480, %v5941
    %v6971 = vsel %vm6843, %v6483, %v5942
    %v6972 = vsel %vm6844, %v6486, %v5943
    %v6973 = vsel %vm6845, %v6489, %v5944
    %v6974 = vsel %vm6846, %v6492, %v5945
    %v6975 = vsel %vm6847, %v6495, %v5946
    %v6976 = vsel %vm6848, %v6498, %v5947
    %v6977 = vsel %vm6849, %v6501, %v5948
    %v6978 = vsel %vm6850, %v6504, %v5949
    %v6979 = vsel %vm6851, %v6507, %v5950
    %v6980 = vsel %vm6852, %v6510, %v5951
    %v6981 = vsel %vm6853, %v6513, %v5952
    %v6982 = vsel %vm6854, %v6516, %v5953
    %v6983 = vsel %vm6855, %v6519, %v5954
    %v6984 = vsel %vm6856, %v6522, %v5955
    %v6985 = vsel %vm6857, %v6525, %v5956
    %v6986 = vsel %vm6858, %v6528, %v5957
    %v6987 = vsel %vm6859, %v6531, %v5958
    %v6988 = vsel %vm6860, %v6534, %v5959
    %v6989 = vsel %vm6861, %v6537, %v5960
    %v6990 = vsel %vm6862, %v6540, %v5961
    %v6991 = vsel %vm6863, %v6543, %v5962
    %v6992 = vsel %vm6864, %v6546, %v5963
    %v6993 = vsel %vm6865, %v6549, %v5964
    %v6994 = vsel %vm6866, %v6552, %v5965
    %v6995 = vsel %vm6867, %v6555, %v5966
    %v6996 = vsel %vm6868, %v6558, %v5967
    %v6997 = vsel %vm6869, %v6561, %v5968
    %v6998 = vsel %vm6870, %v6564, %v5969
    %v6999 = vsel %vm6871, %v6567, %v5970
    %v7000 = vsel %vm6872, %v6570, %v5971
    %v7001 = vsel %vm6873, %v6573, %v5972
    %v7002 = vsel %vm6874, %v6576, %v5973
    %v7003 = vsel %vm6875, %v6579, %v5974
    %v7004 = vsel %vm6876, %v6582, %v5975
    %v7005 = vsel %vm6877, %v6585, %v5976
    %v7006 = vsel %vm6878, %v6588, %v5977
    %v7007 = vsel %vm6879, %v6591, %v5978
    %v7008 = vsel %vm6880, %v6594, %v5979
    %v7009 = vsel %vm6881, %v6597, %v5980
    %v7010 = vsel %vm6882, %v6600, %v5981
    %v7011 = vsel %vm6883, %v6603, %v5982
    %v7012 = vsel %vm6884, %v6606, %v5983
    %v7013 = vsel %vm6885, %v6609, %v5984
    %v7014 = vsel %vm6886, %v6612, %v5985
    %v7015 = vsel %vm6887, %v6615, %v5986
    %v7016 = vsel %vm6888, %v6618, %v5987
    %v7017 = vsel %vm6889, %v6621, %v5988
    %v7018 = vsel %vm6890, %v6624, %v5989
    %v7019 = vsel %vm6891, %v6627, %v5990
    %v7020 = vsel %vm6892, %v6630, %v5991
    %v7021 = vsel %vm6893, %v6633, %v5992
    %v7022 = vsel %vm6894, %v6636, %v5993
    %v7023 = vsel %vm6895, %v6639, %v5994
    %v7024 = vsel %vm6896, %v6642, %v5995
    %v7025 = vsel %vm6897, %v6645, %v5996
    %v7026 = vsel %vm6898, %v6648, %v5997
    %v7027 = vsel %vm6899, %v6651, %v5998
    %v7028 = vsel %vm6900, %v6654, %v5999
    %v7029 = vsel %vm6901, %v6657, %v6000
    %v7030 = vsel %vm6902, %v6660, %v6001
    %v7031 = vsel %vm6903, %v6663, %v6002
    %v7032 = vsel %vm6904, %v6666, %v6003
    %v7033 = vsel %vm6905, %v6669, %v6004
    %v7034 = vsel %vm6906, %v6672, %v6005
    %v7035 = vsel %vm6907, %v6675, %v6006
    %v7036 = vsel %vm6908, %v6678, %v6007
    %v7037 = vsel %vm6909, %v6681, %v6008
    %v7038 = vsel %vm6910, %v6684, %v6009
    %v7039 = vsel %vm6911, %v6687, %v6010
    %v7040 = vsel %vm6912, %v6690, %v6011
    %v7041 = vsel %vm6913, %v6693, %v6012
    %v7042 = vsel %vm6914, %v6696, %v6013
    %v7043 = vsel %vm6915, %v6699, %v6014
    %v7044 = vsel %vm6916, %v6702, %v6015
    %v7045 = vsel %vm6917, %v6705, %v6016
    %v7046 = vsel %vm6918, %v6708, %v6017
    %v7047 = vsel %vm6919, %v6711, %v6018
    %v7048 = vsel %vm6920, %v6714, %v6019
    %v7049 = vsel %vm6921, %v6717, %v6020
    %v7050 = vsel %vm6922, %v6720, %v6021
    %v7051 = vsel %vm6923, %v6723, %v6022
    %v7052 = vsel %vm6924, %v6726, %v6023
    %v7053 = vsel %vm6925, %v6729, %v6024
    %v7054 = vsel %vm6926, %v6732, %v6025
    %v7055 = vsel %vm6927, %v6735, %v6026
    %v7056 = vsel %vm6928, %v6738, %v6027
    %v7057 = vsel %vm6929, %v6741, %v6028
    %v7058 = vsel %vm6930, %v6744, %v6029
    %v7059 = vsel %vm6931, %v6747, %v6030
    %v7060 = vsel %vm6932, %v6750, %v6031
    %v7061 = vsel %vm6933, %v6753, %v6032
    %v7062 = vsel %vm6934, %v6756, %v6033
    %v7063 = vsel %vm6935, %v6759, %v6034
    %v7064 = vsel %vm6936, %v6762, %v6035
    %v7065 = vsel %vm6937, %v6765, %v6036
    %v7066 = vsel %vm6938, %v6768, %v6037
    %v7067 = vsel %vm6939, %v6771, %v6038
    %v7068 = vsel %vm6940, %v6774, %v6039
    %v7069 = vsel %vm6941, %v6777, %v6040
    %v7070 = vsel %vm6942, %v6780, %v6041
    %v7071 = vsel %vm6943, %v6783, %v6042
    %v7072 = vsel %vm6944, %v6786, %v6043
    %v7073 = vsel %vm6945, %v6789, %v6044
    %v7074 = vsel %vm6946, %v6792, %v6045
    %v7075 = vsel %vm6947, %v6795, %v6046
    %v7076 = vsel %vm6948, %v6798, %v6047
    %v7077 = vsel %vm6949, %v6801, %v6048
    %v7078 = vsel %vm6950, %v6804, %v6049
    %v7079 = vsel %vm6951, %v6807, %v6050
    %v7080 = vsel %vm6952, %v6810, %v6051
    %v7081 = vsel %vm6953, %v6813, %v6052
    %v7082 = vsel %vm6954, %v6816, %v6053
    %v7083 = vsel %vm6955, %v6819, %v6054
    %v7084 = vsel %vm6956, %v6822, %v6055
    %v7085 = vsel %vm6957, %v6825, %v6056
    %v7086 = vsel %vm6958, %v6828, %v6057
    %v7087 = vsel %vm6959, %v6831, %v6058
    %v7088 = vsel %vm6832, 6, %v6059
    %v7089 = vsel %vm6833, 6, %v6060
    %v7090 = vsel %vm6834, 6, %v6061
    %v7091 = vsel %vm6835, 6, %v6062
    %v7092 = vsel %vm6836, 6, %v6063
    %v7093 = vsel %vm6837, 6, %v6064
    %v7094 = vsel %vm6838, 6, %v6065
    %v7095 = vsel %vm6839, 6, %v6066
    %v7096 = vsel %vm6840, 6, %v6067
    %v7097 = vsel %vm6841, 6, %v6068
    %v7098 = vsel %vm6842, 6, %v6069
    %v7099 = vsel %vm6843, 6, %v6070
    %v7100 = vsel %vm6844, 6, %v6071
    %v7101 = vsel %vm6845, 6, %v6072
    %v7102 = vsel %vm6846, 6, %v6073
    %v7103 = vsel %vm6847, 6, %v6074
    %v7104 = vsel %vm6848, 6, %v6075
    %v7105 = vsel %vm6849, 6, %v6076
    %v7106 = vsel %vm6850, 6, %v6077
    %v7107 = vsel %vm6851, 6, %v6078
    %v7108 = vsel %vm6852, 6, %v6079
    %v7109 = vsel %vm6853, 6, %v6080
    %v7110 = vsel %vm6854, 6, %v6081
    %v7111 = vsel %vm6855, 6, %v6082
    %v7112 = vsel %vm6856, 6, %v6083
    %v7113 = vsel %vm6857, 6, %v6084
    %v7114 = vsel %vm6858, 6, %v6085
    %v7115 = vsel %vm6859, 6, %v6086
    %v7116 = vsel %vm6860, 6, %v6087
    %v7117 = vsel %vm6861, 6, %v6088
    %v7118 = vsel %vm6862, 6, %v6089
    %v7119 = vsel %vm6863, 6, %v6090
    %v7120 = vsel %vm6864, 6, %v6091
    %v7121 = vsel %vm6865, 6, %v6092
    %v7122 = vsel %vm6866, 6, %v6093
    %v7123 = vsel %vm6867, 6, %v6094
    %v7124 = vsel %vm6868, 6, %v6095
    %v7125 = vsel %vm6869, 6, %v6096
    %v7126 = vsel %vm6870, 6, %v6097
    %v7127 = vsel %vm6871, 6, %v6098
    %v7128 = vsel %vm6872, 6, %v6099
    %v7129 = vsel %vm6873, 6, %v6100
    %v7130 = vsel %vm6874, 6, %v6101
    %v7131 = vsel %vm6875, 6, %v6102
    %v7132 = vsel %vm6876, 6, %v6103
    %v7133 = vsel %vm6877, 6, %v6104
    %v7134 = vsel %vm6878, 6, %v6105
    %v7135 = vsel %vm6879, 6, %v6106
    %v7136 = vsel %vm6880, 6, %v6107
    %v7137 = vsel %vm6881, 6, %v6108
    %v7138 = vsel %vm6882, 6, %v6109
    %v7139 = vsel %vm6883, 6, %v6110
    %v7140 = vsel %vm6884, 6, %v6111
    %v7141 = vsel %vm6885, 6, %v6112
    %v7142 = vsel %vm6886, 6, %v6113
    %v7143 = vsel %vm6887, 6, %v6114
    %v7144 = vsel %vm6888, 6, %v6115
    %v7145 = vsel %vm6889, 6, %v6116
    %v7146 = vsel %vm6890, 6, %v6117
    %v7147 = vsel %vm6891, 6, %v6118
    %v7148 = vsel %vm6892, 6, %v6119
    %v7149 = vsel %vm6893, 6, %v6120
    %v7150 = vsel %vm6894, 6, %v6121
    %v7151 = vsel %vm6895, 6, %v6122
    %v7152 = vsel %vm6896, 6, %v6123
    %v7153 = vsel %vm6897, 6, %v6124
    %v7154 = vsel %vm6898, 6, %v6125
    %v7155 = vsel %vm6899, 6, %v6126
    %v7156 = vsel %vm6900, 6, %v6127
    %v7157 = vsel %vm6901, 6, %v6128
    %v7158 = vsel %vm6902, 6, %v6129
    %v7159 = vsel %vm6903, 6, %v6130
    %v7160 = vsel %vm6904, 6, %v6131
    %v7161 = vsel %vm6905, 6, %v6132
    %v7162 = vsel %vm6906, 6, %v6133
    %v7163 = vsel %vm6907, 6, %v6134
    %v7164 = vsel %vm6908, 6, %v6135
    %v7165 = vsel %vm6909, 6, %v6136
    %v7166 = vsel %vm6910, 6, %v6137
    %v7167 = vsel %vm6911, 6, %v6138
    %v7168 = vsel %vm6912, 6, %v6139
    %v7169 = vsel %vm6913, 6, %v6140
    %v7170 = vsel %vm6914, 6, %v6141
    %v7171 = vsel %vm6915, 6, %v6142
    %v7172 = vsel %vm6916, 6, %v6143
    %v7173 = vsel %vm6917, 6, %v6144
    %v7174 = vsel %vm6918, 6, %v6145
    %v7175 = vsel %vm6919, 6, %v6146
    %v7176 = vsel %vm6920, 6, %v6147
    %v7177 = vsel %vm6921, 6, %v6148
    %v7178 = vsel %vm6922, 6, %v6149
    %v7179 = vsel %vm6923, 6, %v6150
    %v7180 = vsel %vm6924, 6, %v6151
    %v7181 = vsel %vm6925, 6, %v6152
    %v7182 = vsel %vm6926, 6, %v6153
    %v7183 = vsel %vm6927, 6, %v6154
    %v7184 = vsel %vm6928, 6, %v6155
    %v7185 = vsel %vm6929, 6, %v6156
    %v7186 = vsel %vm6930, 6, %v6157
    %v7187 = vsel %vm6931, 6, %v6158
    %v7188 = vsel %vm6932, 6, %v6159
    %v7189 = vsel %vm6933, 6, %v6160
    %v7190 = vsel %vm6934, 6, %v6161
    %v7191 = vsel %vm6935, 6, %v6162
    %v7192 = vsel %vm6936, 6, %v6163
    %v7193 = vsel %vm6937, 6, %v6164
    %v7194 = vsel %vm6938, 6, %v6165
    %v7195 = vsel %vm6939, 6, %v6166
    %v7196 = vsel %vm6940, 6, %v6167
    %v7197 = vsel %vm6941, 6, %v6168
    %v7198 = vsel %vm6942, 6, %v6169
    %v7199 = vsel %vm6943, 6, %v6170
    %v7200 = vsel %vm6944, 6, %v6171
    %v7201 = vsel %vm6945, 6, %v6172
    %v7202 = vsel %vm6946, 6, %v6173
    %v7203 = vsel %vm6947, 6, %v6174
    %v7204 = vsel %vm6948, 6, %v6175
    %v7205 = vsel %vm6949, 6, %v6176
    %v7206 = vsel %vm6950, 6, %v6177
    %v7207 = vsel %vm6951, 6, %v6178
    %v7208 = vsel %vm6952, 6, %v6179
    %v7209 = vsel %vm6953, 6, %v6180
    %v7210 = vsel %vm6954, 6, %v6181
    %v7211 = vsel %vm6955, 6, %v6182
    %v7212 = vsel %vm6956, 6, %v6183
    %v7213 = vsel %vm6957, 6, %v6184
    %v7214 = vsel %vm6958, 6, %v6185
    %v7215 = vsel %vm6959, 6, %v6186
    %v7216 = vld [vmem:[%s1 + $0x7] sm:$0x1]
    %v7217 = vlaneseq
    %v7218 = vshrl.u32 %v7217, 7
    %v7219 = vsub.s32 0, %v7218
    %v7220 = vrot.slane %v7216, %v7219
    %v7221 = vsub.f32 %v12, %v7220
    %v7222 = vsub.f32 %v13, %v7220
    %v7223 = vsub.f32 %v14, %v7220
    %v7224 = vsub.f32 %v15, %v7220
    %v7225 = vsub.f32 %v16, %v7220
    %v7226 = vsub.f32 %v17, %v7220
    %v7227 = vsub.f32 %v18, %v7220
    %v7228 = vsub.f32 %v19, %v7220
    %v7229 = vsub.f32 %v20, %v7220
    %v7230 = vsub.f32 %v21, %v7220
    %v7231 = vsub.f32 %v22, %v7220
    %v7232 = vsub.f32 %v23, %v7220
    %v7233 = vsub.f32 %v24, %v7220
    %v7234 = vsub.f32 %v25, %v7220
    %v7235 = vsub.f32 %v26, %v7220
    %v7236 = vsub.f32 %v27, %v7220
    %v7237 = vsub.f32 %v28, %v7220
    %v7238 = vsub.f32 %v29, %v7220
    %v7239 = vsub.f32 %v30, %v7220
    %v7240 = vsub.f32 %v31, %v7220
    %v7241 = vsub.f32 %v32, %v7220
    %v7242 = vsub.f32 %v33, %v7220
    %v7243 = vsub.f32 %v34, %v7220
    %v7244 = vsub.f32 %v35, %v7220
    %v7245 = vsub.f32 %v36, %v7220
    %v7246 = vsub.f32 %v37, %v7220
    %v7247 = vsub.f32 %v38, %v7220
    %v7248 = vsub.f32 %v39, %v7220
    %v7249 = vsub.f32 %v40, %v7220
    %v7250 = vsub.f32 %v41, %v7220
    %v7251 = vsub.f32 %v42, %v7220
    %v7252 = vsub.f32 %v43, %v7220
    %v7253 = vsub.f32 %v44, %v7220
    %v7254 = vsub.f32 %v45, %v7220
    %v7255 = vsub.f32 %v46, %v7220
    %v7256 = vsub.f32 %v47, %v7220
    %v7257 = vsub.f32 %v48, %v7220
    %v7258 = vsub.f32 %v49, %v7220
    %v7259 = vsub.f32 %v50, %v7220
    %v7260 = vsub.f32 %v51, %v7220
    %v7261 = vsub.f32 %v52, %v7220
    %v7262 = vsub.f32 %v53, %v7220
    %v7263 = vsub.f32 %v54, %v7220
    %v7264 = vsub.f32 %v55, %v7220
    %v7265 = vsub.f32 %v56, %v7220
    %v7266 = vsub.f32 %v57, %v7220
    %v7267 = vsub.f32 %v58, %v7220
    %v7268 = vsub.f32 %v59, %v7220
    %v7269 = vsub.f32 %v60, %v7220
    %v7270 = vsub.f32 %v61, %v7220
    %v7271 = vsub.f32 %v62, %v7220
    %v7272 = vsub.f32 %v63, %v7220
    %v7273 = vsub.f32 %v64, %v7220
    %v7274 = vsub.f32 %v65, %v7220
    %v7275 = vsub.f32 %v66, %v7220
    %v7276 = vsub.f32 %v67, %v7220
    %v7277 = vsub.f32 %v68, %v7220
    %v7278 = vsub.f32 %v69, %v7220
    %v7279 = vsub.f32 %v70, %v7220
    %v7280 = vsub.f32 %v71, %v7220
    %v7281 = vsub.f32 %v72, %v7220
    %v7282 = vsub.f32 %v73, %v7220
    %v7283 = vsub.f32 %v74, %v7220
    %v7284 = vsub.f32 %v75, %v7220
    %v7285 = vsub.f32 %v76, %v7220
    %v7286 = vsub.f32 %v77, %v7220
    %v7287 = vsub.f32 %v78, %v7220
    %v7288 = vsub.f32 %v79, %v7220
    %v7289 = vsub.f32 %v80, %v7220
    %v7290 = vsub.f32 %v81, %v7220
    %v7291 = vsub.f32 %v82, %v7220
    %v7292 = vsub.f32 %v83, %v7220
    %v7293 = vsub.f32 %v84, %v7220
    %v7294 = vsub.f32 %v85, %v7220
    %v7295 = vsub.f32 %v86, %v7220
    %v7296 = vsub.f32 %v87, %v7220
    %v7297 = vsub.f32 %v88, %v7220
    %v7298 = vsub.f32 %v89, %v7220
    %v7299 = vsub.f32 %v90, %v7220
    %v7300 = vsub.f32 %v91, %v7220
    %v7301 = vsub.f32 %v92, %v7220
    %v7302 = vsub.f32 %v93, %v7220
    %v7303 = vsub.f32 %v94, %v7220
    %v7304 = vsub.f32 %v95, %v7220
    %v7305 = vsub.f32 %v96, %v7220
    %v7306 = vsub.f32 %v97, %v7220
    %v7307 = vsub.f32 %v98, %v7220
    %v7308 = vsub.f32 %v99, %v7220
    %v7309 = vsub.f32 %v100, %v7220
    %v7310 = vsub.f32 %v101, %v7220
    %v7311 = vsub.f32 %v102, %v7220
    %v7312 = vsub.f32 %v103, %v7220
    %v7313 = vsub.f32 %v104, %v7220
    %v7314 = vsub.f32 %v105, %v7220
    %v7315 = vsub.f32 %v106, %v7220
    %v7316 = vsub.f32 %v107, %v7220
    %v7317 = vsub.f32 %v108, %v7220
    %v7318 = vsub.f32 %v109, %v7220
    %v7319 = vsub.f32 %v110, %v7220
    %v7320 = vsub.f32 %v111, %v7220
    %v7321 = vsub.f32 %v112, %v7220
    %v7322 = vsub.f32 %v113, %v7220
    %v7323 = vsub.f32 %v114, %v7220
    %v7324 = vsub.f32 %v115, %v7220
    %v7325 = vsub.f32 %v116, %v7220
    %v7326 = vsub.f32 %v117, %v7220
    %v7327 = vsub.f32 %v118, %v7220
    %v7328 = vsub.f32 %v119, %v7220
    %v7329 = vsub.f32 %v120, %v7220
    %v7330 = vsub.f32 %v121, %v7220
    %v7331 = vsub.f32 %v122, %v7220
    %v7332 = vsub.f32 %v123, %v7220
    %v7333 = vsub.f32 %v124, %v7220
    %v7334 = vsub.f32 %v125, %v7220
    %v7335 = vsub.f32 %v126, %v7220
    %v7336 = vsub.f32 %v127, %v7220
    %v7337 = vsub.f32 %v128, %v7220
    %v7338 = vsub.f32 %v129, %v7220
    %v7339 = vsub.f32 %v130, %v7220
    %v7340 = vsub.f32 %v131, %v7220
    %v7341 = vsub.f32 %v132, %v7220
    %v7342 = vsub.f32 %v133, %v7220
    %v7343 = vsub.f32 %v134, %v7220
    %v7344 = vsub.f32 %v135, %v7220
    %v7345 = vsub.f32 %v136, %v7220
    %v7346 = vsub.f32 %v137, %v7220
    %v7347 = vsub.f32 %v138, %v7220
    %v7348 = vsub.f32 %v139, %v7220
    %v7349 = vmul.f32 %v7221, %v7221
    %v7350 = vmul.f32 %v7222, %v7222
    %v7351 = vmul.f32 %v7223, %v7223
    %v7352 = vmul.f32 %v7224, %v7224
    %v7353 = vmul.f32 %v7225, %v7225
    %v7354 = vmul.f32 %v7226, %v7226
    %v7355 = vmul.f32 %v7227, %v7227
    %v7356 = vmul.f32 %v7228, %v7228
    %v7357 = vmul.f32 %v7229, %v7229
    %v7358 = vmul.f32 %v7230, %v7230
    %v7359 = vmul.f32 %v7231, %v7231
    %v7360 = vmul.f32 %v7232, %v7232
    %v7361 = vmul.f32 %v7233, %v7233
    %v7362 = vmul.f32 %v7234, %v7234
    %v7363 = vmul.f32 %v7235, %v7235
    %v7364 = vmul.f32 %v7236, %v7236
    %v7365 = vmul.f32 %v7237, %v7237
    %v7366 = vmul.f32 %v7238, %v7238
    %v7367 = vmul.f32 %v7239, %v7239
    %v7368 = vmul.f32 %v7240, %v7240
    %v7369 = vmul.f32 %v7241, %v7241
    %v7370 = vmul.f32 %v7242, %v7242
    %v7371 = vmul.f32 %v7243, %v7243
    %v7372 = vmul.f32 %v7244, %v7244
    %v7373 = vmul.f32 %v7245, %v7245
    %v7374 = vmul.f32 %v7246, %v7246
    %v7375 = vmul.f32 %v7247, %v7247
    %v7376 = vmul.f32 %v7248, %v7248
    %v7377 = vmul.f32 %v7249, %v7249
    %v7378 = vmul.f32 %v7250, %v7250
    %v7379 = vmul.f32 %v7251, %v7251
    %v7380 = vmul.f32 %v7252, %v7252
    %v7381 = vmul.f32 %v7253, %v7253
    %v7382 = vmul.f32 %v7254, %v7254
    %v7383 = vmul.f32 %v7255, %v7255
    %v7384 = vmul.f32 %v7256, %v7256
    %v7385 = vmul.f32 %v7257, %v7257
    %v7386 = vmul.f32 %v7258, %v7258
    %v7387 = vmul.f32 %v7259, %v7259
    %v7388 = vmul.f32 %v7260, %v7260
    %v7389 = vmul.f32 %v7261, %v7261
    %v7390 = vmul.f32 %v7262, %v7262
    %v7391 = vmul.f32 %v7263, %v7263
    %v7392 = vmul.f32 %v7264, %v7264
    %v7393 = vmul.f32 %v7265, %v7265
    %v7394 = vmul.f32 %v7266, %v7266
    %v7395 = vmul.f32 %v7267, %v7267
    %v7396 = vmul.f32 %v7268, %v7268
    %v7397 = vmul.f32 %v7269, %v7269
    %v7398 = vmul.f32 %v7270, %v7270
    %v7399 = vmul.f32 %v7271, %v7271
    %v7400 = vmul.f32 %v7272, %v7272
    %v7401 = vmul.f32 %v7273, %v7273
    %v7402 = vmul.f32 %v7274, %v7274
    %v7403 = vmul.f32 %v7275, %v7275
    %v7404 = vmul.f32 %v7276, %v7276
    %v7405 = vmul.f32 %v7277, %v7277
    %v7406 = vmul.f32 %v7278, %v7278
    %v7407 = vmul.f32 %v7279, %v7279
    %v7408 = vmul.f32 %v7280, %v7280
    %v7409 = vmul.f32 %v7281, %v7281
    %v7410 = vmul.f32 %v7282, %v7282
    %v7411 = vmul.f32 %v7283, %v7283
    %v7412 = vmul.f32 %v7284, %v7284
    %v7413 = vmul.f32 %v7285, %v7285
    %v7414 = vmul.f32 %v7286, %v7286
    %v7415 = vmul.f32 %v7287, %v7287
    %v7416 = vmul.f32 %v7288, %v7288
    %v7417 = vmul.f32 %v7289, %v7289
    %v7418 = vmul.f32 %v7290, %v7290
    %v7419 = vmul.f32 %v7291, %v7291
    %v7420 = vmul.f32 %v7292, %v7292
    %v7421 = vmul.f32 %v7293, %v7293
    %v7422 = vmul.f32 %v7294, %v7294
    %v7423 = vmul.f32 %v7295, %v7295
    %v7424 = vmul.f32 %v7296, %v7296
    %v7425 = vmul.f32 %v7297, %v7297
    %v7426 = vmul.f32 %v7298, %v7298
    %v7427 = vmul.f32 %v7299, %v7299
    %v7428 = vmul.f32 %v7300, %v7300
    %v7429 = vmul.f32 %v7301, %v7301
    %v7430 = vmul.f32 %v7302, %v7302
    %v7431 = vmul.f32 %v7303, %v7303
    %v7432 = vmul.f32 %v7304, %v7304
    %v7433 = vmul.f32 %v7305, %v7305
    %v7434 = vmul.f32 %v7306, %v7306
    %v7435 = vmul.f32 %v7307, %v7307
    %v7436 = vmul.f32 %v7308, %v7308
    %v7437 = vmul.f32 %v7309, %v7309
    %v7438 = vmul.f32 %v7310, %v7310
    %v7439 = vmul.f32 %v7311, %v7311
    %v7440 = vmul.f32 %v7312, %v7312
    %v7441 = vmul.f32 %v7313, %v7313
    %v7442 = vmul.f32 %v7314, %v7314
    %v7443 = vmul.f32 %v7315, %v7315
    %v7444 = vmul.f32 %v7316, %v7316
    %v7445 = vmul.f32 %v7317, %v7317
    %v7446 = vmul.f32 %v7318, %v7318
    %v7447 = vmul.f32 %v7319, %v7319
    %v7448 = vmul.f32 %v7320, %v7320
    %v7449 = vmul.f32 %v7321, %v7321
    %v7450 = vmul.f32 %v7322, %v7322
    %v7451 = vmul.f32 %v7323, %v7323
    %v7452 = vmul.f32 %v7324, %v7324
    %v7453 = vmul.f32 %v7325, %v7325
    %v7454 = vmul.f32 %v7326, %v7326
    %v7455 = vmul.f32 %v7327, %v7327
    %v7456 = vmul.f32 %v7328, %v7328
    %v7457 = vmul.f32 %v7329, %v7329
    %v7458 = vmul.f32 %v7330, %v7330
    %v7459 = vmul.f32 %v7331, %v7331
    %v7460 = vmul.f32 %v7332, %v7332
    %v7461 = vmul.f32 %v7333, %v7333
    %v7462 = vmul.f32 %v7334, %v7334
    %v7463 = vmul.f32 %v7335, %v7335
    %v7464 = vmul.f32 %v7336, %v7336
    %v7465 = vmul.f32 %v7337, %v7337
    %v7466 = vmul.f32 %v7338, %v7338
    %v7467 = vmul.f32 %v7339, %v7339
    %v7468 = vmul.f32 %v7340, %v7340
    %v7469 = vmul.f32 %v7341, %v7341
    %v7470 = vmul.f32 %v7342, %v7342
    %v7471 = vmul.f32 %v7343, %v7343
    %v7472 = vmul.f32 %v7344, %v7344
    %v7473 = vmul.f32 %v7345, %v7345
    %v7474 = vmul.f32 %v7346, %v7346
    %v7475 = vmul.f32 %v7347, %v7347
    %v7476 = vmul.f32 %v7348, %v7348
    %v7477 = vsel %vm401, %v7349, 0.0
    %7478 = vadd.xlane.f32.xlu0 %v7477
    %v7479 = vpop.xlane.xlu0 %7478
    %v7480 = vsel %vm401, %v7350, 0.0
    %7481 = vadd.xlane.f32.xlu0 %v7480
    %v7482 = vpop.xlane.xlu0 %7481
    %v7483 = vsel %vm401, %v7351, 0.0
    %7484 = vadd.xlane.f32.xlu0 %v7483
    %v7485 = vpop.xlane.xlu0 %7484
    %v7486 = vsel %vm401, %v7352, 0.0
    %7487 = vadd.xlane.f32.xlu0 %v7486
    %v7488 = vpop.xlane.xlu0 %7487
    %v7489 = vsel %vm401, %v7353, 0.0
    %7490 = vadd.xlane.f32.xlu0 %v7489
    %v7491 = vpop.xlane.xlu0 %7490
    %v7492 = vsel %vm401, %v7354, 0.0
    %7493 = vadd.xlane.f32.xlu0 %v7492
    %v7494 = vpop.xlane.xlu0 %7493
    %v7495 = vsel %vm401, %v7355, 0.0
    %7496 = vadd.xlane.f32.xlu0 %v7495
    %v7497 = vpop.xlane.xlu0 %7496
    %v7498 = vsel %vm401, %v7356, 0.0
    %7499 = vadd.xlane.f32.xlu0 %v7498
    %v7500 = vpop.xlane.xlu0 %7499
    %v7501 = vsel %vm401, %v7357, 0.0
    %7502 = vadd.xlane.f32.xlu0 %v7501
    %v7503 = vpop.xlane.xlu0 %7502
    %v7504 = vsel %vm401, %v7358, 0.0
    %7505 = vadd.xlane.f32.xlu0 %v7504
    %v7506 = vpop.xlane.xlu0 %7505
    %v7507 = vsel %vm401, %v7359, 0.0
    %7508 = vadd.xlane.f32.xlu0 %v7507
    %v7509 = vpop.xlane.xlu0 %7508
    %v7510 = vsel %vm401, %v7360, 0.0
    %7511 = vadd.xlane.f32.xlu0 %v7510
    %v7512 = vpop.xlane.xlu0 %7511
    %v7513 = vsel %vm401, %v7361, 0.0
    %7514 = vadd.xlane.f32.xlu0 %v7513
    %v7515 = vpop.xlane.xlu0 %7514
    %v7516 = vsel %vm401, %v7362, 0.0
    %7517 = vadd.xlane.f32.xlu0 %v7516
    %v7518 = vpop.xlane.xlu0 %7517
    %v7519 = vsel %vm401, %v7363, 0.0
    %7520 = vadd.xlane.f32.xlu0 %v7519
    %v7521 = vpop.xlane.xlu0 %7520
    %v7522 = vsel %vm401, %v7364, 0.0
    %7523 = vadd.xlane.f32.xlu0 %v7522
    %v7524 = vpop.xlane.xlu0 %7523
    %v7525 = vsel %vm401, %v7365, 0.0
    %7526 = vadd.xlane.f32.xlu0 %v7525
    %v7527 = vpop.xlane.xlu0 %7526
    %v7528 = vsel %vm401, %v7366, 0.0
    %7529 = vadd.xlane.f32.xlu0 %v7528
    %v7530 = vpop.xlane.xlu0 %7529
    %v7531 = vsel %vm401, %v7367, 0.0
    %7532 = vadd.xlane.f32.xlu0 %v7531
    %v7533 = vpop.xlane.xlu0 %7532
    %v7534 = vsel %vm401, %v7368, 0.0
    %7535 = vadd.xlane.f32.xlu0 %v7534
    %v7536 = vpop.xlane.xlu0 %7535
    %v7537 = vsel %vm401, %v7369, 0.0
    %7538 = vadd.xlane.f32.xlu0 %v7537
    %v7539 = vpop.xlane.xlu0 %7538
    %v7540 = vsel %vm401, %v7370, 0.0
    %7541 = vadd.xlane.f32.xlu0 %v7540
    %v7542 = vpop.xlane.xlu0 %7541
    %v7543 = vsel %vm401, %v7371, 0.0
    %7544 = vadd.xlane.f32.xlu0 %v7543
    %v7545 = vpop.xlane.xlu0 %7544
    %v7546 = vsel %vm401, %v7372, 0.0
    %7547 = vadd.xlane.f32.xlu0 %v7546
    %v7548 = vpop.xlane.xlu0 %7547
    %v7549 = vsel %vm401, %v7373, 0.0
    %7550 = vadd.xlane.f32.xlu0 %v7549
    %v7551 = vpop.xlane.xlu0 %7550
    %v7552 = vsel %vm401, %v7374, 0.0
    %7553 = vadd.xlane.f32.xlu0 %v7552
    %v7554 = vpop.xlane.xlu0 %7553
    %v7555 = vsel %vm401, %v7375, 0.0
    %7556 = vadd.xlane.f32.xlu0 %v7555
    %v7557 = vpop.xlane.xlu0 %7556
    %v7558 = vsel %vm401, %v7376, 0.0
    %7559 = vadd.xlane.f32.xlu0 %v7558
    %v7560 = vpop.xlane.xlu0 %7559
    %v7561 = vsel %vm401, %v7377, 0.0
    %7562 = vadd.xlane.f32.xlu0 %v7561
    %v7563 = vpop.xlane.xlu0 %7562
    %v7564 = vsel %vm401, %v7378, 0.0
    %7565 = vadd.xlane.f32.xlu0 %v7564
    %v7566 = vpop.xlane.xlu0 %7565
    %v7567 = vsel %vm401, %v7379, 0.0
    %7568 = vadd.xlane.f32.xlu0 %v7567
    %v7569 = vpop.xlane.xlu0 %7568
    %v7570 = vsel %vm401, %v7380, 0.0
    %7571 = vadd.xlane.f32.xlu0 %v7570
    %v7572 = vpop.xlane.xlu0 %7571
    %v7573 = vsel %vm401, %v7381, 0.0
    %7574 = vadd.xlane.f32.xlu0 %v7573
    %v7575 = vpop.xlane.xlu0 %7574
    %v7576 = vsel %vm401, %v7382, 0.0
    %7577 = vadd.xlane.f32.xlu0 %v7576
    %v7578 = vpop.xlane.xlu0 %7577
    %v7579 = vsel %vm401, %v7383, 0.0
    %7580 = vadd.xlane.f32.xlu0 %v7579
    %v7581 = vpop.xlane.xlu0 %7580
    %v7582 = vsel %vm401, %v7384, 0.0
    %7583 = vadd.xlane.f32.xlu0 %v7582
    %v7584 = vpop.xlane.xlu0 %7583
    %v7585 = vsel %vm401, %v7385, 0.0
    %7586 = vadd.xlane.f32.xlu0 %v7585
    %v7587 = vpop.xlane.xlu0 %7586
    %v7588 = vsel %vm401, %v7386, 0.0
    %7589 = vadd.xlane.f32.xlu0 %v7588
    %v7590 = vpop.xlane.xlu0 %7589
    %v7591 = vsel %vm401, %v7387, 0.0
    %7592 = vadd.xlane.f32.xlu0 %v7591
    %v7593 = vpop.xlane.xlu0 %7592
    %v7594 = vsel %vm401, %v7388, 0.0
    %7595 = vadd.xlane.f32.xlu0 %v7594
    %v7596 = vpop.xlane.xlu0 %7595
    %v7597 = vsel %vm401, %v7389, 0.0
    %7598 = vadd.xlane.f32.xlu0 %v7597
    %v7599 = vpop.xlane.xlu0 %7598
    %v7600 = vsel %vm401, %v7390, 0.0
    %7601 = vadd.xlane.f32.xlu0 %v7600
    %v7602 = vpop.xlane.xlu0 %7601
    %v7603 = vsel %vm401, %v7391, 0.0
    %7604 = vadd.xlane.f32.xlu0 %v7603
    %v7605 = vpop.xlane.xlu0 %7604
    %v7606 = vsel %vm401, %v7392, 0.0
    %7607 = vadd.xlane.f32.xlu0 %v7606
    %v7608 = vpop.xlane.xlu0 %7607
    %v7609 = vsel %vm401, %v7393, 0.0
    %7610 = vadd.xlane.f32.xlu0 %v7609
    %v7611 = vpop.xlane.xlu0 %7610
    %v7612 = vsel %vm401, %v7394, 0.0
    %7613 = vadd.xlane.f32.xlu0 %v7612
    %v7614 = vpop.xlane.xlu0 %7613
    %v7615 = vsel %vm401, %v7395, 0.0
    %7616 = vadd.xlane.f32.xlu0 %v7615
    %v7617 = vpop.xlane.xlu0 %7616
    %v7618 = vsel %vm401, %v7396, 0.0
    %7619 = vadd.xlane.f32.xlu0 %v7618
    %v7620 = vpop.xlane.xlu0 %7619
    %v7621 = vsel %vm401, %v7397, 0.0
    %7622 = vadd.xlane.f32.xlu0 %v7621
    %v7623 = vpop.xlane.xlu0 %7622
    %v7624 = vsel %vm401, %v7398, 0.0
    %7625 = vadd.xlane.f32.xlu0 %v7624
    %v7626 = vpop.xlane.xlu0 %7625
    %v7627 = vsel %vm401, %v7399, 0.0
    %7628 = vadd.xlane.f32.xlu0 %v7627
    %v7629 = vpop.xlane.xlu0 %7628
    %v7630 = vsel %vm401, %v7400, 0.0
    %7631 = vadd.xlane.f32.xlu0 %v7630
    %v7632 = vpop.xlane.xlu0 %7631
    %v7633 = vsel %vm401, %v7401, 0.0
    %7634 = vadd.xlane.f32.xlu0 %v7633
    %v7635 = vpop.xlane.xlu0 %7634
    %v7636 = vsel %vm401, %v7402, 0.0
    %7637 = vadd.xlane.f32.xlu0 %v7636
    %v7638 = vpop.xlane.xlu0 %7637
    %v7639 = vsel %vm401, %v7403, 0.0
    %7640 = vadd.xlane.f32.xlu0 %v7639
    %v7641 = vpop.xlane.xlu0 %7640
    %v7642 = vsel %vm401, %v7404, 0.0
    %7643 = vadd.xlane.f32.xlu0 %v7642
    %v7644 = vpop.xlane.xlu0 %7643
    %v7645 = vsel %vm401, %v7405, 0.0
    %7646 = vadd.xlane.f32.xlu0 %v7645
    %v7647 = vpop.xlane.xlu0 %7646
    %v7648 = vsel %vm401, %v7406, 0.0
    %7649 = vadd.xlane.f32.xlu0 %v7648
    %v7650 = vpop.xlane.xlu0 %7649
    %v7651 = vsel %vm401, %v7407, 0.0
    %7652 = vadd.xlane.f32.xlu0 %v7651
    %v7653 = vpop.xlane.xlu0 %7652
    %v7654 = vsel %vm401, %v7408, 0.0
    %7655 = vadd.xlane.f32.xlu0 %v7654
    %v7656 = vpop.xlane.xlu0 %7655
    %v7657 = vsel %vm401, %v7409, 0.0
    %7658 = vadd.xlane.f32.xlu0 %v7657
    %v7659 = vpop.xlane.xlu0 %7658
    %v7660 = vsel %vm401, %v7410, 0.0
    %7661 = vadd.xlane.f32.xlu0 %v7660
    %v7662 = vpop.xlane.xlu0 %7661
    %v7663 = vsel %vm401, %v7411, 0.0
    %7664 = vadd.xlane.f32.xlu0 %v7663
    %v7665 = vpop.xlane.xlu0 %7664
    %v7666 = vsel %vm401, %v7412, 0.0
    %7667 = vadd.xlane.f32.xlu0 %v7666
    %v7668 = vpop.xlane.xlu0 %7667
    %v7669 = vsel %vm401, %v7413, 0.0
    %7670 = vadd.xlane.f32.xlu0 %v7669
    %v7671 = vpop.xlane.xlu0 %7670
    %v7672 = vsel %vm401, %v7414, 0.0
    %7673 = vadd.xlane.f32.xlu0 %v7672
    %v7674 = vpop.xlane.xlu0 %7673
    %v7675 = vsel %vm401, %v7415, 0.0
    %7676 = vadd.xlane.f32.xlu0 %v7675
    %v7677 = vpop.xlane.xlu0 %7676
    %v7678 = vsel %vm401, %v7416, 0.0
    %7679 = vadd.xlane.f32.xlu0 %v7678
    %v7680 = vpop.xlane.xlu0 %7679
    %v7681 = vsel %vm401, %v7417, 0.0
    %7682 = vadd.xlane.f32.xlu0 %v7681
    %v7683 = vpop.xlane.xlu0 %7682
    %v7684 = vsel %vm401, %v7418, 0.0
    %7685 = vadd.xlane.f32.xlu0 %v7684
    %v7686 = vpop.xlane.xlu0 %7685
    %v7687 = vsel %vm401, %v7419, 0.0
    %7688 = vadd.xlane.f32.xlu0 %v7687
    %v7689 = vpop.xlane.xlu0 %7688
    %v7690 = vsel %vm401, %v7420, 0.0
    %7691 = vadd.xlane.f32.xlu0 %v7690
    %v7692 = vpop.xlane.xlu0 %7691
    %v7693 = vsel %vm401, %v7421, 0.0
    %7694 = vadd.xlane.f32.xlu0 %v7693
    %v7695 = vpop.xlane.xlu0 %7694
    %v7696 = vsel %vm401, %v7422, 0.0
    %7697 = vadd.xlane.f32.xlu0 %v7696
    %v7698 = vpop.xlane.xlu0 %7697
    %v7699 = vsel %vm401, %v7423, 0.0
    %7700 = vadd.xlane.f32.xlu0 %v7699
    %v7701 = vpop.xlane.xlu0 %7700
    %v7702 = vsel %vm401, %v7424, 0.0
    %7703 = vadd.xlane.f32.xlu0 %v7702
    %v7704 = vpop.xlane.xlu0 %7703
    %v7705 = vsel %vm401, %v7425, 0.0
    %7706 = vadd.xlane.f32.xlu0 %v7705
    %v7707 = vpop.xlane.xlu0 %7706
    %v7708 = vsel %vm401, %v7426, 0.0
    %7709 = vadd.xlane.f32.xlu0 %v7708
    %v7710 = vpop.xlane.xlu0 %7709
    %v7711 = vsel %vm401, %v7427, 0.0
    %7712 = vadd.xlane.f32.xlu0 %v7711
    %v7713 = vpop.xlane.xlu0 %7712
    %v7714 = vsel %vm401, %v7428, 0.0
    %7715 = vadd.xlane.f32.xlu0 %v7714
    %v7716 = vpop.xlane.xlu0 %7715
    %v7717 = vsel %vm401, %v7429, 0.0
    %7718 = vadd.xlane.f32.xlu0 %v7717
    %v7719 = vpop.xlane.xlu0 %7718
    %v7720 = vsel %vm401, %v7430, 0.0
    %7721 = vadd.xlane.f32.xlu0 %v7720
    %v7722 = vpop.xlane.xlu0 %7721
    %v7723 = vsel %vm401, %v7431, 0.0
    %7724 = vadd.xlane.f32.xlu0 %v7723
    %v7725 = vpop.xlane.xlu0 %7724
    %v7726 = vsel %vm401, %v7432, 0.0
    %7727 = vadd.xlane.f32.xlu0 %v7726
    %v7728 = vpop.xlane.xlu0 %7727
    %v7729 = vsel %vm401, %v7433, 0.0
    %7730 = vadd.xlane.f32.xlu0 %v7729
    %v7731 = vpop.xlane.xlu0 %7730
    %v7732 = vsel %vm401, %v7434, 0.0
    %7733 = vadd.xlane.f32.xlu0 %v7732
    %v7734 = vpop.xlane.xlu0 %7733
    %v7735 = vsel %vm401, %v7435, 0.0
    %7736 = vadd.xlane.f32.xlu0 %v7735
    %v7737 = vpop.xlane.xlu0 %7736
    %v7738 = vsel %vm401, %v7436, 0.0
    %7739 = vadd.xlane.f32.xlu0 %v7738
    %v7740 = vpop.xlane.xlu0 %7739
    %v7741 = vsel %vm401, %v7437, 0.0
    %7742 = vadd.xlane.f32.xlu0 %v7741
    %v7743 = vpop.xlane.xlu0 %7742
    %v7744 = vsel %vm401, %v7438, 0.0
    %7745 = vadd.xlane.f32.xlu0 %v7744
    %v7746 = vpop.xlane.xlu0 %7745
    %v7747 = vsel %vm401, %v7439, 0.0
    %7748 = vadd.xlane.f32.xlu0 %v7747
    %v7749 = vpop.xlane.xlu0 %7748
    %v7750 = vsel %vm401, %v7440, 0.0
    %7751 = vadd.xlane.f32.xlu0 %v7750
    %v7752 = vpop.xlane.xlu0 %7751
    %v7753 = vsel %vm401, %v7441, 0.0
    %7754 = vadd.xlane.f32.xlu0 %v7753
    %v7755 = vpop.xlane.xlu0 %7754
    %v7756 = vsel %vm401, %v7442, 0.0
    %7757 = vadd.xlane.f32.xlu0 %v7756
    %v7758 = vpop.xlane.xlu0 %7757
    %v7759 = vsel %vm401, %v7443, 0.0
    %7760 = vadd.xlane.f32.xlu0 %v7759
    %v7761 = vpop.xlane.xlu0 %7760
    %v7762 = vsel %vm401, %v7444, 0.0
    %7763 = vadd.xlane.f32.xlu0 %v7762
    %v7764 = vpop.xlane.xlu0 %7763
    %v7765 = vsel %vm401, %v7445, 0.0
    %7766 = vadd.xlane.f32.xlu0 %v7765
    %v7767 = vpop.xlane.xlu0 %7766
    %v7768 = vsel %vm401, %v7446, 0.0
    %7769 = vadd.xlane.f32.xlu0 %v7768
    %v7770 = vpop.xlane.xlu0 %7769
    %v7771 = vsel %vm401, %v7447, 0.0
    %7772 = vadd.xlane.f32.xlu0 %v7771
    %v7773 = vpop.xlane.xlu0 %7772
    %v7774 = vsel %vm401, %v7448, 0.0
    %7775 = vadd.xlane.f32.xlu0 %v7774
    %v7776 = vpop.xlane.xlu0 %7775
    %v7777 = vsel %vm401, %v7449, 0.0
    %7778 = vadd.xlane.f32.xlu0 %v7777
    %v7779 = vpop.xlane.xlu0 %7778
    %v7780 = vsel %vm401, %v7450, 0.0
    %7781 = vadd.xlane.f32.xlu0 %v7780
    %v7782 = vpop.xlane.xlu0 %7781
    %v7783 = vsel %vm401, %v7451, 0.0
    %7784 = vadd.xlane.f32.xlu0 %v7783
    %v7785 = vpop.xlane.xlu0 %7784
    %v7786 = vsel %vm401, %v7452, 0.0
    %7787 = vadd.xlane.f32.xlu0 %v7786
    %v7788 = vpop.xlane.xlu0 %7787
    %v7789 = vsel %vm401, %v7453, 0.0
    %7790 = vadd.xlane.f32.xlu0 %v7789
    %v7791 = vpop.xlane.xlu0 %7790
    %v7792 = vsel %vm401, %v7454, 0.0
    %7793 = vadd.xlane.f32.xlu0 %v7792
    %v7794 = vpop.xlane.xlu0 %7793
    %v7795 = vsel %vm401, %v7455, 0.0
    %7796 = vadd.xlane.f32.xlu0 %v7795
    %v7797 = vpop.xlane.xlu0 %7796
    %v7798 = vsel %vm401, %v7456, 0.0
    %7799 = vadd.xlane.f32.xlu0 %v7798
    %v7800 = vpop.xlane.xlu0 %7799
    %v7801 = vsel %vm401, %v7457, 0.0
    %7802 = vadd.xlane.f32.xlu0 %v7801
    %v7803 = vpop.xlane.xlu0 %7802
    %v7804 = vsel %vm401, %v7458, 0.0
    %7805 = vadd.xlane.f32.xlu0 %v7804
    %v7806 = vpop.xlane.xlu0 %7805
    %v7807 = vsel %vm401, %v7459, 0.0
    %7808 = vadd.xlane.f32.xlu0 %v7807
    %v7809 = vpop.xlane.xlu0 %7808
    %v7810 = vsel %vm401, %v7460, 0.0
    %7811 = vadd.xlane.f32.xlu0 %v7810
    %v7812 = vpop.xlane.xlu0 %7811
    %v7813 = vsel %vm401, %v7461, 0.0
    %7814 = vadd.xlane.f32.xlu0 %v7813
    %v7815 = vpop.xlane.xlu0 %7814
    %v7816 = vsel %vm401, %v7462, 0.0
    %7817 = vadd.xlane.f32.xlu0 %v7816
    %v7818 = vpop.xlane.xlu0 %7817
    %v7819 = vsel %vm401, %v7463, 0.0
    %7820 = vadd.xlane.f32.xlu0 %v7819
    %v7821 = vpop.xlane.xlu0 %7820
    %v7822 = vsel %vm401, %v7464, 0.0
    %7823 = vadd.xlane.f32.xlu0 %v7822
    %v7824 = vpop.xlane.xlu0 %7823
    %v7825 = vsel %vm401, %v7465, 0.0
    %7826 = vadd.xlane.f32.xlu0 %v7825
    %v7827 = vpop.xlane.xlu0 %7826
    %v7828 = vsel %vm401, %v7466, 0.0
    %7829 = vadd.xlane.f32.xlu0 %v7828
    %v7830 = vpop.xlane.xlu0 %7829
    %v7831 = vsel %vm401, %v7467, 0.0
    %7832 = vadd.xlane.f32.xlu0 %v7831
    %v7833 = vpop.xlane.xlu0 %7832
    %v7834 = vsel %vm401, %v7468, 0.0
    %7835 = vadd.xlane.f32.xlu0 %v7834
    %v7836 = vpop.xlane.xlu0 %7835
    %v7837 = vsel %vm401, %v7469, 0.0
    %7838 = vadd.xlane.f32.xlu0 %v7837
    %v7839 = vpop.xlane.xlu0 %7838
    %v7840 = vsel %vm401, %v7470, 0.0
    %7841 = vadd.xlane.f32.xlu0 %v7840
    %v7842 = vpop.xlane.xlu0 %7841
    %v7843 = vsel %vm401, %v7471, 0.0
    %7844 = vadd.xlane.f32.xlu0 %v7843
    %v7845 = vpop.xlane.xlu0 %7844
    %v7846 = vsel %vm401, %v7472, 0.0
    %7847 = vadd.xlane.f32.xlu0 %v7846
    %v7848 = vpop.xlane.xlu0 %7847
    %v7849 = vsel %vm401, %v7473, 0.0
    %7850 = vadd.xlane.f32.xlu0 %v7849
    %v7851 = vpop.xlane.xlu0 %7850
    %v7852 = vsel %vm401, %v7474, 0.0
    %7853 = vadd.xlane.f32.xlu0 %v7852
    %v7854 = vpop.xlane.xlu0 %7853
    %v7855 = vsel %vm401, %v7475, 0.0
    %7856 = vadd.xlane.f32.xlu0 %v7855
    %v7857 = vpop.xlane.xlu0 %7856
    %v7858 = vsel %vm401, %v7476, 0.0
    %7859 = vadd.xlane.f32.xlu0 %v7858
    %v7860 = vpop.xlane.xlu0 %7859
    %vm7861 = vcmp.lt.f32.partialorder %v7479, %v6960
    %vm7862 = vcmp.lt.f32.partialorder %v7482, %v6961
    %vm7863 = vcmp.lt.f32.partialorder %v7485, %v6962
    %vm7864 = vcmp.lt.f32.partialorder %v7488, %v6963
    %vm7865 = vcmp.lt.f32.partialorder %v7491, %v6964
    %vm7866 = vcmp.lt.f32.partialorder %v7494, %v6965
    %vm7867 = vcmp.lt.f32.partialorder %v7497, %v6966
    %vm7868 = vcmp.lt.f32.partialorder %v7500, %v6967
    %vm7869 = vcmp.lt.f32.partialorder %v7503, %v6968
    %vm7870 = vcmp.lt.f32.partialorder %v7506, %v6969
    %vm7871 = vcmp.lt.f32.partialorder %v7509, %v6970
    %vm7872 = vcmp.lt.f32.partialorder %v7512, %v6971
    %vm7873 = vcmp.lt.f32.partialorder %v7515, %v6972
    %vm7874 = vcmp.lt.f32.partialorder %v7518, %v6973
    %vm7875 = vcmp.lt.f32.partialorder %v7521, %v6974
    %vm7876 = vcmp.lt.f32.partialorder %v7524, %v6975
    %vm7877 = vcmp.lt.f32.partialorder %v7527, %v6976
    %vm7878 = vcmp.lt.f32.partialorder %v7530, %v6977
    %vm7879 = vcmp.lt.f32.partialorder %v7533, %v6978
    %vm7880 = vcmp.lt.f32.partialorder %v7536, %v6979
    %vm7881 = vcmp.lt.f32.partialorder %v7539, %v6980
    %vm7882 = vcmp.lt.f32.partialorder %v7542, %v6981
    %vm7883 = vcmp.lt.f32.partialorder %v7545, %v6982
    %vm7884 = vcmp.lt.f32.partialorder %v7548, %v6983
    %vm7885 = vcmp.lt.f32.partialorder %v7551, %v6984
    %vm7886 = vcmp.lt.f32.partialorder %v7554, %v6985
    %vm7887 = vcmp.lt.f32.partialorder %v7557, %v6986
    %vm7888 = vcmp.lt.f32.partialorder %v7560, %v6987
    %vm7889 = vcmp.lt.f32.partialorder %v7563, %v6988
    %vm7890 = vcmp.lt.f32.partialorder %v7566, %v6989
    %vm7891 = vcmp.lt.f32.partialorder %v7569, %v6990
    %vm7892 = vcmp.lt.f32.partialorder %v7572, %v6991
    %vm7893 = vcmp.lt.f32.partialorder %v7575, %v6992
    %vm7894 = vcmp.lt.f32.partialorder %v7578, %v6993
    %vm7895 = vcmp.lt.f32.partialorder %v7581, %v6994
    %vm7896 = vcmp.lt.f32.partialorder %v7584, %v6995
    %vm7897 = vcmp.lt.f32.partialorder %v7587, %v6996
    %vm7898 = vcmp.lt.f32.partialorder %v7590, %v6997
    %vm7899 = vcmp.lt.f32.partialorder %v7593, %v6998
    %vm7900 = vcmp.lt.f32.partialorder %v7596, %v6999
    %vm7901 = vcmp.lt.f32.partialorder %v7599, %v7000
    %vm7902 = vcmp.lt.f32.partialorder %v7602, %v7001
    %vm7903 = vcmp.lt.f32.partialorder %v7605, %v7002
    %vm7904 = vcmp.lt.f32.partialorder %v7608, %v7003
    %vm7905 = vcmp.lt.f32.partialorder %v7611, %v7004
    %vm7906 = vcmp.lt.f32.partialorder %v7614, %v7005
    %vm7907 = vcmp.lt.f32.partialorder %v7617, %v7006
    %vm7908 = vcmp.lt.f32.partialorder %v7620, %v7007
    %vm7909 = vcmp.lt.f32.partialorder %v7623, %v7008
    %vm7910 = vcmp.lt.f32.partialorder %v7626, %v7009
    %vm7911 = vcmp.lt.f32.partialorder %v7629, %v7010
    %vm7912 = vcmp.lt.f32.partialorder %v7632, %v7011
    %vm7913 = vcmp.lt.f32.partialorder %v7635, %v7012
    %vm7914 = vcmp.lt.f32.partialorder %v7638, %v7013
    %vm7915 = vcmp.lt.f32.partialorder %v7641, %v7014
    %vm7916 = vcmp.lt.f32.partialorder %v7644, %v7015
    %vm7917 = vcmp.lt.f32.partialorder %v7647, %v7016
    %vm7918 = vcmp.lt.f32.partialorder %v7650, %v7017
    %vm7919 = vcmp.lt.f32.partialorder %v7653, %v7018
    %vm7920 = vcmp.lt.f32.partialorder %v7656, %v7019
    %vm7921 = vcmp.lt.f32.partialorder %v7659, %v7020
    %vm7922 = vcmp.lt.f32.partialorder %v7662, %v7021
    %vm7923 = vcmp.lt.f32.partialorder %v7665, %v7022
    %vm7924 = vcmp.lt.f32.partialorder %v7668, %v7023
    %vm7925 = vcmp.lt.f32.partialorder %v7671, %v7024
    %vm7926 = vcmp.lt.f32.partialorder %v7674, %v7025
    %vm7927 = vcmp.lt.f32.partialorder %v7677, %v7026
    %vm7928 = vcmp.lt.f32.partialorder %v7680, %v7027
    %vm7929 = vcmp.lt.f32.partialorder %v7683, %v7028
    %vm7930 = vcmp.lt.f32.partialorder %v7686, %v7029
    %vm7931 = vcmp.lt.f32.partialorder %v7689, %v7030
    %vm7932 = vcmp.lt.f32.partialorder %v7692, %v7031
    %vm7933 = vcmp.lt.f32.partialorder %v7695, %v7032
    %vm7934 = vcmp.lt.f32.partialorder %v7698, %v7033
    %vm7935 = vcmp.lt.f32.partialorder %v7701, %v7034
    %vm7936 = vcmp.lt.f32.partialorder %v7704, %v7035
    %vm7937 = vcmp.lt.f32.partialorder %v7707, %v7036
    %vm7938 = vcmp.lt.f32.partialorder %v7710, %v7037
    %vm7939 = vcmp.lt.f32.partialorder %v7713, %v7038
    %vm7940 = vcmp.lt.f32.partialorder %v7716, %v7039
    %vm7941 = vcmp.lt.f32.partialorder %v7719, %v7040
    %vm7942 = vcmp.lt.f32.partialorder %v7722, %v7041
    %vm7943 = vcmp.lt.f32.partialorder %v7725, %v7042
    %vm7944 = vcmp.lt.f32.partialorder %v7728, %v7043
    %vm7945 = vcmp.lt.f32.partialorder %v7731, %v7044
    %vm7946 = vcmp.lt.f32.partialorder %v7734, %v7045
    %vm7947 = vcmp.lt.f32.partialorder %v7737, %v7046
    %vm7948 = vcmp.lt.f32.partialorder %v7740, %v7047
    %vm7949 = vcmp.lt.f32.partialorder %v7743, %v7048
    %vm7950 = vcmp.lt.f32.partialorder %v7746, %v7049
    %vm7951 = vcmp.lt.f32.partialorder %v7749, %v7050
    %vm7952 = vcmp.lt.f32.partialorder %v7752, %v7051
    %vm7953 = vcmp.lt.f32.partialorder %v7755, %v7052
    %vm7954 = vcmp.lt.f32.partialorder %v7758, %v7053
    %vm7955 = vcmp.lt.f32.partialorder %v7761, %v7054
    %vm7956 = vcmp.lt.f32.partialorder %v7764, %v7055
    %vm7957 = vcmp.lt.f32.partialorder %v7767, %v7056
    %vm7958 = vcmp.lt.f32.partialorder %v7770, %v7057
    %vm7959 = vcmp.lt.f32.partialorder %v7773, %v7058
    %vm7960 = vcmp.lt.f32.partialorder %v7776, %v7059
    %vm7961 = vcmp.lt.f32.partialorder %v7779, %v7060
    %vm7962 = vcmp.lt.f32.partialorder %v7782, %v7061
    %vm7963 = vcmp.lt.f32.partialorder %v7785, %v7062
    %vm7964 = vcmp.lt.f32.partialorder %v7788, %v7063
    %vm7965 = vcmp.lt.f32.partialorder %v7791, %v7064
    %vm7966 = vcmp.lt.f32.partialorder %v7794, %v7065
    %vm7967 = vcmp.lt.f32.partialorder %v7797, %v7066
    %vm7968 = vcmp.lt.f32.partialorder %v7800, %v7067
    %vm7969 = vcmp.lt.f32.partialorder %v7803, %v7068
    %vm7970 = vcmp.lt.f32.partialorder %v7806, %v7069
    %vm7971 = vcmp.lt.f32.partialorder %v7809, %v7070
    %vm7972 = vcmp.lt.f32.partialorder %v7812, %v7071
    %vm7973 = vcmp.lt.f32.partialorder %v7815, %v7072
    %vm7974 = vcmp.lt.f32.partialorder %v7818, %v7073
    %vm7975 = vcmp.lt.f32.partialorder %v7821, %v7074
    %vm7976 = vcmp.lt.f32.partialorder %v7824, %v7075
    %vm7977 = vcmp.lt.f32.partialorder %v7827, %v7076
    %vm7978 = vcmp.lt.f32.partialorder %v7830, %v7077
    %vm7979 = vcmp.lt.f32.partialorder %v7833, %v7078
    %vm7980 = vcmp.lt.f32.partialorder %v7836, %v7079
    %vm7981 = vcmp.lt.f32.partialorder %v7839, %v7080
    %vm7982 = vcmp.lt.f32.partialorder %v7842, %v7081
    %vm7983 = vcmp.lt.f32.partialorder %v7845, %v7082
    %vm7984 = vcmp.lt.f32.partialorder %v7848, %v7083
    %vm7985 = vcmp.lt.f32.partialorder %v7851, %v7084
    %vm7986 = vcmp.lt.f32.partialorder %v7854, %v7085
    %vm7987 = vcmp.lt.f32.partialorder %v7857, %v7086
    %vm7988 = vcmp.lt.f32.partialorder %v7860, %v7087
    %v7989 = vsel %vm7861, 7, %v7088
    %v7990 = vsel %vm7862, 7, %v7089
    %v7991 = vsel %vm7863, 7, %v7090
    %v7992 = vsel %vm7864, 7, %v7091
    %v7993 = vsel %vm7865, 7, %v7092
    %v7994 = vsel %vm7866, 7, %v7093
    %v7995 = vsel %vm7867, 7, %v7094
    %v7996 = vsel %vm7868, 7, %v7095
    %v7997 = vsel %vm7869, 7, %v7096
    %v7998 = vsel %vm7870, 7, %v7097
    %v7999 = vsel %vm7871, 7, %v7098
    %v8000 = vsel %vm7872, 7, %v7099
    %v8001 = vsel %vm7873, 7, %v7100
    %v8002 = vsel %vm7874, 7, %v7101
    %v8003 = vsel %vm7875, 7, %v7102
    %v8004 = vsel %vm7876, 7, %v7103
    %v8005 = vsel %vm7877, 7, %v7104
    %v8006 = vsel %vm7878, 7, %v7105
    %v8007 = vsel %vm7879, 7, %v7106
    %v8008 = vsel %vm7880, 7, %v7107
    %v8009 = vsel %vm7881, 7, %v7108
    %v8010 = vsel %vm7882, 7, %v7109
    %v8011 = vsel %vm7883, 7, %v7110
    %v8012 = vsel %vm7884, 7, %v7111
    %v8013 = vsel %vm7885, 7, %v7112
    %v8014 = vsel %vm7886, 7, %v7113
    %v8015 = vsel %vm7887, 7, %v7114
    %v8016 = vsel %vm7888, 7, %v7115
    %v8017 = vsel %vm7889, 7, %v7116
    %v8018 = vsel %vm7890, 7, %v7117
    %v8019 = vsel %vm7891, 7, %v7118
    %v8020 = vsel %vm7892, 7, %v7119
    %v8021 = vsel %vm7893, 7, %v7120
    %v8022 = vsel %vm7894, 7, %v7121
    %v8023 = vsel %vm7895, 7, %v7122
    %v8024 = vsel %vm7896, 7, %v7123
    %v8025 = vsel %vm7897, 7, %v7124
    %v8026 = vsel %vm7898, 7, %v7125
    %v8027 = vsel %vm7899, 7, %v7126
    %v8028 = vsel %vm7900, 7, %v7127
    %v8029 = vsel %vm7901, 7, %v7128
    %v8030 = vsel %vm7902, 7, %v7129
    %v8031 = vsel %vm7903, 7, %v7130
    %v8032 = vsel %vm7904, 7, %v7131
    %v8033 = vsel %vm7905, 7, %v7132
    %v8034 = vsel %vm7906, 7, %v7133
    %v8035 = vsel %vm7907, 7, %v7134
    %v8036 = vsel %vm7908, 7, %v7135
    %v8037 = vsel %vm7909, 7, %v7136
    %v8038 = vsel %vm7910, 7, %v7137
    %v8039 = vsel %vm7911, 7, %v7138
    %v8040 = vsel %vm7912, 7, %v7139
    %v8041 = vsel %vm7913, 7, %v7140
    %v8042 = vsel %vm7914, 7, %v7141
    %v8043 = vsel %vm7915, 7, %v7142
    %v8044 = vsel %vm7916, 7, %v7143
    %v8045 = vsel %vm7917, 7, %v7144
    %v8046 = vsel %vm7918, 7, %v7145
    %v8047 = vsel %vm7919, 7, %v7146
    %v8048 = vsel %vm7920, 7, %v7147
    %v8049 = vsel %vm7921, 7, %v7148
    %v8050 = vsel %vm7922, 7, %v7149
    %v8051 = vsel %vm7923, 7, %v7150
    %v8052 = vsel %vm7924, 7, %v7151
    %v8053 = vsel %vm7925, 7, %v7152
    %v8054 = vsel %vm7926, 7, %v7153
    %v8055 = vsel %vm7927, 7, %v7154
    %v8056 = vsel %vm7928, 7, %v7155
    %v8057 = vsel %vm7929, 7, %v7156
    %v8058 = vsel %vm7930, 7, %v7157
    %v8059 = vsel %vm7931, 7, %v7158
    %v8060 = vsel %vm7932, 7, %v7159
    %v8061 = vsel %vm7933, 7, %v7160
    %v8062 = vsel %vm7934, 7, %v7161
    %v8063 = vsel %vm7935, 7, %v7162
    %v8064 = vsel %vm7936, 7, %v7163
    %v8065 = vsel %vm7937, 7, %v7164
    %v8066 = vsel %vm7938, 7, %v7165
    %v8067 = vsel %vm7939, 7, %v7166
    %v8068 = vsel %vm7940, 7, %v7167
    %v8069 = vsel %vm7941, 7, %v7168
    %v8070 = vsel %vm7942, 7, %v7169
    %v8071 = vsel %vm7943, 7, %v7170
    %v8072 = vsel %vm7944, 7, %v7171
    %v8073 = vsel %vm7945, 7, %v7172
    %v8074 = vsel %vm7946, 7, %v7173
    %v8075 = vsel %vm7947, 7, %v7174
    %v8076 = vsel %vm7948, 7, %v7175
    %v8077 = vsel %vm7949, 7, %v7176
    %v8078 = vsel %vm7950, 7, %v7177
    %v8079 = vsel %vm7951, 7, %v7178
    %v8080 = vsel %vm7952, 7, %v7179
    %v8081 = vsel %vm7953, 7, %v7180
    %v8082 = vsel %vm7954, 7, %v7181
    %v8083 = vsel %vm7955, 7, %v7182
    %v8084 = vsel %vm7956, 7, %v7183
    %v8085 = vsel %vm7957, 7, %v7184
    %v8086 = vsel %vm7958, 7, %v7185
    %v8087 = vsel %vm7959, 7, %v7186
    %v8088 = vsel %vm7960, 7, %v7187
    %v8089 = vsel %vm7961, 7, %v7188
    %v8090 = vsel %vm7962, 7, %v7189
    %v8091 = vsel %vm7963, 7, %v7190
    %v8092 = vsel %vm7964, 7, %v7191
    %v8093 = vsel %vm7965, 7, %v7192
    %v8094 = vsel %vm7966, 7, %v7193
    %v8095 = vsel %vm7967, 7, %v7194
    %v8096 = vsel %vm7968, 7, %v7195
    %v8097 = vsel %vm7969, 7, %v7196
    %v8098 = vsel %vm7970, 7, %v7197
    %v8099 = vsel %vm7971, 7, %v7198
    %v8100 = vsel %vm7972, 7, %v7199
    %v8101 = vsel %vm7973, 7, %v7200
    %v8102 = vsel %vm7974, 7, %v7201
    %v8103 = vsel %vm7975, 7, %v7202
    %v8104 = vsel %vm7976, 7, %v7203
    %v8105 = vsel %vm7977, 7, %v7204
    %v8106 = vsel %vm7978, 7, %v7205
    %v8107 = vsel %vm7979, 7, %v7206
    %v8108 = vsel %vm7980, 7, %v7207
    %v8109 = vsel %vm7981, 7, %v7208
    %v8110 = vsel %vm7982, 7, %v7209
    %v8111 = vsel %vm7983, 7, %v7210
    %v8112 = vsel %vm7984, 7, %v7211
    %v8113 = vsel %vm7985, 7, %v7212
    %v8114 = vsel %vm7986, 7, %v7213
    %v8115 = vsel %vm7987, 7, %v7214
    %v8116 = vsel %vm7988, 7, %v7215
    %v8117 = vlaneseq
    %v8118 = vand.u32 %v8117, 127
    %v8119 = vlaneseq
    %v8120 = vshrl.u32 %v8119, 7
    %v8121 = vsub.s32 %v8118, %v8120
    %v8122 = vrot.slane %v7989, %v8121
    %v8123 = vadd.s32 %v8118, 4294967288
    %v8124 = vlaneseq
    %v8125 = vshrl.u32 %v8124, 7
    %v8126 = vsub.s32 %v8123, %v8125
    %v8127 = vrot.slane %v7990, %v8126
    %vm8128 = vcmask 130112
    %v8129 = vsel %vm8128, %v8127, %v8122
    %v8130 = vadd.s32 %v8118, 4294967280
    %v8131 = vlaneseq
    %v8132 = vshrl.u32 %v8131, 7
    %v8133 = vsub.s32 %v8130, %v8132
    %v8134 = vrot.slane %v7991, %v8133
    %vm8135 = vcmask 195712
    %v8136 = vsel %vm8135, %v8134, %v8129
    %v8137 = vadd.s32 %v8118, 4294967272
    %v8138 = vlaneseq
    %v8139 = vshrl.u32 %v8138, 7
    %v8140 = vsub.s32 %v8137, %v8139
    %v8141 = vrot.slane %v7992, %v8140
    %vm8142 = vcmask 261312
    %v8143 = vsel %vm8142, %v8141, %v8136
    %v8144 = vadd.s32 %v8118, 4294967264
    %v8145 = vlaneseq
    %v8146 = vshrl.u32 %v8145, 7
    %v8147 = vsub.s32 %v8144, %v8146
    %v8148 = vrot.slane %v7993, %v8147
    %vm8149 = vcmask 326912
    %v8150 = vsel %vm8149, %v8148, %v8143
    %v8151 = vadd.s32 %v8118, 4294967256
    %v8152 = vlaneseq
    %v8153 = vshrl.u32 %v8152, 7
    %v8154 = vsub.s32 %v8151, %v8153
    %v8155 = vrot.slane %v7994, %v8154
    %vm8156 = vcmask 392512
    %v8157 = vsel %vm8156, %v8155, %v8150
    %v8158 = vadd.s32 %v8118, 4294967248
    %v8159 = vlaneseq
    %v8160 = vshrl.u32 %v8159, 7
    %v8161 = vsub.s32 %v8158, %v8160
    %v8162 = vrot.slane %v7995, %v8161
    %vm8163 = vcmask 458112
    %v8164 = vsel %vm8163, %v8162, %v8157
    %v8165 = vadd.s32 %v8118, 4294967240
    %v8166 = vlaneseq
    %v8167 = vshrl.u32 %v8166, 7
    %v8168 = vsub.s32 %v8165, %v8167
    %v8169 = vrot.slane %v7996, %v8168
    %vm8170 = vcmask 523712
    %v8171 = vsel %vm8170, %v8169, %v8164
    %v8172 = vadd.s32 %v8118, 4294967232
    %v8173 = vlaneseq
    %v8174 = vshrl.u32 %v8173, 7
    %v8175 = vsub.s32 %v8172, %v8174
    %v8176 = vrot.slane %v7997, %v8175
    %vm8177 = vcmask 589312
    %v8178 = vsel %vm8177, %v8176, %v8171
    %v8179 = vadd.s32 %v8118, 4294967224
    %v8180 = vlaneseq
    %v8181 = vshrl.u32 %v8180, 7
    %v8182 = vsub.s32 %v8179, %v8181
    %v8183 = vrot.slane %v7998, %v8182
    %vm8184 = vcmask 654912
    %v8185 = vsel %vm8184, %v8183, %v8178
    %v8186 = vadd.s32 %v8118, 4294967216
    %v8187 = vlaneseq
    %v8188 = vshrl.u32 %v8187, 7
    %v8189 = vsub.s32 %v8186, %v8188
    %v8190 = vrot.slane %v7999, %v8189
    %vm8191 = vcmask 720512
    %v8192 = vsel %vm8191, %v8190, %v8185
    %v8193 = vadd.s32 %v8118, 4294967208
    %v8194 = vlaneseq
    %v8195 = vshrl.u32 %v8194, 7
    %v8196 = vsub.s32 %v8193, %v8195
    %v8197 = vrot.slane %v8000, %v8196
    %vm8198 = vcmask 786112
    %v8199 = vsel %vm8198, %v8197, %v8192
    %v8200 = vadd.s32 %v8118, 4294967200
    %v8201 = vlaneseq
    %v8202 = vshrl.u32 %v8201, 7
    %v8203 = vsub.s32 %v8200, %v8202
    %v8204 = vrot.slane %v8001, %v8203
    %vm8205 = vcmask 851712
    %v8206 = vsel %vm8205, %v8204, %v8199
    %v8207 = vadd.s32 %v8118, 4294967192
    %v8208 = vlaneseq
    %v8209 = vshrl.u32 %v8208, 7
    %v8210 = vsub.s32 %v8207, %v8209
    %v8211 = vrot.slane %v8002, %v8210
    %vm8212 = vcmask 917312
    %v8213 = vsel %vm8212, %v8211, %v8206
    %v8214 = vadd.s32 %v8118, 4294967184
    %v8215 = vlaneseq
    %v8216 = vshrl.u32 %v8215, 7
    %v8217 = vsub.s32 %v8214, %v8216
    %v8218 = vrot.slane %v8003, %v8217
    %vm8219 = vcmask 982912
    %v8220 = vsel %vm8219, %v8218, %v8213
    %v8221 = vadd.s32 %v8118, 4294967176
    %v8222 = vlaneseq
    %v8223 = vshrl.u32 %v8222, 7
    %v8224 = vsub.s32 %v8221, %v8223
    %v8225 = vrot.slane %v8004, %v8224
    %vm8226 = vcmask 1048512
    %v8227 = vsel %vm8226, %v8225, %v8220
    %v8228 = vlaneseq
    %v8229 = vshrl.u32 %v8228, 7
    %v8230 = vsub.s32 %v8118, %v8229
    %v8231 = vrot.slane %v8005, %v8230
    %v8232 = vlaneseq
    %v8233 = vshrl.u32 %v8232, 7
    %v8234 = vsub.s32 %v8123, %v8233
    %v8235 = vrot.slane %v8006, %v8234
    %v8236 = vsel %vm8128, %v8235, %v8231
    %v8237 = vlaneseq
    %v8238 = vshrl.u32 %v8237, 7
    %v8239 = vsub.s32 %v8130, %v8238
    %v8240 = vrot.slane %v8007, %v8239
    %v8241 = vsel %vm8135, %v8240, %v8236
    %v8242 = vlaneseq
    %v8243 = vshrl.u32 %v8242, 7
    %v8244 = vsub.s32 %v8137, %v8243
    %v8245 = vrot.slane %v8008, %v8244
    %v8246 = vsel %vm8142, %v8245, %v8241
    %v8247 = vlaneseq
    %v8248 = vshrl.u32 %v8247, 7
    %v8249 = vsub.s32 %v8144, %v8248
    %v8250 = vrot.slane %v8009, %v8249
    %v8251 = vsel %vm8149, %v8250, %v8246
    %v8252 = vlaneseq
    %v8253 = vshrl.u32 %v8252, 7
    %v8254 = vsub.s32 %v8151, %v8253
    %v8255 = vrot.slane %v8010, %v8254
    %v8256 = vsel %vm8156, %v8255, %v8251
    %v8257 = vlaneseq
    %v8258 = vshrl.u32 %v8257, 7
    %v8259 = vsub.s32 %v8158, %v8258
    %v8260 = vrot.slane %v8011, %v8259
    %v8261 = vsel %vm8163, %v8260, %v8256
    %v8262 = vlaneseq
    %v8263 = vshrl.u32 %v8262, 7
    %v8264 = vsub.s32 %v8165, %v8263
    %v8265 = vrot.slane %v8012, %v8264
    %v8266 = vsel %vm8170, %v8265, %v8261
    %v8267 = vlaneseq
    %v8268 = vshrl.u32 %v8267, 7
    %v8269 = vsub.s32 %v8172, %v8268
    %v8270 = vrot.slane %v8013, %v8269
    %v8271 = vsel %vm8177, %v8270, %v8266
    %v8272 = vlaneseq
    %v8273 = vshrl.u32 %v8272, 7
    %v8274 = vsub.s32 %v8179, %v8273
    %v8275 = vrot.slane %v8014, %v8274
    %v8276 = vsel %vm8184, %v8275, %v8271
    %v8277 = vlaneseq
    %v8278 = vshrl.u32 %v8277, 7
    %v8279 = vsub.s32 %v8186, %v8278
    %v8280 = vrot.slane %v8015, %v8279
    %v8281 = vsel %vm8191, %v8280, %v8276
    %v8282 = vlaneseq
    %v8283 = vshrl.u32 %v8282, 7
    %v8284 = vsub.s32 %v8193, %v8283
    %v8285 = vrot.slane %v8016, %v8284
    %v8286 = vsel %vm8198, %v8285, %v8281
    %v8287 = vlaneseq
    %v8288 = vshrl.u32 %v8287, 7
    %v8289 = vsub.s32 %v8200, %v8288
    %v8290 = vrot.slane %v8017, %v8289
    %v8291 = vsel %vm8205, %v8290, %v8286
    %v8292 = vlaneseq
    %v8293 = vshrl.u32 %v8292, 7
    %v8294 = vsub.s32 %v8207, %v8293
    %v8295 = vrot.slane %v8018, %v8294
    %v8296 = vsel %vm8212, %v8295, %v8291
    %v8297 = vlaneseq
    %v8298 = vshrl.u32 %v8297, 7
    %v8299 = vsub.s32 %v8214, %v8298
    %v8300 = vrot.slane %v8019, %v8299
    %v8301 = vsel %vm8219, %v8300, %v8296
    %v8302 = vlaneseq
    %v8303 = vshrl.u32 %v8302, 7
    %v8304 = vsub.s32 %v8221, %v8303
    %v8305 = vrot.slane %v8020, %v8304
    %v8306 = vsel %vm8226, %v8305, %v8301
    %v8307 = vlaneseq
    %v8308 = vshrl.u32 %v8307, 7
    %v8309 = vsub.s32 %v8118, %v8308
    %v8310 = vrot.slane %v8021, %v8309
    %v8311 = vlaneseq
    %v8312 = vshrl.u32 %v8311, 7
    %v8313 = vsub.s32 %v8123, %v8312
    %v8314 = vrot.slane %v8022, %v8313
    %v8315 = vsel %vm8128, %v8314, %v8310
    %v8316 = vlaneseq
    %v8317 = vshrl.u32 %v8316, 7
    %v8318 = vsub.s32 %v8130, %v8317
    %v8319 = vrot.slane %v8023, %v8318
    %v8320 = vsel %vm8135, %v8319, %v8315
    %v8321 = vlaneseq
    %v8322 = vshrl.u32 %v8321, 7
    %v8323 = vsub.s32 %v8137, %v8322
    %v8324 = vrot.slane %v8024, %v8323
    %v8325 = vsel %vm8142, %v8324, %v8320
    %v8326 = vlaneseq
    %v8327 = vshrl.u32 %v8326, 7
    %v8328 = vsub.s32 %v8144, %v8327
    %v8329 = vrot.slane %v8025, %v8328
    %v8330 = vsel %vm8149, %v8329, %v8325
    %v8331 = vlaneseq
    %v8332 = vshrl.u32 %v8331, 7
    %v8333 = vsub.s32 %v8151, %v8332
    %v8334 = vrot.slane %v8026, %v8333
    %v8335 = vsel %vm8156, %v8334, %v8330
    %v8336 = vlaneseq
    %v8337 = vshrl.u32 %v8336, 7
    %v8338 = vsub.s32 %v8158, %v8337
    %v8339 = vrot.slane %v8027, %v8338
    %v8340 = vsel %vm8163, %v8339, %v8335
    %v8341 = vlaneseq
    %v8342 = vshrl.u32 %v8341, 7
    %v8343 = vsub.s32 %v8165, %v8342
    %v8344 = vrot.slane %v8028, %v8343
    %v8345 = vsel %vm8170, %v8344, %v8340
    %v8346 = vlaneseq
    %v8347 = vshrl.u32 %v8346, 7
    %v8348 = vsub.s32 %v8172, %v8347
    %v8349 = vrot.slane %v8029, %v8348
    %v8350 = vsel %vm8177, %v8349, %v8345
    %v8351 = vlaneseq
    %v8352 = vshrl.u32 %v8351, 7
    %v8353 = vsub.s32 %v8179, %v8352
    %v8354 = vrot.slane %v8030, %v8353
    %v8355 = vsel %vm8184, %v8354, %v8350
    %v8356 = vlaneseq
    %v8357 = vshrl.u32 %v8356, 7
    %v8358 = vsub.s32 %v8186, %v8357
    %v8359 = vrot.slane %v8031, %v8358
    %v8360 = vsel %vm8191, %v8359, %v8355
    %v8361 = vlaneseq
    %v8362 = vshrl.u32 %v8361, 7
    %v8363 = vsub.s32 %v8193, %v8362
    %v8364 = vrot.slane %v8032, %v8363
    %v8365 = vsel %vm8198, %v8364, %v8360
    %v8366 = vlaneseq
    %v8367 = vshrl.u32 %v8366, 7
    %v8368 = vsub.s32 %v8200, %v8367
    %v8369 = vrot.slane %v8033, %v8368
    %v8370 = vsel %vm8205, %v8369, %v8365
    %v8371 = vlaneseq
    %v8372 = vshrl.u32 %v8371, 7
    %v8373 = vsub.s32 %v8207, %v8372
    %v8374 = vrot.slane %v8034, %v8373
    %v8375 = vsel %vm8212, %v8374, %v8370
    %v8376 = vlaneseq
    %v8377 = vshrl.u32 %v8376, 7
    %v8378 = vsub.s32 %v8214, %v8377
    %v8379 = vrot.slane %v8035, %v8378
    %v8380 = vsel %vm8219, %v8379, %v8375
    %v8381 = vlaneseq
    %v8382 = vshrl.u32 %v8381, 7
    %v8383 = vsub.s32 %v8221, %v8382
    %v8384 = vrot.slane %v8036, %v8383
    %v8385 = vsel %vm8226, %v8384, %v8380
    %v8386 = vlaneseq
    %v8387 = vshrl.u32 %v8386, 7
    %v8388 = vsub.s32 %v8118, %v8387
    %v8389 = vrot.slane %v8037, %v8388
    %v8390 = vlaneseq
    %v8391 = vshrl.u32 %v8390, 7
    %v8392 = vsub.s32 %v8123, %v8391
    %v8393 = vrot.slane %v8038, %v8392
    %v8394 = vsel %vm8128, %v8393, %v8389
    %v8395 = vlaneseq
    %v8396 = vshrl.u32 %v8395, 7
    %v8397 = vsub.s32 %v8130, %v8396
    %v8398 = vrot.slane %v8039, %v8397
    %v8399 = vsel %vm8135, %v8398, %v8394
    %v8400 = vlaneseq
    %v8401 = vshrl.u32 %v8400, 7
    %v8402 = vsub.s32 %v8137, %v8401
    %v8403 = vrot.slane %v8040, %v8402
    %v8404 = vsel %vm8142, %v8403, %v8399
    %v8405 = vlaneseq
    %v8406 = vshrl.u32 %v8405, 7
    %v8407 = vsub.s32 %v8144, %v8406
    %v8408 = vrot.slane %v8041, %v8407
    %v8409 = vsel %vm8149, %v8408, %v8404
    %v8410 = vlaneseq
    %v8411 = vshrl.u32 %v8410, 7
    %v8412 = vsub.s32 %v8151, %v8411
    %v8413 = vrot.slane %v8042, %v8412
    %v8414 = vsel %vm8156, %v8413, %v8409
    %v8415 = vlaneseq
    %v8416 = vshrl.u32 %v8415, 7
    %v8417 = vsub.s32 %v8158, %v8416
    %v8418 = vrot.slane %v8043, %v8417
    %v8419 = vsel %vm8163, %v8418, %v8414
    %v8420 = vlaneseq
    %v8421 = vshrl.u32 %v8420, 7
    %v8422 = vsub.s32 %v8165, %v8421
    %v8423 = vrot.slane %v8044, %v8422
    %v8424 = vsel %vm8170, %v8423, %v8419
    %v8425 = vlaneseq
    %v8426 = vshrl.u32 %v8425, 7
    %v8427 = vsub.s32 %v8172, %v8426
    %v8428 = vrot.slane %v8045, %v8427
    %v8429 = vsel %vm8177, %v8428, %v8424
    %v8430 = vlaneseq
    %v8431 = vshrl.u32 %v8430, 7
    %v8432 = vsub.s32 %v8179, %v8431
    %v8433 = vrot.slane %v8046, %v8432
    %v8434 = vsel %vm8184, %v8433, %v8429
    %v8435 = vlaneseq
    %v8436 = vshrl.u32 %v8435, 7
    %v8437 = vsub.s32 %v8186, %v8436
    %v8438 = vrot.slane %v8047, %v8437
    %v8439 = vsel %vm8191, %v8438, %v8434
    %v8440 = vlaneseq
    %v8441 = vshrl.u32 %v8440, 7
    %v8442 = vsub.s32 %v8193, %v8441
    %v8443 = vrot.slane %v8048, %v8442
    %v8444 = vsel %vm8198, %v8443, %v8439
    %v8445 = vlaneseq
    %v8446 = vshrl.u32 %v8445, 7
    %v8447 = vsub.s32 %v8200, %v8446
    %v8448 = vrot.slane %v8049, %v8447
    %v8449 = vsel %vm8205, %v8448, %v8444
    %v8450 = vlaneseq
    %v8451 = vshrl.u32 %v8450, 7
    %v8452 = vsub.s32 %v8207, %v8451
    %v8453 = vrot.slane %v8050, %v8452
    %v8454 = vsel %vm8212, %v8453, %v8449
    %v8455 = vlaneseq
    %v8456 = vshrl.u32 %v8455, 7
    %v8457 = vsub.s32 %v8214, %v8456
    %v8458 = vrot.slane %v8051, %v8457
    %v8459 = vsel %vm8219, %v8458, %v8454
    %v8460 = vlaneseq
    %v8461 = vshrl.u32 %v8460, 7
    %v8462 = vsub.s32 %v8221, %v8461
    %v8463 = vrot.slane %v8052, %v8462
    %v8464 = vsel %vm8226, %v8463, %v8459
    %v8465 = vlaneseq
    %v8466 = vshrl.u32 %v8465, 7
    %v8467 = vsub.s32 %v8118, %v8466
    %v8468 = vrot.slane %v8053, %v8467
    %v8469 = vlaneseq
    %v8470 = vshrl.u32 %v8469, 7
    %v8471 = vsub.s32 %v8123, %v8470
    %v8472 = vrot.slane %v8054, %v8471
    %v8473 = vsel %vm8128, %v8472, %v8468
    %v8474 = vlaneseq
    %v8475 = vshrl.u32 %v8474, 7
    %v8476 = vsub.s32 %v8130, %v8475
    %v8477 = vrot.slane %v8055, %v8476
    %v8478 = vsel %vm8135, %v8477, %v8473
    %v8479 = vlaneseq
    %v8480 = vshrl.u32 %v8479, 7
    %v8481 = vsub.s32 %v8137, %v8480
    %v8482 = vrot.slane %v8056, %v8481
    %v8483 = vsel %vm8142, %v8482, %v8478
    %v8484 = vlaneseq
    %v8485 = vshrl.u32 %v8484, 7
    %v8486 = vsub.s32 %v8144, %v8485
    %v8487 = vrot.slane %v8057, %v8486
    %v8488 = vsel %vm8149, %v8487, %v8483
    %v8489 = vlaneseq
    %v8490 = vshrl.u32 %v8489, 7
    %v8491 = vsub.s32 %v8151, %v8490
    %v8492 = vrot.slane %v8058, %v8491
    %v8493 = vsel %vm8156, %v8492, %v8488
    %v8494 = vlaneseq
    %v8495 = vshrl.u32 %v8494, 7
    %v8496 = vsub.s32 %v8158, %v8495
    %v8497 = vrot.slane %v8059, %v8496
    %v8498 = vsel %vm8163, %v8497, %v8493
    %v8499 = vlaneseq
    %v8500 = vshrl.u32 %v8499, 7
    %v8501 = vsub.s32 %v8165, %v8500
    %v8502 = vrot.slane %v8060, %v8501
    %v8503 = vsel %vm8170, %v8502, %v8498
    %v8504 = vlaneseq
    %v8505 = vshrl.u32 %v8504, 7
    %v8506 = vsub.s32 %v8172, %v8505
    %v8507 = vrot.slane %v8061, %v8506
    %v8508 = vsel %vm8177, %v8507, %v8503
    %v8509 = vlaneseq
    %v8510 = vshrl.u32 %v8509, 7
    %v8511 = vsub.s32 %v8179, %v8510
    %v8512 = vrot.slane %v8062, %v8511
    %v8513 = vsel %vm8184, %v8512, %v8508
    %v8514 = vlaneseq
    %v8515 = vshrl.u32 %v8514, 7
    %v8516 = vsub.s32 %v8186, %v8515
    %v8517 = vrot.slane %v8063, %v8516
    %v8518 = vsel %vm8191, %v8517, %v8513
    %v8519 = vlaneseq
    %v8520 = vshrl.u32 %v8519, 7
    %v8521 = vsub.s32 %v8193, %v8520
    %v8522 = vrot.slane %v8064, %v8521
    %v8523 = vsel %vm8198, %v8522, %v8518
    %v8524 = vlaneseq
    %v8525 = vshrl.u32 %v8524, 7
    %v8526 = vsub.s32 %v8200, %v8525
    %v8527 = vrot.slane %v8065, %v8526
    %v8528 = vsel %vm8205, %v8527, %v8523
    %v8529 = vlaneseq
    %v8530 = vshrl.u32 %v8529, 7
    %v8531 = vsub.s32 %v8207, %v8530
    %v8532 = vrot.slane %v8066, %v8531
    %v8533 = vsel %vm8212, %v8532, %v8528
    %v8534 = vlaneseq
    %v8535 = vshrl.u32 %v8534, 7
    %v8536 = vsub.s32 %v8214, %v8535
    %v8537 = vrot.slane %v8067, %v8536
    %v8538 = vsel %vm8219, %v8537, %v8533
    %v8539 = vlaneseq
    %v8540 = vshrl.u32 %v8539, 7
    %v8541 = vsub.s32 %v8221, %v8540
    %v8542 = vrot.slane %v8068, %v8541
    %v8543 = vsel %vm8226, %v8542, %v8538
    %v8544 = vlaneseq
    %v8545 = vshrl.u32 %v8544, 7
    %v8546 = vsub.s32 %v8118, %v8545
    %v8547 = vrot.slane %v8069, %v8546
    %v8548 = vlaneseq
    %v8549 = vshrl.u32 %v8548, 7
    %v8550 = vsub.s32 %v8123, %v8549
    %v8551 = vrot.slane %v8070, %v8550
    %v8552 = vsel %vm8128, %v8551, %v8547
    %v8553 = vlaneseq
    %v8554 = vshrl.u32 %v8553, 7
    %v8555 = vsub.s32 %v8130, %v8554
    %v8556 = vrot.slane %v8071, %v8555
    %v8557 = vsel %vm8135, %v8556, %v8552
    %v8558 = vlaneseq
    %v8559 = vshrl.u32 %v8558, 7
    %v8560 = vsub.s32 %v8137, %v8559
    %v8561 = vrot.slane %v8072, %v8560
    %v8562 = vsel %vm8142, %v8561, %v8557
    %v8563 = vlaneseq
    %v8564 = vshrl.u32 %v8563, 7
    %v8565 = vsub.s32 %v8144, %v8564
    %v8566 = vrot.slane %v8073, %v8565
    %v8567 = vsel %vm8149, %v8566, %v8562
    %v8568 = vlaneseq
    %v8569 = vshrl.u32 %v8568, 7
    %v8570 = vsub.s32 %v8151, %v8569
    %v8571 = vrot.slane %v8074, %v8570
    %v8572 = vsel %vm8156, %v8571, %v8567
    %v8573 = vlaneseq
    %v8574 = vshrl.u32 %v8573, 7
    %v8575 = vsub.s32 %v8158, %v8574
    %v8576 = vrot.slane %v8075, %v8575
    %v8577 = vsel %vm8163, %v8576, %v8572
    %v8578 = vlaneseq
    %v8579 = vshrl.u32 %v8578, 7
    %v8580 = vsub.s32 %v8165, %v8579
    %v8581 = vrot.slane %v8076, %v8580
    %v8582 = vsel %vm8170, %v8581, %v8577
    %v8583 = vlaneseq
    %v8584 = vshrl.u32 %v8583, 7
    %v8585 = vsub.s32 %v8172, %v8584
    %v8586 = vrot.slane %v8077, %v8585
    %v8587 = vsel %vm8177, %v8586, %v8582
    %v8588 = vlaneseq
    %v8589 = vshrl.u32 %v8588, 7
    %v8590 = vsub.s32 %v8179, %v8589
    %v8591 = vrot.slane %v8078, %v8590
    %v8592 = vsel %vm8184, %v8591, %v8587
    %v8593 = vlaneseq
    %v8594 = vshrl.u32 %v8593, 7
    %v8595 = vsub.s32 %v8186, %v8594
    %v8596 = vrot.slane %v8079, %v8595
    %v8597 = vsel %vm8191, %v8596, %v8592
    %v8598 = vlaneseq
    %v8599 = vshrl.u32 %v8598, 7
    %v8600 = vsub.s32 %v8193, %v8599
    %v8601 = vrot.slane %v8080, %v8600
    %v8602 = vsel %vm8198, %v8601, %v8597
    %v8603 = vlaneseq
    %v8604 = vshrl.u32 %v8603, 7
    %v8605 = vsub.s32 %v8200, %v8604
    %v8606 = vrot.slane %v8081, %v8605
    %v8607 = vsel %vm8205, %v8606, %v8602
    %v8608 = vlaneseq
    %v8609 = vshrl.u32 %v8608, 7
    %v8610 = vsub.s32 %v8207, %v8609
    %v8611 = vrot.slane %v8082, %v8610
    %v8612 = vsel %vm8212, %v8611, %v8607
    %v8613 = vlaneseq
    %v8614 = vshrl.u32 %v8613, 7
    %v8615 = vsub.s32 %v8214, %v8614
    %v8616 = vrot.slane %v8083, %v8615
    %v8617 = vsel %vm8219, %v8616, %v8612
    %v8618 = vlaneseq
    %v8619 = vshrl.u32 %v8618, 7
    %v8620 = vsub.s32 %v8221, %v8619
    %v8621 = vrot.slane %v8084, %v8620
    %v8622 = vsel %vm8226, %v8621, %v8617
    %v8623 = vlaneseq
    %v8624 = vshrl.u32 %v8623, 7
    %v8625 = vsub.s32 %v8118, %v8624
    %v8626 = vrot.slane %v8085, %v8625
    %v8627 = vlaneseq
    %v8628 = vshrl.u32 %v8627, 7
    %v8629 = vsub.s32 %v8123, %v8628
    %v8630 = vrot.slane %v8086, %v8629
    %v8631 = vsel %vm8128, %v8630, %v8626
    %v8632 = vlaneseq
    %v8633 = vshrl.u32 %v8632, 7
    %v8634 = vsub.s32 %v8130, %v8633
    %v8635 = vrot.slane %v8087, %v8634
    %v8636 = vsel %vm8135, %v8635, %v8631
    %v8637 = vlaneseq
    %v8638 = vshrl.u32 %v8637, 7
    %v8639 = vsub.s32 %v8137, %v8638
    %v8640 = vrot.slane %v8088, %v8639
    %v8641 = vsel %vm8142, %v8640, %v8636
    %v8642 = vlaneseq
    %v8643 = vshrl.u32 %v8642, 7
    %v8644 = vsub.s32 %v8144, %v8643
    %v8645 = vrot.slane %v8089, %v8644
    %v8646 = vsel %vm8149, %v8645, %v8641
    %v8647 = vlaneseq
    %v8648 = vshrl.u32 %v8647, 7
    %v8649 = vsub.s32 %v8151, %v8648
    %v8650 = vrot.slane %v8090, %v8649
    %v8651 = vsel %vm8156, %v8650, %v8646
    %v8652 = vlaneseq
    %v8653 = vshrl.u32 %v8652, 7
    %v8654 = vsub.s32 %v8158, %v8653
    %v8655 = vrot.slane %v8091, %v8654
    %v8656 = vsel %vm8163, %v8655, %v8651
    %v8657 = vlaneseq
    %v8658 = vshrl.u32 %v8657, 7
    %v8659 = vsub.s32 %v8165, %v8658
    %v8660 = vrot.slane %v8092, %v8659
    %v8661 = vsel %vm8170, %v8660, %v8656
    %v8662 = vlaneseq
    %v8663 = vshrl.u32 %v8662, 7
    %v8664 = vsub.s32 %v8172, %v8663
    %v8665 = vrot.slane %v8093, %v8664
    %v8666 = vsel %vm8177, %v8665, %v8661
    %v8667 = vlaneseq
    %v8668 = vshrl.u32 %v8667, 7
    %v8669 = vsub.s32 %v8179, %v8668
    %v8670 = vrot.slane %v8094, %v8669
    %v8671 = vsel %vm8184, %v8670, %v8666
    %v8672 = vlaneseq
    %v8673 = vshrl.u32 %v8672, 7
    %v8674 = vsub.s32 %v8186, %v8673
    %v8675 = vrot.slane %v8095, %v8674
    %v8676 = vsel %vm8191, %v8675, %v8671
    %v8677 = vlaneseq
    %v8678 = vshrl.u32 %v8677, 7
    %v8679 = vsub.s32 %v8193, %v8678
    %v8680 = vrot.slane %v8096, %v8679
    %v8681 = vsel %vm8198, %v8680, %v8676
    %v8682 = vlaneseq
    %v8683 = vshrl.u32 %v8682, 7
    %v8684 = vsub.s32 %v8200, %v8683
    %v8685 = vrot.slane %v8097, %v8684
    %v8686 = vsel %vm8205, %v8685, %v8681
    %v8687 = vlaneseq
    %v8688 = vshrl.u32 %v8687, 7
    %v8689 = vsub.s32 %v8207, %v8688
    %v8690 = vrot.slane %v8098, %v8689
    %v8691 = vsel %vm8212, %v8690, %v8686
    %v8692 = vlaneseq
    %v8693 = vshrl.u32 %v8692, 7
    %v8694 = vsub.s32 %v8214, %v8693
    %v8695 = vrot.slane %v8099, %v8694
    %v8696 = vsel %vm8219, %v8695, %v8691
    %v8697 = vlaneseq
    %v8698 = vshrl.u32 %v8697, 7
    %v8699 = vsub.s32 %v8221, %v8698
    %v8700 = vrot.slane %v8100, %v8699
    %v8701 = vsel %vm8226, %v8700, %v8696
    %v8702 = vlaneseq
    %v8703 = vshrl.u32 %v8702, 7
    %v8704 = vsub.s32 %v8118, %v8703
    %v8705 = vrot.slane %v8101, %v8704
    %v8706 = vlaneseq
    %v8707 = vshrl.u32 %v8706, 7
    %v8708 = vsub.s32 %v8123, %v8707
    %v8709 = vrot.slane %v8102, %v8708
    %v8710 = vsel %vm8128, %v8709, %v8705
    %v8711 = vlaneseq
    %v8712 = vshrl.u32 %v8711, 7
    %v8713 = vsub.s32 %v8130, %v8712
    %v8714 = vrot.slane %v8103, %v8713
    %v8715 = vsel %vm8135, %v8714, %v8710
    %v8716 = vlaneseq
    %v8717 = vshrl.u32 %v8716, 7
    %v8718 = vsub.s32 %v8137, %v8717
    %v8719 = vrot.slane %v8104, %v8718
    %v8720 = vsel %vm8142, %v8719, %v8715
    %v8721 = vlaneseq
    %v8722 = vshrl.u32 %v8721, 7
    %v8723 = vsub.s32 %v8144, %v8722
    %v8724 = vrot.slane %v8105, %v8723
    %v8725 = vsel %vm8149, %v8724, %v8720
    %v8726 = vlaneseq
    %v8727 = vshrl.u32 %v8726, 7
    %v8728 = vsub.s32 %v8151, %v8727
    %v8729 = vrot.slane %v8106, %v8728
    %v8730 = vsel %vm8156, %v8729, %v8725
    %v8731 = vlaneseq
    %v8732 = vshrl.u32 %v8731, 7
    %v8733 = vsub.s32 %v8158, %v8732
    %v8734 = vrot.slane %v8107, %v8733
    %v8735 = vsel %vm8163, %v8734, %v8730
    %v8736 = vlaneseq
    %v8737 = vshrl.u32 %v8736, 7
    %v8738 = vsub.s32 %v8165, %v8737
    %v8739 = vrot.slane %v8108, %v8738
    %v8740 = vsel %vm8170, %v8739, %v8735
    %v8741 = vlaneseq
    %v8742 = vshrl.u32 %v8741, 7
    %v8743 = vsub.s32 %v8172, %v8742
    %v8744 = vrot.slane %v8109, %v8743
    %v8745 = vsel %vm8177, %v8744, %v8740
    %v8746 = vlaneseq
    %v8747 = vshrl.u32 %v8746, 7
    %v8748 = vsub.s32 %v8179, %v8747
    %v8749 = vrot.slane %v8110, %v8748
    %v8750 = vsel %vm8184, %v8749, %v8745
    %v8751 = vlaneseq
    %v8752 = vshrl.u32 %v8751, 7
    %v8753 = vsub.s32 %v8186, %v8752
    %v8754 = vrot.slane %v8111, %v8753
    %v8755 = vsel %vm8191, %v8754, %v8750
    %v8756 = vlaneseq
    %v8757 = vshrl.u32 %v8756, 7
    %v8758 = vsub.s32 %v8193, %v8757
    %v8759 = vrot.slane %v8112, %v8758
    %v8760 = vsel %vm8198, %v8759, %v8755
    %v8761 = vlaneseq
    %v8762 = vshrl.u32 %v8761, 7
    %v8763 = vsub.s32 %v8200, %v8762
    %v8764 = vrot.slane %v8113, %v8763
    %v8765 = vsel %vm8205, %v8764, %v8760
    %v8766 = vlaneseq
    %v8767 = vshrl.u32 %v8766, 7
    %v8768 = vsub.s32 %v8207, %v8767
    %v8769 = vrot.slane %v8114, %v8768
    %v8770 = vsel %vm8212, %v8769, %v8765
    %v8771 = vlaneseq
    %v8772 = vshrl.u32 %v8771, 7
    %v8773 = vsub.s32 %v8214, %v8772
    %v8774 = vrot.slane %v8115, %v8773
    %v8775 = vsel %vm8219, %v8774, %v8770
    %v8776 = vlaneseq
    %v8777 = vshrl.u32 %v8776, 7
    %v8778 = vsub.s32 %v8221, %v8777
    %v8779 = vrot.slane %v8116, %v8778
    %v8780 = vsel %vm8226, %v8779, %v8775
    %vm8781 = vcmask 1041409
    %v8782 = vsel %vm8781, %v8306, %v8227
    %vm8783 = vcmask 1042434
    %v8784 = vsel %vm8783, %v8385, %v8782
    %vm8785 = vcmask 1043459
    %v8786 = vsel %vm8785, %v8464, %v8784
    %vm8787 = vcmask 1044484
    %v8788 = vsel %vm8787, %v8543, %v8786
    %vm8789 = vcmask 1045509
    %v8790 = vsel %vm8789, %v8622, %v8788
    %vm8791 = vcmask 1046534
    %v8792 = vsel %vm8791, %v8701, %v8790
    %vm8793 = vcmask 1047559
    %v8794 = vsel %vm8793, %v8780, %v8792
    %8795 = vst [vmem:[#allocation2] sm:$0xff] %v8794
    // Predicated region
    $region10: #{tpu_custom_call.1} parent=1 // pred_check
      _
    $region11: #{tpu_custom_call.1} parent=1 // pred_check_branch
      %8797 = sbr.rel (0) target = $region13
    $region12: #{tpu_custom_call.1} parent=1 // pred_region
      %s8799 = ssub.s32 128, 128
      %8800 = vsyncadd [#allocation3], %s8799
      %s8802 = sshll.u32 [#allocation2], 4
      %s8803 = int_to_ptr.vmem [resolvable:$true] %s8802
      %8805 = dma.vmem_to_hbm [thread:$0]  %s8803, 128, %s2, [#allocation3]
    $region13: #{tpu_custom_call.1} parent=1 // pred_fallthru
      _
    // Predicated region
    $region14: #{tpu_custom_call.1} parent=1 // pred_check
      _
    $region15: #{tpu_custom_call.1} parent=1 // pred_check_branch
      %8807 = sbr.rel (0) target = $region17
    $region16: #{tpu_custom_call.1} parent=1 // pred_region
      %8808 = dma.done [#allocation3], 128
    $region17: #{tpu_custom_call.1} parent=1 // pred_fallthru
      _
    %8809 = vsyncpa [#allocation3], 1

</llo_original>
